<compile_context>
chip_gen: v5e
topology: v5e:2x2
jax: 0.10.0
libtpu: 0.0.40
codegen_flags: <defaults>
</compile_context>

<pallas_src>
import functools

import jax
import jax.numpy as jnp
from jax.experimental import pallas as pl
from jax.experimental.pallas import tpu as pltpu

BN_EPS = 1e-5
HIDDEN_DIMS = (2048, 1024, 512, 128, 64, 1)


def _fused_mlp_kernel(n_layers, x_ref, *refs):
    n_bn = n_layers - 1
    # ---- unpack refs: inputs, output, scratch (order matches pallas_call) --
    w_hbm = refs[0:n_layers]                                   # HBM weight refs
    b_last_ref = refs[n_layers]                                # (1, 1) final bias
    gamma_refs = refs[n_layers + 1:n_layers + 1 + n_bn]        # 5 x (1, F)
    beta_refs = refs[n_layers + 1 + n_bn:n_layers + 1 + 2 * n_bn]
    o_ref = refs[n_layers + 1 + 2 * n_bn]                      # (B, 1) output
    w_vmem = refs[n_layers + 2 + 2 * n_bn:2 * n_layers + 2 + 2 * n_bn]
    sem = refs[2 * n_layers + 2 + 2 * n_bn]                    # DMA sems (6,)

    # Kick off all weight DMAs (HBM -> VMEM scratch) immediately.  The DMA
    # engine drains them in issue order, so each layer's weight tends to land
    # while the previous layer's matmul/BN is still in flight.
    copies = []
    for i in range(n_layers):
        cp = pltpu.make_async_copy(w_hbm[i], w_vmem[i], sem.at[i])
        cp.start()
        copies.append(cp)

    h = x_ref[...]
    for i in range(n_layers):
        copies[i].wait()  # block only on this layer's weight
        y = jnp.dot(h, w_vmem[i][...], preferred_element_type=jnp.float32)
        if i < n_bn:
            # Training-mode BatchNorm1d over the batch axis, folded into a
            # single scale/shift.  The Linear bias is omitted on purpose: the
            # batch-mean subtraction cancels any per-feature constant exactly.
            mean = jnp.mean(y, axis=0, keepdims=True)
            var = jnp.mean(y * y, axis=0, keepdims=True) - mean * mean
            var = jnp.maximum(var, 0.0)
            s = gamma_refs[i][...] * jax.lax.rsqrt(var + BN_EPS)
            t = beta_refs[i][...] - mean * s
            h = jnp.maximum(y * s + t, 0.0)
        else:
            o_ref[...] = (y + b_last_ref[...]).astype(o_ref.dtype)


def model2_forward(x, params):
    """Fused forward pass.  params = 5 x (w, b, gamma, beta) + 1 x (w, b)."""
    n_layers = len(params)
    weights = [p[0] for p in params]
    b_last = params[-1][1].reshape(1, -1)
    gammas = [p[2].reshape(1, -1) for p in params[:-1]]
    betas = [p[3].reshape(1, -1) for p in params[:-1]]

    batch = x.shape[0]
    out_features = weights[-1].shape[1]

    flops = 2 * batch * sum(int(w.size) for w in weights)
    bytes_accessed = 4 * (
        int(x.size)
        + sum(int(w.size) for w in weights)
        + int(b_last.size)
        + sum(int(g.size) for g in gammas)
        + sum(int(bt.size) for bt in betas)
        + batch * out_features
    )

    vmem = pl.BlockSpec(memory_space=pltpu.MemorySpace.VMEM)
    hbm = pl.BlockSpec(memory_space=pl.ANY)

    return pl.pallas_call(
        functools.partial(_fused_mlp_kernel, n_layers),
        out_shape=jax.ShapeDtypeStruct((batch, out_features), jnp.float32),
        in_specs=[vmem] + [hbm] * n_layers + [vmem] * (1 + 2 * (n_layers - 1)),
        out_specs=vmem,
        scratch_shapes=(
            [pltpu.VMEM(w.shape, w.dtype) for w in weights]
            + [pltpu.SemaphoreType.DMA((n_layers,))]
        ),
        compiler_params=pltpu.CompilerParams(
            vmem_limit_bytes=32 * 1024 * 1024,
        ),
        cost_estimate=pl.CostEstimate(
            flops=flops, transcendentals=0, bytes_accessed=bytes_accessed
        ),
    )(x, *weights, b_last, *gammas, *betas)


model2_forward_jit = jax.jit(model2_forward)


def init_params(key, in_features):
    dims = [in_features, *HIDDEN_DIMS]
    params = []
    for i in range(len(dims) - 1):
        f_in, f_out = dims[i], dims[i + 1]
        key, kw, kb = jax.random.split(key, 3)
        bound = 1.0 / jnp.sqrt(f_in)
        w = jax.random.uniform(kw, (f_in, f_out), jnp.float32, -bound, bound)
        b = jax.random.uniform(kb, (f_out,), jnp.float32, -bound, bound)
        if i < len(dims) - 2:  # layers followed by BatchNorm
            gamma = jnp.ones((f_out,), jnp.float32)
            beta = jnp.zeros((f_out,), jnp.float32)
            params.append((w, b, gamma, beta))
        else:
            params.append((w, b))
    return params


def _reference_forward(x, params):
    # Plain-JAX reference matching PyTorch exactly (bias + standard BN form).
    out = x
    for w, b, gamma, beta in params[:-1]:
        y = out @ w + b
        mean = jnp.mean(y, axis=0, keepdims=True)
        var = jnp.mean((y - mean) ** 2, axis=0, keepdims=True)
        y = (y - mean) * jax.lax.rsqrt(var + BN_EPS)
        y = gamma * y + beta
        out = jnp.maximum(y, 0.0)
    w, b = params[-1]
    return out @ w + b


if __name__ == "__main__":
    key = jax.random.PRNGKey(0)
    k_x, k_p = jax.random.split(key)

    batch = 8
    in_features = 256
    x = jax.random.normal(k_x, (batch, in_features), jnp.float32)
    params = init_params(k_p, in_features)

    out = model2_forward_jit(x, params)
    out = jax.block_until_ready(out)

    ref = _reference_forward(x, params)
    assert out.shape == (batch, 1), out.shape
    max_err = float(jnp.max(jnp.abs(out - ref)))
    assert jnp.allclose(out, ref, atol=2e-3, rtol=2e-3), max_err
    print("KERNEL_OK")
</pallas_src>

<mosaic_0001>
module attributes {stable_mosaic.version = 11 : i64} {
  func.func @_fused_mlp_kernel(%arg0: memref<8x256xf32, #tpu.memory_space<vmem>>, %arg1: memref<256x2048xf32, #tpu.memory_space<any>>, %arg2: memref<2048x1024xf32, #tpu.memory_space<any>>, %arg3: memref<1024x512xf32, #tpu.memory_space<any>>, %arg4: memref<512x128xf32, #tpu.memory_space<any>>, %arg5: memref<128x64xf32, #tpu.memory_space<any>>, %arg6: memref<64x1xf32, #tpu.memory_space<any>>, %arg7: memref<1x1xf32, #tpu.memory_space<vmem>>, %arg8: memref<1x2048xf32, #tpu.memory_space<vmem>>, %arg9: memref<1x1024xf32, #tpu.memory_space<vmem>>, %arg10: memref<1x512xf32, #tpu.memory_space<vmem>>, %arg11: memref<1x128xf32, #tpu.memory_space<vmem>>, %arg12: memref<1x64xf32, #tpu.memory_space<vmem>>, %arg13: memref<1x2048xf32, #tpu.memory_space<vmem>>, %arg14: memref<1x1024xf32, #tpu.memory_space<vmem>>, %arg15: memref<1x512xf32, #tpu.memory_space<vmem>>, %arg16: memref<1x128xf32, #tpu.memory_space<vmem>>, %arg17: memref<1x64xf32, #tpu.memory_space<vmem>>, %arg18: memref<8x1xf32, #tpu.memory_space<vmem>>, %arg19: memref<256x2048xf32, #tpu.memory_space<vmem>>, %arg20: memref<2048x1024xf32, #tpu.memory_space<vmem>>, %arg21: memref<1024x512xf32, #tpu.memory_space<vmem>>, %arg22: memref<512x128xf32, #tpu.memory_space<vmem>>, %arg23: memref<128x64xf32, #tpu.memory_space<vmem>>, %arg24: memref<64x1xf32, #tpu.memory_space<vmem>>, %arg25: memref<6x!tpu.dma_semaphore, #tpu.memory_space<semaphore_mem>>) attributes {dimension_semantics = [], scalar_prefetch = 0 : i64, scratch_operands = 7 : i64, tpu.core_type = #tpu.core_type<tc>} {
    %c0_i32 = arith.constant 0 : i32
    %0 = tpu.memref_slice %arg25[%c0_i32] : memref<6x!tpu.dma_semaphore, #tpu.memory_space<semaphore_mem>> -> memref<1x!tpu.dma_semaphore, #tpu.memory_space<semaphore_mem>>
    %1 = tpu.memref_squeeze %0 : memref<1x!tpu.dma_semaphore, #tpu.memory_space<semaphore_mem>> -> memref<!tpu.dma_semaphore, #tpu.memory_space<semaphore_mem>>
    tpu.enqueue_dma source(%arg1 : memref<256x2048xf32, #tpu.memory_space<any>>) target(%arg19 : memref<256x2048xf32, #tpu.memory_space<vmem>>) target_semaphore(%1 : memref<!tpu.dma_semaphore, #tpu.memory_space<semaphore_mem>>)
    %c1_i32 = arith.constant 1 : i32
    %2 = tpu.memref_slice %arg25[%c1_i32] : memref<6x!tpu.dma_semaphore, #tpu.memory_space<semaphore_mem>> -> memref<1x!tpu.dma_semaphore, #tpu.memory_space<semaphore_mem>>
    %3 = tpu.memref_squeeze %2 : memref<1x!tpu.dma_semaphore, #tpu.memory_space<semaphore_mem>> -> memref<!tpu.dma_semaphore, #tpu.memory_space<semaphore_mem>>
    tpu.enqueue_dma source(%arg2 : memref<2048x1024xf32, #tpu.memory_space<any>>) target(%arg20 : memref<2048x1024xf32, #tpu.memory_space<vmem>>) target_semaphore(%3 : memref<!tpu.dma_semaphore, #tpu.memory_space<semaphore_mem>>)
    %c2_i32 = arith.constant 2 : i32
    %4 = tpu.memref_slice %arg25[%c2_i32] : memref<6x!tpu.dma_semaphore, #tpu.memory_space<semaphore_mem>> -> memref<1x!tpu.dma_semaphore, #tpu.memory_space<semaphore_mem>>
    %5 = tpu.memref_squeeze %4 : memref<1x!tpu.dma_semaphore, #tpu.memory_space<semaphore_mem>> -> memref<!tpu.dma_semaphore, #tpu.memory_space<semaphore_mem>>
    tpu.enqueue_dma source(%arg3 : memref<1024x512xf32, #tpu.memory_space<any>>) target(%arg21 : memref<1024x512xf32, #tpu.memory_space<vmem>>) target_semaphore(%5 : memref<!tpu.dma_semaphore, #tpu.memory_space<semaphore_mem>>)
    %c3_i32 = arith.constant 3 : i32
    %6 = tpu.memref_slice %arg25[%c3_i32] : memref<6x!tpu.dma_semaphore, #tpu.memory_space<semaphore_mem>> -> memref<1x!tpu.dma_semaphore, #tpu.memory_space<semaphore_mem>>
    %7 = tpu.memref_squeeze %6 : memref<1x!tpu.dma_semaphore, #tpu.memory_space<semaphore_mem>> -> memref<!tpu.dma_semaphore, #tpu.memory_space<semaphore_mem>>
    tpu.enqueue_dma source(%arg4 : memref<512x128xf32, #tpu.memory_space<any>>) target(%arg22 : memref<512x128xf32, #tpu.memory_space<vmem>>) target_semaphore(%7 : memref<!tpu.dma_semaphore, #tpu.memory_space<semaphore_mem>>)
    %c4_i32 = arith.constant 4 : i32
    %8 = tpu.memref_slice %arg25[%c4_i32] : memref<6x!tpu.dma_semaphore, #tpu.memory_space<semaphore_mem>> -> memref<1x!tpu.dma_semaphore, #tpu.memory_space<semaphore_mem>>
    %9 = tpu.memref_squeeze %8 : memref<1x!tpu.dma_semaphore, #tpu.memory_space<semaphore_mem>> -> memref<!tpu.dma_semaphore, #tpu.memory_space<semaphore_mem>>
    tpu.enqueue_dma source(%arg5 : memref<128x64xf32, #tpu.memory_space<any>>) target(%arg23 : memref<128x64xf32, #tpu.memory_space<vmem>>) target_semaphore(%9 : memref<!tpu.dma_semaphore, #tpu.memory_space<semaphore_mem>>)
    %c5_i32 = arith.constant 5 : i32
    %10 = tpu.memref_slice %arg25[%c5_i32] : memref<6x!tpu.dma_semaphore, #tpu.memory_space<semaphore_mem>> -> memref<1x!tpu.dma_semaphore, #tpu.memory_space<semaphore_mem>>
    %11 = tpu.memref_squeeze %10 : memref<1x!tpu.dma_semaphore, #tpu.memory_space<semaphore_mem>> -> memref<!tpu.dma_semaphore, #tpu.memory_space<semaphore_mem>>
    tpu.enqueue_dma source(%arg6 : memref<64x1xf32, #tpu.memory_space<any>>) target(%arg24 : memref<64x1xf32, #tpu.memory_space<vmem>>) target_semaphore(%11 : memref<!tpu.dma_semaphore, #tpu.memory_space<semaphore_mem>>)
    %c0 = arith.constant 0 : index
    %c0_0 = arith.constant 0 : index
    %12 = vector.load %arg0[%c0, %c0_0] : memref<8x256xf32, #tpu.memory_space<vmem>>, vector<8x256xf32>
    %c0_i32_1 = arith.constant 0 : i32
    %13 = tpu.memref_slice %arg25[%c0_i32_1] : memref<6x!tpu.dma_semaphore, #tpu.memory_space<semaphore_mem>> -> memref<1x!tpu.dma_semaphore, #tpu.memory_space<semaphore_mem>>
    %14 = tpu.memref_squeeze %13 : memref<1x!tpu.dma_semaphore, #tpu.memory_space<semaphore_mem>> -> memref<!tpu.dma_semaphore, #tpu.memory_space<semaphore_mem>>
    tpu.wait_dma2 semaphore(%14 : memref<!tpu.dma_semaphore, #tpu.memory_space<semaphore_mem>>) src(%arg1 : memref<256x2048xf32, #tpu.memory_space<any>>) dst(%arg19 : memref<256x2048xf32, #tpu.memory_space<vmem>>)
    %c0_2 = arith.constant 0 : index
    %c0_3 = arith.constant 0 : index
    %15 = vector.load %arg19[%c0_2, %c0_3] : memref<256x2048xf32, #tpu.memory_space<vmem>>, vector<256x2048xf32>
    %cst = arith.constant dense<0.000000e+00> : vector<8x2048xf32>
    %16 = tpu.matmul %12, %15, %cst {dimension_numbers = #tpu.dot_dimension_numbers<[1], [0], [0], [1], [0, 0, 1, 1], [], []>} : vector<8x256xf32>, vector<256x2048xf32>, vector<8x2048xf32> -> vector<8x2048xf32>
    %cst_4 = arith.constant dense<0.000000e+00> : vector<2048xf32>
    %17 = vector.multi_reduction <add>, %16, %cst_4 [0] : vector<8x2048xf32> to vector<2048xf32>
    %18 = vector.shape_cast %17 : vector<2048xf32> to vector<1x2048xf32>
    %cst_5 = arith.constant 8.000000e+00 : f32
    %19 = vector.broadcast %cst_5 : f32 to vector<1x2048xf32>
    %20 = arith.divf %18, %19 : vector<1x2048xf32>
    %21 = arith.mulf %16, %16 : vector<8x2048xf32>
    %cst_6 = arith.constant dense<0.000000e+00> : vector<2048xf32>
    %22 = vector.multi_reduction <add>, %21, %cst_6 [0] : vector<8x2048xf32> to vector<2048xf32>
    %23 = vector.shape_cast %22 : vector<2048xf32> to vector<1x2048xf32>
    %cst_7 = arith.constant 8.000000e+00 : f32
    %24 = vector.broadcast %cst_7 : f32 to vector<1x2048xf32>
    %25 = arith.divf %23, %24 : vector<1x2048xf32>
    %26 = arith.mulf %20, %20 : vector<1x2048xf32>
    %27 = arith.subf %25, %26 : vector<1x2048xf32>
    %cst_8 = arith.constant 0.000000e+00 : f32
    %28 = vector.broadcast %cst_8 : f32 to vector<1x2048xf32>
    %29 = arith.maximumf %27, %28 : vector<1x2048xf32>
    %c0_9 = arith.constant 0 : index
    %c0_10 = arith.constant 0 : index
    %30 = vector.load %arg8[%c0_9, %c0_10] : memref<1x2048xf32, #tpu.memory_space<vmem>>, vector<1x2048xf32>
    %cst_11 = arith.constant 9.99999974E-6 : f32
    %31 = vector.broadcast %cst_11 : f32 to vector<1x2048xf32>
    %32 = arith.addf %29, %31 : vector<1x2048xf32>
    %33 = math.rsqrt %32 : vector<1x2048xf32>
    %34 = arith.mulf %30, %33 : vector<1x2048xf32>
    %c0_12 = arith.constant 0 : index
    %c0_13 = arith.constant 0 : index
    %35 = vector.load %arg13[%c0_12, %c0_13] : memref<1x2048xf32, #tpu.memory_space<vmem>>, vector<1x2048xf32>
    %36 = arith.mulf %20, %34 : vector<1x2048xf32>
    %37 = arith.subf %35, %36 : vector<1x2048xf32>
    %38 = vector.broadcast %34 : vector<1x2048xf32> to vector<8x2048xf32>
    %39 = arith.mulf %16, %38 : vector<8x2048xf32>
    %40 = vector.broadcast %37 : vector<1x2048xf32> to vector<8x2048xf32>
    %41 = arith.addf %39, %40 : vector<8x2048xf32>
    %cst_14 = arith.constant 0.000000e+00 : f32
    %42 = vector.broadcast %cst_14 : f32 to vector<8x2048xf32>
    %43 = arith.maximumf %41, %42 : vector<8x2048xf32>
    %c1_i32_15 = arith.constant 1 : i32
    %44 = tpu.memref_slice %arg25[%c1_i32_15] : memref<6x!tpu.dma_semaphore, #tpu.memory_space<semaphore_mem>> -> memref<1x!tpu.dma_semaphore, #tpu.memory_space<semaphore_mem>>
    %45 = tpu.memref_squeeze %44 : memref<1x!tpu.dma_semaphore, #tpu.memory_space<semaphore_mem>> -> memref<!tpu.dma_semaphore, #tpu.memory_space<semaphore_mem>>
    tpu.wait_dma2 semaphore(%45 : memref<!tpu.dma_semaphore, #tpu.memory_space<semaphore_mem>>) src(%arg2 : memref<2048x1024xf32, #tpu.memory_space<any>>) dst(%arg20 : memref<2048x1024xf32, #tpu.memory_space<vmem>>)
    %c0_16 = arith.constant 0 : index
    %c0_17 = arith.constant 0 : index
    %46 = vector.load %arg20[%c0_16, %c0_17] : memref<2048x1024xf32, #tpu.memory_space<vmem>>, vector<2048x1024xf32>
    %cst_18 = arith.constant dense<0.000000e+00> : vector<8x1024xf32>
    %47 = tpu.matmul %43, %46, %cst_18 {dimension_numbers = #tpu.dot_dimension_numbers<[1], [0], [0], [1], [0, 0, 1, 1], [], []>} : vector<8x2048xf32>, vector<2048x1024xf32>, vector<8x1024xf32> -> vector<8x1024xf32>
    %cst_19 = arith.constant dense<0.000000e+00> : vector<1024xf32>
    %48 = vector.multi_reduction <add>, %47, %cst_19 [0] : vector<8x1024xf32> to vector<1024xf32>
    %49 = vector.shape_cast %48 : vector<1024xf32> to vector<1x1024xf32>
    %cst_20 = arith.constant 8.000000e+00 : f32
    %50 = vector.broadcast %cst_20 : f32 to vector<1x1024xf32>
    %51 = arith.divf %49, %50 : vector<1x1024xf32>
    %52 = arith.mulf %47, %47 : vector<8x1024xf32>
    %cst_21 = arith.constant dense<0.000000e+00> : vector<1024xf32>
    %53 = vector.multi_reduction <add>, %52, %cst_21 [0] : vector<8x1024xf32> to vector<1024xf32>
    %54 = vector.shape_cast %53 : vector<1024xf32> to vector<1x1024xf32>
    %cst_22 = arith.constant 8.000000e+00 : f32
    %55 = vector.broadcast %cst_22 : f32 to vector<1x1024xf32>
    %56 = arith.divf %54, %55 : vector<1x1024xf32>
    %57 = arith.mulf %51, %51 : vector<1x1024xf32>
    %58 = arith.subf %56, %57 : vector<1x1024xf32>
    %cst_23 = arith.constant 0.000000e+00 : f32
    %59 = vector.broadcast %cst_23 : f32 to vector<1x1024xf32>
    %60 = arith.maximumf %58, %59 : vector<1x1024xf32>
    %c0_24 = arith.constant 0 : index
    %c0_25 = arith.constant 0 : index
    %61 = vector.load %arg9[%c0_24, %c0_25] : memref<1x1024xf32, #tpu.memory_space<vmem>>, vector<1x1024xf32>
    %cst_26 = arith.constant 9.99999974E-6 : f32
    %62 = vector.broadcast %cst_26 : f32 to vector<1x1024xf32>
    %63 = arith.addf %60, %62 : vector<1x1024xf32>
    %64 = math.rsqrt %63 : vector<1x1024xf32>
    %65 = arith.mulf %61, %64 : vector<1x1024xf32>
    %c0_27 = arith.constant 0 : index
    %c0_28 = arith.constant 0 : index
    %66 = vector.load %arg14[%c0_27, %c0_28] : memref<1x1024xf32, #tpu.memory_space<vmem>>, vector<1x1024xf32>
    %67 = arith.mulf %51, %65 : vector<1x1024xf32>
    %68 = arith.subf %66, %67 : vector<1x1024xf32>
    %69 = vector.broadcast %65 : vector<1x1024xf32> to vector<8x1024xf32>
    %70 = arith.mulf %47, %69 : vector<8x1024xf32>
    %71 = vector.broadcast %68 : vector<1x1024xf32> to vector<8x1024xf32>
    %72 = arith.addf %70, %71 : vector<8x1024xf32>
    %cst_29 = arith.constant 0.000000e+00 : f32
    %73 = vector.broadcast %cst_29 : f32 to vector<8x1024xf32>
    %74 = arith.maximumf %72, %73 : vector<8x1024xf32>
    %c2_i32_30 = arith.constant 2 : i32
    %75 = tpu.memref_slice %arg25[%c2_i32_30] : memref<6x!tpu.dma_semaphore, #tpu.memory_space<semaphore_mem>> -> memref<1x!tpu.dma_semaphore, #tpu.memory_space<semaphore_mem>>
    %76 = tpu.memref_squeeze %75 : memref<1x!tpu.dma_semaphore, #tpu.memory_space<semaphore_mem>> -> memref<!tpu.dma_semaphore, #tpu.memory_space<semaphore_mem>>
    tpu.wait_dma2 semaphore(%76 : memref<!tpu.dma_semaphore, #tpu.memory_space<semaphore_mem>>) src(%arg3 : memref<1024x512xf32, #tpu.memory_space<any>>) dst(%arg21 : memref<1024x512xf32, #tpu.memory_space<vmem>>)
    %c0_31 = arith.constant 0 : index
    %c0_32 = arith.constant 0 : index
    %77 = vector.load %arg21[%c0_31, %c0_32] : memref<1024x512xf32, #tpu.memory_space<vmem>>, vector<1024x512xf32>
    %cst_33 = arith.constant dense<0.000000e+00> : vector<8x512xf32>
    %78 = tpu.matmul %74, %77, %cst_33 {dimension_numbers = #tpu.dot_dimension_numbers<[1], [0], [0], [1], [0, 0, 1, 1], [], []>} : vector<8x1024xf32>, vector<1024x512xf32>, vector<8x512xf32> -> vector<8x512xf32>
    %cst_34 = arith.constant dense<0.000000e+00> : vector<512xf32>
    %79 = vector.multi_reduction <add>, %78, %cst_34 [0] : vector<8x512xf32> to vector<512xf32>
    %80 = vector.shape_cast %79 : vector<512xf32> to vector<1x512xf32>
    %cst_35 = arith.constant 8.000000e+00 : f32
    %81 = vector.broadcast %cst_35 : f32 to vector<1x512xf32>
    %82 = arith.divf %80, %81 : vector<1x512xf32>
    %83 = arith.mulf %78, %78 : vector<8x512xf32>
    %cst_36 = arith.constant dense<0.000000e+00> : vector<512xf32>
    %84 = vector.multi_reduction <add>, %83, %cst_36 [0] : vector<8x512xf32> to vector<512xf32>
    %85 = vector.shape_cast %84 : vector<512xf32> to vector<1x512xf32>
    %cst_37 = arith.constant 8.000000e+00 : f32
    %86 = vector.broadcast %cst_37 : f32 to vector<1x512xf32>
    %87 = arith.divf %85, %86 : vector<1x512xf32>
    %88 = arith.mulf %82, %82 : vector<1x512xf32>
    %89 = arith.subf %87, %88 : vector<1x512xf32>
    %cst_38 = arith.constant 0.000000e+00 : f32
    %90 = vector.broadcast %cst_38 : f32 to vector<1x512xf32>
    %91 = arith.maximumf %89, %90 : vector<1x512xf32>
    %c0_39 = arith.constant 0 : index
    %c0_40 = arith.constant 0 : index
    %92 = vector.load %arg10[%c0_39, %c0_40] : memref<1x512xf32, #tpu.memory_space<vmem>>, vector<1x512xf32>
    %cst_41 = arith.constant 9.99999974E-6 : f32
    %93 = vector.broadcast %cst_41 : f32 to vector<1x512xf32>
    %94 = arith.addf %91, %93 : vector<1x512xf32>
    %95 = math.rsqrt %94 : vector<1x512xf32>
    %96 = arith.mulf %92, %95 : vector<1x512xf32>
    %c0_42 = arith.constant 0 : index
    %c0_43 = arith.constant 0 : index
    %97 = vector.load %arg15[%c0_42, %c0_43] : memref<1x512xf32, #tpu.memory_space<vmem>>, vector<1x512xf32>
    %98 = arith.mulf %82, %96 : vector<1x512xf32>
    %99 = arith.subf %97, %98 : vector<1x512xf32>
    %100 = vector.broadcast %96 : vector<1x512xf32> to vector<8x512xf32>
    %101 = arith.mulf %78, %100 : vector<8x512xf32>
    %102 = vector.broadcast %99 : vector<1x512xf32> to vector<8x512xf32>
    %103 = arith.addf %101, %102 : vector<8x512xf32>
    %cst_44 = arith.constant 0.000000e+00 : f32
    %104 = vector.broadcast %cst_44 : f32 to vector<8x512xf32>
    %105 = arith.maximumf %103, %104 : vector<8x512xf32>
    %c3_i32_45 = arith.constant 3 : i32
    %106 = tpu.memref_slice %arg25[%c3_i32_45] : memref<6x!tpu.dma_semaphore, #tpu.memory_space<semaphore_mem>> -> memref<1x!tpu.dma_semaphore, #tpu.memory_space<semaphore_mem>>
    %107 = tpu.memref_squeeze %106 : memref<1x!tpu.dma_semaphore, #tpu.memory_space<semaphore_mem>> -> memref<!tpu.dma_semaphore, #tpu.memory_space<semaphore_mem>>
    tpu.wait_dma2 semaphore(%107 : memref<!tpu.dma_semaphore, #tpu.memory_space<semaphore_mem>>) src(%arg4 : memref<512x128xf32, #tpu.memory_space<any>>) dst(%arg22 : memref<512x128xf32, #tpu.memory_space<vmem>>)
    %c0_46 = arith.constant 0 : index
    %c0_47 = arith.constant 0 : index
    %108 = vector.load %arg22[%c0_46, %c0_47] : memref<512x128xf32, #tpu.memory_space<vmem>>, vector<512x128xf32>
    %cst_48 = arith.constant dense<0.000000e+00> : vector<8x128xf32>
    %109 = tpu.matmul %105, %108, %cst_48 {dimension_numbers = #tpu.dot_dimension_numbers<[1], [0], [0], [1], [0, 0, 1, 1], [], []>} : vector<8x512xf32>, vector<512x128xf32>, vector<8x128xf32> -> vector<8x128xf32>
    %cst_49 = arith.constant dense<0.000000e+00> : vector<128xf32>
    %110 = vector.multi_reduction <add>, %109, %cst_49 [0] : vector<8x128xf32> to vector<128xf32>
    %111 = vector.shape_cast %110 : vector<128xf32> to vector<1x128xf32>
    %cst_50 = arith.constant 8.000000e+00 : f32
    %112 = vector.broadcast %cst_50 : f32 to vector<1x128xf32>
    %113 = arith.divf %111, %112 : vector<1x128xf32>
    %114 = arith.mulf %109, %109 : vector<8x128xf32>
    %cst_51 = arith.constant dense<0.000000e+00> : vector<128xf32>
    %115 = vector.multi_reduction <add>, %114, %cst_51 [0] : vector<8x128xf32> to vector<128xf32>
    %116 = vector.shape_cast %115 : vector<128xf32> to vector<1x128xf32>
    %cst_52 = arith.constant 8.000000e+00 : f32
    %117 = vector.broadcast %cst_52 : f32 to vector<1x128xf32>
    %118 = arith.divf %116, %117 : vector<1x128xf32>
    %119 = arith.mulf %113, %113 : vector<1x128xf32>
    %120 = arith.subf %118, %119 : vector<1x128xf32>
    %cst_53 = arith.constant 0.000000e+00 : f32
    %121 = vector.broadcast %cst_53 : f32 to vector<1x128xf32>
    %122 = arith.maximumf %120, %121 : vector<1x128xf32>
    %c0_54 = arith.constant 0 : index
    %c0_55 = arith.constant 0 : index
    %123 = vector.load %arg11[%c0_54, %c0_55] : memref<1x128xf32, #tpu.memory_space<vmem>>, vector<1x128xf32>
    %cst_56 = arith.constant 9.99999974E-6 : f32
    %124 = vector.broadcast %cst_56 : f32 to vector<1x128xf32>
    %125 = arith.addf %122, %124 : vector<1x128xf32>
    %126 = math.rsqrt %125 : vector<1x128xf32>
    %127 = arith.mulf %123, %126 : vector<1x128xf32>
    %c0_57 = arith.constant 0 : index
    %c0_58 = arith.constant 0 : index
    %128 = vector.load %arg16[%c0_57, %c0_58] : memref<1x128xf32, #tpu.memory_space<vmem>>, vector<1x128xf32>
    %129 = arith.mulf %113, %127 : vector<1x128xf32>
    %130 = arith.subf %128, %129 : vector<1x128xf32>
    %131 = vector.broadcast %127 : vector<1x128xf32> to vector<8x128xf32>
    %132 = arith.mulf %109, %131 : vector<8x128xf32>
    %133 = vector.broadcast %130 : vector<1x128xf32> to vector<8x128xf32>
    %134 = arith.addf %132, %133 : vector<8x128xf32>
    %cst_59 = arith.constant 0.000000e+00 : f32
    %135 = vector.broadcast %cst_59 : f32 to vector<8x128xf32>
    %136 = arith.maximumf %134, %135 : vector<8x128xf32>
    %c4_i32_60 = arith.constant 4 : i32
    %137 = tpu.memref_slice %arg25[%c4_i32_60] : memref<6x!tpu.dma_semaphore, #tpu.memory_space<semaphore_mem>> -> memref<1x!tpu.dma_semaphore, #tpu.memory_space<semaphore_mem>>
    %138 = tpu.memref_squeeze %137 : memref<1x!tpu.dma_semaphore, #tpu.memory_space<semaphore_mem>> -> memref<!tpu.dma_semaphore, #tpu.memory_space<semaphore_mem>>
    tpu.wait_dma2 semaphore(%138 : memref<!tpu.dma_semaphore, #tpu.memory_space<semaphore_mem>>) src(%arg5 : memref<128x64xf32, #tpu.memory_space<any>>) dst(%arg23 : memref<128x64xf32, #tpu.memory_space<vmem>>)
    %c0_61 = arith.constant 0 : index
    %c0_62 = arith.constant 0 : index
    %139 = vector.load %arg23[%c0_61, %c0_62] : memref<128x64xf32, #tpu.memory_space<vmem>>, vector<128x64xf32>
    %cst_63 = arith.constant dense<0.000000e+00> : vector<8x64xf32>
    %140 = tpu.matmul %136, %139, %cst_63 {dimension_numbers = #tpu.dot_dimension_numbers<[1], [0], [0], [1], [0, 0, 1, 1], [], []>} : vector<8x128xf32>, vector<128x64xf32>, vector<8x64xf32> -> vector<8x64xf32>
    %cst_64 = arith.constant dense<0.000000e+00> : vector<64xf32>
    %141 = vector.multi_reduction <add>, %140, %cst_64 [0] : vector<8x64xf32> to vector<64xf32>
    %142 = vector.shape_cast %141 : vector<64xf32> to vector<1x64xf32>
    %cst_65 = arith.constant 8.000000e+00 : f32
    %143 = vector.broadcast %cst_65 : f32 to vector<1x64xf32>
    %144 = arith.divf %142, %143 : vector<1x64xf32>
    %145 = arith.mulf %140, %140 : vector<8x64xf32>
    %cst_66 = arith.constant dense<0.000000e+00> : vector<64xf32>
    %146 = vector.multi_reduction <add>, %145, %cst_66 [0] : vector<8x64xf32> to vector<64xf32>
    %147 = vector.shape_cast %146 : vector<64xf32> to vector<1x64xf32>
    %cst_67 = arith.constant 8.000000e+00 : f32
    %148 = vector.broadcast %cst_67 : f32 to vector<1x64xf32>
    %149 = arith.divf %147, %148 : vector<1x64xf32>
    %150 = arith.mulf %144, %144 : vector<1x64xf32>
    %151 = arith.subf %149, %150 : vector<1x64xf32>
    %cst_68 = arith.constant 0.000000e+00 : f32
    %152 = vector.broadcast %cst_68 : f32 to vector<1x64xf32>
    %153 = arith.maximumf %151, %152 : vector<1x64xf32>
    %c0_69 = arith.constant 0 : index
    %c0_70 = arith.constant 0 : index
    %154 = vector.load %arg12[%c0_69, %c0_70] : memref<1x64xf32, #tpu.memory_space<vmem>>, vector<1x64xf32>
    %cst_71 = arith.constant 9.99999974E-6 : f32
    %155 = vector.broadcast %cst_71 : f32 to vector<1x64xf32>
    %156 = arith.addf %153, %155 : vector<1x64xf32>
    %157 = math.rsqrt %156 : vector<1x64xf32>
    %158 = arith.mulf %154, %157 : vector<1x64xf32>
    %c0_72 = arith.constant 0 : index
    %c0_73 = arith.constant 0 : index
    %159 = vector.load %arg17[%c0_72, %c0_73] : memref<1x64xf32, #tpu.memory_space<vmem>>, vector<1x64xf32>
    %160 = arith.mulf %144, %158 : vector<1x64xf32>
    %161 = arith.subf %159, %160 : vector<1x64xf32>
    %162 = vector.broadcast %158 : vector<1x64xf32> to vector<8x64xf32>
    %163 = arith.mulf %140, %162 : vector<8x64xf32>
    %164 = vector.broadcast %161 : vector<1x64xf32> to vector<8x64xf32>
    %165 = arith.addf %163, %164 : vector<8x64xf32>
    %cst_74 = arith.constant 0.000000e+00 : f32
    %166 = vector.broadcast %cst_74 : f32 to vector<8x64xf32>
    %167 = arith.maximumf %165, %166 : vector<8x64xf32>
    %c5_i32_75 = arith.constant 5 : i32
    %168 = tpu.memref_slice %arg25[%c5_i32_75] : memref<6x!tpu.dma_semaphore, #tpu.memory_space<semaphore_mem>> -> memref<1x!tpu.dma_semaphore, #tpu.memory_space<semaphore_mem>>
    %169 = tpu.memref_squeeze %168 : memref<1x!tpu.dma_semaphore, #tpu.memory_space<semaphore_mem>> -> memref<!tpu.dma_semaphore, #tpu.memory_space<semaphore_mem>>
    tpu.wait_dma2 semaphore(%169 : memref<!tpu.dma_semaphore, #tpu.memory_space<semaphore_mem>>) src(%arg6 : memref<64x1xf32, #tpu.memory_space<any>>) dst(%arg24 : memref<64x1xf32, #tpu.memory_space<vmem>>)
    %c0_76 = arith.constant 0 : index
    %c0_77 = arith.constant 0 : index
    %170 = vector.load %arg24[%c0_76, %c0_77] : memref<64x1xf32, #tpu.memory_space<vmem>>, vector<64x1xf32>
    %cst_78 = arith.constant dense<0.000000e+00> : vector<8x1xf32>
    %171 = tpu.matmul %167, %170, %cst_78 {dimension_numbers = #tpu.dot_dimension_numbers<[1], [0], [0], [1], [0, 0, 1, 1], [], []>} : vector<8x64xf32>, vector<64x1xf32>, vector<8x1xf32> -> vector<8x1xf32>
    %c0_79 = arith.constant 0 : index
    %c0_80 = arith.constant 0 : index
    %172 = vector.load %arg7[%c0_79, %c0_80] : memref<1x1xf32, #tpu.memory_space<vmem>>, vector<1x1xf32>
    %173 = vector.broadcast %172 : vector<1x1xf32> to vector<8x1xf32>
    %174 = arith.addf %171, %173 : vector<8x1xf32>
    %c0_81 = arith.constant 0 : index
    %c0_82 = arith.constant 0 : index
    %175 = vector.load %arg18[%c0_81, %c0_82] : memref<8x1xf32, #tpu.memory_space<vmem>>, vector<8x1xf32>
    tpu.vector_store %arg18[%c0_81, %c0_82], %174 {strides = array<i32>} : memref<8x1xf32, #tpu.memory_space<vmem>>, vector<8x1xf32>,
    return
  }
}

</mosaic_0001>

<llo_original>
// kernel: model2_forward.1
$region0: #{model2_forward.1}
  #allocation0 [shape = 'u32[]', space=smem, size = 0x4, offset = 0x4, fixed_abs, tag = 'smem constant byte address 0x4 - core index']
  #allocation1 [shape = 'u32[72,128]{1,0:T(1,128)}', space=vmem, size = 0x9000, scoped, tag = 'internal scratch']
  #allocation2 [shape = 'f32[256,2048]{1,0:T(8,128)}', space=vmem, size = 0x200000, scoped, tag = 'scratch operand']
  #allocation3 [shape = 'f32[2048,1024]{1,0:T(8,128)}', space=vmem, size = 0x800000, scoped, tag = 'scratch operand']
  #allocation4 [shape = 'f32[1024,512]{1,0:T(8,128)}', space=vmem, size = 0x200000, scoped, tag = 'scratch operand']
  #allocation5 [shape = 'f32[512,128]{1,0:T(8,128)}', space=vmem, size = 0x40000, scoped, tag = 'scratch operand']
  #allocation6 [shape = 'f32[128,64]{1,0:T(8,128)}', space=vmem, size = 0x10000, scoped, tag = 'scratch operand']
  #allocation7 [shape = 'f32[64,1]{1,0:T(8,128)}', space=vmem, size = 0x8000, scoped, tag = 'scratch operand']
  #allocation8 [shape = 's32[6]{0}', space=sflag, size = 0x18, scoped, tag = 'scratch operand']
  #allocation9 [shape = 'f32[1,1]{1,0:T(1,128)S(1)}', space=vmem, size = 0x200, scoped, tag = 'scoped memory for model2_forward.1']
  #allocation27 [shape = 's32[]', space=sflag, size = 0x4, offset = 0, fixed_abs, tag = 'sflag constant byte address 0x0 - dummy sync flag']
  #allocation28 [shape = 's32[]', space=sflag, size = 0x4, offset = 0, fixed_abs, tag = 'sflag constant byte address 0x0 - dummy sync flag']
  #allocation29 [shape = 'u32[]', space=smem, size = 0x4, offset = 0x44, fixed_abs, tag = 'smem constant byte address 0x44 - assertion arg 0']
  #allocation30 [shape = 'u32[]', space=smem, size = 0x4, offset = 0x48, fixed_abs, tag = 'smem constant byte address 0x48 - assertion arg 1']
  #allocation31 [shape = 's32[]', space=sflag, size = 0x4, offset = 0, fixed_abs, tag = 'sflag constant byte address 0x0 - dummy sync flag']
  #allocation32 [shape = 's32[]', space=sflag, size = 0x4, offset = 0, fixed_abs, tag = 'sflag constant byte address 0x0 - dummy sync flag']
  #allocation33 [shape = 's32[]', space=sflag, size = 0x4, offset = 0, fixed_abs, tag = 'sflag constant byte address 0x0 - dummy sync flag']
  #allocation34 [shape = 's32[]', space=sflag, size = 0x4, offset = 0, fixed_abs, tag = 'sflag constant byte address 0x0 - dummy sync flag']
  #allocation35 [shape = 's32[]', space=sflag, size = 0x4, offset = 0, fixed_abs, tag = 'sflag constant byte address 0x0 - dummy sync flag']
  #allocation36 [shape = 's32[]', space=sflag, size = 0x4, offset = 0, fixed_abs, tag = 'sflag constant byte address 0x0 - dummy sync flag']
  #allocation37 [shape = 's32[]', space=sflag, size = 0x4, offset = 0, fixed_abs, tag = 'sflag constant byte address 0x0 - dummy sync flag']
  #allocation38 [shape = 's32[]', space=sflag, size = 0x4, offset = 0, fixed_abs, tag = 'sflag constant byte address 0x0 - dummy sync flag']
  %s0 = inlined_call_operand.hbm [shape: f32[8,256], index: 0, kind: input, shape index: {}]
  %s1 = inlined_call_operand.hbm [shape: f32[256,2048], index: 1, kind: input, shape index: {}]
  %s2 = inlined_call_operand.hbm [shape: f32[2048,1024], index: 2, kind: input, shape index: {}]
  %s3 = inlined_call_operand.hbm [shape: f32[1024,512], index: 3, kind: input, shape index: {}]
  %s4 = inlined_call_operand.hbm [shape: f32[512,128], index: 4, kind: input, shape index: {}]
  %s5 = inlined_call_operand.vmem [shape: f32[128,64], index: 5, kind: input, shape index: {}]
  %s6 = inlined_call_operand.vmem [shape: f32[64,1], index: 6, kind: input, shape index: {}]
  %s7 = inlined_call_operand.<no memory space> [shape: f32[1,1], index: 7, kind: input, shape index: {}]
  %s8 = inlined_call_operand.hbm [shape: f32[1,2048], index: 8, kind: input, shape index: {}]
  %s9 = inlined_call_operand.hbm [shape: f32[1,1024], index: 9, kind: input, shape index: {}]
  %s10 = inlined_call_operand.hbm [shape: f32[1,512], index: 10, kind: input, shape index: {}]
  %s11 = inlined_call_operand.hbm [shape: f32[1,128], index: 11, kind: input, shape index: {}]
  %s12 = inlined_call_operand.hbm [shape: f32[1,64], index: 12, kind: input, shape index: {}]
  %s13 = inlined_call_operand.hbm [shape: f32[1,2048], index: 13, kind: input, shape index: {}]
  %s14 = inlined_call_operand.hbm [shape: f32[1,1024], index: 14, kind: input, shape index: {}]
  %s15 = inlined_call_operand.hbm [shape: f32[1,512], index: 15, kind: input, shape index: {}]
  %s16 = inlined_call_operand.hbm [shape: f32[1,128], index: 16, kind: input, shape index: {}]
  %s17 = inlined_call_operand.hbm [shape: f32[1,64], index: 17, kind: input, shape index: {}]
  %s18 = inlined_call_operand.vmem [shape: f32[8,1], index: 18, kind: output, shape index: {}]
  %s19 = sld [smem:[#allocation0]]
  $region156: #{model2_forward.1} parent=0
    _
  %s21 = ssub.s32 1, %s19
  %s22 = scalar_select 0, %s21, %s19
  %v23 = vstv %s7
  %24 = vst [vmem:[#allocation9] sm:$0x1] %v23
  $region1: #{model2_forward.1} parent=0
    #allocation10 [shape = 'u8[8192]{0}', space=vmem, size = 0x2000, scoped, tag = 'input window, operand 0, single buffered']
    #allocation11 [shape = 's32[1]{0}', space=sflag, size = 0x4, scoped, tag = 'scoped memory for model2_forward.1']
    #allocation12 [shape = 'u8[8192]{0}', space=vmem, size = 0x2000, scoped, tag = 'input window, operand 8, single buffered']
    #allocation13 [shape = 's32[1]{0}', space=sflag, size = 0x4, scoped, tag = 'scoped memory for model2_forward.1']
    #allocation14 [shape = 'u8[4096]{0}', space=vmem, size = 0x1000, scoped, tag = 'input window, operand 9, single buffered']
    #allocation15 [shape = 'u8[2048]{0}', space=vmem, size = 0x800, scoped, tag = 'input window, operand 10, single buffered']
    #allocation16 [shape = 's32[1]{0}', space=sflag, size = 0x4, scoped, tag = 'scoped memory for model2_forward.1']
    #allocation17 [shape = 'u8[512]{0}', space=vmem, size = 0x400, scoped, tag = 'input window, operand 11, single buffered']
    #allocation18 [shape = 'u8[512]{0}', space=vmem, size = 0x400, scoped, tag = 'input window, operand 12, single buffered']
    #allocation19 [shape = 's32[1]{0}', space=sflag, size = 0x4, scoped, tag = 'scoped memory for model2_forward.1']
    #allocation20 [shape = 'u8[8192]{0}', space=vmem, size = 0x2000, scoped, tag = 'input window, operand 13, single buffered']
    #allocation21 [shape = 'u8[4096]{0}', space=vmem, size = 0x1000, scoped, tag = 'input window, operand 14, single buffered']
    #allocation22 [shape = 's32[1]{0}', space=sflag, size = 0x4, scoped, tag = 'scoped memory for model2_forward.1']
    #allocation23 [shape = 'u8[2048]{0}', space=vmem, size = 0x800, scoped, tag = 'input window, operand 15, single buffered']
    #allocation24 [shape = 'u8[512]{0}', space=vmem, size = 0x400, scoped, tag = 'input window, operand 16, single buffered']
    #allocation25 [shape = 's32[1]{0}', space=sflag, size = 0x4, scoped, tag = 'scoped memory for model2_forward.1']
    #allocation26 [shape = 'u8[512]{0}', space=vmem, size = 0x400, scoped, tag = 'input window, operand 17, single buffered']
    %25 = vsyncpa [#allocation11], 0
    %26 = vsyncpa [#allocation13], 0
    %27 = vsyncpa [#allocation16], 0
    %28 = vsyncpa [#allocation19], 0
    %29 = vsyncpa [#allocation22], 0
    %30 = vsyncpa [#allocation25], 0
    // Predicated region
    $region2: #{model2_forward.1} parent=1 // pred_check
      _
    $region3: #{model2_forward.1} parent=1 // pred_check_branch
      %32 = sbr.rel (0) target = $region5
    $region4: #{model2_forward.1} parent=1 // pred_region
      %34 = vsyncadd [#allocation11], 0
      %s36 = sshll.u32 %s0, 4
      %s37 = int_to_ptr.hbm [resolvable:$true] %s36
      %s38 = sshll.u32 [#allocation10], 4
      %s39 = int_to_ptr.vmem [resolvable:$true] %s38
      %41 = dma.hbm_to_vmem [thread:$0]  %s37, 256, %s39, [#allocation11]
    $region5: #{model2_forward.1} parent=1 // pred_fallthru
      _
    // Predicated region
    $region6: #{model2_forward.1} parent=1 // pred_check
      _
    $region7: #{model2_forward.1} parent=1 // pred_check_branch
      %43 = sbr.rel (0) target = $region9
    $region8: #{model2_forward.1} parent=1 // pred_region
      _
    $region9: #{model2_forward.1} parent=1 // pred_fallthru
      _
    // Predicated region
    $region10: #{model2_forward.1} parent=1 // pred_check
      _
    $region11: #{model2_forward.1} parent=1 // pred_check_branch
      %45 = sbr.rel (0) target = $region13
    $region12: #{model2_forward.1} parent=1 // pred_region
      %47 = vsyncadd [#allocation13], 0
      %s49 = sshll.u32 %s8, 4
      %s50 = int_to_ptr.hbm [resolvable:$true] %s49
      %s51 = sshll.u32 [#allocation12], 4
      %s52 = int_to_ptr.vmem [resolvable:$true] %s51
      %54 = dma.hbm_to_vmem [thread:$0]  %s50, 256, %s52, [#allocation13]
    $region13: #{model2_forward.1} parent=1 // pred_fallthru
      _
    // Predicated region
    $region14: #{model2_forward.1} parent=1 // pred_check
      _
    $region15: #{model2_forward.1} parent=1 // pred_check_branch
      %56 = sbr.rel (0) target = $region17
    $region16: #{model2_forward.1} parent=1 // pred_region
      %58 = vsyncadd [#allocation13], 0
      %s60 = sshll.u32 %s9, 4
      %s61 = int_to_ptr.hbm [resolvable:$true] %s60
      %s62 = sshll.u32 [#allocation14], 4
      %s63 = int_to_ptr.vmem [resolvable:$true] %s62
      %65 = dma.hbm_to_vmem [thread:$0]  %s61, 128, %s63, [#allocation13]
    $region17: #{model2_forward.1} parent=1 // pred_fallthru
      _
    // Predicated region
    $region18: #{model2_forward.1} parent=1 // pred_check
      _
    $region19: #{model2_forward.1} parent=1 // pred_check_branch
      %67 = sbr.rel (0) target = $region21
    $region20: #{model2_forward.1} parent=1 // pred_region
      %69 = vsyncadd [#allocation16], 0
      %s71 = sshll.u32 %s10, 4
      %s72 = int_to_ptr.hbm [resolvable:$true] %s71
      %s73 = sshll.u32 [#allocation15], 4
      %s74 = int_to_ptr.vmem [resolvable:$true] %s73
      %76 = dma.hbm_to_vmem [thread:$0]  %s72, 64, %s74, [#allocation16]
    $region21: #{model2_forward.1} parent=1 // pred_fallthru
      _
    // Predicated region
    $region22: #{model2_forward.1} parent=1 // pred_check
      _
    $region23: #{model2_forward.1} parent=1 // pred_check_branch
      %78 = sbr.rel (0) target = $region25
    $region24: #{model2_forward.1} parent=1 // pred_region
      %80 = vsyncadd [#allocation16], 0
      %s82 = sshll.u32 %s11, 4
      %s83 = int_to_ptr.hbm [resolvable:$true] %s82
      %s84 = sshll.u32 [#allocation17], 4
      %s85 = int_to_ptr.vmem [resolvable:$true] %s84
      %87 = dma.hbm_to_vmem [thread:$0]  %s83, 16, %s85, [#allocation16]
    $region25: #{model2_forward.1} parent=1 // pred_fallthru
      _
    // Predicated region
    $region26: #{model2_forward.1} parent=1 // pred_check
      _
    $region27: #{model2_forward.1} parent=1 // pred_check_branch
      %89 = sbr.rel (0) target = $region29
    $region28: #{model2_forward.1} parent=1 // pred_region
      %91 = vsyncadd [#allocation19], 0
      %s93 = sshll.u32 %s12, 4
      %s94 = int_to_ptr.hbm [resolvable:$true] %s93
      %s95 = sshll.u32 [#allocation18], 4
      %s96 = int_to_ptr.vmem [resolvable:$true] %s95
      %98 = dma.hbm_to_vmem [thread:$0]  %s94, 16, %s96, [#allocation19]
    $region29: #{model2_forward.1} parent=1 // pred_fallthru
      _
    // Predicated region
    $region30: #{model2_forward.1} parent=1 // pred_check
      _
    $region31: #{model2_forward.1} parent=1 // pred_check_branch
      %100 = sbr.rel (0) target = $region33
    $region32: #{model2_forward.1} parent=1 // pred_region
      %102 = vsyncadd [#allocation19], 0
      %s104 = sshll.u32 %s13, 4
      %s105 = int_to_ptr.hbm [resolvable:$true] %s104
      %s106 = sshll.u32 [#allocation20], 4
      %s107 = int_to_ptr.vmem [resolvable:$true] %s106
      %109 = dma.hbm_to_vmem [thread:$0]  %s105, 256, %s107, [#allocation19]
    $region33: #{model2_forward.1} parent=1 // pred_fallthru
      _
    // Predicated region
    $region34: #{model2_forward.1} parent=1 // pred_check
      _
    $region35: #{model2_forward.1} parent=1 // pred_check_branch
      %111 = sbr.rel (0) target = $region37
    $region36: #{model2_forward.1} parent=1 // pred_region
      %113 = vsyncadd [#allocation22], 0
      %s115 = sshll.u32 %s14, 4
      %s116 = int_to_ptr.hbm [resolvable:$true] %s115
      %s117 = sshll.u32 [#allocation21], 4
      %s118 = int_to_ptr.vmem [resolvable:$true] %s117
      %120 = dma.hbm_to_vmem [thread:$0]  %s116, 128, %s118, [#allocation22]
    $region37: #{model2_forward.1} parent=1 // pred_fallthru
      _
    // Predicated region
    $region38: #{model2_forward.1} parent=1 // pred_check
      _
    $region39: #{model2_forward.1} parent=1 // pred_check_branch
      %122 = sbr.rel (0) target = $region41
    $region40: #{model2_forward.1} parent=1 // pred_region
      %124 = vsyncadd [#allocation22], 0
      %s126 = sshll.u32 %s15, 4
      %s127 = int_to_ptr.hbm [resolvable:$true] %s126
      %s128 = sshll.u32 [#allocation23], 4
      %s129 = int_to_ptr.vmem [resolvable:$true] %s128
      %131 = dma.hbm_to_vmem [thread:$0]  %s127, 64, %s129, [#allocation22]
    $region41: #{model2_forward.1} parent=1 // pred_fallthru
      _
    // Predicated region
    $region42: #{model2_forward.1} parent=1 // pred_check
      _
    $region43: #{model2_forward.1} parent=1 // pred_check_branch
      %133 = sbr.rel (0) target = $region45
    $region44: #{model2_forward.1} parent=1 // pred_region
      %135 = vsyncadd [#allocation25], 0
      %s137 = sshll.u32 %s16, 4
      %s138 = int_to_ptr.hbm [resolvable:$true] %s137
      %s139 = sshll.u32 [#allocation24], 4
      %s140 = int_to_ptr.vmem [resolvable:$true] %s139
      %142 = dma.hbm_to_vmem [thread:$0]  %s138, 16, %s140, [#allocation25]
    $region45: #{model2_forward.1} parent=1 // pred_fallthru
      _
    // Predicated region
    $region46: #{model2_forward.1} parent=1 // pred_check
      _
    $region47: #{model2_forward.1} parent=1 // pred_check_branch
      %144 = sbr.rel (0) target = $region49
    $region48: #{model2_forward.1} parent=1 // pred_region
      %146 = vsyncadd [#allocation25], 0
      %s148 = sshll.u32 %s17, 4
      %s149 = int_to_ptr.hbm [resolvable:$true] %s148
      %s150 = sshll.u32 [#allocation26], 4
      %s151 = int_to_ptr.vmem [resolvable:$true] %s150
      %153 = dma.hbm_to_vmem [thread:$0]  %s149, 16, %s151, [#allocation25]
    $region49: #{model2_forward.1} parent=1 // pred_fallthru
      _
    // Predicated region
    $region50: #{model2_forward.1} parent=1 // pred_check
      _
    $region51: #{model2_forward.1} parent=1 // pred_check_branch
      %155 = sbr.rel (0) target = $region53
    $region52: #{model2_forward.1} parent=1 // pred_region
      %157 = dma.done [#allocation11], 256
    $region53: #{model2_forward.1} parent=1 // pred_fallthru
      _
    // Predicated region
    $region54: #{model2_forward.1} parent=1 // pred_check
      _
    $region55: #{model2_forward.1} parent=1 // pred_check_branch
      %159 = sbr.rel (0) target = $region57
    $region56: #{model2_forward.1} parent=1 // pred_region
      %161 = dma.done [#allocation13], 256
    $region57: #{model2_forward.1} parent=1 // pred_fallthru
      _
    // Predicated region
    $region58: #{model2_forward.1} parent=1 // pred_check
      _
    $region59: #{model2_forward.1} parent=1 // pred_check_branch
      %163 = sbr.rel (0) target = $region61
    $region60: #{model2_forward.1} parent=1 // pred_region
      %165 = dma.done [#allocation13], 128
    $region61: #{model2_forward.1} parent=1 // pred_fallthru
      _
    // Predicated region
    $region62: #{model2_forward.1} parent=1 // pred_check
      _
    $region63: #{model2_forward.1} parent=1 // pred_check_branch
      %167 = sbr.rel (0) target = $region65
    $region64: #{model2_forward.1} parent=1 // pred_region
      %169 = dma.done [#allocation16], 64
    $region65: #{model2_forward.1} parent=1 // pred_fallthru
      _
    // Predicated region
    $region66: #{model2_forward.1} parent=1 // pred_check
      _
    $region67: #{model2_forward.1} parent=1 // pred_check_branch
      %171 = sbr.rel (0) target = $region69
    $region68: #{model2_forward.1} parent=1 // pred_region
      %173 = dma.done [#allocation16], 16
    $region69: #{model2_forward.1} parent=1 // pred_fallthru
      _
    // Predicated region
    $region70: #{model2_forward.1} parent=1 // pred_check
      _
    $region71: #{model2_forward.1} parent=1 // pred_check_branch
      %175 = sbr.rel (0) target = $region73
    $region72: #{model2_forward.1} parent=1 // pred_region
      %177 = dma.done [#allocation19], 16
    $region73: #{model2_forward.1} parent=1 // pred_fallthru
      _
    // Predicated region
    $region74: #{model2_forward.1} parent=1 // pred_check
      _
    $region75: #{model2_forward.1} parent=1 // pred_check_branch
      %179 = sbr.rel (0) target = $region77
    $region76: #{model2_forward.1} parent=1 // pred_region
      %181 = dma.done [#allocation19], 256
    $region77: #{model2_forward.1} parent=1 // pred_fallthru
      _
    // Predicated region
    $region78: #{model2_forward.1} parent=1 // pred_check
      _
    $region79: #{model2_forward.1} parent=1 // pred_check_branch
      %183 = sbr.rel (0) target = $region81
    $region80: #{model2_forward.1} parent=1 // pred_region
      %185 = dma.done [#allocation22], 128
    $region81: #{model2_forward.1} parent=1 // pred_fallthru
      _
    // Predicated region
    $region82: #{model2_forward.1} parent=1 // pred_check
      _
    $region83: #{model2_forward.1} parent=1 // pred_check_branch
      %187 = sbr.rel (0) target = $region85
    $region84: #{model2_forward.1} parent=1 // pred_region
      %189 = dma.done [#allocation22], 64
    $region85: #{model2_forward.1} parent=1 // pred_fallthru
      _
    // Predicated region
    $region86: #{model2_forward.1} parent=1 // pred_check
      _
    $region87: #{model2_forward.1} parent=1 // pred_check_branch
      %191 = sbr.rel (0) target = $region89
    $region88: #{model2_forward.1} parent=1 // pred_region
      %193 = dma.done [#allocation25], 16
    $region89: #{model2_forward.1} parent=1 // pred_fallthru
      _
    // Predicated region
    $region90: #{model2_forward.1} parent=1 // pred_check
      _
    $region91: #{model2_forward.1} parent=1 // pred_check_branch
      %195 = sbr.rel (0) target = $region93
    $region92: #{model2_forward.1} parent=1 // pred_region
      %197 = dma.done [#allocation25], 16
    $region93: #{model2_forward.1} parent=1 // pred_fallthru
      _
    // Predicated region
    $region94: #{model2_forward.1} parent=1 // pred_check
      _
    $region95: #{model2_forward.1} parent=1 // pred_check_branch
      %199 = sbr.rel target = $region97
    $region96: #{model2_forward.1} parent=1 // pred_region
      %200 = sst [smem:[#allocation29]] [#allocation28]
      %201 = sst [smem:[#allocation30]] [#allocation27]
    $region97: #{model2_forward.1} parent=1 // pred_fallthru
      _
    %203 = shalt.err (0)
    %s205 = sshll.u32 %s1, 4
    %s206 = int_to_ptr.hbm [resolvable:$true] %s205
    %s207 = sshll.u32 [#allocation2], 4
    %s208 = int_to_ptr.vmem [resolvable:$true] %s207
    %210 = dma.hbm_to_vmem [thread:$0]  %s206, 65536, %s208, [#allocation8]
    %s211 = scalar_lea.sflag [#allocation8], 1
    // Predicated region
    $region98: #{model2_forward.1} parent=1 // pred_check
      _
    $region99: #{model2_forward.1} parent=1 // pred_check_branch
      %213 = sbr.rel target = $region101
    $region100: #{model2_forward.1} parent=1 // pred_region
      %214 = sst [smem:[#allocation29]] [#allocation32]
      %215 = sst [smem:[#allocation30]] [#allocation31]
    $region101: #{model2_forward.1} parent=1 // pred_fallthru
      _
    %217 = shalt.err (0)
    %s219 = sshll.u32 %s2, 4
    %s220 = int_to_ptr.hbm [resolvable:$true] %s219
    %s221 = sshll.u32 [#allocation3], 4
    %s222 = int_to_ptr.vmem [resolvable:$true] %s221
    %224 = dma.hbm_to_vmem [thread:$0]  %s220, 262144, %s222, %s211
    %s225 = scalar_lea.sflag [#allocation8], 2
    // Predicated region
    $region102: #{model2_forward.1} parent=1 // pred_check
      _
    $region103: #{model2_forward.1} parent=1 // pred_check_branch
      %227 = sbr.rel target = $region105
    $region104: #{model2_forward.1} parent=1 // pred_region
      %228 = sst [smem:[#allocation29]] [#allocation34]
      %229 = sst [smem:[#allocation30]] [#allocation33]
    $region105: #{model2_forward.1} parent=1 // pred_fallthru
      _
    %231 = shalt.err (0)
    %s233 = sshll.u32 %s3, 4
    %s234 = int_to_ptr.hbm [resolvable:$true] %s233
    %s235 = sshll.u32 [#allocation4], 4
    %s236 = int_to_ptr.vmem [resolvable:$true] %s235
    %238 = dma.hbm_to_vmem [thread:$0]  %s234, 65536, %s236, %s225
    %s239 = scalar_lea.sflag [#allocation8], 3
    // Predicated region
    $region106: #{model2_forward.1} parent=1 // pred_check
      _
    $region107: #{model2_forward.1} parent=1 // pred_check_branch
      %241 = sbr.rel target = $region109
    $region108: #{model2_forward.1} parent=1 // pred_region
      %242 = sst [smem:[#allocation29]] [#allocation36]
      %243 = sst [smem:[#allocation30]] [#allocation35]
    $region109: #{model2_forward.1} parent=1 // pred_fallthru
      _
    %245 = shalt.err (0)
    %s247 = sshll.u32 %s4, 4
    %s248 = int_to_ptr.hbm [resolvable:$true] %s247
    %s249 = sshll.u32 [#allocation5], 4
    %s250 = int_to_ptr.vmem [resolvable:$true] %s249
    %252 = dma.hbm_to_vmem [thread:$0]  %s248, 8192, %s250, %s239
    %s253 = scalar_lea.sflag [#allocation8], 4
    // Predicated region
    $region110: #{model2_forward.1} parent=1 // pred_check
      _
    $region111: #{model2_forward.1} parent=1 // pred_check_branch
      %255 = sbr.rel (0) target = $region113
    $region112: #{model2_forward.1} parent=1 // pred_region
      loop: start=0, step=1, limit=1
      $region114: #{model2_forward.1} parent=112 // loop_pre_header
        _
      $region115: #{model2_forward.1} parent=112 // loop_header
        %s257 = sphi 0, %s261
        %p258 = scmp.ge.s32.totalorder %s257, 1
        %s262 = sphi %s5, %s5
        %s263 = sphi [#allocation6], [#allocation6]
      $region116: #{model2_forward.1} parent=112 // loop_header_branch
        %260 = sbr.rel (%p258) target = $region120
      $region117: #{model2_forward.1} parent=112 // loop_body
        %v264 = vld [vmem:[%s262] sm:$0xff]
        %265 = vst [vmem:[%s263] sm:$0xff] %v264
        %v266 = vld [vmem:[%s262 + $0x8] sm:$0xff]
        %267 = vst [vmem:[%s263 + $0x8] sm:$0xff] %v266
        %v268 = vld [vmem:[%s262 + $0x10] sm:$0xff]
        %269 = vst [vmem:[%s263 + $0x10] sm:$0xff] %v268
        %v270 = vld [vmem:[%s262 + $0x18] sm:$0xff]
        %271 = vst [vmem:[%s263 + $0x18] sm:$0xff] %v270
        %v272 = vld [vmem:[%s262 + $0x20] sm:$0xff]
        %273 = vst [vmem:[%s263 + $0x20] sm:$0xff] %v272
        %v274 = vld [vmem:[%s262 + $0x28] sm:$0xff]
        %275 = vst [vmem:[%s263 + $0x28] sm:$0xff] %v274
        %v276 = vld [vmem:[%s262 + $0x30] sm:$0xff]
        %277 = vst [vmem:[%s263 + $0x30] sm:$0xff] %v276
        %v278 = vld [vmem:[%s262 + $0x38] sm:$0xff]
        %279 = vst [vmem:[%s263 + $0x38] sm:$0xff] %v278
        %v280 = vld [vmem:[%s262 + $0x40] sm:$0xff]
        %281 = vst [vmem:[%s263 + $0x40] sm:$0xff] %v280
        %v282 = vld [vmem:[%s262 + $0x48] sm:$0xff]
        %283 = vst [vmem:[%s263 + $0x48] sm:$0xff] %v282
        %v284 = vld [vmem:[%s262 + $0x50] sm:$0xff]
        %285 = vst [vmem:[%s263 + $0x50] sm:$0xff] %v284
        %v286 = vld [vmem:[%s262 + $0x58] sm:$0xff]
        %287 = vst [vmem:[%s263 + $0x58] sm:$0xff] %v286
        %v288 = vld [vmem:[%s262 + $0x60] sm:$0xff]
        %289 = vst [vmem:[%s263 + $0x60] sm:$0xff] %v288
        %v290 = vld [vmem:[%s262 + $0x68] sm:$0xff]
        %291 = vst [vmem:[%s263 + $0x68] sm:$0xff] %v290
        %v292 = vld [vmem:[%s262 + $0x70] sm:$0xff]
        %293 = vst [vmem:[%s263 + $0x70] sm:$0xff] %v292
        %v294 = vld [vmem:[%s262 + $0x78] sm:$0xff]
        %295 = vst [vmem:[%s263 + $0x78] sm:$0xff] %v294
      $region118: #{model2_forward.1} parent=112 // loop_footer
        %s261 = sadd.s32 1, %s257
      $region119: #{model2_forward.1} parent=112 // loop_footer_branch
        %256 = sbr.rel target = $region115
      $region120: #{model2_forward.1} parent=112 // loop_exit
        _
    $region113: #{model2_forward.1} parent=1 // pred_fallthru
      _
    // Predicated region
    $region121: #{model2_forward.1} parent=1 // pred_check
      _
    $region122: #{model2_forward.1} parent=1 // pred_check_branch
      %297 = sbr.rel target = $region124
    $region123: #{model2_forward.1} parent=1 // pred_region
      _
    $region124: #{model2_forward.1} parent=1 // pred_fallthru
      _
    // Predicated region
    $region125: #{model2_forward.1} parent=1 // pred_check
      _
    $region126: #{model2_forward.1} parent=1 // pred_check_branch
      %300 = sbr.rel (0) target = $region128
    $region127: #{model2_forward.1} parent=1 // pred_region
      %301 = vsyncadd %s253, 2048
    $region128: #{model2_forward.1} parent=1 // pred_fallthru
      _
    %s302 = scalar_lea.sflag [#allocation8], 5
    // Predicated region
    $region129: #{model2_forward.1} parent=1 // pred_check
      _
    $region130: #{model2_forward.1} parent=1 // pred_check_branch
      %304 = sbr.rel (0) target = $region132
    $region131: #{model2_forward.1} parent=1 // pred_region
      loop: start=0, step=1, limit=1
      $region133: #{model2_forward.1} parent=131 // loop_pre_header
        _
      $region134: #{model2_forward.1} parent=131 // loop_header
        %s306 = sphi 0, %s310
        %p307 = scmp.ge.s32.totalorder %s306, 1
        %s311 = sphi %s6, %s6
        %s312 = sphi [#allocation7], [#allocation7]
      $region135: #{model2_forward.1} parent=131 // loop_header_branch
        %309 = sbr.rel (%p307) target = $region139
      $region136: #{model2_forward.1} parent=131 // loop_body
        %v313 = vld [vmem:[%s311] sm:$0xff]
        %314 = vst [vmem:[%s312] sm:$0xff] %v313
        %v315 = vld [vmem:[%s311 + $0x8] sm:$0xff]
        %316 = vst [vmem:[%s312 + $0x8] sm:$0xff] %v315
        %v317 = vld [vmem:[%s311 + $0x10] sm:$0xff]
        %318 = vst [vmem:[%s312 + $0x10] sm:$0xff] %v317
        %v319 = vld [vmem:[%s311 + $0x18] sm:$0xff]
        %320 = vst [vmem:[%s312 + $0x18] sm:$0xff] %v319
        %v321 = vld [vmem:[%s311 + $0x20] sm:$0xff]
        %322 = vst [vmem:[%s312 + $0x20] sm:$0xff] %v321
        %v323 = vld [vmem:[%s311 + $0x28] sm:$0xff]
        %324 = vst [vmem:[%s312 + $0x28] sm:$0xff] %v323
        %v325 = vld [vmem:[%s311 + $0x30] sm:$0xff]
        %326 = vst [vmem:[%s312 + $0x30] sm:$0xff] %v325
        %v327 = vld [vmem:[%s311 + $0x38] sm:$0xff]
        %328 = vst [vmem:[%s312 + $0x38] sm:$0xff] %v327
      $region137: #{model2_forward.1} parent=131 // loop_footer
        %s310 = sadd.s32 1, %s306
      $region138: #{model2_forward.1} parent=131 // loop_footer_branch
        %305 = sbr.rel target = $region134
      $region139: #{model2_forward.1} parent=131 // loop_exit
        _
    $region132: #{model2_forward.1} parent=1 // pred_fallthru
      _
    // Predicated region
    $region140: #{model2_forward.1} parent=1 // pred_check
      _
    $region141: #{model2_forward.1} parent=1 // pred_check_branch
      %330 = sbr.rel target = $region143
    $region142: #{model2_forward.1} parent=1 // pred_region
      _
    $region143: #{model2_forward.1} parent=1 // pred_fallthru
      _
    // Predicated region
    $region144: #{model2_forward.1} parent=1 // pred_check
      _
    $region145: #{model2_forward.1} parent=1 // pred_check_branch
      %333 = sbr.rel (0) target = $region147
    $region146: #{model2_forward.1} parent=1 // pred_region
      %334 = vsyncadd %s302, 1024
    $region147: #{model2_forward.1} parent=1 // pred_fallthru
      _
    %v335 = vld [vmem:[#allocation10] sm:$0xff]
    %v336 = vld [vmem:[#allocation10 + $0x8] sm:$0xff]
    %s337 = smul.u32 8, 32
    %s338 = smul.u32 %s337, 16
    %s339 = sshll.u32 %s338, 4
    %340 = dma.done [#allocation8], %s339
    %v341 = vld [vmem:[#allocation2] sm:$0xff]
    %v342 = vld [vmem:[#allocation2 + $0x8] sm:$0xff]
    %v343 = vld [vmem:[#allocation2 + $0x10] sm:$0xff]
    %v344 = vld [vmem:[#allocation2 + $0x18] sm:$0xff]
    %v345 = vld [vmem:[#allocation2 + $0x20] sm:$0xff]
    %v346 = vld [vmem:[#allocation2 + $0x28] sm:$0xff]
    %v347 = vld [vmem:[#allocation2 + $0x30] sm:$0xff]
    %v348 = vld [vmem:[#allocation2 + $0x38] sm:$0xff]
    %v349 = vld [vmem:[#allocation2 + $0x40] sm:$0xff]
    %v350 = vld [vmem:[#allocation2 + $0x48] sm:$0xff]
    %v351 = vld [vmem:[#allocation2 + $0x50] sm:$0xff]
    %v352 = vld [vmem:[#allocation2 + $0x58] sm:$0xff]
    %v353 = vld [vmem:[#allocation2 + $0x60] sm:$0xff]
    %v354 = vld [vmem:[#allocation2 + $0x68] sm:$0xff]
    %v355 = vld [vmem:[#allocation2 + $0x70] sm:$0xff]
    %v356 = vld [vmem:[#allocation2 + $0x78] sm:$0xff]
    %v357 = vld [vmem:[#allocation2 + $0x80] sm:$0xff]
    %v358 = vld [vmem:[#allocation2 + $0x88] sm:$0xff]
    %v359 = vld [vmem:[#allocation2 + $0x90] sm:$0xff]
    %v360 = vld [vmem:[#allocation2 + $0x98] sm:$0xff]
    %v361 = vld [vmem:[#allocation2 + $0xa0] sm:$0xff]
    %v362 = vld [vmem:[#allocation2 + $0xa8] sm:$0xff]
    %v363 = vld [vmem:[#allocation2 + $0xb0] sm:$0xff]
    %v364 = vld [vmem:[#allocation2 + $0xb8] sm:$0xff]
    %v365 = vld [vmem:[#allocation2 + $0xc0] sm:$0xff]
    %v366 = vld [vmem:[#allocation2 + $0xc8] sm:$0xff]
    %v367 = vld [vmem:[#allocation2 + $0xd0] sm:$0xff]
    %v368 = vld [vmem:[#allocation2 + $0xd8] sm:$0xff]
    %v369 = vld [vmem:[#allocation2 + $0xe0] sm:$0xff]
    %v370 = vld [vmem:[#allocation2 + $0xe8] sm:$0xff]
    %v371 = vld [vmem:[#allocation2 + $0xf0] sm:$0xff]
    %v372 = vld [vmem:[#allocation2 + $0xf8] sm:$0xff]
    %v373 = vld [vmem:[#allocation2 + $0x100] sm:$0xff]
    %v374 = vld [vmem:[#allocation2 + $0x108] sm:$0xff]
    %v375 = vld [vmem:[#allocation2 + $0x110] sm:$0xff]
    %v376 = vld [vmem:[#allocation2 + $0x118] sm:$0xff]
    %v377 = vld [vmem:[#allocation2 + $0x120] sm:$0xff]
    %v378 = vld [vmem:[#allocation2 + $0x128] sm:$0xff]
    %v379 = vld [vmem:[#allocation2 + $0x130] sm:$0xff]
    %v380 = vld [vmem:[#allocation2 + $0x138] sm:$0xff]
    %v381 = vld [vmem:[#allocation2 + $0x140] sm:$0xff]
    %v382 = vld [vmem:[#allocation2 + $0x148] sm:$0xff]
    %v383 = vld [vmem:[#allocation2 + $0x150] sm:$0xff]
    %v384 = vld [vmem:[#allocation2 + $0x158] sm:$0xff]
    %v385 = vld [vmem:[#allocation2 + $0x160] sm:$0xff]
    %v386 = vld [vmem:[#allocation2 + $0x168] sm:$0xff]
    %v387 = vld [vmem:[#allocation2 + $0x170] sm:$0xff]
    %v388 = vld [vmem:[#allocation2 + $0x178] sm:$0xff]
    %v389 = vld [vmem:[#allocation2 + $0x180] sm:$0xff]
    %v390 = vld [vmem:[#allocation2 + $0x188] sm:$0xff]
    %v391 = vld [vmem:[#allocation2 + $0x190] sm:$0xff]
    %v392 = vld [vmem:[#allocation2 + $0x198] sm:$0xff]
    %v393 = vld [vmem:[#allocation2 + $0x1a0] sm:$0xff]
    %v394 = vld [vmem:[#allocation2 + $0x1a8] sm:$0xff]
    %v395 = vld [vmem:[#allocation2 + $0x1b0] sm:$0xff]
    %v396 = vld [vmem:[#allocation2 + $0x1b8] sm:$0xff]
    %v397 = vld [vmem:[#allocation2 + $0x1c0] sm:$0xff]
    %v398 = vld [vmem:[#allocation2 + $0x1c8] sm:$0xff]
    %v399 = vld [vmem:[#allocation2 + $0x1d0] sm:$0xff]
    %v400 = vld [vmem:[#allocation2 + $0x1d8] sm:$0xff]
    %v401 = vld [vmem:[#allocation2 + $0x1e0] sm:$0xff]
    %v402 = vld [vmem:[#allocation2 + $0x1e8] sm:$0xff]
    %v403 = vld [vmem:[#allocation2 + $0x1f0] sm:$0xff]
    %v404 = vld [vmem:[#allocation2 + $0x1f8] sm:$0xff]
    %v405 = vld [vmem:[#allocation2 + $0x200] sm:$0xff]
    %v406 = vld [vmem:[#allocation2 + $0x208] sm:$0xff]
    %v407 = vld [vmem:[#allocation2 + $0x210] sm:$0xff]
    %v408 = vld [vmem:[#allocation2 + $0x218] sm:$0xff]
    %v409 = vld [vmem:[#allocation2 + $0x220] sm:$0xff]
    %v410 = vld [vmem:[#allocation2 + $0x228] sm:$0xff]
    %v411 = vld [vmem:[#allocation2 + $0x230] sm:$0xff]
    %v412 = vld [vmem:[#allocation2 + $0x238] sm:$0xff]
    %v413 = vld [vmem:[#allocation2 + $0x240] sm:$0xff]
    %v414 = vld [vmem:[#allocation2 + $0x248] sm:$0xff]
    %v415 = vld [vmem:[#allocation2 + $0x250] sm:$0xff]
    %v416 = vld [vmem:[#allocation2 + $0x258] sm:$0xff]
    %v417 = vld [vmem:[#allocation2 + $0x260] sm:$0xff]
    %v418 = vld [vmem:[#allocation2 + $0x268] sm:$0xff]
    %v419 = vld [vmem:[#allocation2 + $0x270] sm:$0xff]
    %v420 = vld [vmem:[#allocation2 + $0x278] sm:$0xff]
    %v421 = vld [vmem:[#allocation2 + $0x280] sm:$0xff]
    %v422 = vld [vmem:[#allocation2 + $0x288] sm:$0xff]
    %v423 = vld [vmem:[#allocation2 + $0x290] sm:$0xff]
    %v424 = vld [vmem:[#allocation2 + $0x298] sm:$0xff]
    %v425 = vld [vmem:[#allocation2 + $0x2a0] sm:$0xff]
    %v426 = vld [vmem:[#allocation2 + $0x2a8] sm:$0xff]
    %v427 = vld [vmem:[#allocation2 + $0x2b0] sm:$0xff]
    %v428 = vld [vmem:[#allocation2 + $0x2b8] sm:$0xff]
    %v429 = vld [vmem:[#allocation2 + $0x2c0] sm:$0xff]
    %v430 = vld [vmem:[#allocation2 + $0x2c8] sm:$0xff]
    %v431 = vld [vmem:[#allocation2 + $0x2d0] sm:$0xff]
    %v432 = vld [vmem:[#allocation2 + $0x2d8] sm:$0xff]
    %v433 = vld [vmem:[#allocation2 + $0x2e0] sm:$0xff]
    %v434 = vld [vmem:[#allocation2 + $0x2e8] sm:$0xff]
    %v435 = vld [vmem:[#allocation2 + $0x2f0] sm:$0xff]
    %v436 = vld [vmem:[#allocation2 + $0x2f8] sm:$0xff]
    %v437 = vld [vmem:[#allocation2 + $0x300] sm:$0xff]
    %v438 = vld [vmem:[#allocation2 + $0x308] sm:$0xff]
    %v439 = vld [vmem:[#allocation2 + $0x310] sm:$0xff]
    %v440 = vld [vmem:[#allocation2 + $0x318] sm:$0xff]
    %v441 = vld [vmem:[#allocation2 + $0x320] sm:$0xff]
    %v442 = vld [vmem:[#allocation2 + $0x328] sm:$0xff]
    %v443 = vld [vmem:[#allocation2 + $0x330] sm:$0xff]
    %v444 = vld [vmem:[#allocation2 + $0x338] sm:$0xff]
    %v445 = vld [vmem:[#allocation2 + $0x340] sm:$0xff]
    %v446 = vld [vmem:[#allocation2 + $0x348] sm:$0xff]
    %v447 = vld [vmem:[#allocation2 + $0x350] sm:$0xff]
    %v448 = vld [vmem:[#allocation2 + $0x358] sm:$0xff]
    %v449 = vld [vmem:[#allocation2 + $0x360] sm:$0xff]
    %v450 = vld [vmem:[#allocation2 + $0x368] sm:$0xff]
    %v451 = vld [vmem:[#allocation2 + $0x370] sm:$0xff]
    %v452 = vld [vmem:[#allocation2 + $0x378] sm:$0xff]
    %v453 = vld [vmem:[#allocation2 + $0x380] sm:$0xff]
    %v454 = vld [vmem:[#allocation2 + $0x388] sm:$0xff]
    %v455 = vld [vmem:[#allocation2 + $0x390] sm:$0xff]
    %v456 = vld [vmem:[#allocation2 + $0x398] sm:$0xff]
    %v457 = vld [vmem:[#allocation2 + $0x3a0] sm:$0xff]
    %v458 = vld [vmem:[#allocation2 + $0x3a8] sm:$0xff]
    %v459 = vld [vmem:[#allocation2 + $0x3b0] sm:$0xff]
    %v460 = vld [vmem:[#allocation2 + $0x3b8] sm:$0xff]
    %v461 = vld [vmem:[#allocation2 + $0x3c0] sm:$0xff]
    %v462 = vld [vmem:[#allocation2 + $0x3c8] sm:$0xff]
    %v463 = vld [vmem:[#allocation2 + $0x3d0] sm:$0xff]
    %v464 = vld [vmem:[#allocation2 + $0x3d8] sm:$0xff]
    %v465 = vld [vmem:[#allocation2 + $0x3e0] sm:$0xff]
    %v466 = vld [vmem:[#allocation2 + $0x3e8] sm:$0xff]
    %v467 = vld [vmem:[#allocation2 + $0x3f0] sm:$0xff]
    %v468 = vld [vmem:[#allocation2 + $0x3f8] sm:$0xff]
    %v469 = vld [vmem:[#allocation2 + $0x400] sm:$0xff]
    %v470 = vld [vmem:[#allocation2 + $0x408] sm:$0xff]
    %v471 = vld [vmem:[#allocation2 + $0x410] sm:$0xff]
    %v472 = vld [vmem:[#allocation2 + $0x418] sm:$0xff]
    %v473 = vld [vmem:[#allocation2 + $0x420] sm:$0xff]
    %v474 = vld [vmem:[#allocation2 + $0x428] sm:$0xff]
    %v475 = vld [vmem:[#allocation2 + $0x430] sm:$0xff]
    %v476 = vld [vmem:[#allocation2 + $0x438] sm:$0xff]
    %v477 = vld [vmem:[#allocation2 + $0x440] sm:$0xff]
    %v478 = vld [vmem:[#allocation2 + $0x448] sm:$0xff]
    %v479 = vld [vmem:[#allocation2 + $0x450] sm:$0xff]
    %v480 = vld [vmem:[#allocation2 + $0x458] sm:$0xff]
    %v481 = vld [vmem:[#allocation2 + $0x460] sm:$0xff]
    %v482 = vld [vmem:[#allocation2 + $0x468] sm:$0xff]
    %v483 = vld [vmem:[#allocation2 + $0x470] sm:$0xff]
    %v484 = vld [vmem:[#allocation2 + $0x478] sm:$0xff]
    %v485 = vld [vmem:[#allocation2 + $0x480] sm:$0xff]
    %v486 = vld [vmem:[#allocation2 + $0x488] sm:$0xff]
    %v487 = vld [vmem:[#allocation2 + $0x490] sm:$0xff]
    %v488 = vld [vmem:[#allocation2 + $0x498] sm:$0xff]
    %v489 = vld [vmem:[#allocation2 + $0x4a0] sm:$0xff]
    %v490 = vld [vmem:[#allocation2 + $0x4a8] sm:$0xff]
    %v491 = vld [vmem:[#allocation2 + $0x4b0] sm:$0xff]
    %v492 = vld [vmem:[#allocation2 + $0x4b8] sm:$0xff]
    %v493 = vld [vmem:[#allocation2 + $0x4c0] sm:$0xff]
    %v494 = vld [vmem:[#allocation2 + $0x4c8] sm:$0xff]
    %v495 = vld [vmem:[#allocation2 + $0x4d0] sm:$0xff]
    %v496 = vld [vmem:[#allocation2 + $0x4d8] sm:$0xff]
    %v497 = vld [vmem:[#allocation2 + $0x4e0] sm:$0xff]
    %v498 = vld [vmem:[#allocation2 + $0x4e8] sm:$0xff]
    %v499 = vld [vmem:[#allocation2 + $0x4f0] sm:$0xff]
    %v500 = vld [vmem:[#allocation2 + $0x4f8] sm:$0xff]
    %v501 = vld [vmem:[#allocation2 + $0x500] sm:$0xff]
    %v502 = vld [vmem:[#allocation2 + $0x508] sm:$0xff]
    %v503 = vld [vmem:[#allocation2 + $0x510] sm:$0xff]
    %v504 = vld [vmem:[#allocation2 + $0x518] sm:$0xff]
    %v505 = vld [vmem:[#allocation2 + $0x520] sm:$0xff]
    %v506 = vld [vmem:[#allocation2 + $0x528] sm:$0xff]
    %v507 = vld [vmem:[#allocation2 + $0x530] sm:$0xff]
    %v508 = vld [vmem:[#allocation2 + $0x538] sm:$0xff]
    %v509 = vld [vmem:[#allocation2 + $0x540] sm:$0xff]
    %v510 = vld [vmem:[#allocation2 + $0x548] sm:$0xff]
    %v511 = vld [vmem:[#allocation2 + $0x550] sm:$0xff]
    %v512 = vld [vmem:[#allocation2 + $0x558] sm:$0xff]
    %v513 = vld [vmem:[#allocation2 + $0x560] sm:$0xff]
    %v514 = vld [vmem:[#allocation2 + $0x568] sm:$0xff]
    %v515 = vld [vmem:[#allocation2 + $0x570] sm:$0xff]
    %v516 = vld [vmem:[#allocation2 + $0x578] sm:$0xff]
    %v517 = vld [vmem:[#allocation2 + $0x580] sm:$0xff]
    %v518 = vld [vmem:[#allocation2 + $0x588] sm:$0xff]
    %v519 = vld [vmem:[#allocation2 + $0x590] sm:$0xff]
    %v520 = vld [vmem:[#allocation2 + $0x598] sm:$0xff]
    %v521 = vld [vmem:[#allocation2 + $0x5a0] sm:$0xff]
    %v522 = vld [vmem:[#allocation2 + $0x5a8] sm:$0xff]
    %v523 = vld [vmem:[#allocation2 + $0x5b0] sm:$0xff]
    %v524 = vld [vmem:[#allocation2 + $0x5b8] sm:$0xff]
    %v525 = vld [vmem:[#allocation2 + $0x5c0] sm:$0xff]
    %v526 = vld [vmem:[#allocation2 + $0x5c8] sm:$0xff]
    %v527 = vld [vmem:[#allocation2 + $0x5d0] sm:$0xff]
    %v528 = vld [vmem:[#allocation2 + $0x5d8] sm:$0xff]
    %v529 = vld [vmem:[#allocation2 + $0x5e0] sm:$0xff]
    %v530 = vld [vmem:[#allocation2 + $0x5e8] sm:$0xff]
    %v531 = vld [vmem:[#allocation2 + $0x5f0] sm:$0xff]
    %v532 = vld [vmem:[#allocation2 + $0x5f8] sm:$0xff]
    %v533 = vld [vmem:[#allocation2 + $0x600] sm:$0xff]
    %v534 = vld [vmem:[#allocation2 + $0x608] sm:$0xff]
    %v535 = vld [vmem:[#allocation2 + $0x610] sm:$0xff]
    %v536 = vld [vmem:[#allocation2 + $0x618] sm:$0xff]
    %v537 = vld [vmem:[#allocation2 + $0x620] sm:$0xff]
    %v538 = vld [vmem:[#allocation2 + $0x628] sm:$0xff]
    %v539 = vld [vmem:[#allocation2 + $0x630] sm:$0xff]
    %v540 = vld [vmem:[#allocation2 + $0x638] sm:$0xff]
    %v541 = vld [vmem:[#allocation2 + $0x640] sm:$0xff]
    %v542 = vld [vmem:[#allocation2 + $0x648] sm:$0xff]
    %v543 = vld [vmem:[#allocation2 + $0x650] sm:$0xff]
    %v544 = vld [vmem:[#allocation2 + $0x658] sm:$0xff]
    %v545 = vld [vmem:[#allocation2 + $0x660] sm:$0xff]
    %v546 = vld [vmem:[#allocation2 + $0x668] sm:$0xff]
    %v547 = vld [vmem:[#allocation2 + $0x670] sm:$0xff]
    %v548 = vld [vmem:[#allocation2 + $0x678] sm:$0xff]
    %v549 = vld [vmem:[#allocation2 + $0x680] sm:$0xff]
    %v550 = vld [vmem:[#allocation2 + $0x688] sm:$0xff]
    %v551 = vld [vmem:[#allocation2 + $0x690] sm:$0xff]
    %v552 = vld [vmem:[#allocation2 + $0x698] sm:$0xff]
    %v553 = vld [vmem:[#allocation2 + $0x6a0] sm:$0xff]
    %v554 = vld [vmem:[#allocation2 + $0x6a8] sm:$0xff]
    %v555 = vld [vmem:[#allocation2 + $0x6b0] sm:$0xff]
    %v556 = vld [vmem:[#allocation2 + $0x6b8] sm:$0xff]
    %v557 = vld [vmem:[#allocation2 + $0x6c0] sm:$0xff]
    %v558 = vld [vmem:[#allocation2 + $0x6c8] sm:$0xff]
    %v559 = vld [vmem:[#allocation2 + $0x6d0] sm:$0xff]
    %v560 = vld [vmem:[#allocation2 + $0x6d8] sm:$0xff]
    %v561 = vld [vmem:[#allocation2 + $0x6e0] sm:$0xff]
    %v562 = vld [vmem:[#allocation2 + $0x6e8] sm:$0xff]
    %v563 = vld [vmem:[#allocation2 + $0x6f0] sm:$0xff]
    %v564 = vld [vmem:[#allocation2 + $0x6f8] sm:$0xff]
    %v565 = vld [vmem:[#allocation2 + $0x700] sm:$0xff]
    %v566 = vld [vmem:[#allocation2 + $0x708] sm:$0xff]
    %v567 = vld [vmem:[#allocation2 + $0x710] sm:$0xff]
    %v568 = vld [vmem:[#allocation2 + $0x718] sm:$0xff]
    %v569 = vld [vmem:[#allocation2 + $0x720] sm:$0xff]
    %v570 = vld [vmem:[#allocation2 + $0x728] sm:$0xff]
    %v571 = vld [vmem:[#allocation2 + $0x730] sm:$0xff]
    %v572 = vld [vmem:[#allocation2 + $0x738] sm:$0xff]
    %v573 = vld [vmem:[#allocation2 + $0x740] sm:$0xff]
    %v574 = vld [vmem:[#allocation2 + $0x748] sm:$0xff]
    %v575 = vld [vmem:[#allocation2 + $0x750] sm:$0xff]
    %v576 = vld [vmem:[#allocation2 + $0x758] sm:$0xff]
    %v577 = vld [vmem:[#allocation2 + $0x760] sm:$0xff]
    %v578 = vld [vmem:[#allocation2 + $0x768] sm:$0xff]
    %v579 = vld [vmem:[#allocation2 + $0x770] sm:$0xff]
    %v580 = vld [vmem:[#allocation2 + $0x778] sm:$0xff]
    %v581 = vld [vmem:[#allocation2 + $0x780] sm:$0xff]
    %v582 = vld [vmem:[#allocation2 + $0x788] sm:$0xff]
    %v583 = vld [vmem:[#allocation2 + $0x790] sm:$0xff]
    %v584 = vld [vmem:[#allocation2 + $0x798] sm:$0xff]
    %v585 = vld [vmem:[#allocation2 + $0x7a0] sm:$0xff]
    %v586 = vld [vmem:[#allocation2 + $0x7a8] sm:$0xff]
    %v587 = vld [vmem:[#allocation2 + $0x7b0] sm:$0xff]
    %v588 = vld [vmem:[#allocation2 + $0x7b8] sm:$0xff]
    %v589 = vld [vmem:[#allocation2 + $0x7c0] sm:$0xff]
    %v590 = vld [vmem:[#allocation2 + $0x7c8] sm:$0xff]
    %v591 = vld [vmem:[#allocation2 + $0x7d0] sm:$0xff]
    %v592 = vld [vmem:[#allocation2 + $0x7d8] sm:$0xff]
    %v593 = vld [vmem:[#allocation2 + $0x7e0] sm:$0xff]
    %v594 = vld [vmem:[#allocation2 + $0x7e8] sm:$0xff]
    %v595 = vld [vmem:[#allocation2 + $0x7f0] sm:$0xff]
    %v596 = vld [vmem:[#allocation2 + $0x7f8] sm:$0xff]
    %v597 = vld [vmem:[#allocation2 + $0x800] sm:$0xff]
    %v598 = vld [vmem:[#allocation2 + $0x808] sm:$0xff]
    %v599 = vld [vmem:[#allocation2 + $0x810] sm:$0xff]
    %v600 = vld [vmem:[#allocation2 + $0x818] sm:$0xff]
    %v601 = vld [vmem:[#allocation2 + $0x820] sm:$0xff]
    %v602 = vld [vmem:[#allocation2 + $0x828] sm:$0xff]
    %v603 = vld [vmem:[#allocation2 + $0x830] sm:$0xff]
    %v604 = vld [vmem:[#allocation2 + $0x838] sm:$0xff]
    %v605 = vld [vmem:[#allocation2 + $0x840] sm:$0xff]
    %v606 = vld [vmem:[#allocation2 + $0x848] sm:$0xff]
    %v607 = vld [vmem:[#allocation2 + $0x850] sm:$0xff]
    %v608 = vld [vmem:[#allocation2 + $0x858] sm:$0xff]
    %v609 = vld [vmem:[#allocation2 + $0x860] sm:$0xff]
    %v610 = vld [vmem:[#allocation2 + $0x868] sm:$0xff]
    %v611 = vld [vmem:[#allocation2 + $0x870] sm:$0xff]
    %v612 = vld [vmem:[#allocation2 + $0x878] sm:$0xff]
    %v613 = vld [vmem:[#allocation2 + $0x880] sm:$0xff]
    %v614 = vld [vmem:[#allocation2 + $0x888] sm:$0xff]
    %v615 = vld [vmem:[#allocation2 + $0x890] sm:$0xff]
    %v616 = vld [vmem:[#allocation2 + $0x898] sm:$0xff]
    %v617 = vld [vmem:[#allocation2 + $0x8a0] sm:$0xff]
    %v618 = vld [vmem:[#allocation2 + $0x8a8] sm:$0xff]
    %v619 = vld [vmem:[#allocation2 + $0x8b0] sm:$0xff]
    %v620 = vld [vmem:[#allocation2 + $0x8b8] sm:$0xff]
    %v621 = vld [vmem:[#allocation2 + $0x8c0] sm:$0xff]
    %v622 = vld [vmem:[#allocation2 + $0x8c8] sm:$0xff]
    %v623 = vld [vmem:[#allocation2 + $0x8d0] sm:$0xff]
    %v624 = vld [vmem:[#allocation2 + $0x8d8] sm:$0xff]
    %v625 = vld [vmem:[#allocation2 + $0x8e0] sm:$0xff]
    %v626 = vld [vmem:[#allocation2 + $0x8e8] sm:$0xff]
    %v627 = vld [vmem:[#allocation2 + $0x8f0] sm:$0xff]
    %v628 = vld [vmem:[#allocation2 + $0x8f8] sm:$0xff]
    %v629 = vld [vmem:[#allocation2 + $0x900] sm:$0xff]
    %v630 = vld [vmem:[#allocation2 + $0x908] sm:$0xff]
    %v631 = vld [vmem:[#allocation2 + $0x910] sm:$0xff]
    %v632 = vld [vmem:[#allocation2 + $0x918] sm:$0xff]
    %v633 = vld [vmem:[#allocation2 + $0x920] sm:$0xff]
    %v634 = vld [vmem:[#allocation2 + $0x928] sm:$0xff]
    %v635 = vld [vmem:[#allocation2 + $0x930] sm:$0xff]
    %v636 = vld [vmem:[#allocation2 + $0x938] sm:$0xff]
    %v637 = vld [vmem:[#allocation2 + $0x940] sm:$0xff]
    %v638 = vld [vmem:[#allocation2 + $0x948] sm:$0xff]
    %v639 = vld [vmem:[#allocation2 + $0x950] sm:$0xff]
    %v640 = vld [vmem:[#allocation2 + $0x958] sm:$0xff]
    %v641 = vld [vmem:[#allocation2 + $0x960] sm:$0xff]
    %v642 = vld [vmem:[#allocation2 + $0x968] sm:$0xff]
    %v643 = vld [vmem:[#allocation2 + $0x970] sm:$0xff]
    %v644 = vld [vmem:[#allocation2 + $0x978] sm:$0xff]
    %v645 = vld [vmem:[#allocation2 + $0x980] sm:$0xff]
    %v646 = vld [vmem:[#allocation2 + $0x988] sm:$0xff]
    %v647 = vld [vmem:[#allocation2 + $0x990] sm:$0xff]
    %v648 = vld [vmem:[#allocation2 + $0x998] sm:$0xff]
    %v649 = vld [vmem:[#allocation2 + $0x9a0] sm:$0xff]
    %v650 = vld [vmem:[#allocation2 + $0x9a8] sm:$0xff]
    %v651 = vld [vmem:[#allocation2 + $0x9b0] sm:$0xff]
    %v652 = vld [vmem:[#allocation2 + $0x9b8] sm:$0xff]
    %v653 = vld [vmem:[#allocation2 + $0x9c0] sm:$0xff]
    %v654 = vld [vmem:[#allocation2 + $0x9c8] sm:$0xff]
    %v655 = vld [vmem:[#allocation2 + $0x9d0] sm:$0xff]
    %v656 = vld [vmem:[#allocation2 + $0x9d8] sm:$0xff]
    %v657 = vld [vmem:[#allocation2 + $0x9e0] sm:$0xff]
    %v658 = vld [vmem:[#allocation2 + $0x9e8] sm:$0xff]
    %v659 = vld [vmem:[#allocation2 + $0x9f0] sm:$0xff]
    %v660 = vld [vmem:[#allocation2 + $0x9f8] sm:$0xff]
    %v661 = vld [vmem:[#allocation2 + $0xa00] sm:$0xff]
    %v662 = vld [vmem:[#allocation2 + $0xa08] sm:$0xff]
    %v663 = vld [vmem:[#allocation2 + $0xa10] sm:$0xff]
    %v664 = vld [vmem:[#allocation2 + $0xa18] sm:$0xff]
    %v665 = vld [vmem:[#allocation2 + $0xa20] sm:$0xff]
    %v666 = vld [vmem:[#allocation2 + $0xa28] sm:$0xff]
    %v667 = vld [vmem:[#allocation2 + $0xa30] sm:$0xff]
    %v668 = vld [vmem:[#allocation2 + $0xa38] sm:$0xff]
    %v669 = vld [vmem:[#allocation2 + $0xa40] sm:$0xff]
    %v670 = vld [vmem:[#allocation2 + $0xa48] sm:$0xff]
    %v671 = vld [vmem:[#allocation2 + $0xa50] sm:$0xff]
    %v672 = vld [vmem:[#allocation2 + $0xa58] sm:$0xff]
    %v673 = vld [vmem:[#allocation2 + $0xa60] sm:$0xff]
    %v674 = vld [vmem:[#allocation2 + $0xa68] sm:$0xff]
    %v675 = vld [vmem:[#allocation2 + $0xa70] sm:$0xff]
    %v676 = vld [vmem:[#allocation2 + $0xa78] sm:$0xff]
    %v677 = vld [vmem:[#allocation2 + $0xa80] sm:$0xff]
    %v678 = vld [vmem:[#allocation2 + $0xa88] sm:$0xff]
    %v679 = vld [vmem:[#allocation2 + $0xa90] sm:$0xff]
    %v680 = vld [vmem:[#allocation2 + $0xa98] sm:$0xff]
    %v681 = vld [vmem:[#allocation2 + $0xaa0] sm:$0xff]
    %v682 = vld [vmem:[#allocation2 + $0xaa8] sm:$0xff]
    %v683 = vld [vmem:[#allocation2 + $0xab0] sm:$0xff]
    %v684 = vld [vmem:[#allocation2 + $0xab8] sm:$0xff]
    %v685 = vld [vmem:[#allocation2 + $0xac0] sm:$0xff]
    %v686 = vld [vmem:[#allocation2 + $0xac8] sm:$0xff]
    %v687 = vld [vmem:[#allocation2 + $0xad0] sm:$0xff]
    %v688 = vld [vmem:[#allocation2 + $0xad8] sm:$0xff]
    %v689 = vld [vmem:[#allocation2 + $0xae0] sm:$0xff]
    %v690 = vld [vmem:[#allocation2 + $0xae8] sm:$0xff]
    %v691 = vld [vmem:[#allocation2 + $0xaf0] sm:$0xff]
    %v692 = vld [vmem:[#allocation2 + $0xaf8] sm:$0xff]
    %v693 = vld [vmem:[#allocation2 + $0xb00] sm:$0xff]
    %v694 = vld [vmem:[#allocation2 + $0xb08] sm:$0xff]
    %v695 = vld [vmem:[#allocation2 + $0xb10] sm:$0xff]
    %v696 = vld [vmem:[#allocation2 + $0xb18] sm:$0xff]
    %v697 = vld [vmem:[#allocation2 + $0xb20] sm:$0xff]
    %v698 = vld [vmem:[#allocation2 + $0xb28] sm:$0xff]
    %v699 = vld [vmem:[#allocation2 + $0xb30] sm:$0xff]
    %v700 = vld [vmem:[#allocation2 + $0xb38] sm:$0xff]
    %v701 = vld [vmem:[#allocation2 + $0xb40] sm:$0xff]
    %v702 = vld [vmem:[#allocation2 + $0xb48] sm:$0xff]
    %v703 = vld [vmem:[#allocation2 + $0xb50] sm:$0xff]
    %v704 = vld [vmem:[#allocation2 + $0xb58] sm:$0xff]
    %v705 = vld [vmem:[#allocation2 + $0xb60] sm:$0xff]
    %v706 = vld [vmem:[#allocation2 + $0xb68] sm:$0xff]
    %v707 = vld [vmem:[#allocation2 + $0xb70] sm:$0xff]
    %v708 = vld [vmem:[#allocation2 + $0xb78] sm:$0xff]
    %v709 = vld [vmem:[#allocation2 + $0xb80] sm:$0xff]
    %v710 = vld [vmem:[#allocation2 + $0xb88] sm:$0xff]
    %v711 = vld [vmem:[#allocation2 + $0xb90] sm:$0xff]
    %v712 = vld [vmem:[#allocation2 + $0xb98] sm:$0xff]
    %v713 = vld [vmem:[#allocation2 + $0xba0] sm:$0xff]
    %v714 = vld [vmem:[#allocation2 + $0xba8] sm:$0xff]
    %v715 = vld [vmem:[#allocation2 + $0xbb0] sm:$0xff]
    %v716 = vld [vmem:[#allocation2 + $0xbb8] sm:$0xff]
    %v717 = vld [vmem:[#allocation2 + $0xbc0] sm:$0xff]
    %v718 = vld [vmem:[#allocation2 + $0xbc8] sm:$0xff]
    %v719 = vld [vmem:[#allocation2 + $0xbd0] sm:$0xff]
    %v720 = vld [vmem:[#allocation2 + $0xbd8] sm:$0xff]
    %v721 = vld [vmem:[#allocation2 + $0xbe0] sm:$0xff]
    %v722 = vld [vmem:[#allocation2 + $0xbe8] sm:$0xff]
    %v723 = vld [vmem:[#allocation2 + $0xbf0] sm:$0xff]
    %v724 = vld [vmem:[#allocation2 + $0xbf8] sm:$0xff]
    %v725 = vld [vmem:[#allocation2 + $0xc00] sm:$0xff]
    %v726 = vld [vmem:[#allocation2 + $0xc08] sm:$0xff]
    %v727 = vld [vmem:[#allocation2 + $0xc10] sm:$0xff]
    %v728 = vld [vmem:[#allocation2 + $0xc18] sm:$0xff]
    %v729 = vld [vmem:[#allocation2 + $0xc20] sm:$0xff]
    %v730 = vld [vmem:[#allocation2 + $0xc28] sm:$0xff]
    %v731 = vld [vmem:[#allocation2 + $0xc30] sm:$0xff]
    %v732 = vld [vmem:[#allocation2 + $0xc38] sm:$0xff]
    %v733 = vld [vmem:[#allocation2 + $0xc40] sm:$0xff]
    %v734 = vld [vmem:[#allocation2 + $0xc48] sm:$0xff]
    %v735 = vld [vmem:[#allocation2 + $0xc50] sm:$0xff]
    %v736 = vld [vmem:[#allocation2 + $0xc58] sm:$0xff]
    %v737 = vld [vmem:[#allocation2 + $0xc60] sm:$0xff]
    %v738 = vld [vmem:[#allocation2 + $0xc68] sm:$0xff]
    %v739 = vld [vmem:[#allocation2 + $0xc70] sm:$0xff]
    %v740 = vld [vmem:[#allocation2 + $0xc78] sm:$0xff]
    %v741 = vld [vmem:[#allocation2 + $0xc80] sm:$0xff]
    %v742 = vld [vmem:[#allocation2 + $0xc88] sm:$0xff]
    %v743 = vld [vmem:[#allocation2 + $0xc90] sm:$0xff]
    %v744 = vld [vmem:[#allocation2 + $0xc98] sm:$0xff]
    %v745 = vld [vmem:[#allocation2 + $0xca0] sm:$0xff]
    %v746 = vld [vmem:[#allocation2 + $0xca8] sm:$0xff]
    %v747 = vld [vmem:[#allocation2 + $0xcb0] sm:$0xff]
    %v748 = vld [vmem:[#allocation2 + $0xcb8] sm:$0xff]
    %v749 = vld [vmem:[#allocation2 + $0xcc0] sm:$0xff]
    %v750 = vld [vmem:[#allocation2 + $0xcc8] sm:$0xff]
    %v751 = vld [vmem:[#allocation2 + $0xcd0] sm:$0xff]
    %v752 = vld [vmem:[#allocation2 + $0xcd8] sm:$0xff]
    %v753 = vld [vmem:[#allocation2 + $0xce0] sm:$0xff]
    %v754 = vld [vmem:[#allocation2 + $0xce8] sm:$0xff]
    %v755 = vld [vmem:[#allocation2 + $0xcf0] sm:$0xff]
    %v756 = vld [vmem:[#allocation2 + $0xcf8] sm:$0xff]
    %v757 = vld [vmem:[#allocation2 + $0xd00] sm:$0xff]
    %v758 = vld [vmem:[#allocation2 + $0xd08] sm:$0xff]
    %v759 = vld [vmem:[#allocation2 + $0xd10] sm:$0xff]
    %v760 = vld [vmem:[#allocation2 + $0xd18] sm:$0xff]
    %v761 = vld [vmem:[#allocation2 + $0xd20] sm:$0xff]
    %v762 = vld [vmem:[#allocation2 + $0xd28] sm:$0xff]
    %v763 = vld [vmem:[#allocation2 + $0xd30] sm:$0xff]
    %v764 = vld [vmem:[#allocation2 + $0xd38] sm:$0xff]
    %v765 = vld [vmem:[#allocation2 + $0xd40] sm:$0xff]
    %v766 = vld [vmem:[#allocation2 + $0xd48] sm:$0xff]
    %v767 = vld [vmem:[#allocation2 + $0xd50] sm:$0xff]
    %v768 = vld [vmem:[#allocation2 + $0xd58] sm:$0xff]
    %v769 = vld [vmem:[#allocation2 + $0xd60] sm:$0xff]
    %v770 = vld [vmem:[#allocation2 + $0xd68] sm:$0xff]
    %v771 = vld [vmem:[#allocation2 + $0xd70] sm:$0xff]
    %v772 = vld [vmem:[#allocation2 + $0xd78] sm:$0xff]
    %v773 = vld [vmem:[#allocation2 + $0xd80] sm:$0xff]
    %v774 = vld [vmem:[#allocation2 + $0xd88] sm:$0xff]
    %v775 = vld [vmem:[#allocation2 + $0xd90] sm:$0xff]
    %v776 = vld [vmem:[#allocation2 + $0xd98] sm:$0xff]
    %v777 = vld [vmem:[#allocation2 + $0xda0] sm:$0xff]
    %v778 = vld [vmem:[#allocation2 + $0xda8] sm:$0xff]
    %v779 = vld [vmem:[#allocation2 + $0xdb0] sm:$0xff]
    %v780 = vld [vmem:[#allocation2 + $0xdb8] sm:$0xff]
    %v781 = vld [vmem:[#allocation2 + $0xdc0] sm:$0xff]
    %v782 = vld [vmem:[#allocation2 + $0xdc8] sm:$0xff]
    %v783 = vld [vmem:[#allocation2 + $0xdd0] sm:$0xff]
    %v784 = vld [vmem:[#allocation2 + $0xdd8] sm:$0xff]
    %v785 = vld [vmem:[#allocation2 + $0xde0] sm:$0xff]
    %v786 = vld [vmem:[#allocation2 + $0xde8] sm:$0xff]
    %v787 = vld [vmem:[#allocation2 + $0xdf0] sm:$0xff]
    %v788 = vld [vmem:[#allocation2 + $0xdf8] sm:$0xff]
    %v789 = vld [vmem:[#allocation2 + $0xe00] sm:$0xff]
    %v790 = vld [vmem:[#allocation2 + $0xe08] sm:$0xff]
    %v791 = vld [vmem:[#allocation2 + $0xe10] sm:$0xff]
    %v792 = vld [vmem:[#allocation2 + $0xe18] sm:$0xff]
    %v793 = vld [vmem:[#allocation2 + $0xe20] sm:$0xff]
    %v794 = vld [vmem:[#allocation2 + $0xe28] sm:$0xff]
    %v795 = vld [vmem:[#allocation2 + $0xe30] sm:$0xff]
    %v796 = vld [vmem:[#allocation2 + $0xe38] sm:$0xff]
    %v797 = vld [vmem:[#allocation2 + $0xe40] sm:$0xff]
    %v798 = vld [vmem:[#allocation2 + $0xe48] sm:$0xff]
    %v799 = vld [vmem:[#allocation2 + $0xe50] sm:$0xff]
    %v800 = vld [vmem:[#allocation2 + $0xe58] sm:$0xff]
    %v801 = vld [vmem:[#allocation2 + $0xe60] sm:$0xff]
    %v802 = vld [vmem:[#allocation2 + $0xe68] sm:$0xff]
    %v803 = vld [vmem:[#allocation2 + $0xe70] sm:$0xff]
    %v804 = vld [vmem:[#allocation2 + $0xe78] sm:$0xff]
    %v805 = vld [vmem:[#allocation2 + $0xe80] sm:$0xff]
    %v806 = vld [vmem:[#allocation2 + $0xe88] sm:$0xff]
    %v807 = vld [vmem:[#allocation2 + $0xe90] sm:$0xff]
    %v808 = vld [vmem:[#allocation2 + $0xe98] sm:$0xff]
    %v809 = vld [vmem:[#allocation2 + $0xea0] sm:$0xff]
    %v810 = vld [vmem:[#allocation2 + $0xea8] sm:$0xff]
    %v811 = vld [vmem:[#allocation2 + $0xeb0] sm:$0xff]
    %v812 = vld [vmem:[#allocation2 + $0xeb8] sm:$0xff]
    %v813 = vld [vmem:[#allocation2 + $0xec0] sm:$0xff]
    %v814 = vld [vmem:[#allocation2 + $0xec8] sm:$0xff]
    %v815 = vld [vmem:[#allocation2 + $0xed0] sm:$0xff]
    %v816 = vld [vmem:[#allocation2 + $0xed8] sm:$0xff]
    %v817 = vld [vmem:[#allocation2 + $0xee0] sm:$0xff]
    %v818 = vld [vmem:[#allocation2 + $0xee8] sm:$0xff]
    %v819 = vld [vmem:[#allocation2 + $0xef0] sm:$0xff]
    %v820 = vld [vmem:[#allocation2 + $0xef8] sm:$0xff]
    %v821 = vld [vmem:[#allocation2 + $0xf00] sm:$0xff]
    %v822 = vld [vmem:[#allocation2 + $0xf08] sm:$0xff]
    %v823 = vld [vmem:[#allocation2 + $0xf10] sm:$0xff]
    %v824 = vld [vmem:[#allocation2 + $0xf18] sm:$0xff]
    %v825 = vld [vmem:[#allocation2 + $0xf20] sm:$0xff]
    %v826 = vld [vmem:[#allocation2 + $0xf28] sm:$0xff]
    %v827 = vld [vmem:[#allocation2 + $0xf30] sm:$0xff]
    %v828 = vld [vmem:[#allocation2 + $0xf38] sm:$0xff]
    %v829 = vld [vmem:[#allocation2 + $0xf40] sm:$0xff]
    %v830 = vld [vmem:[#allocation2 + $0xf48] sm:$0xff]
    %v831 = vld [vmem:[#allocation2 + $0xf50] sm:$0xff]
    %v832 = vld [vmem:[#allocation2 + $0xf58] sm:$0xff]
    %v833 = vld [vmem:[#allocation2 + $0xf60] sm:$0xff]
    %v834 = vld [vmem:[#allocation2 + $0xf68] sm:$0xff]
    %v835 = vld [vmem:[#allocation2 + $0xf70] sm:$0xff]
    %v836 = vld [vmem:[#allocation2 + $0xf78] sm:$0xff]
    %v837 = vld [vmem:[#allocation2 + $0xf80] sm:$0xff]
    %v838 = vld [vmem:[#allocation2 + $0xf88] sm:$0xff]
    %v839 = vld [vmem:[#allocation2 + $0xf90] sm:$0xff]
    %v840 = vld [vmem:[#allocation2 + $0xf98] sm:$0xff]
    %v841 = vld [vmem:[#allocation2 + $0xfa0] sm:$0xff]
    %v842 = vld [vmem:[#allocation2 + $0xfa8] sm:$0xff]
    %v843 = vld [vmem:[#allocation2 + $0xfb0] sm:$0xff]
    %v844 = vld [vmem:[#allocation2 + $0xfb8] sm:$0xff]
    %v845 = vld [vmem:[#allocation2 + $0xfc0] sm:$0xff]
    %v846 = vld [vmem:[#allocation2 + $0xfc8] sm:$0xff]
    %v847 = vld [vmem:[#allocation2 + $0xfd0] sm:$0xff]
    %v848 = vld [vmem:[#allocation2 + $0xfd8] sm:$0xff]
    %v849 = vld [vmem:[#allocation2 + $0xfe0] sm:$0xff]
    %v850 = vld [vmem:[#allocation2 + $0xfe8] sm:$0xff]
    %v851 = vld [vmem:[#allocation2 + $0xff0] sm:$0xff]
    %v852 = vld [vmem:[#allocation2 + $0xff8] sm:$0xff]
    %853 = vmatpush.msra.mxu0 %v581
    %854 = vmatpush.msra.mxu0 %v565
    %855 = vmatpush.msra.mxu0 %v549
    %856 = vmatpush.msra.mxu0 %v533
    %857 = vmatpush.msra.mxu0 %v517
    %858 = vmatpush.msra.mxu0 %v501
    %859 = vmatpush.msra.mxu0 %v485
    %860 = vmatpush.msra.mxu0 %v469
    %861 = vmatpush.msra.mxu0 %v453
    %862 = vmatpush.msra.mxu0 %v437
    %863 = vmatpush.msra.mxu0 %v421
    %864 = vmatpush.msra.mxu0 %v405
    %865 = vmatpush.msra.mxu0 %v389
    %866 = vmatpush.msra.mxu0 %v373
    %867 = vmatpush.msra.mxu0 %v357
    %868 = vmatpush.msra.mxu0 %v341
    %869 = vmatmul.f32.gmra.mxu0 %v335
    %v870 = vpop.f32.mrf.mxu0
    %v871 = vadd.f32 0.0, %v870
    %872 = vdwg.mxu0
    %873 = vmatpush.msra.mxu0 %v837
    %874 = vmatpush.msra.mxu0 %v821
    %875 = vmatpush.msra.mxu0 %v805
    %876 = vmatpush.msra.mxu0 %v789
    %877 = vmatpush.msra.mxu0 %v773
    %878 = vmatpush.msra.mxu0 %v757
    %879 = vmatpush.msra.mxu0 %v741
    %880 = vmatpush.msra.mxu0 %v725
    %881 = vmatpush.msra.mxu0 %v709
    %882 = vmatpush.msra.mxu0 %v693
    %883 = vmatpush.msra.mxu0 %v677
    %884 = vmatpush.msra.mxu0 %v661
    %885 = vmatpush.msra.mxu0 %v645
    %886 = vmatpush.msra.mxu0 %v629
    %887 = vmatpush.msra.mxu0 %v613
    %888 = vmatpush.msra.mxu0 %v597
    %889 = vmatmul.f32.gmra.mxu0 %v336
    %v890 = vpop.f32.mrf.mxu0
    %v891 = vadd.f32 %v871, %v890
    %892 = vdwg.mxu0
    %893 = vmatpush.msra.mxu0 %v582
    %894 = vmatpush.msra.mxu0 %v566
    %895 = vmatpush.msra.mxu0 %v550
    %896 = vmatpush.msra.mxu0 %v534
    %897 = vmatpush.msra.mxu0 %v518
    %898 = vmatpush.msra.mxu0 %v502
    %899 = vmatpush.msra.mxu0 %v486
    %900 = vmatpush.msra.mxu0 %v470
    %901 = vmatpush.msra.mxu0 %v454
    %902 = vmatpush.msra.mxu0 %v438
    %903 = vmatpush.msra.mxu0 %v422
    %904 = vmatpush.msra.mxu0 %v406
    %905 = vmatpush.msra.mxu0 %v390
    %906 = vmatpush.msra.mxu0 %v374
    %907 = vmatpush.msra.mxu0 %v358
    %908 = vmatpush.msra.mxu0 %v342
    %909 = vmatmul.f32.gmra.mxu0 %v335
    %v910 = vpop.f32.mrf.mxu0
    %v911 = vadd.f32 0.0, %v910
    %912 = vdwg.mxu0
    %913 = vmatpush.msra.mxu0 %v838
    %914 = vmatpush.msra.mxu0 %v822
    %915 = vmatpush.msra.mxu0 %v806
    %916 = vmatpush.msra.mxu0 %v790
    %917 = vmatpush.msra.mxu0 %v774
    %918 = vmatpush.msra.mxu0 %v758
    %919 = vmatpush.msra.mxu0 %v742
    %920 = vmatpush.msra.mxu0 %v726
    %921 = vmatpush.msra.mxu0 %v710
    %922 = vmatpush.msra.mxu0 %v694
    %923 = vmatpush.msra.mxu0 %v678
    %924 = vmatpush.msra.mxu0 %v662
    %925 = vmatpush.msra.mxu0 %v646
    %926 = vmatpush.msra.mxu0 %v630
    %927 = vmatpush.msra.mxu0 %v614
    %928 = vmatpush.msra.mxu0 %v598
    %929 = vmatmul.f32.gmra.mxu0 %v336
    %v930 = vpop.f32.mrf.mxu0
    %v931 = vadd.f32 %v911, %v930
    %932 = vdwg.mxu0
    %933 = vmatpush.msra.mxu0 %v583
    %934 = vmatpush.msra.mxu0 %v567
    %935 = vmatpush.msra.mxu0 %v551
    %936 = vmatpush.msra.mxu0 %v535
    %937 = vmatpush.msra.mxu0 %v519
    %938 = vmatpush.msra.mxu0 %v503
    %939 = vmatpush.msra.mxu0 %v487
    %940 = vmatpush.msra.mxu0 %v471
    %941 = vmatpush.msra.mxu0 %v455
    %942 = vmatpush.msra.mxu0 %v439
    %943 = vmatpush.msra.mxu0 %v423
    %944 = vmatpush.msra.mxu0 %v407
    %945 = vmatpush.msra.mxu0 %v391
    %946 = vmatpush.msra.mxu0 %v375
    %947 = vmatpush.msra.mxu0 %v359
    %948 = vmatpush.msra.mxu0 %v343
    %949 = vmatmul.f32.gmra.mxu0 %v335
    %v950 = vpop.f32.mrf.mxu0
    %v951 = vadd.f32 0.0, %v950
    %952 = vdwg.mxu0
    %953 = vmatpush.msra.mxu0 %v839
    %954 = vmatpush.msra.mxu0 %v823
    %955 = vmatpush.msra.mxu0 %v807
    %956 = vmatpush.msra.mxu0 %v791
    %957 = vmatpush.msra.mxu0 %v775
    %958 = vmatpush.msra.mxu0 %v759
    %959 = vmatpush.msra.mxu0 %v743
    %960 = vmatpush.msra.mxu0 %v727
    %961 = vmatpush.msra.mxu0 %v711
    %962 = vmatpush.msra.mxu0 %v695
    %963 = vmatpush.msra.mxu0 %v679
    %964 = vmatpush.msra.mxu0 %v663
    %965 = vmatpush.msra.mxu0 %v647
    %966 = vmatpush.msra.mxu0 %v631
    %967 = vmatpush.msra.mxu0 %v615
    %968 = vmatpush.msra.mxu0 %v599
    %969 = vmatmul.f32.gmra.mxu0 %v336
    %v970 = vpop.f32.mrf.mxu0
    %v971 = vadd.f32 %v951, %v970
    %972 = vdwg.mxu0
    %973 = vmatpush.msra.mxu0 %v584
    %974 = vmatpush.msra.mxu0 %v568
    %975 = vmatpush.msra.mxu0 %v552
    %976 = vmatpush.msra.mxu0 %v536
    %977 = vmatpush.msra.mxu0 %v520
    %978 = vmatpush.msra.mxu0 %v504
    %979 = vmatpush.msra.mxu0 %v488
    %980 = vmatpush.msra.mxu0 %v472
    %981 = vmatpush.msra.mxu0 %v456
    %982 = vmatpush.msra.mxu0 %v440
    %983 = vmatpush.msra.mxu0 %v424
    %984 = vmatpush.msra.mxu0 %v408
    %985 = vmatpush.msra.mxu0 %v392
    %986 = vmatpush.msra.mxu0 %v376
    %987 = vmatpush.msra.mxu0 %v360
    %988 = vmatpush.msra.mxu0 %v344
    %989 = vmatmul.f32.gmra.mxu0 %v335
    %v990 = vpop.f32.mrf.mxu0
    %v991 = vadd.f32 0.0, %v990
    %992 = vdwg.mxu0
    %993 = vmatpush.msra.mxu0 %v840
    %994 = vmatpush.msra.mxu0 %v824
    %995 = vmatpush.msra.mxu0 %v808
    %996 = vmatpush.msra.mxu0 %v792
    %997 = vmatpush.msra.mxu0 %v776
    %998 = vmatpush.msra.mxu0 %v760
    %999 = vmatpush.msra.mxu0 %v744
    %1000 = vmatpush.msra.mxu0 %v728
    %1001 = vmatpush.msra.mxu0 %v712
    %1002 = vmatpush.msra.mxu0 %v696
    %1003 = vmatpush.msra.mxu0 %v680
    %1004 = vmatpush.msra.mxu0 %v664
    %1005 = vmatpush.msra.mxu0 %v648
    %1006 = vmatpush.msra.mxu0 %v632
    %1007 = vmatpush.msra.mxu0 %v616
    %1008 = vmatpush.msra.mxu0 %v600
    %1009 = vmatmul.f32.gmra.mxu0 %v336
    %v1010 = vpop.f32.mrf.mxu0
    %v1011 = vadd.f32 %v991, %v1010
    %1012 = vdwg.mxu0
    %1013 = vmatpush.msra.mxu0 %v585
    %1014 = vmatpush.msra.mxu0 %v569
    %1015 = vmatpush.msra.mxu0 %v553
    %1016 = vmatpush.msra.mxu0 %v537
    %1017 = vmatpush.msra.mxu0 %v521
    %1018 = vmatpush.msra.mxu0 %v505
    %1019 = vmatpush.msra.mxu0 %v489
    %1020 = vmatpush.msra.mxu0 %v473
    %1021 = vmatpush.msra.mxu0 %v457
    %1022 = vmatpush.msra.mxu0 %v441
    %1023 = vmatpush.msra.mxu0 %v425
    %1024 = vmatpush.msra.mxu0 %v409
    %1025 = vmatpush.msra.mxu0 %v393
    %1026 = vmatpush.msra.mxu0 %v377
    %1027 = vmatpush.msra.mxu0 %v361
    %1028 = vmatpush.msra.mxu0 %v345
    %1029 = vmatmul.f32.gmra.mxu0 %v335
    %v1030 = vpop.f32.mrf.mxu0
    %v1031 = vadd.f32 0.0, %v1030
    %1032 = vdwg.mxu0
    %1033 = vmatpush.msra.mxu0 %v841
    %1034 = vmatpush.msra.mxu0 %v825
    %1035 = vmatpush.msra.mxu0 %v809
    %1036 = vmatpush.msra.mxu0 %v793
    %1037 = vmatpush.msra.mxu0 %v777
    %1038 = vmatpush.msra.mxu0 %v761
    %1039 = vmatpush.msra.mxu0 %v745
    %1040 = vmatpush.msra.mxu0 %v729
    %1041 = vmatpush.msra.mxu0 %v713
    %1042 = vmatpush.msra.mxu0 %v697
    %1043 = vmatpush.msra.mxu0 %v681
    %1044 = vmatpush.msra.mxu0 %v665
    %1045 = vmatpush.msra.mxu0 %v649
    %1046 = vmatpush.msra.mxu0 %v633
    %1047 = vmatpush.msra.mxu0 %v617
    %1048 = vmatpush.msra.mxu0 %v601
    %1049 = vmatmul.f32.gmra.mxu0 %v336
    %v1050 = vpop.f32.mrf.mxu0
    %v1051 = vadd.f32 %v1031, %v1050
    %1052 = vdwg.mxu0
    %1053 = vmatpush.msra.mxu0 %v586
    %1054 = vmatpush.msra.mxu0 %v570
    %1055 = vmatpush.msra.mxu0 %v554
    %1056 = vmatpush.msra.mxu0 %v538
    %1057 = vmatpush.msra.mxu0 %v522
    %1058 = vmatpush.msra.mxu0 %v506
    %1059 = vmatpush.msra.mxu0 %v490
    %1060 = vmatpush.msra.mxu0 %v474
    %1061 = vmatpush.msra.mxu0 %v458
    %1062 = vmatpush.msra.mxu0 %v442
    %1063 = vmatpush.msra.mxu0 %v426
    %1064 = vmatpush.msra.mxu0 %v410
    %1065 = vmatpush.msra.mxu0 %v394
    %1066 = vmatpush.msra.mxu0 %v378
    %1067 = vmatpush.msra.mxu0 %v362
    %1068 = vmatpush.msra.mxu0 %v346
    %1069 = vmatmul.f32.gmra.mxu0 %v335
    %v1070 = vpop.f32.mrf.mxu0
    %v1071 = vadd.f32 0.0, %v1070
    %1072 = vdwg.mxu0
    %1073 = vmatpush.msra.mxu0 %v842
    %1074 = vmatpush.msra.mxu0 %v826
    %1075 = vmatpush.msra.mxu0 %v810
    %1076 = vmatpush.msra.mxu0 %v794
    %1077 = vmatpush.msra.mxu0 %v778
    %1078 = vmatpush.msra.mxu0 %v762
    %1079 = vmatpush.msra.mxu0 %v746
    %1080 = vmatpush.msra.mxu0 %v730
    %1081 = vmatpush.msra.mxu0 %v714
    %1082 = vmatpush.msra.mxu0 %v698
    %1083 = vmatpush.msra.mxu0 %v682
    %1084 = vmatpush.msra.mxu0 %v666
    %1085 = vmatpush.msra.mxu0 %v650
    %1086 = vmatpush.msra.mxu0 %v634
    %1087 = vmatpush.msra.mxu0 %v618
    %1088 = vmatpush.msra.mxu0 %v602
    %1089 = vmatmul.f32.gmra.mxu0 %v336
    %v1090 = vpop.f32.mrf.mxu0
    %v1091 = vadd.f32 %v1071, %v1090
    %1092 = vdwg.mxu0
    %1093 = vmatpush.msra.mxu0 %v587
    %1094 = vmatpush.msra.mxu0 %v571
    %1095 = vmatpush.msra.mxu0 %v555
    %1096 = vmatpush.msra.mxu0 %v539
    %1097 = vmatpush.msra.mxu0 %v523
    %1098 = vmatpush.msra.mxu0 %v507
    %1099 = vmatpush.msra.mxu0 %v491
    %1100 = vmatpush.msra.mxu0 %v475
    %1101 = vmatpush.msra.mxu0 %v459
    %1102 = vmatpush.msra.mxu0 %v443
    %1103 = vmatpush.msra.mxu0 %v427
    %1104 = vmatpush.msra.mxu0 %v411
    %1105 = vmatpush.msra.mxu0 %v395
    %1106 = vmatpush.msra.mxu0 %v379
    %1107 = vmatpush.msra.mxu0 %v363
    %1108 = vmatpush.msra.mxu0 %v347
    %1109 = vmatmul.f32.gmra.mxu0 %v335
    %v1110 = vpop.f32.mrf.mxu0
    %v1111 = vadd.f32 0.0, %v1110
    %1112 = vdwg.mxu0
    %1113 = vmatpush.msra.mxu0 %v843
    %1114 = vmatpush.msra.mxu0 %v827
    %1115 = vmatpush.msra.mxu0 %v811
    %1116 = vmatpush.msra.mxu0 %v795
    %1117 = vmatpush.msra.mxu0 %v779
    %1118 = vmatpush.msra.mxu0 %v763
    %1119 = vmatpush.msra.mxu0 %v747
    %1120 = vmatpush.msra.mxu0 %v731
    %1121 = vmatpush.msra.mxu0 %v715
    %1122 = vmatpush.msra.mxu0 %v699
    %1123 = vmatpush.msra.mxu0 %v683
    %1124 = vmatpush.msra.mxu0 %v667
    %1125 = vmatpush.msra.mxu0 %v651
    %1126 = vmatpush.msra.mxu0 %v635
    %1127 = vmatpush.msra.mxu0 %v619
    %1128 = vmatpush.msra.mxu0 %v603
    %1129 = vmatmul.f32.gmra.mxu0 %v336
    %v1130 = vpop.f32.mrf.mxu0
    %v1131 = vadd.f32 %v1111, %v1130
    %1132 = vdwg.mxu0
    %1133 = vmatpush.msra.mxu0 %v588
    %1134 = vmatpush.msra.mxu0 %v572
    %1135 = vmatpush.msra.mxu0 %v556
    %1136 = vmatpush.msra.mxu0 %v540
    %1137 = vmatpush.msra.mxu0 %v524
    %1138 = vmatpush.msra.mxu0 %v508
    %1139 = vmatpush.msra.mxu0 %v492
    %1140 = vmatpush.msra.mxu0 %v476
    %1141 = vmatpush.msra.mxu0 %v460
    %1142 = vmatpush.msra.mxu0 %v444
    %1143 = vmatpush.msra.mxu0 %v428
    %1144 = vmatpush.msra.mxu0 %v412
    %1145 = vmatpush.msra.mxu0 %v396
    %1146 = vmatpush.msra.mxu0 %v380
    %1147 = vmatpush.msra.mxu0 %v364
    %1148 = vmatpush.msra.mxu0 %v348
    %1149 = vmatmul.f32.gmra.mxu0 %v335
    %v1150 = vpop.f32.mrf.mxu0
    %v1151 = vadd.f32 0.0, %v1150
    %1152 = vdwg.mxu0
    %1153 = vmatpush.msra.mxu0 %v844
    %1154 = vmatpush.msra.mxu0 %v828
    %1155 = vmatpush.msra.mxu0 %v812
    %1156 = vmatpush.msra.mxu0 %v796
    %1157 = vmatpush.msra.mxu0 %v780
    %1158 = vmatpush.msra.mxu0 %v764
    %1159 = vmatpush.msra.mxu0 %v748
    %1160 = vmatpush.msra.mxu0 %v732
    %1161 = vmatpush.msra.mxu0 %v716
    %1162 = vmatpush.msra.mxu0 %v700
    %1163 = vmatpush.msra.mxu0 %v684
    %1164 = vmatpush.msra.mxu0 %v668
    %1165 = vmatpush.msra.mxu0 %v652
    %1166 = vmatpush.msra.mxu0 %v636
    %1167 = vmatpush.msra.mxu0 %v620
    %1168 = vmatpush.msra.mxu0 %v604
    %1169 = vmatmul.f32.gmra.mxu0 %v336
    %v1170 = vpop.f32.mrf.mxu0
    %v1171 = vadd.f32 %v1151, %v1170
    %1172 = vdwg.mxu0
    %1173 = vmatpush.msra.mxu0 %v589
    %1174 = vmatpush.msra.mxu0 %v573
    %1175 = vmatpush.msra.mxu0 %v557
    %1176 = vmatpush.msra.mxu0 %v541
    %1177 = vmatpush.msra.mxu0 %v525
    %1178 = vmatpush.msra.mxu0 %v509
    %1179 = vmatpush.msra.mxu0 %v493
    %1180 = vmatpush.msra.mxu0 %v477
    %1181 = vmatpush.msra.mxu0 %v461
    %1182 = vmatpush.msra.mxu0 %v445
    %1183 = vmatpush.msra.mxu0 %v429
    %1184 = vmatpush.msra.mxu0 %v413
    %1185 = vmatpush.msra.mxu0 %v397
    %1186 = vmatpush.msra.mxu0 %v381
    %1187 = vmatpush.msra.mxu0 %v365
    %1188 = vmatpush.msra.mxu0 %v349
    %1189 = vmatmul.f32.gmra.mxu0 %v335
    %v1190 = vpop.f32.mrf.mxu0
    %v1191 = vadd.f32 0.0, %v1190
    %1192 = vdwg.mxu0
    %1193 = vmatpush.msra.mxu0 %v845
    %1194 = vmatpush.msra.mxu0 %v829
    %1195 = vmatpush.msra.mxu0 %v813
    %1196 = vmatpush.msra.mxu0 %v797
    %1197 = vmatpush.msra.mxu0 %v781
    %1198 = vmatpush.msra.mxu0 %v765
    %1199 = vmatpush.msra.mxu0 %v749
    %1200 = vmatpush.msra.mxu0 %v733
    %1201 = vmatpush.msra.mxu0 %v717
    %1202 = vmatpush.msra.mxu0 %v701
    %1203 = vmatpush.msra.mxu0 %v685
    %1204 = vmatpush.msra.mxu0 %v669
    %1205 = vmatpush.msra.mxu0 %v653
    %1206 = vmatpush.msra.mxu0 %v637
    %1207 = vmatpush.msra.mxu0 %v621
    %1208 = vmatpush.msra.mxu0 %v605
    %1209 = vmatmul.f32.gmra.mxu0 %v336
    %v1210 = vpop.f32.mrf.mxu0
    %v1211 = vadd.f32 %v1191, %v1210
    %1212 = vdwg.mxu0
    %1213 = vmatpush.msra.mxu0 %v590
    %1214 = vmatpush.msra.mxu0 %v574
    %1215 = vmatpush.msra.mxu0 %v558
    %1216 = vmatpush.msra.mxu0 %v542
    %1217 = vmatpush.msra.mxu0 %v526
    %1218 = vmatpush.msra.mxu0 %v510
    %1219 = vmatpush.msra.mxu0 %v494
    %1220 = vmatpush.msra.mxu0 %v478
    %1221 = vmatpush.msra.mxu0 %v462
    %1222 = vmatpush.msra.mxu0 %v446
    %1223 = vmatpush.msra.mxu0 %v430
    %1224 = vmatpush.msra.mxu0 %v414
    %1225 = vmatpush.msra.mxu0 %v398
    %1226 = vmatpush.msra.mxu0 %v382
    %1227 = vmatpush.msra.mxu0 %v366
    %1228 = vmatpush.msra.mxu0 %v350
    %1229 = vmatmul.f32.gmra.mxu0 %v335
    %v1230 = vpop.f32.mrf.mxu0
    %v1231 = vadd.f32 0.0, %v1230
    %1232 = vdwg.mxu0
    %1233 = vmatpush.msra.mxu0 %v846
    %1234 = vmatpush.msra.mxu0 %v830
    %1235 = vmatpush.msra.mxu0 %v814
    %1236 = vmatpush.msra.mxu0 %v798
    %1237 = vmatpush.msra.mxu0 %v782
    %1238 = vmatpush.msra.mxu0 %v766
    %1239 = vmatpush.msra.mxu0 %v750
    %1240 = vmatpush.msra.mxu0 %v734
    %1241 = vmatpush.msra.mxu0 %v718
    %1242 = vmatpush.msra.mxu0 %v702
    %1243 = vmatpush.msra.mxu0 %v686
    %1244 = vmatpush.msra.mxu0 %v670
    %1245 = vmatpush.msra.mxu0 %v654
    %1246 = vmatpush.msra.mxu0 %v638
    %1247 = vmatpush.msra.mxu0 %v622
    %1248 = vmatpush.msra.mxu0 %v606
    %1249 = vmatmul.f32.gmra.mxu0 %v336
    %v1250 = vpop.f32.mrf.mxu0
    %v1251 = vadd.f32 %v1231, %v1250
    %1252 = vdwg.mxu0
    %1253 = vmatpush.msra.mxu0 %v591
    %1254 = vmatpush.msra.mxu0 %v575
    %1255 = vmatpush.msra.mxu0 %v559
    %1256 = vmatpush.msra.mxu0 %v543
    %1257 = vmatpush.msra.mxu0 %v527
    %1258 = vmatpush.msra.mxu0 %v511
    %1259 = vmatpush.msra.mxu0 %v495
    %1260 = vmatpush.msra.mxu0 %v479
    %1261 = vmatpush.msra.mxu0 %v463
    %1262 = vmatpush.msra.mxu0 %v447
    %1263 = vmatpush.msra.mxu0 %v431
    %1264 = vmatpush.msra.mxu0 %v415
    %1265 = vmatpush.msra.mxu0 %v399
    %1266 = vmatpush.msra.mxu0 %v383
    %1267 = vmatpush.msra.mxu0 %v367
    %1268 = vmatpush.msra.mxu0 %v351
    %1269 = vmatmul.f32.gmra.mxu0 %v335
    %v1270 = vpop.f32.mrf.mxu0
    %v1271 = vadd.f32 0.0, %v1270
    %1272 = vdwg.mxu0
    %1273 = vmatpush.msra.mxu0 %v847
    %1274 = vmatpush.msra.mxu0 %v831
    %1275 = vmatpush.msra.mxu0 %v815
    %1276 = vmatpush.msra.mxu0 %v799
    %1277 = vmatpush.msra.mxu0 %v783
    %1278 = vmatpush.msra.mxu0 %v767
    %1279 = vmatpush.msra.mxu0 %v751
    %1280 = vmatpush.msra.mxu0 %v735
    %1281 = vmatpush.msra.mxu0 %v719
    %1282 = vmatpush.msra.mxu0 %v703
    %1283 = vmatpush.msra.mxu0 %v687
    %1284 = vmatpush.msra.mxu0 %v671
    %1285 = vmatpush.msra.mxu0 %v655
    %1286 = vmatpush.msra.mxu0 %v639
    %1287 = vmatpush.msra.mxu0 %v623
    %1288 = vmatpush.msra.mxu0 %v607
    %1289 = vmatmul.f32.gmra.mxu0 %v336
    %v1290 = vpop.f32.mrf.mxu0
    %v1291 = vadd.f32 %v1271, %v1290
    %1292 = vdwg.mxu0
    %1293 = vmatpush.msra.mxu0 %v592
    %1294 = vmatpush.msra.mxu0 %v576
    %1295 = vmatpush.msra.mxu0 %v560
    %1296 = vmatpush.msra.mxu0 %v544
    %1297 = vmatpush.msra.mxu0 %v528
    %1298 = vmatpush.msra.mxu0 %v512
    %1299 = vmatpush.msra.mxu0 %v496
    %1300 = vmatpush.msra.mxu0 %v480
    %1301 = vmatpush.msra.mxu0 %v464
    %1302 = vmatpush.msra.mxu0 %v448
    %1303 = vmatpush.msra.mxu0 %v432
    %1304 = vmatpush.msra.mxu0 %v416
    %1305 = vmatpush.msra.mxu0 %v400
    %1306 = vmatpush.msra.mxu0 %v384
    %1307 = vmatpush.msra.mxu0 %v368
    %1308 = vmatpush.msra.mxu0 %v352
    %1309 = vmatmul.f32.gmra.mxu0 %v335
    %v1310 = vpop.f32.mrf.mxu0
    %v1311 = vadd.f32 0.0, %v1310
    %1312 = vdwg.mxu0
    %1313 = vmatpush.msra.mxu0 %v848
    %1314 = vmatpush.msra.mxu0 %v832
    %1315 = vmatpush.msra.mxu0 %v816
    %1316 = vmatpush.msra.mxu0 %v800
    %1317 = vmatpush.msra.mxu0 %v784
    %1318 = vmatpush.msra.mxu0 %v768
    %1319 = vmatpush.msra.mxu0 %v752
    %1320 = vmatpush.msra.mxu0 %v736
    %1321 = vmatpush.msra.mxu0 %v720
    %1322 = vmatpush.msra.mxu0 %v704
    %1323 = vmatpush.msra.mxu0 %v688
    %1324 = vmatpush.msra.mxu0 %v672
    %1325 = vmatpush.msra.mxu0 %v656
    %1326 = vmatpush.msra.mxu0 %v640
    %1327 = vmatpush.msra.mxu0 %v624
    %1328 = vmatpush.msra.mxu0 %v608
    %1329 = vmatmul.f32.gmra.mxu0 %v336
    %v1330 = vpop.f32.mrf.mxu0
    %v1331 = vadd.f32 %v1311, %v1330
    %1332 = vdwg.mxu0
    %1333 = vmatpush.msra.mxu0 %v593
    %1334 = vmatpush.msra.mxu0 %v577
    %1335 = vmatpush.msra.mxu0 %v561
    %1336 = vmatpush.msra.mxu0 %v545
    %1337 = vmatpush.msra.mxu0 %v529
    %1338 = vmatpush.msra.mxu0 %v513
    %1339 = vmatpush.msra.mxu0 %v497
    %1340 = vmatpush.msra.mxu0 %v481
    %1341 = vmatpush.msra.mxu0 %v465
    %1342 = vmatpush.msra.mxu0 %v449
    %1343 = vmatpush.msra.mxu0 %v433
    %1344 = vmatpush.msra.mxu0 %v417
    %1345 = vmatpush.msra.mxu0 %v401
    %1346 = vmatpush.msra.mxu0 %v385
    %1347 = vmatpush.msra.mxu0 %v369
    %1348 = vmatpush.msra.mxu0 %v353
    %1349 = vmatmul.f32.gmra.mxu0 %v335
    %v1350 = vpop.f32.mrf.mxu0
    %v1351 = vadd.f32 0.0, %v1350
    %1352 = vdwg.mxu0
    %1353 = vmatpush.msra.mxu0 %v849
    %1354 = vmatpush.msra.mxu0 %v833
    %1355 = vmatpush.msra.mxu0 %v817
    %1356 = vmatpush.msra.mxu0 %v801
    %1357 = vmatpush.msra.mxu0 %v785
    %1358 = vmatpush.msra.mxu0 %v769
    %1359 = vmatpush.msra.mxu0 %v753
    %1360 = vmatpush.msra.mxu0 %v737
    %1361 = vmatpush.msra.mxu0 %v721
    %1362 = vmatpush.msra.mxu0 %v705
    %1363 = vmatpush.msra.mxu0 %v689
    %1364 = vmatpush.msra.mxu0 %v673
    %1365 = vmatpush.msra.mxu0 %v657
    %1366 = vmatpush.msra.mxu0 %v641
    %1367 = vmatpush.msra.mxu0 %v625
    %1368 = vmatpush.msra.mxu0 %v609
    %1369 = vmatmul.f32.gmra.mxu0 %v336
    %v1370 = vpop.f32.mrf.mxu0
    %v1371 = vadd.f32 %v1351, %v1370
    %1372 = vdwg.mxu0
    %1373 = vmatpush.msra.mxu0 %v594
    %1374 = vmatpush.msra.mxu0 %v578
    %1375 = vmatpush.msra.mxu0 %v562
    %1376 = vmatpush.msra.mxu0 %v546
    %1377 = vmatpush.msra.mxu0 %v530
    %1378 = vmatpush.msra.mxu0 %v514
    %1379 = vmatpush.msra.mxu0 %v498
    %1380 = vmatpush.msra.mxu0 %v482
    %1381 = vmatpush.msra.mxu0 %v466
    %1382 = vmatpush.msra.mxu0 %v450
    %1383 = vmatpush.msra.mxu0 %v434
    %1384 = vmatpush.msra.mxu0 %v418
    %1385 = vmatpush.msra.mxu0 %v402
    %1386 = vmatpush.msra.mxu0 %v386
    %1387 = vmatpush.msra.mxu0 %v370
    %1388 = vmatpush.msra.mxu0 %v354
    %1389 = vmatmul.f32.gmra.mxu0 %v335
    %v1390 = vpop.f32.mrf.mxu0
    %v1391 = vadd.f32 0.0, %v1390
    %1392 = vdwg.mxu0
    %1393 = vmatpush.msra.mxu0 %v850
    %1394 = vmatpush.msra.mxu0 %v834
    %1395 = vmatpush.msra.mxu0 %v818
    %1396 = vmatpush.msra.mxu0 %v802
    %1397 = vmatpush.msra.mxu0 %v786
    %1398 = vmatpush.msra.mxu0 %v770
    %1399 = vmatpush.msra.mxu0 %v754
    %1400 = vmatpush.msra.mxu0 %v738
    %1401 = vmatpush.msra.mxu0 %v722
    %1402 = vmatpush.msra.mxu0 %v706
    %1403 = vmatpush.msra.mxu0 %v690
    %1404 = vmatpush.msra.mxu0 %v674
    %1405 = vmatpush.msra.mxu0 %v658
    %1406 = vmatpush.msra.mxu0 %v642
    %1407 = vmatpush.msra.mxu0 %v626
    %1408 = vmatpush.msra.mxu0 %v610
    %1409 = vmatmul.f32.gmra.mxu0 %v336
    %v1410 = vpop.f32.mrf.mxu0
    %v1411 = vadd.f32 %v1391, %v1410
    %1412 = vdwg.mxu0
    %1413 = vmatpush.msra.mxu0 %v595
    %1414 = vmatpush.msra.mxu0 %v579
    %1415 = vmatpush.msra.mxu0 %v563
    %1416 = vmatpush.msra.mxu0 %v547
    %1417 = vmatpush.msra.mxu0 %v531
    %1418 = vmatpush.msra.mxu0 %v515
    %1419 = vmatpush.msra.mxu0 %v499
    %1420 = vmatpush.msra.mxu0 %v483
    %1421 = vmatpush.msra.mxu0 %v467
    %1422 = vmatpush.msra.mxu0 %v451
    %1423 = vmatpush.msra.mxu0 %v435
    %1424 = vmatpush.msra.mxu0 %v419
    %1425 = vmatpush.msra.mxu0 %v403
    %1426 = vmatpush.msra.mxu0 %v387
    %1427 = vmatpush.msra.mxu0 %v371
    %1428 = vmatpush.msra.mxu0 %v355
    %1429 = vmatmul.f32.gmra.mxu0 %v335
    %v1430 = vpop.f32.mrf.mxu0
    %v1431 = vadd.f32 0.0, %v1430
    %1432 = vdwg.mxu0
    %1433 = vmatpush.msra.mxu0 %v851
    %1434 = vmatpush.msra.mxu0 %v835
    %1435 = vmatpush.msra.mxu0 %v819
    %1436 = vmatpush.msra.mxu0 %v803
    %1437 = vmatpush.msra.mxu0 %v787
    %1438 = vmatpush.msra.mxu0 %v771
    %1439 = vmatpush.msra.mxu0 %v755
    %1440 = vmatpush.msra.mxu0 %v739
    %1441 = vmatpush.msra.mxu0 %v723
    %1442 = vmatpush.msra.mxu0 %v707
    %1443 = vmatpush.msra.mxu0 %v691
    %1444 = vmatpush.msra.mxu0 %v675
    %1445 = vmatpush.msra.mxu0 %v659
    %1446 = vmatpush.msra.mxu0 %v643
    %1447 = vmatpush.msra.mxu0 %v627
    %1448 = vmatpush.msra.mxu0 %v611
    %1449 = vmatmul.f32.gmra.mxu0 %v336
    %v1450 = vpop.f32.mrf.mxu0
    %v1451 = vadd.f32 %v1431, %v1450
    %1452 = vdwg.mxu0
    %1453 = vmatpush.msra.mxu0 %v596
    %1454 = vmatpush.msra.mxu0 %v580
    %1455 = vmatpush.msra.mxu0 %v564
    %1456 = vmatpush.msra.mxu0 %v548
    %1457 = vmatpush.msra.mxu0 %v532
    %1458 = vmatpush.msra.mxu0 %v516
    %1459 = vmatpush.msra.mxu0 %v500
    %1460 = vmatpush.msra.mxu0 %v484
    %1461 = vmatpush.msra.mxu0 %v468
    %1462 = vmatpush.msra.mxu0 %v452
    %1463 = vmatpush.msra.mxu0 %v436
    %1464 = vmatpush.msra.mxu0 %v420
    %1465 = vmatpush.msra.mxu0 %v404
    %1466 = vmatpush.msra.mxu0 %v388
    %1467 = vmatpush.msra.mxu0 %v372
    %1468 = vmatpush.msra.mxu0 %v356
    %1469 = vmatmul.f32.gmra.mxu0 %v335
    %v1470 = vpop.f32.mrf.mxu0
    %v1471 = vadd.f32 0.0, %v1470
    %1472 = vdwg.mxu0
    %1473 = vmatpush.msra.mxu0 %v852
    %1474 = vmatpush.msra.mxu0 %v836
    %1475 = vmatpush.msra.mxu0 %v820
    %1476 = vmatpush.msra.mxu0 %v804
    %1477 = vmatpush.msra.mxu0 %v788
    %1478 = vmatpush.msra.mxu0 %v772
    %1479 = vmatpush.msra.mxu0 %v756
    %1480 = vmatpush.msra.mxu0 %v740
    %1481 = vmatpush.msra.mxu0 %v724
    %1482 = vmatpush.msra.mxu0 %v708
    %1483 = vmatpush.msra.mxu0 %v692
    %1484 = vmatpush.msra.mxu0 %v676
    %1485 = vmatpush.msra.mxu0 %v660
    %1486 = vmatpush.msra.mxu0 %v644
    %1487 = vmatpush.msra.mxu0 %v628
    %1488 = vmatpush.msra.mxu0 %v612
    %1489 = vmatmul.f32.gmra.mxu0 %v336
    %v1490 = vpop.f32.mrf.mxu0
    %v1491 = vadd.f32 %v1471, %v1490
    %1492 = vdwg.mxu0
    %v1493 = vrot.slane %v891, 4
    %v1494 = vadd.f32 %v891, %v1493
    %v1495 = vrot.slane %v1494, 2
    %v1496 = vadd.f32 %v1494, %v1495
    %v1497 = vrot.slane %v1496, 1
    %v1498 = vadd.f32 %v1496, %v1497
    %v1499 = vrot.slane %v931, 4
    %v1500 = vadd.f32 %v931, %v1499
    %v1501 = vrot.slane %v1500, 2
    %v1502 = vadd.f32 %v1500, %v1501
    %v1503 = vrot.slane %v1502, 1
    %v1504 = vadd.f32 %v1502, %v1503
    %v1505 = vrot.slane %v971, 4
    %v1506 = vadd.f32 %v971, %v1505
    %v1507 = vrot.slane %v1506, 2
    %v1508 = vadd.f32 %v1506, %v1507
    %v1509 = vrot.slane %v1508, 1
    %v1510 = vadd.f32 %v1508, %v1509
    %v1511 = vrot.slane %v1011, 4
    %v1512 = vadd.f32 %v1011, %v1511
    %v1513 = vrot.slane %v1512, 2
    %v1514 = vadd.f32 %v1512, %v1513
    %v1515 = vrot.slane %v1514, 1
    %v1516 = vadd.f32 %v1514, %v1515
    %v1517 = vrot.slane %v1051, 4
    %v1518 = vadd.f32 %v1051, %v1517
    %v1519 = vrot.slane %v1518, 2
    %v1520 = vadd.f32 %v1518, %v1519
    %v1521 = vrot.slane %v1520, 1
    %v1522 = vadd.f32 %v1520, %v1521
    %v1523 = vrot.slane %v1091, 4
    %v1524 = vadd.f32 %v1091, %v1523
    %v1525 = vrot.slane %v1524, 2
    %v1526 = vadd.f32 %v1524, %v1525
    %v1527 = vrot.slane %v1526, 1
    %v1528 = vadd.f32 %v1526, %v1527
    %v1529 = vrot.slane %v1131, 4
    %v1530 = vadd.f32 %v1131, %v1529
    %v1531 = vrot.slane %v1530, 2
    %v1532 = vadd.f32 %v1530, %v1531
    %v1533 = vrot.slane %v1532, 1
    %v1534 = vadd.f32 %v1532, %v1533
    %v1535 = vrot.slane %v1171, 4
    %v1536 = vadd.f32 %v1171, %v1535
    %v1537 = vrot.slane %v1536, 2
    %v1538 = vadd.f32 %v1536, %v1537
    %v1539 = vrot.slane %v1538, 1
    %v1540 = vadd.f32 %v1538, %v1539
    %v1541 = vrot.slane %v1211, 4
    %v1542 = vadd.f32 %v1211, %v1541
    %v1543 = vrot.slane %v1542, 2
    %v1544 = vadd.f32 %v1542, %v1543
    %v1545 = vrot.slane %v1544, 1
    %v1546 = vadd.f32 %v1544, %v1545
    %v1547 = vrot.slane %v1251, 4
    %v1548 = vadd.f32 %v1251, %v1547
    %v1549 = vrot.slane %v1548, 2
    %v1550 = vadd.f32 %v1548, %v1549
    %v1551 = vrot.slane %v1550, 1
    %v1552 = vadd.f32 %v1550, %v1551
    %v1553 = vrot.slane %v1291, 4
    %v1554 = vadd.f32 %v1291, %v1553
    %v1555 = vrot.slane %v1554, 2
    %v1556 = vadd.f32 %v1554, %v1555
    %v1557 = vrot.slane %v1556, 1
    %v1558 = vadd.f32 %v1556, %v1557
    %v1559 = vrot.slane %v1331, 4
    %v1560 = vadd.f32 %v1331, %v1559
    %v1561 = vrot.slane %v1560, 2
    %v1562 = vadd.f32 %v1560, %v1561
    %v1563 = vrot.slane %v1562, 1
    %v1564 = vadd.f32 %v1562, %v1563
    %v1565 = vrot.slane %v1371, 4
    %v1566 = vadd.f32 %v1371, %v1565
    %v1567 = vrot.slane %v1566, 2
    %v1568 = vadd.f32 %v1566, %v1567
    %v1569 = vrot.slane %v1568, 1
    %v1570 = vadd.f32 %v1568, %v1569
    %v1571 = vrot.slane %v1411, 4
    %v1572 = vadd.f32 %v1411, %v1571
    %v1573 = vrot.slane %v1572, 2
    %v1574 = vadd.f32 %v1572, %v1573
    %v1575 = vrot.slane %v1574, 1
    %v1576 = vadd.f32 %v1574, %v1575
    %v1577 = vrot.slane %v1451, 4
    %v1578 = vadd.f32 %v1451, %v1577
    %v1579 = vrot.slane %v1578, 2
    %v1580 = vadd.f32 %v1578, %v1579
    %v1581 = vrot.slane %v1580, 1
    %v1582 = vadd.f32 %v1580, %v1581
    %v1583 = vrot.slane %v1491, 4
    %v1584 = vadd.f32 %v1491, %v1583
    %v1585 = vrot.slane %v1584, 2
    %v1586 = vadd.f32 %v1584, %v1585
    %v1587 = vrot.slane %v1586, 1
    %v1588 = vadd.f32 %v1586, %v1587
    %v1589 = vrcp.pop 8.0
    %v1590 = vmul.f32 8.0, %v1589
    %v1591 = vsub.f32 1.0, %v1590
    %v1592 = vmul.f32 %v1589, %v1591
    %v1593 = vadd.f32 %v1589, %v1592
    %vm1594 = vweird.f32 %v1589
    %v1595 = vsel %vm1594, %v1589, %v1593
    %v1596 = vmul.f32 %v1498, %v1595
    %v1597 = vmul.f32 %v1504, %v1595
    %v1598 = vmul.f32 %v1510, %v1595
    %v1599 = vmul.f32 %v1516, %v1595
    %v1600 = vmul.f32 %v1522, %v1595
    %v1601 = vmul.f32 %v1528, %v1595
    %v1602 = vmul.f32 %v1534, %v1595
    %v1603 = vmul.f32 %v1540, %v1595
    %v1604 = vmul.f32 %v1546, %v1595
    %v1605 = vmul.f32 %v1552, %v1595
    %v1606 = vmul.f32 %v1558, %v1595
    %v1607 = vmul.f32 %v1564, %v1595
    %v1608 = vmul.f32 %v1570, %v1595
    %v1609 = vmul.f32 %v1576, %v1595
    %v1610 = vmul.f32 %v1582, %v1595
    %v1611 = vmul.f32 %v1588, %v1595
    %v1612 = vmul.f32 %v891, %v891
    %v1613 = vmul.f32 %v931, %v931
    %v1614 = vmul.f32 %v971, %v971
    %v1615 = vmul.f32 %v1011, %v1011
    %v1616 = vmul.f32 %v1051, %v1051
    %v1617 = vmul.f32 %v1091, %v1091
    %v1618 = vmul.f32 %v1131, %v1131
    %v1619 = vmul.f32 %v1171, %v1171
    %v1620 = vmul.f32 %v1211, %v1211
    %v1621 = vmul.f32 %v1251, %v1251
    %v1622 = vmul.f32 %v1291, %v1291
    %v1623 = vmul.f32 %v1331, %v1331
    %v1624 = vmul.f32 %v1371, %v1371
    %v1625 = vmul.f32 %v1411, %v1411
    %v1626 = vmul.f32 %v1451, %v1451
    %v1627 = vmul.f32 %v1491, %v1491
    %v1628 = vrot.slane %v1612, 4
    %v1629 = vadd.f32 %v1612, %v1628
    %v1630 = vrot.slane %v1629, 2
    %v1631 = vadd.f32 %v1629, %v1630
    %v1632 = vrot.slane %v1631, 1
    %v1633 = vadd.f32 %v1631, %v1632
    %v1634 = vrot.slane %v1613, 4
    %v1635 = vadd.f32 %v1613, %v1634
    %v1636 = vrot.slane %v1635, 2
    %v1637 = vadd.f32 %v1635, %v1636
    %v1638 = vrot.slane %v1637, 1
    %v1639 = vadd.f32 %v1637, %v1638
    %v1640 = vrot.slane %v1614, 4
    %v1641 = vadd.f32 %v1614, %v1640
    %v1642 = vrot.slane %v1641, 2
    %v1643 = vadd.f32 %v1641, %v1642
    %v1644 = vrot.slane %v1643, 1
    %v1645 = vadd.f32 %v1643, %v1644
    %v1646 = vrot.slane %v1615, 4
    %v1647 = vadd.f32 %v1615, %v1646
    %v1648 = vrot.slane %v1647, 2
    %v1649 = vadd.f32 %v1647, %v1648
    %v1650 = vrot.slane %v1649, 1
    %v1651 = vadd.f32 %v1649, %v1650
    %v1652 = vrot.slane %v1616, 4
    %v1653 = vadd.f32 %v1616, %v1652
    %v1654 = vrot.slane %v1653, 2
    %v1655 = vadd.f32 %v1653, %v1654
    %v1656 = vrot.slane %v1655, 1
    %v1657 = vadd.f32 %v1655, %v1656
    %v1658 = vrot.slane %v1617, 4
    %v1659 = vadd.f32 %v1617, %v1658
    %v1660 = vrot.slane %v1659, 2
    %v1661 = vadd.f32 %v1659, %v1660
    %v1662 = vrot.slane %v1661, 1
    %v1663 = vadd.f32 %v1661, %v1662
    %v1664 = vrot.slane %v1618, 4
    %v1665 = vadd.f32 %v1618, %v1664
    %v1666 = vrot.slane %v1665, 2
    %v1667 = vadd.f32 %v1665, %v1666
    %v1668 = vrot.slane %v1667, 1
    %v1669 = vadd.f32 %v1667, %v1668
    %v1670 = vrot.slane %v1619, 4
    %v1671 = vadd.f32 %v1619, %v1670
    %v1672 = vrot.slane %v1671, 2
    %v1673 = vadd.f32 %v1671, %v1672
    %v1674 = vrot.slane %v1673, 1
    %v1675 = vadd.f32 %v1673, %v1674
    %v1676 = vrot.slane %v1620, 4
    %v1677 = vadd.f32 %v1620, %v1676
    %v1678 = vrot.slane %v1677, 2
    %v1679 = vadd.f32 %v1677, %v1678
    %v1680 = vrot.slane %v1679, 1
    %v1681 = vadd.f32 %v1679, %v1680
    %v1682 = vrot.slane %v1621, 4
    %v1683 = vadd.f32 %v1621, %v1682
    %v1684 = vrot.slane %v1683, 2
    %v1685 = vadd.f32 %v1683, %v1684
    %v1686 = vrot.slane %v1685, 1
    %v1687 = vadd.f32 %v1685, %v1686
    %v1688 = vrot.slane %v1622, 4
    %v1689 = vadd.f32 %v1622, %v1688
    %v1690 = vrot.slane %v1689, 2
    %v1691 = vadd.f32 %v1689, %v1690
    %v1692 = vrot.slane %v1691, 1
    %v1693 = vadd.f32 %v1691, %v1692
    %v1694 = vrot.slane %v1623, 4
    %v1695 = vadd.f32 %v1623, %v1694
    %v1696 = vrot.slane %v1695, 2
    %v1697 = vadd.f32 %v1695, %v1696
    %v1698 = vrot.slane %v1697, 1
    %v1699 = vadd.f32 %v1697, %v1698
    %v1700 = vrot.slane %v1624, 4
    %v1701 = vadd.f32 %v1624, %v1700
    %v1702 = vrot.slane %v1701, 2
    %v1703 = vadd.f32 %v1701, %v1702
    %v1704 = vrot.slane %v1703, 1
    %v1705 = vadd.f32 %v1703, %v1704
    %v1706 = vrot.slane %v1625, 4
    %v1707 = vadd.f32 %v1625, %v1706
    %v1708 = vrot.slane %v1707, 2
    %v1709 = vadd.f32 %v1707, %v1708
    %v1710 = vrot.slane %v1709, 1
    %v1711 = vadd.f32 %v1709, %v1710
    %v1712 = vrot.slane %v1626, 4
    %v1713 = vadd.f32 %v1626, %v1712
    %v1714 = vrot.slane %v1713, 2
    %v1715 = vadd.f32 %v1713, %v1714
    %v1716 = vrot.slane %v1715, 1
    %v1717 = vadd.f32 %v1715, %v1716
    %v1718 = vrot.slane %v1627, 4
    %v1719 = vadd.f32 %v1627, %v1718
    %v1720 = vrot.slane %v1719, 2
    %v1721 = vadd.f32 %v1719, %v1720
    %v1722 = vrot.slane %v1721, 1
    %v1723 = vadd.f32 %v1721, %v1722
    %v1724 = vmul.f32 %v1633, %v1595
    %v1725 = vmul.f32 %v1639, %v1595
    %v1726 = vmul.f32 %v1645, %v1595
    %v1727 = vmul.f32 %v1651, %v1595
    %v1728 = vmul.f32 %v1657, %v1595
    %v1729 = vmul.f32 %v1663, %v1595
    %v1730 = vmul.f32 %v1669, %v1595
    %v1731 = vmul.f32 %v1675, %v1595
    %v1732 = vmul.f32 %v1681, %v1595
    %v1733 = vmul.f32 %v1687, %v1595
    %v1734 = vmul.f32 %v1693, %v1595
    %v1735 = vmul.f32 %v1699, %v1595
    %v1736 = vmul.f32 %v1705, %v1595
    %v1737 = vmul.f32 %v1711, %v1595
    %v1738 = vmul.f32 %v1717, %v1595
    %v1739 = vmul.f32 %v1723, %v1595
    %v1740 = vmul.f32 %v1596, %v1596
    %v1741 = vmul.f32 %v1597, %v1597
    %v1742 = vmul.f32 %v1598, %v1598
    %v1743 = vmul.f32 %v1599, %v1599
    %v1744 = vmul.f32 %v1600, %v1600
    %v1745 = vmul.f32 %v1601, %v1601
    %v1746 = vmul.f32 %v1602, %v1602
    %v1747 = vmul.f32 %v1603, %v1603
    %v1748 = vmul.f32 %v1604, %v1604
    %v1749 = vmul.f32 %v1605, %v1605
    %v1750 = vmul.f32 %v1606, %v1606
    %v1751 = vmul.f32 %v1607, %v1607
    %v1752 = vmul.f32 %v1608, %v1608
    %v1753 = vmul.f32 %v1609, %v1609
    %v1754 = vmul.f32 %v1610, %v1610
    %v1755 = vmul.f32 %v1611, %v1611
    %v1756 = vsub.f32 %v1724, %v1740
    %v1757 = vsub.f32 %v1725, %v1741
    %v1758 = vsub.f32 %v1726, %v1742
    %v1759 = vsub.f32 %v1727, %v1743
    %v1760 = vsub.f32 %v1728, %v1744
    %v1761 = vsub.f32 %v1729, %v1745
    %v1762 = vsub.f32 %v1730, %v1746
    %v1763 = vsub.f32 %v1731, %v1747
    %v1764 = vsub.f32 %v1732, %v1748
    %v1765 = vsub.f32 %v1733, %v1749
    %v1766 = vsub.f32 %v1734, %v1750
    %v1767 = vsub.f32 %v1735, %v1751
    %v1768 = vsub.f32 %v1736, %v1752
    %v1769 = vsub.f32 %v1737, %v1753
    %v1770 = vsub.f32 %v1738, %v1754
    %v1771 = vsub.f32 %v1739, %v1755
    %v1772 = vmax.f32 %v1756, 0.0
    %v1773 = vmax.f32 %v1757, 0.0
    %v1774 = vmax.f32 %v1758, 0.0
    %v1775 = vmax.f32 %v1759, 0.0
    %v1776 = vmax.f32 %v1760, 0.0
    %v1777 = vmax.f32 %v1761, 0.0
    %v1778 = vmax.f32 %v1762, 0.0
    %v1779 = vmax.f32 %v1763, 0.0
    %v1780 = vmax.f32 %v1764, 0.0
    %v1781 = vmax.f32 %v1765, 0.0
    %v1782 = vmax.f32 %v1766, 0.0
    %v1783 = vmax.f32 %v1767, 0.0
    %v1784 = vmax.f32 %v1768, 0.0
    %v1785 = vmax.f32 %v1769, 0.0
    %v1786 = vmax.f32 %v1770, 0.0
    %v1787 = vmax.f32 %v1771, 0.0
    %v1788 = vld [vmem:[#allocation12] sm:$0xff]
    %v1789 = vld [vmem:[#allocation12 + $0x8] sm:$0xff]
    %v1790 = vadd.f32 %v1772, 1e-05
    %v1791 = vadd.f32 %v1773, 1e-05
    %v1792 = vadd.f32 %v1774, 1e-05
    %v1793 = vadd.f32 %v1775, 1e-05
    %v1794 = vadd.f32 %v1776, 1e-05
    %v1795 = vadd.f32 %v1777, 1e-05
    %v1796 = vadd.f32 %v1778, 1e-05
    %v1797 = vadd.f32 %v1779, 1e-05
    %v1798 = vadd.f32 %v1780, 1e-05
    %v1799 = vadd.f32 %v1781, 1e-05
    %v1800 = vadd.f32 %v1782, 1e-05
    %v1801 = vadd.f32 %v1783, 1e-05
    %v1802 = vadd.f32 %v1784, 1e-05
    %v1803 = vadd.f32 %v1785, 1e-05
    %v1804 = vadd.f32 %v1786, 1e-05
    %v1805 = vadd.f32 %v1787, 1e-05
    %v1806 = vrsqrt.pop %v1790
    %v1807 = vmul.f32 %v1806, %v1790
    %v1808 = vmul.f32 %v1807, %v1806
    %v1809 = vmul.f32 0.5, %v1808
    %v1810 = vsub.f32 1.5, %v1809
    %v1811 = vmul.f32 %v1806, %v1810
    %vm1812 = vweird.f32 %v1790
    %vm1813 = vweird.f32 %v1806
    %vm1814 = vmor %vm1812, %vm1813
    %v1815 = vsel %vm1814, %v1806, %v1811
    %v1816 = vrsqrt.pop %v1791
    %v1817 = vmul.f32 %v1816, %v1791
    %v1818 = vmul.f32 %v1817, %v1816
    %v1819 = vmul.f32 0.5, %v1818
    %v1820 = vsub.f32 1.5, %v1819
    %v1821 = vmul.f32 %v1816, %v1820
    %vm1822 = vweird.f32 %v1791
    %vm1823 = vweird.f32 %v1816
    %vm1824 = vmor %vm1822, %vm1823
    %v1825 = vsel %vm1824, %v1816, %v1821
    %v1826 = vrsqrt.pop %v1792
    %v1827 = vmul.f32 %v1826, %v1792
    %v1828 = vmul.f32 %v1827, %v1826
    %v1829 = vmul.f32 0.5, %v1828
    %v1830 = vsub.f32 1.5, %v1829
    %v1831 = vmul.f32 %v1826, %v1830
    %vm1832 = vweird.f32 %v1792
    %vm1833 = vweird.f32 %v1826
    %vm1834 = vmor %vm1832, %vm1833
    %v1835 = vsel %vm1834, %v1826, %v1831
    %v1836 = vrsqrt.pop %v1793
    %v1837 = vmul.f32 %v1836, %v1793
    %v1838 = vmul.f32 %v1837, %v1836
    %v1839 = vmul.f32 0.5, %v1838
    %v1840 = vsub.f32 1.5, %v1839
    %v1841 = vmul.f32 %v1836, %v1840
    %vm1842 = vweird.f32 %v1793
    %vm1843 = vweird.f32 %v1836
    %vm1844 = vmor %vm1842, %vm1843
    %v1845 = vsel %vm1844, %v1836, %v1841
    %v1846 = vrsqrt.pop %v1794
    %v1847 = vmul.f32 %v1846, %v1794
    %v1848 = vmul.f32 %v1847, %v1846
    %v1849 = vmul.f32 0.5, %v1848
    %v1850 = vsub.f32 1.5, %v1849
    %v1851 = vmul.f32 %v1846, %v1850
    %vm1852 = vweird.f32 %v1794
    %vm1853 = vweird.f32 %v1846
    %vm1854 = vmor %vm1852, %vm1853
    %v1855 = vsel %vm1854, %v1846, %v1851
    %v1856 = vrsqrt.pop %v1795
    %v1857 = vmul.f32 %v1856, %v1795
    %v1858 = vmul.f32 %v1857, %v1856
    %v1859 = vmul.f32 0.5, %v1858
    %v1860 = vsub.f32 1.5, %v1859
    %v1861 = vmul.f32 %v1856, %v1860
    %vm1862 = vweird.f32 %v1795
    %vm1863 = vweird.f32 %v1856
    %vm1864 = vmor %vm1862, %vm1863
    %v1865 = vsel %vm1864, %v1856, %v1861
    %v1866 = vrsqrt.pop %v1796
    %v1867 = vmul.f32 %v1866, %v1796
    %v1868 = vmul.f32 %v1867, %v1866
    %v1869 = vmul.f32 0.5, %v1868
    %v1870 = vsub.f32 1.5, %v1869
    %v1871 = vmul.f32 %v1866, %v1870
    %vm1872 = vweird.f32 %v1796
    %vm1873 = vweird.f32 %v1866
    %vm1874 = vmor %vm1872, %vm1873
    %v1875 = vsel %vm1874, %v1866, %v1871
    %v1876 = vrsqrt.pop %v1797
    %v1877 = vmul.f32 %v1876, %v1797
    %v1878 = vmul.f32 %v1877, %v1876
    %v1879 = vmul.f32 0.5, %v1878
    %v1880 = vsub.f32 1.5, %v1879
    %v1881 = vmul.f32 %v1876, %v1880
    %vm1882 = vweird.f32 %v1797
    %vm1883 = vweird.f32 %v1876
    %vm1884 = vmor %vm1882, %vm1883
    %v1885 = vsel %vm1884, %v1876, %v1881
    %v1886 = vrsqrt.pop %v1798
    %v1887 = vmul.f32 %v1886, %v1798
    %v1888 = vmul.f32 %v1887, %v1886
    %v1889 = vmul.f32 0.5, %v1888
    %v1890 = vsub.f32 1.5, %v1889
    %v1891 = vmul.f32 %v1886, %v1890
    %vm1892 = vweird.f32 %v1798
    %vm1893 = vweird.f32 %v1886
    %vm1894 = vmor %vm1892, %vm1893
    %v1895 = vsel %vm1894, %v1886, %v1891
    %v1896 = vrsqrt.pop %v1799
    %v1897 = vmul.f32 %v1896, %v1799
    %v1898 = vmul.f32 %v1897, %v1896
    %v1899 = vmul.f32 0.5, %v1898
    %v1900 = vsub.f32 1.5, %v1899
    %v1901 = vmul.f32 %v1896, %v1900
    %vm1902 = vweird.f32 %v1799
    %vm1903 = vweird.f32 %v1896
    %vm1904 = vmor %vm1902, %vm1903
    %v1905 = vsel %vm1904, %v1896, %v1901
    %v1906 = vrsqrt.pop %v1800
    %v1907 = vmul.f32 %v1906, %v1800
    %v1908 = vmul.f32 %v1907, %v1906
    %v1909 = vmul.f32 0.5, %v1908
    %v1910 = vsub.f32 1.5, %v1909
    %v1911 = vmul.f32 %v1906, %v1910
    %vm1912 = vweird.f32 %v1800
    %vm1913 = vweird.f32 %v1906
    %vm1914 = vmor %vm1912, %vm1913
    %v1915 = vsel %vm1914, %v1906, %v1911
    %v1916 = vrsqrt.pop %v1801
    %v1917 = vmul.f32 %v1916, %v1801
    %v1918 = vmul.f32 %v1917, %v1916
    %v1919 = vmul.f32 0.5, %v1918
    %v1920 = vsub.f32 1.5, %v1919
    %v1921 = vmul.f32 %v1916, %v1920
    %vm1922 = vweird.f32 %v1801
    %vm1923 = vweird.f32 %v1916
    %vm1924 = vmor %vm1922, %vm1923
    %v1925 = vsel %vm1924, %v1916, %v1921
    %v1926 = vrsqrt.pop %v1802
    %v1927 = vmul.f32 %v1926, %v1802
    %v1928 = vmul.f32 %v1927, %v1926
    %v1929 = vmul.f32 0.5, %v1928
    %v1930 = vsub.f32 1.5, %v1929
    %v1931 = vmul.f32 %v1926, %v1930
    %vm1932 = vweird.f32 %v1802
    %vm1933 = vweird.f32 %v1926
    %vm1934 = vmor %vm1932, %vm1933
    %v1935 = vsel %vm1934, %v1926, %v1931
    %v1936 = vrsqrt.pop %v1803
    %v1937 = vmul.f32 %v1936, %v1803
    %v1938 = vmul.f32 %v1937, %v1936
    %v1939 = vmul.f32 0.5, %v1938
    %v1940 = vsub.f32 1.5, %v1939
    %v1941 = vmul.f32 %v1936, %v1940
    %vm1942 = vweird.f32 %v1803
    %vm1943 = vweird.f32 %v1936
    %vm1944 = vmor %vm1942, %vm1943
    %v1945 = vsel %vm1944, %v1936, %v1941
    %v1946 = vrsqrt.pop %v1804
    %v1947 = vmul.f32 %v1946, %v1804
    %v1948 = vmul.f32 %v1947, %v1946
    %v1949 = vmul.f32 0.5, %v1948
    %v1950 = vsub.f32 1.5, %v1949
    %v1951 = vmul.f32 %v1946, %v1950
    %vm1952 = vweird.f32 %v1804
    %vm1953 = vweird.f32 %v1946
    %vm1954 = vmor %vm1952, %vm1953
    %v1955 = vsel %vm1954, %v1946, %v1951
    %v1956 = vrsqrt.pop %v1805
    %v1957 = vmul.f32 %v1956, %v1805
    %v1958 = vmul.f32 %v1957, %v1956
    %v1959 = vmul.f32 0.5, %v1958
    %v1960 = vsub.f32 1.5, %v1959
    %v1961 = vmul.f32 %v1956, %v1960
    %vm1962 = vweird.f32 %v1805
    %vm1963 = vweird.f32 %v1956
    %vm1964 = vmor %vm1962, %vm1963
    %v1965 = vsel %vm1964, %v1956, %v1961
    %v1982 = vrot.slane %v1825, 7
    %v1983 = vrot.slane %v1835, 6
    %v1984 = vrot.slane %v1845, 5
    %v1985 = vrot.slane %v1855, 4
    %v1986 = vrot.slane %v1865, 3
    %v1987 = vrot.slane %v1875, 2
    %v1988 = vrot.slane %v1885, 1
    %v1989 = vrot.slane %v1905, 7
    %v1990 = vrot.slane %v1915, 6
    %v1991 = vrot.slane %v1925, 5
    %v1992 = vrot.slane %v1935, 4
    %v1993 = vrot.slane %v1945, 3
    %v1994 = vrot.slane %v1955, 2
    %v1995 = vrot.slane %v1965, 1
    %vm1996 = vcmask 1040384
    %v1997 = vsel %vm1996, %v1815, %v1982
    %vm1998 = vcmask 1042434
    %v1999 = vsel %vm1998, %v1983, %v1984
    %vm2000 = vcmask 1041408
    %v2001 = vsel %vm2000, %v1997, %v1999
    %vm2002 = vcmask 1044484
    %v2003 = vsel %vm2002, %v1985, %v1986
    %vm2004 = vcmask 1046534
    %v2005 = vsel %vm2004, %v1987, %v1988
    %vm2006 = vcmask 1045508
    %v2007 = vsel %vm2006, %v2003, %v2005
    %vm2008 = vcmask 1043456
    %v2009 = vsel %vm2008, %v2001, %v2007
    %v2010 = vsel %vm1996, %v1895, %v1989
    %v2011 = vsel %vm1998, %v1990, %v1991
    %v2012 = vsel %vm2000, %v2010, %v2011
    %v2013 = vsel %vm2002, %v1992, %v1993
    %v2014 = vsel %vm2004, %v1994, %v1995
    %v2015 = vsel %vm2006, %v2013, %v2014
    %v2016 = vsel %vm2008, %v2012, %v2015
    %v2019 = vmul.f32 %v1788, %v2009
    %v2020 = vmul.f32 %v1789, %v2016
    %v2021 = vld [vmem:[#allocation20] sm:$0xff]
    %v2022 = vld [vmem:[#allocation20 + $0x8] sm:$0xff]
    %v2025 = vperm.slane %v2019, 0
    %v2026 = vperm.slane %v2019, 1
    %v2027 = vperm.slane %v2019, 2
    %v2028 = vperm.slane %v2019, 3
    %v2029 = vperm.slane %v2019, 4
    %v2030 = vperm.slane %v2019, 5
    %v2031 = vperm.slane %v2019, 6
    %v2032 = vperm.slane %v2019, 7
    %v2033 = vperm.slane %v2020, 0
    %v2034 = vperm.slane %v2020, 1
    %v2035 = vperm.slane %v2020, 2
    %v2036 = vperm.slane %v2020, 3
    %v2037 = vperm.slane %v2020, 4
    %v2038 = vperm.slane %v2020, 5
    %v2039 = vperm.slane %v2020, 6
    %v2040 = vperm.slane %v2020, 7
    %v2057 = vmul.f32 %v1596, %v2025
    %v2058 = vmul.f32 %v1597, %v2026
    %v2059 = vmul.f32 %v1598, %v2027
    %v2060 = vmul.f32 %v1599, %v2028
    %v2061 = vmul.f32 %v1600, %v2029
    %v2062 = vmul.f32 %v1601, %v2030
    %v2063 = vmul.f32 %v1602, %v2031
    %v2064 = vmul.f32 %v1603, %v2032
    %v2065 = vmul.f32 %v1604, %v2033
    %v2066 = vmul.f32 %v1605, %v2034
    %v2067 = vmul.f32 %v1606, %v2035
    %v2068 = vmul.f32 %v1607, %v2036
    %v2069 = vmul.f32 %v1608, %v2037
    %v2070 = vmul.f32 %v1609, %v2038
    %v2071 = vmul.f32 %v1610, %v2039
    %v2072 = vmul.f32 %v1611, %v2040
    %v2089 = vrot.slane %v2058, 7
    %v2090 = vrot.slane %v2059, 6
    %v2091 = vrot.slane %v2060, 5
    %v2092 = vrot.slane %v2061, 4
    %v2093 = vrot.slane %v2062, 3
    %v2094 = vrot.slane %v2063, 2
    %v2095 = vrot.slane %v2064, 1
    %v2096 = vrot.slane %v2066, 7
    %v2097 = vrot.slane %v2067, 6
    %v2098 = vrot.slane %v2068, 5
    %v2099 = vrot.slane %v2069, 4
    %v2100 = vrot.slane %v2070, 3
    %v2101 = vrot.slane %v2071, 2
    %v2102 = vrot.slane %v2072, 1
    %v2103 = vsel %vm1996, %v2057, %v2089
    %v2104 = vsel %vm1998, %v2090, %v2091
    %v2105 = vsel %vm2000, %v2103, %v2104
    %v2106 = vsel %vm2002, %v2092, %v2093
    %v2107 = vsel %vm2004, %v2094, %v2095
    %v2108 = vsel %vm2006, %v2106, %v2107
    %v2109 = vsel %vm2008, %v2105, %v2108
    %v2110 = vsel %vm1996, %v2065, %v2096
    %v2111 = vsel %vm1998, %v2097, %v2098
    %v2112 = vsel %vm2000, %v2110, %v2111
    %v2113 = vsel %vm2002, %v2099, %v2100
    %v2114 = vsel %vm2004, %v2101, %v2102
    %v2115 = vsel %vm2006, %v2113, %v2114
    %v2116 = vsel %vm2008, %v2112, %v2115
    %v2119 = vsub.f32 %v2021, %v2109
    %v2120 = vsub.f32 %v2022, %v2116
    %v2121 = vmul.f32 %v891, %v2025
    %v2122 = vmul.f32 %v931, %v2026
    %v2123 = vmul.f32 %v971, %v2027
    %v2124 = vmul.f32 %v1011, %v2028
    %v2125 = vmul.f32 %v1051, %v2029
    %v2126 = vmul.f32 %v1091, %v2030
    %v2127 = vmul.f32 %v1131, %v2031
    %v2128 = vmul.f32 %v1171, %v2032
    %v2129 = vmul.f32 %v1211, %v2033
    %v2130 = vmul.f32 %v1251, %v2034
    %v2131 = vmul.f32 %v1291, %v2035
    %v2132 = vmul.f32 %v1331, %v2036
    %v2133 = vmul.f32 %v1371, %v2037
    %v2134 = vmul.f32 %v1411, %v2038
    %v2135 = vmul.f32 %v1451, %v2039
    %v2136 = vmul.f32 %v1491, %v2040
    %v2139 = vperm.slane %v2119, 0
    %v2140 = vperm.slane %v2119, 1
    %v2141 = vperm.slane %v2119, 2
    %v2142 = vperm.slane %v2119, 3
    %v2143 = vperm.slane %v2119, 4
    %v2144 = vperm.slane %v2119, 5
    %v2145 = vperm.slane %v2119, 6
    %v2146 = vperm.slane %v2119, 7
    %v2147 = vperm.slane %v2120, 0
    %v2148 = vperm.slane %v2120, 1
    %v2149 = vperm.slane %v2120, 2
    %v2150 = vperm.slane %v2120, 3
    %v2151 = vperm.slane %v2120, 4
    %v2152 = vperm.slane %v2120, 5
    %v2153 = vperm.slane %v2120, 6
    %v2154 = vperm.slane %v2120, 7
    %v2171 = vadd.f32 %v2121, %v2139
    %v2172 = vadd.f32 %v2122, %v2140
    %v2173 = vadd.f32 %v2123, %v2141
    %v2174 = vadd.f32 %v2124, %v2142
    %v2175 = vadd.f32 %v2125, %v2143
    %v2176 = vadd.f32 %v2126, %v2144
    %v2177 = vadd.f32 %v2127, %v2145
    %v2178 = vadd.f32 %v2128, %v2146
    %v2179 = vadd.f32 %v2129, %v2147
    %v2180 = vadd.f32 %v2130, %v2148
    %v2181 = vadd.f32 %v2131, %v2149
    %v2182 = vadd.f32 %v2132, %v2150
    %v2183 = vadd.f32 %v2133, %v2151
    %v2184 = vadd.f32 %v2134, %v2152
    %v2185 = vadd.f32 %v2135, %v2153
    %v2186 = vadd.f32 %v2136, %v2154
    %v2187 = vmax.f32 %v2171, 0.0
    %v2188 = vmax.f32 %v2172, 0.0
    %v2189 = vmax.f32 %v2173, 0.0
    %v2190 = vmax.f32 %v2174, 0.0
    %v2191 = vmax.f32 %v2175, 0.0
    %v2192 = vmax.f32 %v2176, 0.0
    %v2193 = vmax.f32 %v2177, 0.0
    %v2194 = vmax.f32 %v2178, 0.0
    %v2195 = vmax.f32 %v2179, 0.0
    %v2196 = vmax.f32 %v2180, 0.0
    %v2197 = vmax.f32 %v2181, 0.0
    %v2198 = vmax.f32 %v2182, 0.0
    %v2199 = vmax.f32 %v2183, 0.0
    %v2200 = vmax.f32 %v2184, 0.0
    %v2201 = vmax.f32 %v2185, 0.0
    %v2202 = vmax.f32 %v2186, 0.0
    %s2203 = smul.u32 8, 256
    %s2204 = smul.u32 %s2203, 8
    %s2205 = sshll.u32 %s2204, 4
    %2206 = dma.done %s211, %s2205
    %v2207 = vld [vmem:[#allocation3] sm:$0xff]
    %v2208 = vld [vmem:[#allocation3 + $0x8] sm:$0xff]
    %v2209 = vld [vmem:[#allocation3 + $0x10] sm:$0xff]
    %v2210 = vld [vmem:[#allocation3 + $0x18] sm:$0xff]
    %v2211 = vld [vmem:[#allocation3 + $0x20] sm:$0xff]
    %v2212 = vld [vmem:[#allocation3 + $0x28] sm:$0xff]
    %v2213 = vld [vmem:[#allocation3 + $0x30] sm:$0xff]
    %v2214 = vld [vmem:[#allocation3 + $0x38] sm:$0xff]
    %v2215 = vld [vmem:[#allocation3 + $0x40] sm:$0xff]
    %v2216 = vld [vmem:[#allocation3 + $0x48] sm:$0xff]
    %v2217 = vld [vmem:[#allocation3 + $0x50] sm:$0xff]
    %v2218 = vld [vmem:[#allocation3 + $0x58] sm:$0xff]
    %v2219 = vld [vmem:[#allocation3 + $0x60] sm:$0xff]
    %v2220 = vld [vmem:[#allocation3 + $0x68] sm:$0xff]
    %v2221 = vld [vmem:[#allocation3 + $0x70] sm:$0xff]
    %v2222 = vld [vmem:[#allocation3 + $0x78] sm:$0xff]
    %v2223 = vld [vmem:[#allocation3 + $0x80] sm:$0xff]
    %v2224 = vld [vmem:[#allocation3 + $0x88] sm:$0xff]
    %v2225 = vld [vmem:[#allocation3 + $0x90] sm:$0xff]
    %v2226 = vld [vmem:[#allocation3 + $0x98] sm:$0xff]
    %v2227 = vld [vmem:[#allocation3 + $0xa0] sm:$0xff]
    %v2228 = vld [vmem:[#allocation3 + $0xa8] sm:$0xff]
    %v2229 = vld [vmem:[#allocation3 + $0xb0] sm:$0xff]
    %v2230 = vld [vmem:[#allocation3 + $0xb8] sm:$0xff]
    %v2231 = vld [vmem:[#allocation3 + $0xc0] sm:$0xff]
    %v2232 = vld [vmem:[#allocation3 + $0xc8] sm:$0xff]
    %v2233 = vld [vmem:[#allocation3 + $0xd0] sm:$0xff]
    %v2234 = vld [vmem:[#allocation3 + $0xd8] sm:$0xff]
    %v2235 = vld [vmem:[#allocation3 + $0xe0] sm:$0xff]
    %v2236 = vld [vmem:[#allocation3 + $0xe8] sm:$0xff]
    %v2237 = vld [vmem:[#allocation3 + $0xf0] sm:$0xff]
    %v2238 = vld [vmem:[#allocation3 + $0xf8] sm:$0xff]
    %v2239 = vld [vmem:[#allocation3 + $0x100] sm:$0xff]
    %v2240 = vld [vmem:[#allocation3 + $0x108] sm:$0xff]
    %v2241 = vld [vmem:[#allocation3 + $0x110] sm:$0xff]
    %v2242 = vld [vmem:[#allocation3 + $0x118] sm:$0xff]
    %v2243 = vld [vmem:[#allocation3 + $0x120] sm:$0xff]
    %v2244 = vld [vmem:[#allocation3 + $0x128] sm:$0xff]
    %v2245 = vld [vmem:[#allocation3 + $0x130] sm:$0xff]
    %v2246 = vld [vmem:[#allocation3 + $0x138] sm:$0xff]
    %v2247 = vld [vmem:[#allocation3 + $0x140] sm:$0xff]
    %v2248 = vld [vmem:[#allocation3 + $0x148] sm:$0xff]
    %v2249 = vld [vmem:[#allocation3 + $0x150] sm:$0xff]
    %v2250 = vld [vmem:[#allocation3 + $0x158] sm:$0xff]
    %v2251 = vld [vmem:[#allocation3 + $0x160] sm:$0xff]
    %v2252 = vld [vmem:[#allocation3 + $0x168] sm:$0xff]
    %v2253 = vld [vmem:[#allocation3 + $0x170] sm:$0xff]
    %v2254 = vld [vmem:[#allocation3 + $0x178] sm:$0xff]
    %v2255 = vld [vmem:[#allocation3 + $0x180] sm:$0xff]
    %v2256 = vld [vmem:[#allocation3 + $0x188] sm:$0xff]
    %v2257 = vld [vmem:[#allocation3 + $0x190] sm:$0xff]
    %v2258 = vld [vmem:[#allocation3 + $0x198] sm:$0xff]
    %v2259 = vld [vmem:[#allocation3 + $0x1a0] sm:$0xff]
    %v2260 = vld [vmem:[#allocation3 + $0x1a8] sm:$0xff]
    %v2261 = vld [vmem:[#allocation3 + $0x1b0] sm:$0xff]
    %v2262 = vld [vmem:[#allocation3 + $0x1b8] sm:$0xff]
    %v2263 = vld [vmem:[#allocation3 + $0x1c0] sm:$0xff]
    %v2264 = vld [vmem:[#allocation3 + $0x1c8] sm:$0xff]
    %v2265 = vld [vmem:[#allocation3 + $0x1d0] sm:$0xff]
    %v2266 = vld [vmem:[#allocation3 + $0x1d8] sm:$0xff]
    %v2267 = vld [vmem:[#allocation3 + $0x1e0] sm:$0xff]
    %v2268 = vld [vmem:[#allocation3 + $0x1e8] sm:$0xff]
    %v2269 = vld [vmem:[#allocation3 + $0x1f0] sm:$0xff]
    %v2270 = vld [vmem:[#allocation3 + $0x1f8] sm:$0xff]
    %v2271 = vld [vmem:[#allocation3 + $0x200] sm:$0xff]
    %v2272 = vld [vmem:[#allocation3 + $0x208] sm:$0xff]
    %v2273 = vld [vmem:[#allocation3 + $0x210] sm:$0xff]
    %v2274 = vld [vmem:[#allocation3 + $0x218] sm:$0xff]
    %v2275 = vld [vmem:[#allocation3 + $0x220] sm:$0xff]
    %v2276 = vld [vmem:[#allocation3 + $0x228] sm:$0xff]
    %v2277 = vld [vmem:[#allocation3 + $0x230] sm:$0xff]
    %v2278 = vld [vmem:[#allocation3 + $0x238] sm:$0xff]
    %v2279 = vld [vmem:[#allocation3 + $0x240] sm:$0xff]
    %v2280 = vld [vmem:[#allocation3 + $0x248] sm:$0xff]
    %v2281 = vld [vmem:[#allocation3 + $0x250] sm:$0xff]
    %v2282 = vld [vmem:[#allocation3 + $0x258] sm:$0xff]
    %v2283 = vld [vmem:[#allocation3 + $0x260] sm:$0xff]
    %v2284 = vld [vmem:[#allocation3 + $0x268] sm:$0xff]
    %v2285 = vld [vmem:[#allocation3 + $0x270] sm:$0xff]
    %v2286 = vld [vmem:[#allocation3 + $0x278] sm:$0xff]
    %v2287 = vld [vmem:[#allocation3 + $0x280] sm:$0xff]
    %v2288 = vld [vmem:[#allocation3 + $0x288] sm:$0xff]
    %v2289 = vld [vmem:[#allocation3 + $0x290] sm:$0xff]
    %v2290 = vld [vmem:[#allocation3 + $0x298] sm:$0xff]
    %v2291 = vld [vmem:[#allocation3 + $0x2a0] sm:$0xff]
    %v2292 = vld [vmem:[#allocation3 + $0x2a8] sm:$0xff]
    %v2293 = vld [vmem:[#allocation3 + $0x2b0] sm:$0xff]
    %v2294 = vld [vmem:[#allocation3 + $0x2b8] sm:$0xff]
    %v2295 = vld [vmem:[#allocation3 + $0x2c0] sm:$0xff]
    %v2296 = vld [vmem:[#allocation3 + $0x2c8] sm:$0xff]
    %v2297 = vld [vmem:[#allocation3 + $0x2d0] sm:$0xff]
    %v2298 = vld [vmem:[#allocation3 + $0x2d8] sm:$0xff]
    %v2299 = vld [vmem:[#allocation3 + $0x2e0] sm:$0xff]
    %v2300 = vld [vmem:[#allocation3 + $0x2e8] sm:$0xff]
    %v2301 = vld [vmem:[#allocation3 + $0x2f0] sm:$0xff]
    %v2302 = vld [vmem:[#allocation3 + $0x2f8] sm:$0xff]
    %v2303 = vld [vmem:[#allocation3 + $0x300] sm:$0xff]
    %v2304 = vld [vmem:[#allocation3 + $0x308] sm:$0xff]
    %v2305 = vld [vmem:[#allocation3 + $0x310] sm:$0xff]
    %v2306 = vld [vmem:[#allocation3 + $0x318] sm:$0xff]
    %v2307 = vld [vmem:[#allocation3 + $0x320] sm:$0xff]
    %v2308 = vld [vmem:[#allocation3 + $0x328] sm:$0xff]
    %v2309 = vld [vmem:[#allocation3 + $0x330] sm:$0xff]
    %v2310 = vld [vmem:[#allocation3 + $0x338] sm:$0xff]
    %v2311 = vld [vmem:[#allocation3 + $0x340] sm:$0xff]
    %v2312 = vld [vmem:[#allocation3 + $0x348] sm:$0xff]
    %v2313 = vld [vmem:[#allocation3 + $0x350] sm:$0xff]
    %v2314 = vld [vmem:[#allocation3 + $0x358] sm:$0xff]
    %v2315 = vld [vmem:[#allocation3 + $0x360] sm:$0xff]
    %v2316 = vld [vmem:[#allocation3 + $0x368] sm:$0xff]
    %v2317 = vld [vmem:[#allocation3 + $0x370] sm:$0xff]
    %v2318 = vld [vmem:[#allocation3 + $0x378] sm:$0xff]
    %v2319 = vld [vmem:[#allocation3 + $0x380] sm:$0xff]
    %v2320 = vld [vmem:[#allocation3 + $0x388] sm:$0xff]
    %v2321 = vld [vmem:[#allocation3 + $0x390] sm:$0xff]
    %v2322 = vld [vmem:[#allocation3 + $0x398] sm:$0xff]
    %v2323 = vld [vmem:[#allocation3 + $0x3a0] sm:$0xff]
    %v2324 = vld [vmem:[#allocation3 + $0x3a8] sm:$0xff]
    %v2325 = vld [vmem:[#allocation3 + $0x3b0] sm:$0xff]
    %v2326 = vld [vmem:[#allocation3 + $0x3b8] sm:$0xff]
    %v2327 = vld [vmem:[#allocation3 + $0x3c0] sm:$0xff]
    %v2328 = vld [vmem:[#allocation3 + $0x3c8] sm:$0xff]
    %v2329 = vld [vmem:[#allocation3 + $0x3d0] sm:$0xff]
    %v2330 = vld [vmem:[#allocation3 + $0x3d8] sm:$0xff]
    %v2331 = vld [vmem:[#allocation3 + $0x3e0] sm:$0xff]
    %v2332 = vld [vmem:[#allocation3 + $0x3e8] sm:$0xff]
    %v2333 = vld [vmem:[#allocation3 + $0x3f0] sm:$0xff]
    %v2334 = vld [vmem:[#allocation3 + $0x3f8] sm:$0xff]
    %v2335 = vld [vmem:[#allocation3 + $0x400] sm:$0xff]
    %v2336 = vld [vmem:[#allocation3 + $0x408] sm:$0xff]
    %v2337 = vld [vmem:[#allocation3 + $0x410] sm:$0xff]
    %v2338 = vld [vmem:[#allocation3 + $0x418] sm:$0xff]
    %v2339 = vld [vmem:[#allocation3 + $0x420] sm:$0xff]
    %v2340 = vld [vmem:[#allocation3 + $0x428] sm:$0xff]
    %v2341 = vld [vmem:[#allocation3 + $0x430] sm:$0xff]
    %v2342 = vld [vmem:[#allocation3 + $0x438] sm:$0xff]
    %v2343 = vld [vmem:[#allocation3 + $0x440] sm:$0xff]
    %v2344 = vld [vmem:[#allocation3 + $0x448] sm:$0xff]
    %v2345 = vld [vmem:[#allocation3 + $0x450] sm:$0xff]
    %v2346 = vld [vmem:[#allocation3 + $0x458] sm:$0xff]
    %v2347 = vld [vmem:[#allocation3 + $0x460] sm:$0xff]
    %v2348 = vld [vmem:[#allocation3 + $0x468] sm:$0xff]
    %v2349 = vld [vmem:[#allocation3 + $0x470] sm:$0xff]
    %v2350 = vld [vmem:[#allocation3 + $0x478] sm:$0xff]
    %v2351 = vld [vmem:[#allocation3 + $0x480] sm:$0xff]
    %v2352 = vld [vmem:[#allocation3 + $0x488] sm:$0xff]
    %v2353 = vld [vmem:[#allocation3 + $0x490] sm:$0xff]
    %v2354 = vld [vmem:[#allocation3 + $0x498] sm:$0xff]
    %v2355 = vld [vmem:[#allocation3 + $0x4a0] sm:$0xff]
    %v2356 = vld [vmem:[#allocation3 + $0x4a8] sm:$0xff]
    %v2357 = vld [vmem:[#allocation3 + $0x4b0] sm:$0xff]
    %v2358 = vld [vmem:[#allocation3 + $0x4b8] sm:$0xff]
    %v2359 = vld [vmem:[#allocation3 + $0x4c0] sm:$0xff]
    %v2360 = vld [vmem:[#allocation3 + $0x4c8] sm:$0xff]
    %v2361 = vld [vmem:[#allocation3 + $0x4d0] sm:$0xff]
    %v2362 = vld [vmem:[#allocation3 + $0x4d8] sm:$0xff]
    %v2363 = vld [vmem:[#allocation3 + $0x4e0] sm:$0xff]
    %v2364 = vld [vmem:[#allocation3 + $0x4e8] sm:$0xff]
    %v2365 = vld [vmem:[#allocation3 + $0x4f0] sm:$0xff]
    %v2366 = vld [vmem:[#allocation3 + $0x4f8] sm:$0xff]
    %v2367 = vld [vmem:[#allocation3 + $0x500] sm:$0xff]
    %v2368 = vld [vmem:[#allocation3 + $0x508] sm:$0xff]
    %v2369 = vld [vmem:[#allocation3 + $0x510] sm:$0xff]
    %v2370 = vld [vmem:[#allocation3 + $0x518] sm:$0xff]
    %v2371 = vld [vmem:[#allocation3 + $0x520] sm:$0xff]
    %v2372 = vld [vmem:[#allocation3 + $0x528] sm:$0xff]
    %v2373 = vld [vmem:[#allocation3 + $0x530] sm:$0xff]
    %v2374 = vld [vmem:[#allocation3 + $0x538] sm:$0xff]
    %v2375 = vld [vmem:[#allocation3 + $0x540] sm:$0xff]
    %v2376 = vld [vmem:[#allocation3 + $0x548] sm:$0xff]
    %v2377 = vld [vmem:[#allocation3 + $0x550] sm:$0xff]
    %v2378 = vld [vmem:[#allocation3 + $0x558] sm:$0xff]
    %v2379 = vld [vmem:[#allocation3 + $0x560] sm:$0xff]
    %v2380 = vld [vmem:[#allocation3 + $0x568] sm:$0xff]
    %v2381 = vld [vmem:[#allocation3 + $0x570] sm:$0xff]
    %v2382 = vld [vmem:[#allocation3 + $0x578] sm:$0xff]
    %v2383 = vld [vmem:[#allocation3 + $0x580] sm:$0xff]
    %v2384 = vld [vmem:[#allocation3 + $0x588] sm:$0xff]
    %v2385 = vld [vmem:[#allocation3 + $0x590] sm:$0xff]
    %v2386 = vld [vmem:[#allocation3 + $0x598] sm:$0xff]
    %v2387 = vld [vmem:[#allocation3 + $0x5a0] sm:$0xff]
    %v2388 = vld [vmem:[#allocation3 + $0x5a8] sm:$0xff]
    %v2389 = vld [vmem:[#allocation3 + $0x5b0] sm:$0xff]
    %v2390 = vld [vmem:[#allocation3 + $0x5b8] sm:$0xff]
    %v2391 = vld [vmem:[#allocation3 + $0x5c0] sm:$0xff]
    %v2392 = vld [vmem:[#allocation3 + $0x5c8] sm:$0xff]
    %v2393 = vld [vmem:[#allocation3 + $0x5d0] sm:$0xff]
    %v2394 = vld [vmem:[#allocation3 + $0x5d8] sm:$0xff]
    %v2395 = vld [vmem:[#allocation3 + $0x5e0] sm:$0xff]
    %v2396 = vld [vmem:[#allocation3 + $0x5e8] sm:$0xff]
    %v2397 = vld [vmem:[#allocation3 + $0x5f0] sm:$0xff]
    %v2398 = vld [vmem:[#allocation3 + $0x5f8] sm:$0xff]
    %v2399 = vld [vmem:[#allocation3 + $0x600] sm:$0xff]
    %v2400 = vld [vmem:[#allocation3 + $0x608] sm:$0xff]
    %v2401 = vld [vmem:[#allocation3 + $0x610] sm:$0xff]
    %v2402 = vld [vmem:[#allocation3 + $0x618] sm:$0xff]
    %v2403 = vld [vmem:[#allocation3 + $0x620] sm:$0xff]
    %v2404 = vld [vmem:[#allocation3 + $0x628] sm:$0xff]
    %v2405 = vld [vmem:[#allocation3 + $0x630] sm:$0xff]
    %v2406 = vld [vmem:[#allocation3 + $0x638] sm:$0xff]
    %v2407 = vld [vmem:[#allocation3 + $0x640] sm:$0xff]
    %v2408 = vld [vmem:[#allocation3 + $0x648] sm:$0xff]
    %v2409 = vld [vmem:[#allocation3 + $0x650] sm:$0xff]
    %v2410 = vld [vmem:[#allocation3 + $0x658] sm:$0xff]
    %v2411 = vld [vmem:[#allocation3 + $0x660] sm:$0xff]
    %v2412 = vld [vmem:[#allocation3 + $0x668] sm:$0xff]
    %v2413 = vld [vmem:[#allocation3 + $0x670] sm:$0xff]
    %v2414 = vld [vmem:[#allocation3 + $0x678] sm:$0xff]
    %v2415 = vld [vmem:[#allocation3 + $0x680] sm:$0xff]
    %v2416 = vld [vmem:[#allocation3 + $0x688] sm:$0xff]
    %v2417 = vld [vmem:[#allocation3 + $0x690] sm:$0xff]
    %v2418 = vld [vmem:[#allocation3 + $0x698] sm:$0xff]
    %v2419 = vld [vmem:[#allocation3 + $0x6a0] sm:$0xff]
    %v2420 = vld [vmem:[#allocation3 + $0x6a8] sm:$0xff]
    %v2421 = vld [vmem:[#allocation3 + $0x6b0] sm:$0xff]
    %v2422 = vld [vmem:[#allocation3 + $0x6b8] sm:$0xff]
    %v2423 = vld [vmem:[#allocation3 + $0x6c0] sm:$0xff]
    %v2424 = vld [vmem:[#allocation3 + $0x6c8] sm:$0xff]
    %v2425 = vld [vmem:[#allocation3 + $0x6d0] sm:$0xff]
    %v2426 = vld [vmem:[#allocation3 + $0x6d8] sm:$0xff]
    %v2427 = vld [vmem:[#allocation3 + $0x6e0] sm:$0xff]
    %v2428 = vld [vmem:[#allocation3 + $0x6e8] sm:$0xff]
    %v2429 = vld [vmem:[#allocation3 + $0x6f0] sm:$0xff]
    %v2430 = vld [vmem:[#allocation3 + $0x6f8] sm:$0xff]
    %v2431 = vld [vmem:[#allocation3 + $0x700] sm:$0xff]
    %v2432 = vld [vmem:[#allocation3 + $0x708] sm:$0xff]
    %v2433 = vld [vmem:[#allocation3 + $0x710] sm:$0xff]
    %v2434 = vld [vmem:[#allocation3 + $0x718] sm:$0xff]
    %v2435 = vld [vmem:[#allocation3 + $0x720] sm:$0xff]
    %v2436 = vld [vmem:[#allocation3 + $0x728] sm:$0xff]
    %v2437 = vld [vmem:[#allocation3 + $0x730] sm:$0xff]
    %v2438 = vld [vmem:[#allocation3 + $0x738] sm:$0xff]
    %v2439 = vld [vmem:[#allocation3 + $0x740] sm:$0xff]
    %v2440 = vld [vmem:[#allocation3 + $0x748] sm:$0xff]
    %v2441 = vld [vmem:[#allocation3 + $0x750] sm:$0xff]
    %v2442 = vld [vmem:[#allocation3 + $0x758] sm:$0xff]
    %v2443 = vld [vmem:[#allocation3 + $0x760] sm:$0xff]
    %v2444 = vld [vmem:[#allocation3 + $0x768] sm:$0xff]
    %v2445 = vld [vmem:[#allocation3 + $0x770] sm:$0xff]
    %v2446 = vld [vmem:[#allocation3 + $0x778] sm:$0xff]
    %v2447 = vld [vmem:[#allocation3 + $0x780] sm:$0xff]
    %v2448 = vld [vmem:[#allocation3 + $0x788] sm:$0xff]
    %v2449 = vld [vmem:[#allocation3 + $0x790] sm:$0xff]
    %v2450 = vld [vmem:[#allocation3 + $0x798] sm:$0xff]
    %v2451 = vld [vmem:[#allocation3 + $0x7a0] sm:$0xff]
    %v2452 = vld [vmem:[#allocation3 + $0x7a8] sm:$0xff]
    %v2453 = vld [vmem:[#allocation3 + $0x7b0] sm:$0xff]
    %v2454 = vld [vmem:[#allocation3 + $0x7b8] sm:$0xff]
    %v2455 = vld [vmem:[#allocation3 + $0x7c0] sm:$0xff]
    %v2456 = vld [vmem:[#allocation3 + $0x7c8] sm:$0xff]
    %v2457 = vld [vmem:[#allocation3 + $0x7d0] sm:$0xff]
    %v2458 = vld [vmem:[#allocation3 + $0x7d8] sm:$0xff]
    %v2459 = vld [vmem:[#allocation3 + $0x7e0] sm:$0xff]
    %v2460 = vld [vmem:[#allocation3 + $0x7e8] sm:$0xff]
    %v2461 = vld [vmem:[#allocation3 + $0x7f0] sm:$0xff]
    %v2462 = vld [vmem:[#allocation3 + $0x7f8] sm:$0xff]
    %v2463 = vld [vmem:[#allocation3 + $0x800] sm:$0xff]
    %v2464 = vld [vmem:[#allocation3 + $0x808] sm:$0xff]
    %v2465 = vld [vmem:[#allocation3 + $0x810] sm:$0xff]
    %v2466 = vld [vmem:[#allocation3 + $0x818] sm:$0xff]
    %v2467 = vld [vmem:[#allocation3 + $0x820] sm:$0xff]
    %v2468 = vld [vmem:[#allocation3 + $0x828] sm:$0xff]
    %v2469 = vld [vmem:[#allocation3 + $0x830] sm:$0xff]
    %v2470 = vld [vmem:[#allocation3 + $0x838] sm:$0xff]
    %v2471 = vld [vmem:[#allocation3 + $0x840] sm:$0xff]
    %v2472 = vld [vmem:[#allocation3 + $0x848] sm:$0xff]
    %v2473 = vld [vmem:[#allocation3 + $0x850] sm:$0xff]
    %v2474 = vld [vmem:[#allocation3 + $0x858] sm:$0xff]
    %v2475 = vld [vmem:[#allocation3 + $0x860] sm:$0xff]
    %v2476 = vld [vmem:[#allocation3 + $0x868] sm:$0xff]
    %v2477 = vld [vmem:[#allocation3 + $0x870] sm:$0xff]
    %v2478 = vld [vmem:[#allocation3 + $0x878] sm:$0xff]
    %v2479 = vld [vmem:[#allocation3 + $0x880] sm:$0xff]
    %v2480 = vld [vmem:[#allocation3 + $0x888] sm:$0xff]
    %v2481 = vld [vmem:[#allocation3 + $0x890] sm:$0xff]
    %v2482 = vld [vmem:[#allocation3 + $0x898] sm:$0xff]
    %v2483 = vld [vmem:[#allocation3 + $0x8a0] sm:$0xff]
    %v2484 = vld [vmem:[#allocation3 + $0x8a8] sm:$0xff]
    %v2485 = vld [vmem:[#allocation3 + $0x8b0] sm:$0xff]
    %v2486 = vld [vmem:[#allocation3 + $0x8b8] sm:$0xff]
    %v2487 = vld [vmem:[#allocation3 + $0x8c0] sm:$0xff]
    %v2488 = vld [vmem:[#allocation3 + $0x8c8] sm:$0xff]
    %v2489 = vld [vmem:[#allocation3 + $0x8d0] sm:$0xff]
    %v2490 = vld [vmem:[#allocation3 + $0x8d8] sm:$0xff]
    %v2491 = vld [vmem:[#allocation3 + $0x8e0] sm:$0xff]
    %v2492 = vld [vmem:[#allocation3 + $0x8e8] sm:$0xff]
    %v2493 = vld [vmem:[#allocation3 + $0x8f0] sm:$0xff]
    %v2494 = vld [vmem:[#allocation3 + $0x8f8] sm:$0xff]
    %v2495 = vld [vmem:[#allocation3 + $0x900] sm:$0xff]
    %v2496 = vld [vmem:[#allocation3 + $0x908] sm:$0xff]
    %v2497 = vld [vmem:[#allocation3 + $0x910] sm:$0xff]
    %v2498 = vld [vmem:[#allocation3 + $0x918] sm:$0xff]
    %v2499 = vld [vmem:[#allocation3 + $0x920] sm:$0xff]
    %v2500 = vld [vmem:[#allocation3 + $0x928] sm:$0xff]
    %v2501 = vld [vmem:[#allocation3 + $0x930] sm:$0xff]
    %v2502 = vld [vmem:[#allocation3 + $0x938] sm:$0xff]
    %v2503 = vld [vmem:[#allocation3 + $0x940] sm:$0xff]
    %v2504 = vld [vmem:[#allocation3 + $0x948] sm:$0xff]
    %v2505 = vld [vmem:[#allocation3 + $0x950] sm:$0xff]
    %v2506 = vld [vmem:[#allocation3 + $0x958] sm:$0xff]
    %v2507 = vld [vmem:[#allocation3 + $0x960] sm:$0xff]
    %v2508 = vld [vmem:[#allocation3 + $0x968] sm:$0xff]
    %v2509 = vld [vmem:[#allocation3 + $0x970] sm:$0xff]
    %v2510 = vld [vmem:[#allocation3 + $0x978] sm:$0xff]
    %v2511 = vld [vmem:[#allocation3 + $0x980] sm:$0xff]
    %v2512 = vld [vmem:[#allocation3 + $0x988] sm:$0xff]
    %v2513 = vld [vmem:[#allocation3 + $0x990] sm:$0xff]
    %v2514 = vld [vmem:[#allocation3 + $0x998] sm:$0xff]
    %v2515 = vld [vmem:[#allocation3 + $0x9a0] sm:$0xff]
    %v2516 = vld [vmem:[#allocation3 + $0x9a8] sm:$0xff]
    %v2517 = vld [vmem:[#allocation3 + $0x9b0] sm:$0xff]
    %v2518 = vld [vmem:[#allocation3 + $0x9b8] sm:$0xff]
    %v2519 = vld [vmem:[#allocation3 + $0x9c0] sm:$0xff]
    %v2520 = vld [vmem:[#allocation3 + $0x9c8] sm:$0xff]
    %v2521 = vld [vmem:[#allocation3 + $0x9d0] sm:$0xff]
    %v2522 = vld [vmem:[#allocation3 + $0x9d8] sm:$0xff]
    %v2523 = vld [vmem:[#allocation3 + $0x9e0] sm:$0xff]
    %v2524 = vld [vmem:[#allocation3 + $0x9e8] sm:$0xff]
    %v2525 = vld [vmem:[#allocation3 + $0x9f0] sm:$0xff]
    %v2526 = vld [vmem:[#allocation3 + $0x9f8] sm:$0xff]
    %v2527 = vld [vmem:[#allocation3 + $0xa00] sm:$0xff]
    %v2528 = vld [vmem:[#allocation3 + $0xa08] sm:$0xff]
    %v2529 = vld [vmem:[#allocation3 + $0xa10] sm:$0xff]
    %v2530 = vld [vmem:[#allocation3 + $0xa18] sm:$0xff]
    %v2531 = vld [vmem:[#allocation3 + $0xa20] sm:$0xff]
    %v2532 = vld [vmem:[#allocation3 + $0xa28] sm:$0xff]
    %v2533 = vld [vmem:[#allocation3 + $0xa30] sm:$0xff]
    %v2534 = vld [vmem:[#allocation3 + $0xa38] sm:$0xff]
    %v2535 = vld [vmem:[#allocation3 + $0xa40] sm:$0xff]
    %v2536 = vld [vmem:[#allocation3 + $0xa48] sm:$0xff]
    %v2537 = vld [vmem:[#allocation3 + $0xa50] sm:$0xff]
    %v2538 = vld [vmem:[#allocation3 + $0xa58] sm:$0xff]
    %v2539 = vld [vmem:[#allocation3 + $0xa60] sm:$0xff]
    %v2540 = vld [vmem:[#allocation3 + $0xa68] sm:$0xff]
    %v2541 = vld [vmem:[#allocation3 + $0xa70] sm:$0xff]
    %v2542 = vld [vmem:[#allocation3 + $0xa78] sm:$0xff]
    %v2543 = vld [vmem:[#allocation3 + $0xa80] sm:$0xff]
    %v2544 = vld [vmem:[#allocation3 + $0xa88] sm:$0xff]
    %v2545 = vld [vmem:[#allocation3 + $0xa90] sm:$0xff]
    %v2546 = vld [vmem:[#allocation3 + $0xa98] sm:$0xff]
    %v2547 = vld [vmem:[#allocation3 + $0xaa0] sm:$0xff]
    %v2548 = vld [vmem:[#allocation3 + $0xaa8] sm:$0xff]
    %v2549 = vld [vmem:[#allocation3 + $0xab0] sm:$0xff]
    %v2550 = vld [vmem:[#allocation3 + $0xab8] sm:$0xff]
    %v2551 = vld [vmem:[#allocation3 + $0xac0] sm:$0xff]
    %v2552 = vld [vmem:[#allocation3 + $0xac8] sm:$0xff]
    %v2553 = vld [vmem:[#allocation3 + $0xad0] sm:$0xff]
    %v2554 = vld [vmem:[#allocation3 + $0xad8] sm:$0xff]
    %v2555 = vld [vmem:[#allocation3 + $0xae0] sm:$0xff]
    %v2556 = vld [vmem:[#allocation3 + $0xae8] sm:$0xff]
    %v2557 = vld [vmem:[#allocation3 + $0xaf0] sm:$0xff]
    %v2558 = vld [vmem:[#allocation3 + $0xaf8] sm:$0xff]
    %v2559 = vld [vmem:[#allocation3 + $0xb00] sm:$0xff]
    %v2560 = vld [vmem:[#allocation3 + $0xb08] sm:$0xff]
    %v2561 = vld [vmem:[#allocation3 + $0xb10] sm:$0xff]
    %v2562 = vld [vmem:[#allocation3 + $0xb18] sm:$0xff]
    %v2563 = vld [vmem:[#allocation3 + $0xb20] sm:$0xff]
    %v2564 = vld [vmem:[#allocation3 + $0xb28] sm:$0xff]
    %v2565 = vld [vmem:[#allocation3 + $0xb30] sm:$0xff]
    %v2566 = vld [vmem:[#allocation3 + $0xb38] sm:$0xff]
    %v2567 = vld [vmem:[#allocation3 + $0xb40] sm:$0xff]
    %v2568 = vld [vmem:[#allocation3 + $0xb48] sm:$0xff]
    %v2569 = vld [vmem:[#allocation3 + $0xb50] sm:$0xff]
    %v2570 = vld [vmem:[#allocation3 + $0xb58] sm:$0xff]
    %v2571 = vld [vmem:[#allocation3 + $0xb60] sm:$0xff]
    %v2572 = vld [vmem:[#allocation3 + $0xb68] sm:$0xff]
    %v2573 = vld [vmem:[#allocation3 + $0xb70] sm:$0xff]
    %v2574 = vld [vmem:[#allocation3 + $0xb78] sm:$0xff]
    %v2575 = vld [vmem:[#allocation3 + $0xb80] sm:$0xff]
    %v2576 = vld [vmem:[#allocation3 + $0xb88] sm:$0xff]
    %v2577 = vld [vmem:[#allocation3 + $0xb90] sm:$0xff]
    %v2578 = vld [vmem:[#allocation3 + $0xb98] sm:$0xff]
    %v2579 = vld [vmem:[#allocation3 + $0xba0] sm:$0xff]
    %v2580 = vld [vmem:[#allocation3 + $0xba8] sm:$0xff]
    %v2581 = vld [vmem:[#allocation3 + $0xbb0] sm:$0xff]
    %v2582 = vld [vmem:[#allocation3 + $0xbb8] sm:$0xff]
    %v2583 = vld [vmem:[#allocation3 + $0xbc0] sm:$0xff]
    %v2584 = vld [vmem:[#allocation3 + $0xbc8] sm:$0xff]
    %v2585 = vld [vmem:[#allocation3 + $0xbd0] sm:$0xff]
    %v2586 = vld [vmem:[#allocation3 + $0xbd8] sm:$0xff]
    %v2587 = vld [vmem:[#allocation3 + $0xbe0] sm:$0xff]
    %v2588 = vld [vmem:[#allocation3 + $0xbe8] sm:$0xff]
    %v2589 = vld [vmem:[#allocation3 + $0xbf0] sm:$0xff]
    %v2590 = vld [vmem:[#allocation3 + $0xbf8] sm:$0xff]
    %v2591 = vld [vmem:[#allocation3 + $0xc00] sm:$0xff]
    %v2592 = vld [vmem:[#allocation3 + $0xc08] sm:$0xff]
    %v2593 = vld [vmem:[#allocation3 + $0xc10] sm:$0xff]
    %v2594 = vld [vmem:[#allocation3 + $0xc18] sm:$0xff]
    %v2595 = vld [vmem:[#allocation3 + $0xc20] sm:$0xff]
    %v2596 = vld [vmem:[#allocation3 + $0xc28] sm:$0xff]
    %v2597 = vld [vmem:[#allocation3 + $0xc30] sm:$0xff]
    %v2598 = vld [vmem:[#allocation3 + $0xc38] sm:$0xff]
    %v2599 = vld [vmem:[#allocation3 + $0xc40] sm:$0xff]
    %v2600 = vld [vmem:[#allocation3 + $0xc48] sm:$0xff]
    %v2601 = vld [vmem:[#allocation3 + $0xc50] sm:$0xff]
    %v2602 = vld [vmem:[#allocation3 + $0xc58] sm:$0xff]
    %v2603 = vld [vmem:[#allocation3 + $0xc60] sm:$0xff]
    %v2604 = vld [vmem:[#allocation3 + $0xc68] sm:$0xff]
    %v2605 = vld [vmem:[#allocation3 + $0xc70] sm:$0xff]
    %v2606 = vld [vmem:[#allocation3 + $0xc78] sm:$0xff]
    %v2607 = vld [vmem:[#allocation3 + $0xc80] sm:$0xff]
    %v2608 = vld [vmem:[#allocation3 + $0xc88] sm:$0xff]
    %v2609 = vld [vmem:[#allocation3 + $0xc90] sm:$0xff]
    %v2610 = vld [vmem:[#allocation3 + $0xc98] sm:$0xff]
    %v2611 = vld [vmem:[#allocation3 + $0xca0] sm:$0xff]
    %v2612 = vld [vmem:[#allocation3 + $0xca8] sm:$0xff]
    %v2613 = vld [vmem:[#allocation3 + $0xcb0] sm:$0xff]
    %v2614 = vld [vmem:[#allocation3 + $0xcb8] sm:$0xff]
    %v2615 = vld [vmem:[#allocation3 + $0xcc0] sm:$0xff]
    %v2616 = vld [vmem:[#allocation3 + $0xcc8] sm:$0xff]
    %v2617 = vld [vmem:[#allocation3 + $0xcd0] sm:$0xff]
    %v2618 = vld [vmem:[#allocation3 + $0xcd8] sm:$0xff]
    %v2619 = vld [vmem:[#allocation3 + $0xce0] sm:$0xff]
    %v2620 = vld [vmem:[#allocation3 + $0xce8] sm:$0xff]
    %v2621 = vld [vmem:[#allocation3 + $0xcf0] sm:$0xff]
    %v2622 = vld [vmem:[#allocation3 + $0xcf8] sm:$0xff]
    %v2623 = vld [vmem:[#allocation3 + $0xd00] sm:$0xff]
    %v2624 = vld [vmem:[#allocation3 + $0xd08] sm:$0xff]
    %v2625 = vld [vmem:[#allocation3 + $0xd10] sm:$0xff]
    %v2626 = vld [vmem:[#allocation3 + $0xd18] sm:$0xff]
    %v2627 = vld [vmem:[#allocation3 + $0xd20] sm:$0xff]
    %v2628 = vld [vmem:[#allocation3 + $0xd28] sm:$0xff]
    %v2629 = vld [vmem:[#allocation3 + $0xd30] sm:$0xff]
    %v2630 = vld [vmem:[#allocation3 + $0xd38] sm:$0xff]
    %v2631 = vld [vmem:[#allocation3 + $0xd40] sm:$0xff]
    %v2632 = vld [vmem:[#allocation3 + $0xd48] sm:$0xff]
    %v2633 = vld [vmem:[#allocation3 + $0xd50] sm:$0xff]
    %v2634 = vld [vmem:[#allocation3 + $0xd58] sm:$0xff]
    %v2635 = vld [vmem:[#allocation3 + $0xd60] sm:$0xff]
    %v2636 = vld [vmem:[#allocation3 + $0xd68] sm:$0xff]
    %v2637 = vld [vmem:[#allocation3 + $0xd70] sm:$0xff]
    %v2638 = vld [vmem:[#allocation3 + $0xd78] sm:$0xff]
    %v2639 = vld [vmem:[#allocation3 + $0xd80] sm:$0xff]
    %v2640 = vld [vmem:[#allocation3 + $0xd88] sm:$0xff]
    %v2641 = vld [vmem:[#allocation3 + $0xd90] sm:$0xff]
    %v2642 = vld [vmem:[#allocation3 + $0xd98] sm:$0xff]
    %v2643 = vld [vmem:[#allocation3 + $0xda0] sm:$0xff]
    %v2644 = vld [vmem:[#allocation3 + $0xda8] sm:$0xff]
    %v2645 = vld [vmem:[#allocation3 + $0xdb0] sm:$0xff]
    %v2646 = vld [vmem:[#allocation3 + $0xdb8] sm:$0xff]
    %v2647 = vld [vmem:[#allocation3 + $0xdc0] sm:$0xff]
    %v2648 = vld [vmem:[#allocation3 + $0xdc8] sm:$0xff]
    %v2649 = vld [vmem:[#allocation3 + $0xdd0] sm:$0xff]
    %v2650 = vld [vmem:[#allocation3 + $0xdd8] sm:$0xff]
    %v2651 = vld [vmem:[#allocation3 + $0xde0] sm:$0xff]
    %v2652 = vld [vmem:[#allocation3 + $0xde8] sm:$0xff]
    %v2653 = vld [vmem:[#allocation3 + $0xdf0] sm:$0xff]
    %v2654 = vld [vmem:[#allocation3 + $0xdf8] sm:$0xff]
    %v2655 = vld [vmem:[#allocation3 + $0xe00] sm:$0xff]
    %v2656 = vld [vmem:[#allocation3 + $0xe08] sm:$0xff]
    %v2657 = vld [vmem:[#allocation3 + $0xe10] sm:$0xff]
    %v2658 = vld [vmem:[#allocation3 + $0xe18] sm:$0xff]
    %v2659 = vld [vmem:[#allocation3 + $0xe20] sm:$0xff]
    %v2660 = vld [vmem:[#allocation3 + $0xe28] sm:$0xff]
    %v2661 = vld [vmem:[#allocation3 + $0xe30] sm:$0xff]
    %v2662 = vld [vmem:[#allocation3 + $0xe38] sm:$0xff]
    %v2663 = vld [vmem:[#allocation3 + $0xe40] sm:$0xff]
    %v2664 = vld [vmem:[#allocation3 + $0xe48] sm:$0xff]
    %v2665 = vld [vmem:[#allocation3 + $0xe50] sm:$0xff]
    %v2666 = vld [vmem:[#allocation3 + $0xe58] sm:$0xff]
    %v2667 = vld [vmem:[#allocation3 + $0xe60] sm:$0xff]
    %v2668 = vld [vmem:[#allocation3 + $0xe68] sm:$0xff]
    %v2669 = vld [vmem:[#allocation3 + $0xe70] sm:$0xff]
    %v2670 = vld [vmem:[#allocation3 + $0xe78] sm:$0xff]
    %v2671 = vld [vmem:[#allocation3 + $0xe80] sm:$0xff]
    %v2672 = vld [vmem:[#allocation3 + $0xe88] sm:$0xff]
    %v2673 = vld [vmem:[#allocation3 + $0xe90] sm:$0xff]
    %v2674 = vld [vmem:[#allocation3 + $0xe98] sm:$0xff]
    %v2675 = vld [vmem:[#allocation3 + $0xea0] sm:$0xff]
    %v2676 = vld [vmem:[#allocation3 + $0xea8] sm:$0xff]
    %v2677 = vld [vmem:[#allocation3 + $0xeb0] sm:$0xff]
    %v2678 = vld [vmem:[#allocation3 + $0xeb8] sm:$0xff]
    %v2679 = vld [vmem:[#allocation3 + $0xec0] sm:$0xff]
    %v2680 = vld [vmem:[#allocation3 + $0xec8] sm:$0xff]
    %v2681 = vld [vmem:[#allocation3 + $0xed0] sm:$0xff]
    %v2682 = vld [vmem:[#allocation3 + $0xed8] sm:$0xff]
    %v2683 = vld [vmem:[#allocation3 + $0xee0] sm:$0xff]
    %v2684 = vld [vmem:[#allocation3 + $0xee8] sm:$0xff]
    %v2685 = vld [vmem:[#allocation3 + $0xef0] sm:$0xff]
    %v2686 = vld [vmem:[#allocation3 + $0xef8] sm:$0xff]
    %v2687 = vld [vmem:[#allocation3 + $0xf00] sm:$0xff]
    %v2688 = vld [vmem:[#allocation3 + $0xf08] sm:$0xff]
    %v2689 = vld [vmem:[#allocation3 + $0xf10] sm:$0xff]
    %v2690 = vld [vmem:[#allocation3 + $0xf18] sm:$0xff]
    %v2691 = vld [vmem:[#allocation3 + $0xf20] sm:$0xff]
    %v2692 = vld [vmem:[#allocation3 + $0xf28] sm:$0xff]
    %v2693 = vld [vmem:[#allocation3 + $0xf30] sm:$0xff]
    %v2694 = vld [vmem:[#allocation3 + $0xf38] sm:$0xff]
    %v2695 = vld [vmem:[#allocation3 + $0xf40] sm:$0xff]
    %v2696 = vld [vmem:[#allocation3 + $0xf48] sm:$0xff]
    %v2697 = vld [vmem:[#allocation3 + $0xf50] sm:$0xff]
    %v2698 = vld [vmem:[#allocation3 + $0xf58] sm:$0xff]
    %v2699 = vld [vmem:[#allocation3 + $0xf60] sm:$0xff]
    %v2700 = vld [vmem:[#allocation3 + $0xf68] sm:$0xff]
    %v2701 = vld [vmem:[#allocation3 + $0xf70] sm:$0xff]
    %v2702 = vld [vmem:[#allocation3 + $0xf78] sm:$0xff]
    %v2703 = vld [vmem:[#allocation3 + $0xf80] sm:$0xff]
    %v2704 = vld [vmem:[#allocation3 + $0xf88] sm:$0xff]
    %v2705 = vld [vmem:[#allocation3 + $0xf90] sm:$0xff]
    %v2706 = vld [vmem:[#allocation3 + $0xf98] sm:$0xff]
    %v2707 = vld [vmem:[#allocation3 + $0xfa0] sm:$0xff]
    %v2708 = vld [vmem:[#allocation3 + $0xfa8] sm:$0xff]
    %v2709 = vld [vmem:[#allocation3 + $0xfb0] sm:$0xff]
    %v2710 = vld [vmem:[#allocation3 + $0xfb8] sm:$0xff]
    %v2711 = vld [vmem:[#allocation3 + $0xfc0] sm:$0xff]
    %v2712 = vld [vmem:[#allocation3 + $0xfc8] sm:$0xff]
    %v2713 = vld [vmem:[#allocation3 + $0xfd0] sm:$0xff]
    %v2714 = vld [vmem:[#allocation3 + $0xfd8] sm:$0xff]
    %v2715 = vld [vmem:[#allocation3 + $0xfe0] sm:$0xff]
    %v2716 = vld [vmem:[#allocation3 + $0xfe8] sm:$0xff]
    %v2717 = vld [vmem:[#allocation3 + $0xff0] sm:$0xff]
    %v2718 = vld [vmem:[#allocation3 + $0xff8] sm:$0xff]
    %v2719 = vld [vmem:[#allocation3 + $0x1000] sm:$0xff]
    %v2720 = vld [vmem:[#allocation3 + $0x1008] sm:$0xff]
    %v2721 = vld [vmem:[#allocation3 + $0x1010] sm:$0xff]
    %v2722 = vld [vmem:[#allocation3 + $0x1018] sm:$0xff]
    %v2723 = vld [vmem:[#allocation3 + $0x1020] sm:$0xff]
    %v2724 = vld [vmem:[#allocation3 + $0x1028] sm:$0xff]
    %v2725 = vld [vmem:[#allocation3 + $0x1030] sm:$0xff]
    %v2726 = vld [vmem:[#allocation3 + $0x1038] sm:$0xff]
    %v2727 = vld [vmem:[#allocation3 + $0x1040] sm:$0xff]
    %v2728 = vld [vmem:[#allocation3 + $0x1048] sm:$0xff]
    %v2729 = vld [vmem:[#allocation3 + $0x1050] sm:$0xff]
    %v2730 = vld [vmem:[#allocation3 + $0x1058] sm:$0xff]
    %v2731 = vld [vmem:[#allocation3 + $0x1060] sm:$0xff]
    %v2732 = vld [vmem:[#allocation3 + $0x1068] sm:$0xff]
    %v2733 = vld [vmem:[#allocation3 + $0x1070] sm:$0xff]
    %v2734 = vld [vmem:[#allocation3 + $0x1078] sm:$0xff]
    %v2735 = vld [vmem:[#allocation3 + $0x1080] sm:$0xff]
    %v2736 = vld [vmem:[#allocation3 + $0x1088] sm:$0xff]
    %v2737 = vld [vmem:[#allocation3 + $0x1090] sm:$0xff]
    %v2738 = vld [vmem:[#allocation3 + $0x1098] sm:$0xff]
    %v2739 = vld [vmem:[#allocation3 + $0x10a0] sm:$0xff]
    %v2740 = vld [vmem:[#allocation3 + $0x10a8] sm:$0xff]
    %v2741 = vld [vmem:[#allocation3 + $0x10b0] sm:$0xff]
    %v2742 = vld [vmem:[#allocation3 + $0x10b8] sm:$0xff]
    %v2743 = vld [vmem:[#allocation3 + $0x10c0] sm:$0xff]
    %v2744 = vld [vmem:[#allocation3 + $0x10c8] sm:$0xff]
    %v2745 = vld [vmem:[#allocation3 + $0x10d0] sm:$0xff]
    %v2746 = vld [vmem:[#allocation3 + $0x10d8] sm:$0xff]
    %v2747 = vld [vmem:[#allocation3 + $0x10e0] sm:$0xff]
    %v2748 = vld [vmem:[#allocation3 + $0x10e8] sm:$0xff]
    %v2749 = vld [vmem:[#allocation3 + $0x10f0] sm:$0xff]
    %v2750 = vld [vmem:[#allocation3 + $0x10f8] sm:$0xff]
    %v2751 = vld [vmem:[#allocation3 + $0x1100] sm:$0xff]
    %v2752 = vld [vmem:[#allocation3 + $0x1108] sm:$0xff]
    %v2753 = vld [vmem:[#allocation3 + $0x1110] sm:$0xff]
    %v2754 = vld [vmem:[#allocation3 + $0x1118] sm:$0xff]
    %v2755 = vld [vmem:[#allocation3 + $0x1120] sm:$0xff]
    %v2756 = vld [vmem:[#allocation3 + $0x1128] sm:$0xff]
    %v2757 = vld [vmem:[#allocation3 + $0x1130] sm:$0xff]
    %v2758 = vld [vmem:[#allocation3 + $0x1138] sm:$0xff]
    %v2759 = vld [vmem:[#allocation3 + $0x1140] sm:$0xff]
    %v2760 = vld [vmem:[#allocation3 + $0x1148] sm:$0xff]
    %v2761 = vld [vmem:[#allocation3 + $0x1150] sm:$0xff]
    %v2762 = vld [vmem:[#allocation3 + $0x1158] sm:$0xff]
    %v2763 = vld [vmem:[#allocation3 + $0x1160] sm:$0xff]
    %v2764 = vld [vmem:[#allocation3 + $0x1168] sm:$0xff]
    %v2765 = vld [vmem:[#allocation3 + $0x1170] sm:$0xff]
    %v2766 = vld [vmem:[#allocation3 + $0x1178] sm:$0xff]
    %v2767 = vld [vmem:[#allocation3 + $0x1180] sm:$0xff]
    %v2768 = vld [vmem:[#allocation3 + $0x1188] sm:$0xff]
    %v2769 = vld [vmem:[#allocation3 + $0x1190] sm:$0xff]
    %v2770 = vld [vmem:[#allocation3 + $0x1198] sm:$0xff]
    %v2771 = vld [vmem:[#allocation3 + $0x11a0] sm:$0xff]
    %v2772 = vld [vmem:[#allocation3 + $0x11a8] sm:$0xff]
    %v2773 = vld [vmem:[#allocation3 + $0x11b0] sm:$0xff]
    %v2774 = vld [vmem:[#allocation3 + $0x11b8] sm:$0xff]
    %v2775 = vld [vmem:[#allocation3 + $0x11c0] sm:$0xff]
    %v2776 = vld [vmem:[#allocation3 + $0x11c8] sm:$0xff]
    %v2777 = vld [vmem:[#allocation3 + $0x11d0] sm:$0xff]
    %v2778 = vld [vmem:[#allocation3 + $0x11d8] sm:$0xff]
    %v2779 = vld [vmem:[#allocation3 + $0x11e0] sm:$0xff]
    %v2780 = vld [vmem:[#allocation3 + $0x11e8] sm:$0xff]
    %v2781 = vld [vmem:[#allocation3 + $0x11f0] sm:$0xff]
    %v2782 = vld [vmem:[#allocation3 + $0x11f8] sm:$0xff]
    %v2783 = vld [vmem:[#allocation3 + $0x1200] sm:$0xff]
    %v2784 = vld [vmem:[#allocation3 + $0x1208] sm:$0xff]
    %v2785 = vld [vmem:[#allocation3 + $0x1210] sm:$0xff]
    %v2786 = vld [vmem:[#allocation3 + $0x1218] sm:$0xff]
    %v2787 = vld [vmem:[#allocation3 + $0x1220] sm:$0xff]
    %v2788 = vld [vmem:[#allocation3 + $0x1228] sm:$0xff]
    %v2789 = vld [vmem:[#allocation3 + $0x1230] sm:$0xff]
    %v2790 = vld [vmem:[#allocation3 + $0x1238] sm:$0xff]
    %v2791 = vld [vmem:[#allocation3 + $0x1240] sm:$0xff]
    %v2792 = vld [vmem:[#allocation3 + $0x1248] sm:$0xff]
    %v2793 = vld [vmem:[#allocation3 + $0x1250] sm:$0xff]
    %v2794 = vld [vmem:[#allocation3 + $0x1258] sm:$0xff]
    %v2795 = vld [vmem:[#allocation3 + $0x1260] sm:$0xff]
    %v2796 = vld [vmem:[#allocation3 + $0x1268] sm:$0xff]
    %v2797 = vld [vmem:[#allocation3 + $0x1270] sm:$0xff]
    %v2798 = vld [vmem:[#allocation3 + $0x1278] sm:$0xff]
    %v2799 = vld [vmem:[#allocation3 + $0x1280] sm:$0xff]
    %v2800 = vld [vmem:[#allocation3 + $0x1288] sm:$0xff]
    %v2801 = vld [vmem:[#allocation3 + $0x1290] sm:$0xff]
    %v2802 = vld [vmem:[#allocation3 + $0x1298] sm:$0xff]
    %v2803 = vld [vmem:[#allocation3 + $0x12a0] sm:$0xff]
    %v2804 = vld [vmem:[#allocation3 + $0x12a8] sm:$0xff]
    %v2805 = vld [vmem:[#allocation3 + $0x12b0] sm:$0xff]
    %v2806 = vld [vmem:[#allocation3 + $0x12b8] sm:$0xff]
    %v2807 = vld [vmem:[#allocation3 + $0x12c0] sm:$0xff]
    %v2808 = vld [vmem:[#allocation3 + $0x12c8] sm:$0xff]
    %v2809 = vld [vmem:[#allocation3 + $0x12d0] sm:$0xff]
    %v2810 = vld [vmem:[#allocation3 + $0x12d8] sm:$0xff]
    %v2811 = vld [vmem:[#allocation3 + $0x12e0] sm:$0xff]
    %v2812 = vld [vmem:[#allocation3 + $0x12e8] sm:$0xff]
    %v2813 = vld [vmem:[#allocation3 + $0x12f0] sm:$0xff]
    %v2814 = vld [vmem:[#allocation3 + $0x12f8] sm:$0xff]
    %v2815 = vld [vmem:[#allocation3 + $0x1300] sm:$0xff]
    %v2816 = vld [vmem:[#allocation3 + $0x1308] sm:$0xff]
    %v2817 = vld [vmem:[#allocation3 + $0x1310] sm:$0xff]
    %v2818 = vld [vmem:[#allocation3 + $0x1318] sm:$0xff]
    %v2819 = vld [vmem:[#allocation3 + $0x1320] sm:$0xff]
    %v2820 = vld [vmem:[#allocation3 + $0x1328] sm:$0xff]
    %v2821 = vld [vmem:[#allocation3 + $0x1330] sm:$0xff]
    %v2822 = vld [vmem:[#allocation3 + $0x1338] sm:$0xff]
    %v2823 = vld [vmem:[#allocation3 + $0x1340] sm:$0xff]
    %v2824 = vld [vmem:[#allocation3 + $0x1348] sm:$0xff]
    %v2825 = vld [vmem:[#allocation3 + $0x1350] sm:$0xff]
    %v2826 = vld [vmem:[#allocation3 + $0x1358] sm:$0xff]
    %v2827 = vld [vmem:[#allocation3 + $0x1360] sm:$0xff]
    %v2828 = vld [vmem:[#allocation3 + $0x1368] sm:$0xff]
    %v2829 = vld [vmem:[#allocation3 + $0x1370] sm:$0xff]
    %v2830 = vld [vmem:[#allocation3 + $0x1378] sm:$0xff]
    %v2831 = vld [vmem:[#allocation3 + $0x1380] sm:$0xff]
    %v2832 = vld [vmem:[#allocation3 + $0x1388] sm:$0xff]
    %v2833 = vld [vmem:[#allocation3 + $0x1390] sm:$0xff]
    %v2834 = vld [vmem:[#allocation3 + $0x1398] sm:$0xff]
    %v2835 = vld [vmem:[#allocation3 + $0x13a0] sm:$0xff]
    %v2836 = vld [vmem:[#allocation3 + $0x13a8] sm:$0xff]
    %v2837 = vld [vmem:[#allocation3 + $0x13b0] sm:$0xff]
    %v2838 = vld [vmem:[#allocation3 + $0x13b8] sm:$0xff]
    %v2839 = vld [vmem:[#allocation3 + $0x13c0] sm:$0xff]
    %v2840 = vld [vmem:[#allocation3 + $0x13c8] sm:$0xff]
    %v2841 = vld [vmem:[#allocation3 + $0x13d0] sm:$0xff]
    %v2842 = vld [vmem:[#allocation3 + $0x13d8] sm:$0xff]
    %v2843 = vld [vmem:[#allocation3 + $0x13e0] sm:$0xff]
    %v2844 = vld [vmem:[#allocation3 + $0x13e8] sm:$0xff]
    %v2845 = vld [vmem:[#allocation3 + $0x13f0] sm:$0xff]
    %v2846 = vld [vmem:[#allocation3 + $0x13f8] sm:$0xff]
    %v2847 = vld [vmem:[#allocation3 + $0x1400] sm:$0xff]
    %v2848 = vld [vmem:[#allocation3 + $0x1408] sm:$0xff]
    %v2849 = vld [vmem:[#allocation3 + $0x1410] sm:$0xff]
    %v2850 = vld [vmem:[#allocation3 + $0x1418] sm:$0xff]
    %v2851 = vld [vmem:[#allocation3 + $0x1420] sm:$0xff]
    %v2852 = vld [vmem:[#allocation3 + $0x1428] sm:$0xff]
    %v2853 = vld [vmem:[#allocation3 + $0x1430] sm:$0xff]
    %v2854 = vld [vmem:[#allocation3 + $0x1438] sm:$0xff]
    %v2855 = vld [vmem:[#allocation3 + $0x1440] sm:$0xff]
    %v2856 = vld [vmem:[#allocation3 + $0x1448] sm:$0xff]
    %v2857 = vld [vmem:[#allocation3 + $0x1450] sm:$0xff]
    %v2858 = vld [vmem:[#allocation3 + $0x1458] sm:$0xff]
    %v2859 = vld [vmem:[#allocation3 + $0x1460] sm:$0xff]
    %v2860 = vld [vmem:[#allocation3 + $0x1468] sm:$0xff]
    %v2861 = vld [vmem:[#allocation3 + $0x1470] sm:$0xff]
    %v2862 = vld [vmem:[#allocation3 + $0x1478] sm:$0xff]
    %v2863 = vld [vmem:[#allocation3 + $0x1480] sm:$0xff]
    %v2864 = vld [vmem:[#allocation3 + $0x1488] sm:$0xff]
    %v2865 = vld [vmem:[#allocation3 + $0x1490] sm:$0xff]
    %v2866 = vld [vmem:[#allocation3 + $0x1498] sm:$0xff]
    %v2867 = vld [vmem:[#allocation3 + $0x14a0] sm:$0xff]
    %v2868 = vld [vmem:[#allocation3 + $0x14a8] sm:$0xff]
    %v2869 = vld [vmem:[#allocation3 + $0x14b0] sm:$0xff]
    %v2870 = vld [vmem:[#allocation3 + $0x14b8] sm:$0xff]
    %v2871 = vld [vmem:[#allocation3 + $0x14c0] sm:$0xff]
    %v2872 = vld [vmem:[#allocation3 + $0x14c8] sm:$0xff]
    %v2873 = vld [vmem:[#allocation3 + $0x14d0] sm:$0xff]
    %v2874 = vld [vmem:[#allocation3 + $0x14d8] sm:$0xff]
    %v2875 = vld [vmem:[#allocation3 + $0x14e0] sm:$0xff]
    %v2876 = vld [vmem:[#allocation3 + $0x14e8] sm:$0xff]
    %v2877 = vld [vmem:[#allocation3 + $0x14f0] sm:$0xff]
    %v2878 = vld [vmem:[#allocation3 + $0x14f8] sm:$0xff]
    %v2879 = vld [vmem:[#allocation3 + $0x1500] sm:$0xff]
    %v2880 = vld [vmem:[#allocation3 + $0x1508] sm:$0xff]
    %v2881 = vld [vmem:[#allocation3 + $0x1510] sm:$0xff]
    %v2882 = vld [vmem:[#allocation3 + $0x1518] sm:$0xff]
    %v2883 = vld [vmem:[#allocation3 + $0x1520] sm:$0xff]
    %v2884 = vld [vmem:[#allocation3 + $0x1528] sm:$0xff]
    %v2885 = vld [vmem:[#allocation3 + $0x1530] sm:$0xff]
    %v2886 = vld [vmem:[#allocation3 + $0x1538] sm:$0xff]
    %v2887 = vld [vmem:[#allocation3 + $0x1540] sm:$0xff]
    %v2888 = vld [vmem:[#allocation3 + $0x1548] sm:$0xff]
    %v2889 = vld [vmem:[#allocation3 + $0x1550] sm:$0xff]
    %v2890 = vld [vmem:[#allocation3 + $0x1558] sm:$0xff]
    %v2891 = vld [vmem:[#allocation3 + $0x1560] sm:$0xff]
    %v2892 = vld [vmem:[#allocation3 + $0x1568] sm:$0xff]
    %v2893 = vld [vmem:[#allocation3 + $0x1570] sm:$0xff]
    %v2894 = vld [vmem:[#allocation3 + $0x1578] sm:$0xff]
    %v2895 = vld [vmem:[#allocation3 + $0x1580] sm:$0xff]
    %v2896 = vld [vmem:[#allocation3 + $0x1588] sm:$0xff]
    %v2897 = vld [vmem:[#allocation3 + $0x1590] sm:$0xff]
    %v2898 = vld [vmem:[#allocation3 + $0x1598] sm:$0xff]
    %v2899 = vld [vmem:[#allocation3 + $0x15a0] sm:$0xff]
    %v2900 = vld [vmem:[#allocation3 + $0x15a8] sm:$0xff]
    %v2901 = vld [vmem:[#allocation3 + $0x15b0] sm:$0xff]
    %v2902 = vld [vmem:[#allocation3 + $0x15b8] sm:$0xff]
    %v2903 = vld [vmem:[#allocation3 + $0x15c0] sm:$0xff]
    %v2904 = vld [vmem:[#allocation3 + $0x15c8] sm:$0xff]
    %v2905 = vld [vmem:[#allocation3 + $0x15d0] sm:$0xff]
    %v2906 = vld [vmem:[#allocation3 + $0x15d8] sm:$0xff]
    %v2907 = vld [vmem:[#allocation3 + $0x15e0] sm:$0xff]
    %v2908 = vld [vmem:[#allocation3 + $0x15e8] sm:$0xff]
    %v2909 = vld [vmem:[#allocation3 + $0x15f0] sm:$0xff]
    %v2910 = vld [vmem:[#allocation3 + $0x15f8] sm:$0xff]
    %v2911 = vld [vmem:[#allocation3 + $0x1600] sm:$0xff]
    %v2912 = vld [vmem:[#allocation3 + $0x1608] sm:$0xff]
    %v2913 = vld [vmem:[#allocation3 + $0x1610] sm:$0xff]
    %v2914 = vld [vmem:[#allocation3 + $0x1618] sm:$0xff]
    %v2915 = vld [vmem:[#allocation3 + $0x1620] sm:$0xff]
    %v2916 = vld [vmem:[#allocation3 + $0x1628] sm:$0xff]
    %v2917 = vld [vmem:[#allocation3 + $0x1630] sm:$0xff]
    %v2918 = vld [vmem:[#allocation3 + $0x1638] sm:$0xff]
    %v2919 = vld [vmem:[#allocation3 + $0x1640] sm:$0xff]
    %v2920 = vld [vmem:[#allocation3 + $0x1648] sm:$0xff]
    %v2921 = vld [vmem:[#allocation3 + $0x1650] sm:$0xff]
    %v2922 = vld [vmem:[#allocation3 + $0x1658] sm:$0xff]
    %v2923 = vld [vmem:[#allocation3 + $0x1660] sm:$0xff]
    %v2924 = vld [vmem:[#allocation3 + $0x1668] sm:$0xff]
    %v2925 = vld [vmem:[#allocation3 + $0x1670] sm:$0xff]
    %v2926 = vld [vmem:[#allocation3 + $0x1678] sm:$0xff]
    %v2927 = vld [vmem:[#allocation3 + $0x1680] sm:$0xff]
    %v2928 = vld [vmem:[#allocation3 + $0x1688] sm:$0xff]
    %v2929 = vld [vmem:[#allocation3 + $0x1690] sm:$0xff]
    %v2930 = vld [vmem:[#allocation3 + $0x1698] sm:$0xff]
    %v2931 = vld [vmem:[#allocation3 + $0x16a0] sm:$0xff]
    %v2932 = vld [vmem:[#allocation3 + $0x16a8] sm:$0xff]
    %v2933 = vld [vmem:[#allocation3 + $0x16b0] sm:$0xff]
    %v2934 = vld [vmem:[#allocation3 + $0x16b8] sm:$0xff]
    %v2935 = vld [vmem:[#allocation3 + $0x16c0] sm:$0xff]
    %v2936 = vld [vmem:[#allocation3 + $0x16c8] sm:$0xff]
    %v2937 = vld [vmem:[#allocation3 + $0x16d0] sm:$0xff]
    %v2938 = vld [vmem:[#allocation3 + $0x16d8] sm:$0xff]
    %v2939 = vld [vmem:[#allocation3 + $0x16e0] sm:$0xff]
    %v2940 = vld [vmem:[#allocation3 + $0x16e8] sm:$0xff]
    %v2941 = vld [vmem:[#allocation3 + $0x16f0] sm:$0xff]
    %v2942 = vld [vmem:[#allocation3 + $0x16f8] sm:$0xff]
    %v2943 = vld [vmem:[#allocation3 + $0x1700] sm:$0xff]
    %v2944 = vld [vmem:[#allocation3 + $0x1708] sm:$0xff]
    %v2945 = vld [vmem:[#allocation3 + $0x1710] sm:$0xff]
    %v2946 = vld [vmem:[#allocation3 + $0x1718] sm:$0xff]
    %v2947 = vld [vmem:[#allocation3 + $0x1720] sm:$0xff]
    %v2948 = vld [vmem:[#allocation3 + $0x1728] sm:$0xff]
    %v2949 = vld [vmem:[#allocation3 + $0x1730] sm:$0xff]
    %v2950 = vld [vmem:[#allocation3 + $0x1738] sm:$0xff]
    %v2951 = vld [vmem:[#allocation3 + $0x1740] sm:$0xff]
    %v2952 = vld [vmem:[#allocation3 + $0x1748] sm:$0xff]
    %v2953 = vld [vmem:[#allocation3 + $0x1750] sm:$0xff]
    %v2954 = vld [vmem:[#allocation3 + $0x1758] sm:$0xff]
    %v2955 = vld [vmem:[#allocation3 + $0x1760] sm:$0xff]
    %v2956 = vld [vmem:[#allocation3 + $0x1768] sm:$0xff]
    %v2957 = vld [vmem:[#allocation3 + $0x1770] sm:$0xff]
    %v2958 = vld [vmem:[#allocation3 + $0x1778] sm:$0xff]
    %v2959 = vld [vmem:[#allocation3 + $0x1780] sm:$0xff]
    %v2960 = vld [vmem:[#allocation3 + $0x1788] sm:$0xff]
    %v2961 = vld [vmem:[#allocation3 + $0x1790] sm:$0xff]
    %v2962 = vld [vmem:[#allocation3 + $0x1798] sm:$0xff]
    %v2963 = vld [vmem:[#allocation3 + $0x17a0] sm:$0xff]
    %v2964 = vld [vmem:[#allocation3 + $0x17a8] sm:$0xff]
    %v2965 = vld [vmem:[#allocation3 + $0x17b0] sm:$0xff]
    %v2966 = vld [vmem:[#allocation3 + $0x17b8] sm:$0xff]
    %v2967 = vld [vmem:[#allocation3 + $0x17c0] sm:$0xff]
    %v2968 = vld [vmem:[#allocation3 + $0x17c8] sm:$0xff]
    %v2969 = vld [vmem:[#allocation3 + $0x17d0] sm:$0xff]
    %v2970 = vld [vmem:[#allocation3 + $0x17d8] sm:$0xff]
    %v2971 = vld [vmem:[#allocation3 + $0x17e0] sm:$0xff]
    %v2972 = vld [vmem:[#allocation3 + $0x17e8] sm:$0xff]
    %v2973 = vld [vmem:[#allocation3 + $0x17f0] sm:$0xff]
    %v2974 = vld [vmem:[#allocation3 + $0x17f8] sm:$0xff]
    %v2975 = vld [vmem:[#allocation3 + $0x1800] sm:$0xff]
    %v2976 = vld [vmem:[#allocation3 + $0x1808] sm:$0xff]
    %v2977 = vld [vmem:[#allocation3 + $0x1810] sm:$0xff]
    %v2978 = vld [vmem:[#allocation3 + $0x1818] sm:$0xff]
    %v2979 = vld [vmem:[#allocation3 + $0x1820] sm:$0xff]
    %v2980 = vld [vmem:[#allocation3 + $0x1828] sm:$0xff]
    %v2981 = vld [vmem:[#allocation3 + $0x1830] sm:$0xff]
    %v2982 = vld [vmem:[#allocation3 + $0x1838] sm:$0xff]
    %v2983 = vld [vmem:[#allocation3 + $0x1840] sm:$0xff]
    %v2984 = vld [vmem:[#allocation3 + $0x1848] sm:$0xff]
    %v2985 = vld [vmem:[#allocation3 + $0x1850] sm:$0xff]
    %v2986 = vld [vmem:[#allocation3 + $0x1858] sm:$0xff]
    %v2987 = vld [vmem:[#allocation3 + $0x1860] sm:$0xff]
    %v2988 = vld [vmem:[#allocation3 + $0x1868] sm:$0xff]
    %v2989 = vld [vmem:[#allocation3 + $0x1870] sm:$0xff]
    %v2990 = vld [vmem:[#allocation3 + $0x1878] sm:$0xff]
    %v2991 = vld [vmem:[#allocation3 + $0x1880] sm:$0xff]
    %v2992 = vld [vmem:[#allocation3 + $0x1888] sm:$0xff]
    %v2993 = vld [vmem:[#allocation3 + $0x1890] sm:$0xff]
    %v2994 = vld [vmem:[#allocation3 + $0x1898] sm:$0xff]
    %v2995 = vld [vmem:[#allocation3 + $0x18a0] sm:$0xff]
    %v2996 = vld [vmem:[#allocation3 + $0x18a8] sm:$0xff]
    %v2997 = vld [vmem:[#allocation3 + $0x18b0] sm:$0xff]
    %v2998 = vld [vmem:[#allocation3 + $0x18b8] sm:$0xff]
    %v2999 = vld [vmem:[#allocation3 + $0x18c0] sm:$0xff]
    %v3000 = vld [vmem:[#allocation3 + $0x18c8] sm:$0xff]
    %v3001 = vld [vmem:[#allocation3 + $0x18d0] sm:$0xff]
    %v3002 = vld [vmem:[#allocation3 + $0x18d8] sm:$0xff]
    %v3003 = vld [vmem:[#allocation3 + $0x18e0] sm:$0xff]
    %v3004 = vld [vmem:[#allocation3 + $0x18e8] sm:$0xff]
    %v3005 = vld [vmem:[#allocation3 + $0x18f0] sm:$0xff]
    %v3006 = vld [vmem:[#allocation3 + $0x18f8] sm:$0xff]
    %v3007 = vld [vmem:[#allocation3 + $0x1900] sm:$0xff]
    %v3008 = vld [vmem:[#allocation3 + $0x1908] sm:$0xff]
    %v3009 = vld [vmem:[#allocation3 + $0x1910] sm:$0xff]
    %v3010 = vld [vmem:[#allocation3 + $0x1918] sm:$0xff]
    %v3011 = vld [vmem:[#allocation3 + $0x1920] sm:$0xff]
    %v3012 = vld [vmem:[#allocation3 + $0x1928] sm:$0xff]
    %v3013 = vld [vmem:[#allocation3 + $0x1930] sm:$0xff]
    %v3014 = vld [vmem:[#allocation3 + $0x1938] sm:$0xff]
    %v3015 = vld [vmem:[#allocation3 + $0x1940] sm:$0xff]
    %v3016 = vld [vmem:[#allocation3 + $0x1948] sm:$0xff]
    %v3017 = vld [vmem:[#allocation3 + $0x1950] sm:$0xff]
    %v3018 = vld [vmem:[#allocation3 + $0x1958] sm:$0xff]
    %v3019 = vld [vmem:[#allocation3 + $0x1960] sm:$0xff]
    %v3020 = vld [vmem:[#allocation3 + $0x1968] sm:$0xff]
    %v3021 = vld [vmem:[#allocation3 + $0x1970] sm:$0xff]
    %v3022 = vld [vmem:[#allocation3 + $0x1978] sm:$0xff]
    %v3023 = vld [vmem:[#allocation3 + $0x1980] sm:$0xff]
    %v3024 = vld [vmem:[#allocation3 + $0x1988] sm:$0xff]
    %v3025 = vld [vmem:[#allocation3 + $0x1990] sm:$0xff]
    %v3026 = vld [vmem:[#allocation3 + $0x1998] sm:$0xff]
    %v3027 = vld [vmem:[#allocation3 + $0x19a0] sm:$0xff]
    %v3028 = vld [vmem:[#allocation3 + $0x19a8] sm:$0xff]
    %v3029 = vld [vmem:[#allocation3 + $0x19b0] sm:$0xff]
    %v3030 = vld [vmem:[#allocation3 + $0x19b8] sm:$0xff]
    %v3031 = vld [vmem:[#allocation3 + $0x19c0] sm:$0xff]
    %v3032 = vld [vmem:[#allocation3 + $0x19c8] sm:$0xff]
    %v3033 = vld [vmem:[#allocation3 + $0x19d0] sm:$0xff]
    %v3034 = vld [vmem:[#allocation3 + $0x19d8] sm:$0xff]
    %v3035 = vld [vmem:[#allocation3 + $0x19e0] sm:$0xff]
    %v3036 = vld [vmem:[#allocation3 + $0x19e8] sm:$0xff]
    %v3037 = vld [vmem:[#allocation3 + $0x19f0] sm:$0xff]
    %v3038 = vld [vmem:[#allocation3 + $0x19f8] sm:$0xff]
    %v3039 = vld [vmem:[#allocation3 + $0x1a00] sm:$0xff]
    %v3040 = vld [vmem:[#allocation3 + $0x1a08] sm:$0xff]
    %v3041 = vld [vmem:[#allocation3 + $0x1a10] sm:$0xff]
    %v3042 = vld [vmem:[#allocation3 + $0x1a18] sm:$0xff]
    %v3043 = vld [vmem:[#allocation3 + $0x1a20] sm:$0xff]
    %v3044 = vld [vmem:[#allocation3 + $0x1a28] sm:$0xff]
    %v3045 = vld [vmem:[#allocation3 + $0x1a30] sm:$0xff]
    %v3046 = vld [vmem:[#allocation3 + $0x1a38] sm:$0xff]
    %v3047 = vld [vmem:[#allocation3 + $0x1a40] sm:$0xff]
    %v3048 = vld [vmem:[#allocation3 + $0x1a48] sm:$0xff]
    %v3049 = vld [vmem:[#allocation3 + $0x1a50] sm:$0xff]
    %v3050 = vld [vmem:[#allocation3 + $0x1a58] sm:$0xff]
    %v3051 = vld [vmem:[#allocation3 + $0x1a60] sm:$0xff]
    %v3052 = vld [vmem:[#allocation3 + $0x1a68] sm:$0xff]
    %v3053 = vld [vmem:[#allocation3 + $0x1a70] sm:$0xff]
    %v3054 = vld [vmem:[#allocation3 + $0x1a78] sm:$0xff]
    %v3055 = vld [vmem:[#allocation3 + $0x1a80] sm:$0xff]
    %v3056 = vld [vmem:[#allocation3 + $0x1a88] sm:$0xff]
    %v3057 = vld [vmem:[#allocation3 + $0x1a90] sm:$0xff]
    %v3058 = vld [vmem:[#allocation3 + $0x1a98] sm:$0xff]
    %v3059 = vld [vmem:[#allocation3 + $0x1aa0] sm:$0xff]
    %v3060 = vld [vmem:[#allocation3 + $0x1aa8] sm:$0xff]
    %v3061 = vld [vmem:[#allocation3 + $0x1ab0] sm:$0xff]
    %v3062 = vld [vmem:[#allocation3 + $0x1ab8] sm:$0xff]
    %v3063 = vld [vmem:[#allocation3 + $0x1ac0] sm:$0xff]
    %v3064 = vld [vmem:[#allocation3 + $0x1ac8] sm:$0xff]
    %v3065 = vld [vmem:[#allocation3 + $0x1ad0] sm:$0xff]
    %v3066 = vld [vmem:[#allocation3 + $0x1ad8] sm:$0xff]
    %v3067 = vld [vmem:[#allocation3 + $0x1ae0] sm:$0xff]
    %v3068 = vld [vmem:[#allocation3 + $0x1ae8] sm:$0xff]
    %v3069 = vld [vmem:[#allocation3 + $0x1af0] sm:$0xff]
    %v3070 = vld [vmem:[#allocation3 + $0x1af8] sm:$0xff]
    %v3071 = vld [vmem:[#allocation3 + $0x1b00] sm:$0xff]
    %v3072 = vld [vmem:[#allocation3 + $0x1b08] sm:$0xff]
    %v3073 = vld [vmem:[#allocation3 + $0x1b10] sm:$0xff]
    %v3074 = vld [vmem:[#allocation3 + $0x1b18] sm:$0xff]
    %v3075 = vld [vmem:[#allocation3 + $0x1b20] sm:$0xff]
    %v3076 = vld [vmem:[#allocation3 + $0x1b28] sm:$0xff]
    %v3077 = vld [vmem:[#allocation3 + $0x1b30] sm:$0xff]
    %v3078 = vld [vmem:[#allocation3 + $0x1b38] sm:$0xff]
    %v3079 = vld [vmem:[#allocation3 + $0x1b40] sm:$0xff]
    %v3080 = vld [vmem:[#allocation3 + $0x1b48] sm:$0xff]
    %v3081 = vld [vmem:[#allocation3 + $0x1b50] sm:$0xff]
    %v3082 = vld [vmem:[#allocation3 + $0x1b58] sm:$0xff]
    %v3083 = vld [vmem:[#allocation3 + $0x1b60] sm:$0xff]
    %v3084 = vld [vmem:[#allocation3 + $0x1b68] sm:$0xff]
    %v3085 = vld [vmem:[#allocation3 + $0x1b70] sm:$0xff]
    %v3086 = vld [vmem:[#allocation3 + $0x1b78] sm:$0xff]
    %v3087 = vld [vmem:[#allocation3 + $0x1b80] sm:$0xff]
    %v3088 = vld [vmem:[#allocation3 + $0x1b88] sm:$0xff]
    %v3089 = vld [vmem:[#allocation3 + $0x1b90] sm:$0xff]
    %v3090 = vld [vmem:[#allocation3 + $0x1b98] sm:$0xff]
    %v3091 = vld [vmem:[#allocation3 + $0x1ba0] sm:$0xff]
    %v3092 = vld [vmem:[#allocation3 + $0x1ba8] sm:$0xff]
    %v3093 = vld [vmem:[#allocation3 + $0x1bb0] sm:$0xff]
    %v3094 = vld [vmem:[#allocation3 + $0x1bb8] sm:$0xff]
    %v3095 = vld [vmem:[#allocation3 + $0x1bc0] sm:$0xff]
    %v3096 = vld [vmem:[#allocation3 + $0x1bc8] sm:$0xff]
    %v3097 = vld [vmem:[#allocation3 + $0x1bd0] sm:$0xff]
    %v3098 = vld [vmem:[#allocation3 + $0x1bd8] sm:$0xff]
    %v3099 = vld [vmem:[#allocation3 + $0x1be0] sm:$0xff]
    %v3100 = vld [vmem:[#allocation3 + $0x1be8] sm:$0xff]
    %v3101 = vld [vmem:[#allocation3 + $0x1bf0] sm:$0xff]
    %v3102 = vld [vmem:[#allocation3 + $0x1bf8] sm:$0xff]
    %v3103 = vld [vmem:[#allocation3 + $0x1c00] sm:$0xff]
    %v3104 = vld [vmem:[#allocation3 + $0x1c08] sm:$0xff]
    %v3105 = vld [vmem:[#allocation3 + $0x1c10] sm:$0xff]
    %v3106 = vld [vmem:[#allocation3 + $0x1c18] sm:$0xff]
    %v3107 = vld [vmem:[#allocation3 + $0x1c20] sm:$0xff]
    %v3108 = vld [vmem:[#allocation3 + $0x1c28] sm:$0xff]
    %v3109 = vld [vmem:[#allocation3 + $0x1c30] sm:$0xff]
    %v3110 = vld [vmem:[#allocation3 + $0x1c38] sm:$0xff]
    %v3111 = vld [vmem:[#allocation3 + $0x1c40] sm:$0xff]
    %v3112 = vld [vmem:[#allocation3 + $0x1c48] sm:$0xff]
    %v3113 = vld [vmem:[#allocation3 + $0x1c50] sm:$0xff]
    %v3114 = vld [vmem:[#allocation3 + $0x1c58] sm:$0xff]
    %v3115 = vld [vmem:[#allocation3 + $0x1c60] sm:$0xff]
    %v3116 = vld [vmem:[#allocation3 + $0x1c68] sm:$0xff]
    %v3117 = vld [vmem:[#allocation3 + $0x1c70] sm:$0xff]
    %v3118 = vld [vmem:[#allocation3 + $0x1c78] sm:$0xff]
    %v3119 = vld [vmem:[#allocation3 + $0x1c80] sm:$0xff]
    %v3120 = vld [vmem:[#allocation3 + $0x1c88] sm:$0xff]
    %v3121 = vld [vmem:[#allocation3 + $0x1c90] sm:$0xff]
    %v3122 = vld [vmem:[#allocation3 + $0x1c98] sm:$0xff]
    %v3123 = vld [vmem:[#allocation3 + $0x1ca0] sm:$0xff]
    %v3124 = vld [vmem:[#allocation3 + $0x1ca8] sm:$0xff]
    %v3125 = vld [vmem:[#allocation3 + $0x1cb0] sm:$0xff]
    %v3126 = vld [vmem:[#allocation3 + $0x1cb8] sm:$0xff]
    %v3127 = vld [vmem:[#allocation3 + $0x1cc0] sm:$0xff]
    %v3128 = vld [vmem:[#allocation3 + $0x1cc8] sm:$0xff]
    %v3129 = vld [vmem:[#allocation3 + $0x1cd0] sm:$0xff]
    %v3130 = vld [vmem:[#allocation3 + $0x1cd8] sm:$0xff]
    %v3131 = vld [vmem:[#allocation3 + $0x1ce0] sm:$0xff]
    %v3132 = vld [vmem:[#allocation3 + $0x1ce8] sm:$0xff]
    %v3133 = vld [vmem:[#allocation3 + $0x1cf0] sm:$0xff]
    %v3134 = vld [vmem:[#allocation3 + $0x1cf8] sm:$0xff]
    %v3135 = vld [vmem:[#allocation3 + $0x1d00] sm:$0xff]
    %v3136 = vld [vmem:[#allocation3 + $0x1d08] sm:$0xff]
    %v3137 = vld [vmem:[#allocation3 + $0x1d10] sm:$0xff]
    %v3138 = vld [vmem:[#allocation3 + $0x1d18] sm:$0xff]
    %v3139 = vld [vmem:[#allocation3 + $0x1d20] sm:$0xff]
    %v3140 = vld [vmem:[#allocation3 + $0x1d28] sm:$0xff]
    %v3141 = vld [vmem:[#allocation3 + $0x1d30] sm:$0xff]
    %v3142 = vld [vmem:[#allocation3 + $0x1d38] sm:$0xff]
    %v3143 = vld [vmem:[#allocation3 + $0x1d40] sm:$0xff]
    %v3144 = vld [vmem:[#allocation3 + $0x1d48] sm:$0xff]
    %v3145 = vld [vmem:[#allocation3 + $0x1d50] sm:$0xff]
    %v3146 = vld [vmem:[#allocation3 + $0x1d58] sm:$0xff]
    %v3147 = vld [vmem:[#allocation3 + $0x1d60] sm:$0xff]
    %v3148 = vld [vmem:[#allocation3 + $0x1d68] sm:$0xff]
    %v3149 = vld [vmem:[#allocation3 + $0x1d70] sm:$0xff]
    %v3150 = vld [vmem:[#allocation3 + $0x1d78] sm:$0xff]
    %v3151 = vld [vmem:[#allocation3 + $0x1d80] sm:$0xff]
    %v3152 = vld [vmem:[#allocation3 + $0x1d88] sm:$0xff]
    %v3153 = vld [vmem:[#allocation3 + $0x1d90] sm:$0xff]
    %v3154 = vld [vmem:[#allocation3 + $0x1d98] sm:$0xff]
    %v3155 = vld [vmem:[#allocation3 + $0x1da0] sm:$0xff]
    %v3156 = vld [vmem:[#allocation3 + $0x1da8] sm:$0xff]
    %v3157 = vld [vmem:[#allocation3 + $0x1db0] sm:$0xff]
    %v3158 = vld [vmem:[#allocation3 + $0x1db8] sm:$0xff]
    %v3159 = vld [vmem:[#allocation3 + $0x1dc0] sm:$0xff]
    %v3160 = vld [vmem:[#allocation3 + $0x1dc8] sm:$0xff]
    %v3161 = vld [vmem:[#allocation3 + $0x1dd0] sm:$0xff]
    %v3162 = vld [vmem:[#allocation3 + $0x1dd8] sm:$0xff]
    %v3163 = vld [vmem:[#allocation3 + $0x1de0] sm:$0xff]
    %v3164 = vld [vmem:[#allocation3 + $0x1de8] sm:$0xff]
    %v3165 = vld [vmem:[#allocation3 + $0x1df0] sm:$0xff]
    %v3166 = vld [vmem:[#allocation3 + $0x1df8] sm:$0xff]
    %v3167 = vld [vmem:[#allocation3 + $0x1e00] sm:$0xff]
    %v3168 = vld [vmem:[#allocation3 + $0x1e08] sm:$0xff]
    %v3169 = vld [vmem:[#allocation3 + $0x1e10] sm:$0xff]
    %v3170 = vld [vmem:[#allocation3 + $0x1e18] sm:$0xff]
    %v3171 = vld [vmem:[#allocation3 + $0x1e20] sm:$0xff]
    %v3172 = vld [vmem:[#allocation3 + $0x1e28] sm:$0xff]
    %v3173 = vld [vmem:[#allocation3 + $0x1e30] sm:$0xff]
    %v3174 = vld [vmem:[#allocation3 + $0x1e38] sm:$0xff]
    %v3175 = vld [vmem:[#allocation3 + $0x1e40] sm:$0xff]
    %v3176 = vld [vmem:[#allocation3 + $0x1e48] sm:$0xff]
    %v3177 = vld [vmem:[#allocation3 + $0x1e50] sm:$0xff]
    %v3178 = vld [vmem:[#allocation3 + $0x1e58] sm:$0xff]
    %v3179 = vld [vmem:[#allocation3 + $0x1e60] sm:$0xff]
    %v3180 = vld [vmem:[#allocation3 + $0x1e68] sm:$0xff]
    %v3181 = vld [vmem:[#allocation3 + $0x1e70] sm:$0xff]
    %v3182 = vld [vmem:[#allocation3 + $0x1e78] sm:$0xff]
    %v3183 = vld [vmem:[#allocation3 + $0x1e80] sm:$0xff]
    %v3184 = vld [vmem:[#allocation3 + $0x1e88] sm:$0xff]
    %v3185 = vld [vmem:[#allocation3 + $0x1e90] sm:$0xff]
    %v3186 = vld [vmem:[#allocation3 + $0x1e98] sm:$0xff]
    %v3187 = vld [vmem:[#allocation3 + $0x1ea0] sm:$0xff]
    %v3188 = vld [vmem:[#allocation3 + $0x1ea8] sm:$0xff]
    %v3189 = vld [vmem:[#allocation3 + $0x1eb0] sm:$0xff]
    %v3190 = vld [vmem:[#allocation3 + $0x1eb8] sm:$0xff]
    %v3191 = vld [vmem:[#allocation3 + $0x1ec0] sm:$0xff]
    %v3192 = vld [vmem:[#allocation3 + $0x1ec8] sm:$0xff]
    %v3193 = vld [vmem:[#allocation3 + $0x1ed0] sm:$0xff]
    %v3194 = vld [vmem:[#allocation3 + $0x1ed8] sm:$0xff]
    %v3195 = vld [vmem:[#allocation3 + $0x1ee0] sm:$0xff]
    %v3196 = vld [vmem:[#allocation3 + $0x1ee8] sm:$0xff]
    %v3197 = vld [vmem:[#allocation3 + $0x1ef0] sm:$0xff]
    %v3198 = vld [vmem:[#allocation3 + $0x1ef8] sm:$0xff]
    %v3199 = vld [vmem:[#allocation3 + $0x1f00] sm:$0xff]
    %v3200 = vld [vmem:[#allocation3 + $0x1f08] sm:$0xff]
    %v3201 = vld [vmem:[#allocation3 + $0x1f10] sm:$0xff]
    %v3202 = vld [vmem:[#allocation3 + $0x1f18] sm:$0xff]
    %v3203 = vld [vmem:[#allocation3 + $0x1f20] sm:$0xff]
    %v3204 = vld [vmem:[#allocation3 + $0x1f28] sm:$0xff]
    %v3205 = vld [vmem:[#allocation3 + $0x1f30] sm:$0xff]
    %v3206 = vld [vmem:[#allocation3 + $0x1f38] sm:$0xff]
    %v3207 = vld [vmem:[#allocation3 + $0x1f40] sm:$0xff]
    %v3208 = vld [vmem:[#allocation3 + $0x1f48] sm:$0xff]
    %v3209 = vld [vmem:[#allocation3 + $0x1f50] sm:$0xff]
    %v3210 = vld [vmem:[#allocation3 + $0x1f58] sm:$0xff]
    %v3211 = vld [vmem:[#allocation3 + $0x1f60] sm:$0xff]
    %v3212 = vld [vmem:[#allocation3 + $0x1f68] sm:$0xff]
    %v3213 = vld [vmem:[#allocation3 + $0x1f70] sm:$0xff]
    %v3214 = vld [vmem:[#allocation3 + $0x1f78] sm:$0xff]
    %v3215 = vld [vmem:[#allocation3 + $0x1f80] sm:$0xff]
    %v3216 = vld [vmem:[#allocation3 + $0x1f88] sm:$0xff]
    %v3217 = vld [vmem:[#allocation3 + $0x1f90] sm:$0xff]
    %v3218 = vld [vmem:[#allocation3 + $0x1f98] sm:$0xff]
    %v3219 = vld [vmem:[#allocation3 + $0x1fa0] sm:$0xff]
    %v3220 = vld [vmem:[#allocation3 + $0x1fa8] sm:$0xff]
    %v3221 = vld [vmem:[#allocation3 + $0x1fb0] sm:$0xff]
    %v3222 = vld [vmem:[#allocation3 + $0x1fb8] sm:$0xff]
    %v3223 = vld [vmem:[#allocation3 + $0x1fc0] sm:$0xff]
    %v3224 = vld [vmem:[#allocation3 + $0x1fc8] sm:$0xff]
    %v3225 = vld [vmem:[#allocation3 + $0x1fd0] sm:$0xff]
    %v3226 = vld [vmem:[#allocation3 + $0x1fd8] sm:$0xff]
    %v3227 = vld [vmem:[#allocation3 + $0x1fe0] sm:$0xff]
    %v3228 = vld [vmem:[#allocation3 + $0x1fe8] sm:$0xff]
    %v3229 = vld [vmem:[#allocation3 + $0x1ff0] sm:$0xff]
    %v3230 = vld [vmem:[#allocation3 + $0x1ff8] sm:$0xff]
    %v3231 = vld [vmem:[#allocation3 + $0x2000] sm:$0xff]
    %v3232 = vld [vmem:[#allocation3 + $0x2008] sm:$0xff]
    %v3233 = vld [vmem:[#allocation3 + $0x2010] sm:$0xff]
    %v3234 = vld [vmem:[#allocation3 + $0x2018] sm:$0xff]
    %v3235 = vld [vmem:[#allocation3 + $0x2020] sm:$0xff]
    %v3236 = vld [vmem:[#allocation3 + $0x2028] sm:$0xff]
    %v3237 = vld [vmem:[#allocation3 + $0x2030] sm:$0xff]
    %v3238 = vld [vmem:[#allocation3 + $0x2038] sm:$0xff]
    %v3239 = vld [vmem:[#allocation3 + $0x2040] sm:$0xff]
    %v3240 = vld [vmem:[#allocation3 + $0x2048] sm:$0xff]
    %v3241 = vld [vmem:[#allocation3 + $0x2050] sm:$0xff]
    %v3242 = vld [vmem:[#allocation3 + $0x2058] sm:$0xff]
    %v3243 = vld [vmem:[#allocation3 + $0x2060] sm:$0xff]
    %v3244 = vld [vmem:[#allocation3 + $0x2068] sm:$0xff]
    %v3245 = vld [vmem:[#allocation3 + $0x2070] sm:$0xff]
    %v3246 = vld [vmem:[#allocation3 + $0x2078] sm:$0xff]
    %v3247 = vld [vmem:[#allocation3 + $0x2080] sm:$0xff]
    %v3248 = vld [vmem:[#allocation3 + $0x2088] sm:$0xff]
    %v3249 = vld [vmem:[#allocation3 + $0x2090] sm:$0xff]
    %v3250 = vld [vmem:[#allocation3 + $0x2098] sm:$0xff]
    %v3251 = vld [vmem:[#allocation3 + $0x20a0] sm:$0xff]
    %v3252 = vld [vmem:[#allocation3 + $0x20a8] sm:$0xff]
    %v3253 = vld [vmem:[#allocation3 + $0x20b0] sm:$0xff]
    %v3254 = vld [vmem:[#allocation3 + $0x20b8] sm:$0xff]
    %v3255 = vld [vmem:[#allocation3 + $0x20c0] sm:$0xff]
    %v3256 = vld [vmem:[#allocation3 + $0x20c8] sm:$0xff]
    %v3257 = vld [vmem:[#allocation3 + $0x20d0] sm:$0xff]
    %v3258 = vld [vmem:[#allocation3 + $0x20d8] sm:$0xff]
    %v3259 = vld [vmem:[#allocation3 + $0x20e0] sm:$0xff]
    %v3260 = vld [vmem:[#allocation3 + $0x20e8] sm:$0xff]
    %v3261 = vld [vmem:[#allocation3 + $0x20f0] sm:$0xff]
    %v3262 = vld [vmem:[#allocation3 + $0x20f8] sm:$0xff]
    %v3263 = vld [vmem:[#allocation3 + $0x2100] sm:$0xff]
    %v3264 = vld [vmem:[#allocation3 + $0x2108] sm:$0xff]
    %v3265 = vld [vmem:[#allocation3 + $0x2110] sm:$0xff]
    %v3266 = vld [vmem:[#allocation3 + $0x2118] sm:$0xff]
    %v3267 = vld [vmem:[#allocation3 + $0x2120] sm:$0xff]
    %v3268 = vld [vmem:[#allocation3 + $0x2128] sm:$0xff]
    %v3269 = vld [vmem:[#allocation3 + $0x2130] sm:$0xff]
    %v3270 = vld [vmem:[#allocation3 + $0x2138] sm:$0xff]
    %v3271 = vld [vmem:[#allocation3 + $0x2140] sm:$0xff]
    %v3272 = vld [vmem:[#allocation3 + $0x2148] sm:$0xff]
    %v3273 = vld [vmem:[#allocation3 + $0x2150] sm:$0xff]
    %v3274 = vld [vmem:[#allocation3 + $0x2158] sm:$0xff]
    %v3275 = vld [vmem:[#allocation3 + $0x2160] sm:$0xff]
    %v3276 = vld [vmem:[#allocation3 + $0x2168] sm:$0xff]
    %v3277 = vld [vmem:[#allocation3 + $0x2170] sm:$0xff]
    %v3278 = vld [vmem:[#allocation3 + $0x2178] sm:$0xff]
    %v3279 = vld [vmem:[#allocation3 + $0x2180] sm:$0xff]
    %v3280 = vld [vmem:[#allocation3 + $0x2188] sm:$0xff]
    %v3281 = vld [vmem:[#allocation3 + $0x2190] sm:$0xff]
    %v3282 = vld [vmem:[#allocation3 + $0x2198] sm:$0xff]
    %v3283 = vld [vmem:[#allocation3 + $0x21a0] sm:$0xff]
    %v3284 = vld [vmem:[#allocation3 + $0x21a8] sm:$0xff]
    %v3285 = vld [vmem:[#allocation3 + $0x21b0] sm:$0xff]
    %v3286 = vld [vmem:[#allocation3 + $0x21b8] sm:$0xff]
    %v3287 = vld [vmem:[#allocation3 + $0x21c0] sm:$0xff]
    %v3288 = vld [vmem:[#allocation3 + $0x21c8] sm:$0xff]
    %v3289 = vld [vmem:[#allocation3 + $0x21d0] sm:$0xff]
    %v3290 = vld [vmem:[#allocation3 + $0x21d8] sm:$0xff]
    %v3291 = vld [vmem:[#allocation3 + $0x21e0] sm:$0xff]
    %v3292 = vld [vmem:[#allocation3 + $0x21e8] sm:$0xff]
    %v3293 = vld [vmem:[#allocation3 + $0x21f0] sm:$0xff]
    %v3294 = vld [vmem:[#allocation3 + $0x21f8] sm:$0xff]
    %v3295 = vld [vmem:[#allocation3 + $0x2200] sm:$0xff]
    %v3296 = vld [vmem:[#allocation3 + $0x2208] sm:$0xff]
    %v3297 = vld [vmem:[#allocation3 + $0x2210] sm:$0xff]
    %v3298 = vld [vmem:[#allocation3 + $0x2218] sm:$0xff]
    %v3299 = vld [vmem:[#allocation3 + $0x2220] sm:$0xff]
    %v3300 = vld [vmem:[#allocation3 + $0x2228] sm:$0xff]
    %v3301 = vld [vmem:[#allocation3 + $0x2230] sm:$0xff]
    %v3302 = vld [vmem:[#allocation3 + $0x2238] sm:$0xff]
    %v3303 = vld [vmem:[#allocation3 + $0x2240] sm:$0xff]
    %v3304 = vld [vmem:[#allocation3 + $0x2248] sm:$0xff]
    %v3305 = vld [vmem:[#allocation3 + $0x2250] sm:$0xff]
    %v3306 = vld [vmem:[#allocation3 + $0x2258] sm:$0xff]
    %v3307 = vld [vmem:[#allocation3 + $0x2260] sm:$0xff]
    %v3308 = vld [vmem:[#allocation3 + $0x2268] sm:$0xff]
    %v3309 = vld [vmem:[#allocation3 + $0x2270] sm:$0xff]
    %v3310 = vld [vmem:[#allocation3 + $0x2278] sm:$0xff]
    %v3311 = vld [vmem:[#allocation3 + $0x2280] sm:$0xff]
    %v3312 = vld [vmem:[#allocation3 + $0x2288] sm:$0xff]
    %v3313 = vld [vmem:[#allocation3 + $0x2290] sm:$0xff]
    %v3314 = vld [vmem:[#allocation3 + $0x2298] sm:$0xff]
    %v3315 = vld [vmem:[#allocation3 + $0x22a0] sm:$0xff]
    %v3316 = vld [vmem:[#allocation3 + $0x22a8] sm:$0xff]
    %v3317 = vld [vmem:[#allocation3 + $0x22b0] sm:$0xff]
    %v3318 = vld [vmem:[#allocation3 + $0x22b8] sm:$0xff]
    %v3319 = vld [vmem:[#allocation3 + $0x22c0] sm:$0xff]
    %v3320 = vld [vmem:[#allocation3 + $0x22c8] sm:$0xff]
    %v3321 = vld [vmem:[#allocation3 + $0x22d0] sm:$0xff]
    %v3322 = vld [vmem:[#allocation3 + $0x22d8] sm:$0xff]
    %v3323 = vld [vmem:[#allocation3 + $0x22e0] sm:$0xff]
    %v3324 = vld [vmem:[#allocation3 + $0x22e8] sm:$0xff]
    %v3325 = vld [vmem:[#allocation3 + $0x22f0] sm:$0xff]
    %v3326 = vld [vmem:[#allocation3 + $0x22f8] sm:$0xff]
    %v3327 = vld [vmem:[#allocation3 + $0x2300] sm:$0xff]
    %v3328 = vld [vmem:[#allocation3 + $0x2308] sm:$0xff]
    %v3329 = vld [vmem:[#allocation3 + $0x2310] sm:$0xff]
    %v3330 = vld [vmem:[#allocation3 + $0x2318] sm:$0xff]
    %v3331 = vld [vmem:[#allocation3 + $0x2320] sm:$0xff]
    %v3332 = vld [vmem:[#allocation3 + $0x2328] sm:$0xff]
    %v3333 = vld [vmem:[#allocation3 + $0x2330] sm:$0xff]
    %v3334 = vld [vmem:[#allocation3 + $0x2338] sm:$0xff]
    %v3335 = vld [vmem:[#allocation3 + $0x2340] sm:$0xff]
    %v3336 = vld [vmem:[#allocation3 + $0x2348] sm:$0xff]
    %v3337 = vld [vmem:[#allocation3 + $0x2350] sm:$0xff]
    %v3338 = vld [vmem:[#allocation3 + $0x2358] sm:$0xff]
    %v3339 = vld [vmem:[#allocation3 + $0x2360] sm:$0xff]
    %v3340 = vld [vmem:[#allocation3 + $0x2368] sm:$0xff]
    %v3341 = vld [vmem:[#allocation3 + $0x2370] sm:$0xff]
    %v3342 = vld [vmem:[#allocation3 + $0x2378] sm:$0xff]
    %v3343 = vld [vmem:[#allocation3 + $0x2380] sm:$0xff]
    %v3344 = vld [vmem:[#allocation3 + $0x2388] sm:$0xff]
    %v3345 = vld [vmem:[#allocation3 + $0x2390] sm:$0xff]
    %v3346 = vld [vmem:[#allocation3 + $0x2398] sm:$0xff]
    %v3347 = vld [vmem:[#allocation3 + $0x23a0] sm:$0xff]
    %v3348 = vld [vmem:[#allocation3 + $0x23a8] sm:$0xff]
    %v3349 = vld [vmem:[#allocation3 + $0x23b0] sm:$0xff]
    %v3350 = vld [vmem:[#allocation3 + $0x23b8] sm:$0xff]
    %v3351 = vld [vmem:[#allocation3 + $0x23c0] sm:$0xff]
    %v3352 = vld [vmem:[#allocation3 + $0x23c8] sm:$0xff]
    %v3353 = vld [vmem:[#allocation3 + $0x23d0] sm:$0xff]
    %v3354 = vld [vmem:[#allocation3 + $0x23d8] sm:$0xff]
    %v3355 = vld [vmem:[#allocation3 + $0x23e0] sm:$0xff]
    %v3356 = vld [vmem:[#allocation3 + $0x23e8] sm:$0xff]
    %v3357 = vld [vmem:[#allocation3 + $0x23f0] sm:$0xff]
    %v3358 = vld [vmem:[#allocation3 + $0x23f8] sm:$0xff]
    %v3359 = vld [vmem:[#allocation3 + $0x2400] sm:$0xff]
    %v3360 = vld [vmem:[#allocation3 + $0x2408] sm:$0xff]
    %v3361 = vld [vmem:[#allocation3 + $0x2410] sm:$0xff]
    %v3362 = vld [vmem:[#allocation3 + $0x2418] sm:$0xff]
    %v3363 = vld [vmem:[#allocation3 + $0x2420] sm:$0xff]
    %v3364 = vld [vmem:[#allocation3 + $0x2428] sm:$0xff]
    %v3365 = vld [vmem:[#allocation3 + $0x2430] sm:$0xff]
    %v3366 = vld [vmem:[#allocation3 + $0x2438] sm:$0xff]
    %v3367 = vld [vmem:[#allocation3 + $0x2440] sm:$0xff]
    %v3368 = vld [vmem:[#allocation3 + $0x2448] sm:$0xff]
    %v3369 = vld [vmem:[#allocation3 + $0x2450] sm:$0xff]
    %v3370 = vld [vmem:[#allocation3 + $0x2458] sm:$0xff]
    %v3371 = vld [vmem:[#allocation3 + $0x2460] sm:$0xff]
    %v3372 = vld [vmem:[#allocation3 + $0x2468] sm:$0xff]
    %v3373 = vld [vmem:[#allocation3 + $0x2470] sm:$0xff]
    %v3374 = vld [vmem:[#allocation3 + $0x2478] sm:$0xff]
    %v3375 = vld [vmem:[#allocation3 + $0x2480] sm:$0xff]
    %v3376 = vld [vmem:[#allocation3 + $0x2488] sm:$0xff]
    %v3377 = vld [vmem:[#allocation3 + $0x2490] sm:$0xff]
    %v3378 = vld [vmem:[#allocation3 + $0x2498] sm:$0xff]
    %v3379 = vld [vmem:[#allocation3 + $0x24a0] sm:$0xff]
    %v3380 = vld [vmem:[#allocation3 + $0x24a8] sm:$0xff]
    %v3381 = vld [vmem:[#allocation3 + $0x24b0] sm:$0xff]
    %v3382 = vld [vmem:[#allocation3 + $0x24b8] sm:$0xff]
    %v3383 = vld [vmem:[#allocation3 + $0x24c0] sm:$0xff]
    %v3384 = vld [vmem:[#allocation3 + $0x24c8] sm:$0xff]
    %v3385 = vld [vmem:[#allocation3 + $0x24d0] sm:$0xff]
    %v3386 = vld [vmem:[#allocation3 + $0x24d8] sm:$0xff]
    %v3387 = vld [vmem:[#allocation3 + $0x24e0] sm:$0xff]
    %v3388 = vld [vmem:[#allocation3 + $0x24e8] sm:$0xff]
    %v3389 = vld [vmem:[#allocation3 + $0x24f0] sm:$0xff]
    %v3390 = vld [vmem:[#allocation3 + $0x24f8] sm:$0xff]
    %v3391 = vld [vmem:[#allocation3 + $0x2500] sm:$0xff]
    %v3392 = vld [vmem:[#allocation3 + $0x2508] sm:$0xff]
    %v3393 = vld [vmem:[#allocation3 + $0x2510] sm:$0xff]
    %v3394 = vld [vmem:[#allocation3 + $0x2518] sm:$0xff]
    %v3395 = vld [vmem:[#allocation3 + $0x2520] sm:$0xff]
    %v3396 = vld [vmem:[#allocation3 + $0x2528] sm:$0xff]
    %v3397 = vld [vmem:[#allocation3 + $0x2530] sm:$0xff]
    %v3398 = vld [vmem:[#allocation3 + $0x2538] sm:$0xff]
    %v3399 = vld [vmem:[#allocation3 + $0x2540] sm:$0xff]
    %v3400 = vld [vmem:[#allocation3 + $0x2548] sm:$0xff]
    %v3401 = vld [vmem:[#allocation3 + $0x2550] sm:$0xff]
    %v3402 = vld [vmem:[#allocation3 + $0x2558] sm:$0xff]
    %v3403 = vld [vmem:[#allocation3 + $0x2560] sm:$0xff]
    %v3404 = vld [vmem:[#allocation3 + $0x2568] sm:$0xff]
    %v3405 = vld [vmem:[#allocation3 + $0x2570] sm:$0xff]
    %v3406 = vld [vmem:[#allocation3 + $0x2578] sm:$0xff]
    %v3407 = vld [vmem:[#allocation3 + $0x2580] sm:$0xff]
    %v3408 = vld [vmem:[#allocation3 + $0x2588] sm:$0xff]
    %v3409 = vld [vmem:[#allocation3 + $0x2590] sm:$0xff]
    %v3410 = vld [vmem:[#allocation3 + $0x2598] sm:$0xff]
    %v3411 = vld [vmem:[#allocation3 + $0x25a0] sm:$0xff]
    %v3412 = vld [vmem:[#allocation3 + $0x25a8] sm:$0xff]
    %v3413 = vld [vmem:[#allocation3 + $0x25b0] sm:$0xff]
    %v3414 = vld [vmem:[#allocation3 + $0x25b8] sm:$0xff]
    %v3415 = vld [vmem:[#allocation3 + $0x25c0] sm:$0xff]
    %v3416 = vld [vmem:[#allocation3 + $0x25c8] sm:$0xff]
    %v3417 = vld [vmem:[#allocation3 + $0x25d0] sm:$0xff]
    %v3418 = vld [vmem:[#allocation3 + $0x25d8] sm:$0xff]
    %v3419 = vld [vmem:[#allocation3 + $0x25e0] sm:$0xff]
    %v3420 = vld [vmem:[#allocation3 + $0x25e8] sm:$0xff]
    %v3421 = vld [vmem:[#allocation3 + $0x25f0] sm:$0xff]
    %v3422 = vld [vmem:[#allocation3 + $0x25f8] sm:$0xff]
    %v3423 = vld [vmem:[#allocation3 + $0x2600] sm:$0xff]
    %v3424 = vld [vmem:[#allocation3 + $0x2608] sm:$0xff]
    %v3425 = vld [vmem:[#allocation3 + $0x2610] sm:$0xff]
    %v3426 = vld [vmem:[#allocation3 + $0x2618] sm:$0xff]
    %v3427 = vld [vmem:[#allocation3 + $0x2620] sm:$0xff]
    %v3428 = vld [vmem:[#allocation3 + $0x2628] sm:$0xff]
    %v3429 = vld [vmem:[#allocation3 + $0x2630] sm:$0xff]
    %v3430 = vld [vmem:[#allocation3 + $0x2638] sm:$0xff]
    %v3431 = vld [vmem:[#allocation3 + $0x2640] sm:$0xff]
    %v3432 = vld [vmem:[#allocation3 + $0x2648] sm:$0xff]
    %v3433 = vld [vmem:[#allocation3 + $0x2650] sm:$0xff]
    %v3434 = vld [vmem:[#allocation3 + $0x2658] sm:$0xff]
    %v3435 = vld [vmem:[#allocation3 + $0x2660] sm:$0xff]
    %v3436 = vld [vmem:[#allocation3 + $0x2668] sm:$0xff]
    %v3437 = vld [vmem:[#allocation3 + $0x2670] sm:$0xff]
    %v3438 = vld [vmem:[#allocation3 + $0x2678] sm:$0xff]
    %v3439 = vld [vmem:[#allocation3 + $0x2680] sm:$0xff]
    %v3440 = vld [vmem:[#allocation3 + $0x2688] sm:$0xff]
    %v3441 = vld [vmem:[#allocation3 + $0x2690] sm:$0xff]
    %v3442 = vld [vmem:[#allocation3 + $0x2698] sm:$0xff]
    %v3443 = vld [vmem:[#allocation3 + $0x26a0] sm:$0xff]
    %v3444 = vld [vmem:[#allocation3 + $0x26a8] sm:$0xff]
    %v3445 = vld [vmem:[#allocation3 + $0x26b0] sm:$0xff]
    %v3446 = vld [vmem:[#allocation3 + $0x26b8] sm:$0xff]
    %v3447 = vld [vmem:[#allocation3 + $0x26c0] sm:$0xff]
    %v3448 = vld [vmem:[#allocation3 + $0x26c8] sm:$0xff]
    %v3449 = vld [vmem:[#allocation3 + $0x26d0] sm:$0xff]
    %v3450 = vld [vmem:[#allocation3 + $0x26d8] sm:$0xff]
    %v3451 = vld [vmem:[#allocation3 + $0x26e0] sm:$0xff]
    %v3452 = vld [vmem:[#allocation3 + $0x26e8] sm:$0xff]
    %v3453 = vld [vmem:[#allocation3 + $0x26f0] sm:$0xff]
    %v3454 = vld [vmem:[#allocation3 + $0x26f8] sm:$0xff]
    %v3455 = vld [vmem:[#allocation3 + $0x2700] sm:$0xff]
    %v3456 = vld [vmem:[#allocation3 + $0x2708] sm:$0xff]
    %v3457 = vld [vmem:[#allocation3 + $0x2710] sm:$0xff]
    %v3458 = vld [vmem:[#allocation3 + $0x2718] sm:$0xff]
    %v3459 = vld [vmem:[#allocation3 + $0x2720] sm:$0xff]
    %v3460 = vld [vmem:[#allocation3 + $0x2728] sm:$0xff]
    %v3461 = vld [vmem:[#allocation3 + $0x2730] sm:$0xff]
    %v3462 = vld [vmem:[#allocation3 + $0x2738] sm:$0xff]
    %v3463 = vld [vmem:[#allocation3 + $0x2740] sm:$0xff]
    %v3464 = vld [vmem:[#allocation3 + $0x2748] sm:$0xff]
    %v3465 = vld [vmem:[#allocation3 + $0x2750] sm:$0xff]
    %v3466 = vld [vmem:[#allocation3 + $0x2758] sm:$0xff]
    %v3467 = vld [vmem:[#allocation3 + $0x2760] sm:$0xff]
    %v3468 = vld [vmem:[#allocation3 + $0x2768] sm:$0xff]
    %v3469 = vld [vmem:[#allocation3 + $0x2770] sm:$0xff]
    %v3470 = vld [vmem:[#allocation3 + $0x2778] sm:$0xff]
    %v3471 = vld [vmem:[#allocation3 + $0x2780] sm:$0xff]
    %v3472 = vld [vmem:[#allocation3 + $0x2788] sm:$0xff]
    %v3473 = vld [vmem:[#allocation3 + $0x2790] sm:$0xff]
    %v3474 = vld [vmem:[#allocation3 + $0x2798] sm:$0xff]
    %v3475 = vld [vmem:[#allocation3 + $0x27a0] sm:$0xff]
    %v3476 = vld [vmem:[#allocation3 + $0x27a8] sm:$0xff]
    %v3477 = vld [vmem:[#allocation3 + $0x27b0] sm:$0xff]
    %v3478 = vld [vmem:[#allocation3 + $0x27b8] sm:$0xff]
    %v3479 = vld [vmem:[#allocation3 + $0x27c0] sm:$0xff]
    %v3480 = vld [vmem:[#allocation3 + $0x27c8] sm:$0xff]
    %v3481 = vld [vmem:[#allocation3 + $0x27d0] sm:$0xff]
    %v3482 = vld [vmem:[#allocation3 + $0x27d8] sm:$0xff]
    %v3483 = vld [vmem:[#allocation3 + $0x27e0] sm:$0xff]
    %v3484 = vld [vmem:[#allocation3 + $0x27e8] sm:$0xff]
    %v3485 = vld [vmem:[#allocation3 + $0x27f0] sm:$0xff]
    %v3486 = vld [vmem:[#allocation3 + $0x27f8] sm:$0xff]
    %v3487 = vld [vmem:[#allocation3 + $0x2800] sm:$0xff]
    %v3488 = vld [vmem:[#allocation3 + $0x2808] sm:$0xff]
    %v3489 = vld [vmem:[#allocation3 + $0x2810] sm:$0xff]
    %v3490 = vld [vmem:[#allocation3 + $0x2818] sm:$0xff]
    %v3491 = vld [vmem:[#allocation3 + $0x2820] sm:$0xff]
    %v3492 = vld [vmem:[#allocation3 + $0x2828] sm:$0xff]
    %v3493 = vld [vmem:[#allocation3 + $0x2830] sm:$0xff]
    %v3494 = vld [vmem:[#allocation3 + $0x2838] sm:$0xff]
    %v3495 = vld [vmem:[#allocation3 + $0x2840] sm:$0xff]
    %v3496 = vld [vmem:[#allocation3 + $0x2848] sm:$0xff]
    %v3497 = vld [vmem:[#allocation3 + $0x2850] sm:$0xff]
    %v3498 = vld [vmem:[#allocation3 + $0x2858] sm:$0xff]
    %v3499 = vld [vmem:[#allocation3 + $0x2860] sm:$0xff]
    %v3500 = vld [vmem:[#allocation3 + $0x2868] sm:$0xff]
    %v3501 = vld [vmem:[#allocation3 + $0x2870] sm:$0xff]
    %v3502 = vld [vmem:[#allocation3 + $0x2878] sm:$0xff]
    %v3503 = vld [vmem:[#allocation3 + $0x2880] sm:$0xff]
    %v3504 = vld [vmem:[#allocation3 + $0x2888] sm:$0xff]
    %v3505 = vld [vmem:[#allocation3 + $0x2890] sm:$0xff]
    %v3506 = vld [vmem:[#allocation3 + $0x2898] sm:$0xff]
    %v3507 = vld [vmem:[#allocation3 + $0x28a0] sm:$0xff]
    %v3508 = vld [vmem:[#allocation3 + $0x28a8] sm:$0xff]
    %v3509 = vld [vmem:[#allocation3 + $0x28b0] sm:$0xff]
    %v3510 = vld [vmem:[#allocation3 + $0x28b8] sm:$0xff]
    %v3511 = vld [vmem:[#allocation3 + $0x28c0] sm:$0xff]
    %v3512 = vld [vmem:[#allocation3 + $0x28c8] sm:$0xff]
    %v3513 = vld [vmem:[#allocation3 + $0x28d0] sm:$0xff]
    %v3514 = vld [vmem:[#allocation3 + $0x28d8] sm:$0xff]
    %v3515 = vld [vmem:[#allocation3 + $0x28e0] sm:$0xff]
    %v3516 = vld [vmem:[#allocation3 + $0x28e8] sm:$0xff]
    %v3517 = vld [vmem:[#allocation3 + $0x28f0] sm:$0xff]
    %v3518 = vld [vmem:[#allocation3 + $0x28f8] sm:$0xff]
    %v3519 = vld [vmem:[#allocation3 + $0x2900] sm:$0xff]
    %v3520 = vld [vmem:[#allocation3 + $0x2908] sm:$0xff]
    %v3521 = vld [vmem:[#allocation3 + $0x2910] sm:$0xff]
    %v3522 = vld [vmem:[#allocation3 + $0x2918] sm:$0xff]
    %v3523 = vld [vmem:[#allocation3 + $0x2920] sm:$0xff]
    %v3524 = vld [vmem:[#allocation3 + $0x2928] sm:$0xff]
    %v3525 = vld [vmem:[#allocation3 + $0x2930] sm:$0xff]
    %v3526 = vld [vmem:[#allocation3 + $0x2938] sm:$0xff]
    %v3527 = vld [vmem:[#allocation3 + $0x2940] sm:$0xff]
    %v3528 = vld [vmem:[#allocation3 + $0x2948] sm:$0xff]
    %v3529 = vld [vmem:[#allocation3 + $0x2950] sm:$0xff]
    %v3530 = vld [vmem:[#allocation3 + $0x2958] sm:$0xff]
    %v3531 = vld [vmem:[#allocation3 + $0x2960] sm:$0xff]
    %v3532 = vld [vmem:[#allocation3 + $0x2968] sm:$0xff]
    %v3533 = vld [vmem:[#allocation3 + $0x2970] sm:$0xff]
    %v3534 = vld [vmem:[#allocation3 + $0x2978] sm:$0xff]
    %v3535 = vld [vmem:[#allocation3 + $0x2980] sm:$0xff]
    %v3536 = vld [vmem:[#allocation3 + $0x2988] sm:$0xff]
    %v3537 = vld [vmem:[#allocation3 + $0x2990] sm:$0xff]
    %v3538 = vld [vmem:[#allocation3 + $0x2998] sm:$0xff]
    %v3539 = vld [vmem:[#allocation3 + $0x29a0] sm:$0xff]
    %v3540 = vld [vmem:[#allocation3 + $0x29a8] sm:$0xff]
    %v3541 = vld [vmem:[#allocation3 + $0x29b0] sm:$0xff]
    %v3542 = vld [vmem:[#allocation3 + $0x29b8] sm:$0xff]
    %v3543 = vld [vmem:[#allocation3 + $0x29c0] sm:$0xff]
    %v3544 = vld [vmem:[#allocation3 + $0x29c8] sm:$0xff]
    %v3545 = vld [vmem:[#allocation3 + $0x29d0] sm:$0xff]
    %v3546 = vld [vmem:[#allocation3 + $0x29d8] sm:$0xff]
    %v3547 = vld [vmem:[#allocation3 + $0x29e0] sm:$0xff]
    %v3548 = vld [vmem:[#allocation3 + $0x29e8] sm:$0xff]
    %v3549 = vld [vmem:[#allocation3 + $0x29f0] sm:$0xff]
    %v3550 = vld [vmem:[#allocation3 + $0x29f8] sm:$0xff]
    %v3551 = vld [vmem:[#allocation3 + $0x2a00] sm:$0xff]
    %v3552 = vld [vmem:[#allocation3 + $0x2a08] sm:$0xff]
    %v3553 = vld [vmem:[#allocation3 + $0x2a10] sm:$0xff]
    %v3554 = vld [vmem:[#allocation3 + $0x2a18] sm:$0xff]
    %v3555 = vld [vmem:[#allocation3 + $0x2a20] sm:$0xff]
    %v3556 = vld [vmem:[#allocation3 + $0x2a28] sm:$0xff]
    %v3557 = vld [vmem:[#allocation3 + $0x2a30] sm:$0xff]
    %v3558 = vld [vmem:[#allocation3 + $0x2a38] sm:$0xff]
    %v3559 = vld [vmem:[#allocation3 + $0x2a40] sm:$0xff]
    %v3560 = vld [vmem:[#allocation3 + $0x2a48] sm:$0xff]
    %v3561 = vld [vmem:[#allocation3 + $0x2a50] sm:$0xff]
    %v3562 = vld [vmem:[#allocation3 + $0x2a58] sm:$0xff]
    %v3563 = vld [vmem:[#allocation3 + $0x2a60] sm:$0xff]
    %v3564 = vld [vmem:[#allocation3 + $0x2a68] sm:$0xff]
    %v3565 = vld [vmem:[#allocation3 + $0x2a70] sm:$0xff]
    %v3566 = vld [vmem:[#allocation3 + $0x2a78] sm:$0xff]
    %v3567 = vld [vmem:[#allocation3 + $0x2a80] sm:$0xff]
    %v3568 = vld [vmem:[#allocation3 + $0x2a88] sm:$0xff]
    %v3569 = vld [vmem:[#allocation3 + $0x2a90] sm:$0xff]
    %v3570 = vld [vmem:[#allocation3 + $0x2a98] sm:$0xff]
    %v3571 = vld [vmem:[#allocation3 + $0x2aa0] sm:$0xff]
    %v3572 = vld [vmem:[#allocation3 + $0x2aa8] sm:$0xff]
    %v3573 = vld [vmem:[#allocation3 + $0x2ab0] sm:$0xff]
    %v3574 = vld [vmem:[#allocation3 + $0x2ab8] sm:$0xff]
    %v3575 = vld [vmem:[#allocation3 + $0x2ac0] sm:$0xff]
    %v3576 = vld [vmem:[#allocation3 + $0x2ac8] sm:$0xff]
    %v3577 = vld [vmem:[#allocation3 + $0x2ad0] sm:$0xff]
    %v3578 = vld [vmem:[#allocation3 + $0x2ad8] sm:$0xff]
    %v3579 = vld [vmem:[#allocation3 + $0x2ae0] sm:$0xff]
    %v3580 = vld [vmem:[#allocation3 + $0x2ae8] sm:$0xff]
    %v3581 = vld [vmem:[#allocation3 + $0x2af0] sm:$0xff]
    %v3582 = vld [vmem:[#allocation3 + $0x2af8] sm:$0xff]
    %v3583 = vld [vmem:[#allocation3 + $0x2b00] sm:$0xff]
    %v3584 = vld [vmem:[#allocation3 + $0x2b08] sm:$0xff]
    %v3585 = vld [vmem:[#allocation3 + $0x2b10] sm:$0xff]
    %v3586 = vld [vmem:[#allocation3 + $0x2b18] sm:$0xff]
    %v3587 = vld [vmem:[#allocation3 + $0x2b20] sm:$0xff]
    %v3588 = vld [vmem:[#allocation3 + $0x2b28] sm:$0xff]
    %v3589 = vld [vmem:[#allocation3 + $0x2b30] sm:$0xff]
    %v3590 = vld [vmem:[#allocation3 + $0x2b38] sm:$0xff]
    %v3591 = vld [vmem:[#allocation3 + $0x2b40] sm:$0xff]
    %v3592 = vld [vmem:[#allocation3 + $0x2b48] sm:$0xff]
    %v3593 = vld [vmem:[#allocation3 + $0x2b50] sm:$0xff]
    %v3594 = vld [vmem:[#allocation3 + $0x2b58] sm:$0xff]
    %v3595 = vld [vmem:[#allocation3 + $0x2b60] sm:$0xff]
    %v3596 = vld [vmem:[#allocation3 + $0x2b68] sm:$0xff]
    %v3597 = vld [vmem:[#allocation3 + $0x2b70] sm:$0xff]
    %v3598 = vld [vmem:[#allocation3 + $0x2b78] sm:$0xff]
    %v3599 = vld [vmem:[#allocation3 + $0x2b80] sm:$0xff]
    %v3600 = vld [vmem:[#allocation3 + $0x2b88] sm:$0xff]
    %v3601 = vld [vmem:[#allocation3 + $0x2b90] sm:$0xff]
    %v3602 = vld [vmem:[#allocation3 + $0x2b98] sm:$0xff]
    %v3603 = vld [vmem:[#allocation3 + $0x2ba0] sm:$0xff]
    %v3604 = vld [vmem:[#allocation3 + $0x2ba8] sm:$0xff]
    %v3605 = vld [vmem:[#allocation3 + $0x2bb0] sm:$0xff]
    %v3606 = vld [vmem:[#allocation3 + $0x2bb8] sm:$0xff]
    %v3607 = vld [vmem:[#allocation3 + $0x2bc0] sm:$0xff]
    %v3608 = vld [vmem:[#allocation3 + $0x2bc8] sm:$0xff]
    %v3609 = vld [vmem:[#allocation3 + $0x2bd0] sm:$0xff]
    %v3610 = vld [vmem:[#allocation3 + $0x2bd8] sm:$0xff]
    %v3611 = vld [vmem:[#allocation3 + $0x2be0] sm:$0xff]
    %v3612 = vld [vmem:[#allocation3 + $0x2be8] sm:$0xff]
    %v3613 = vld [vmem:[#allocation3 + $0x2bf0] sm:$0xff]
    %v3614 = vld [vmem:[#allocation3 + $0x2bf8] sm:$0xff]
    %v3615 = vld [vmem:[#allocation3 + $0x2c00] sm:$0xff]
    %v3616 = vld [vmem:[#allocation3 + $0x2c08] sm:$0xff]
    %v3617 = vld [vmem:[#allocation3 + $0x2c10] sm:$0xff]
    %v3618 = vld [vmem:[#allocation3 + $0x2c18] sm:$0xff]
    %v3619 = vld [vmem:[#allocation3 + $0x2c20] sm:$0xff]
    %v3620 = vld [vmem:[#allocation3 + $0x2c28] sm:$0xff]
    %v3621 = vld [vmem:[#allocation3 + $0x2c30] sm:$0xff]
    %v3622 = vld [vmem:[#allocation3 + $0x2c38] sm:$0xff]
    %v3623 = vld [vmem:[#allocation3 + $0x2c40] sm:$0xff]
    %v3624 = vld [vmem:[#allocation3 + $0x2c48] sm:$0xff]
    %v3625 = vld [vmem:[#allocation3 + $0x2c50] sm:$0xff]
    %v3626 = vld [vmem:[#allocation3 + $0x2c58] sm:$0xff]
    %v3627 = vld [vmem:[#allocation3 + $0x2c60] sm:$0xff]
    %v3628 = vld [vmem:[#allocation3 + $0x2c68] sm:$0xff]
    %v3629 = vld [vmem:[#allocation3 + $0x2c70] sm:$0xff]
    %v3630 = vld [vmem:[#allocation3 + $0x2c78] sm:$0xff]
    %v3631 = vld [vmem:[#allocation3 + $0x2c80] sm:$0xff]
    %v3632 = vld [vmem:[#allocation3 + $0x2c88] sm:$0xff]
    %v3633 = vld [vmem:[#allocation3 + $0x2c90] sm:$0xff]
    %v3634 = vld [vmem:[#allocation3 + $0x2c98] sm:$0xff]
    %v3635 = vld [vmem:[#allocation3 + $0x2ca0] sm:$0xff]
    %v3636 = vld [vmem:[#allocation3 + $0x2ca8] sm:$0xff]
    %v3637 = vld [vmem:[#allocation3 + $0x2cb0] sm:$0xff]
    %v3638 = vld [vmem:[#allocation3 + $0x2cb8] sm:$0xff]
    %v3639 = vld [vmem:[#allocation3 + $0x2cc0] sm:$0xff]
    %v3640 = vld [vmem:[#allocation3 + $0x2cc8] sm:$0xff]
    %v3641 = vld [vmem:[#allocation3 + $0x2cd0] sm:$0xff]
    %v3642 = vld [vmem:[#allocation3 + $0x2cd8] sm:$0xff]
    %v3643 = vld [vmem:[#allocation3 + $0x2ce0] sm:$0xff]
    %v3644 = vld [vmem:[#allocation3 + $0x2ce8] sm:$0xff]
    %v3645 = vld [vmem:[#allocation3 + $0x2cf0] sm:$0xff]
    %v3646 = vld [vmem:[#allocation3 + $0x2cf8] sm:$0xff]
    %v3647 = vld [vmem:[#allocation3 + $0x2d00] sm:$0xff]
    %v3648 = vld [vmem:[#allocation3 + $0x2d08] sm:$0xff]
    %v3649 = vld [vmem:[#allocation3 + $0x2d10] sm:$0xff]
    %v3650 = vld [vmem:[#allocation3 + $0x2d18] sm:$0xff]
    %v3651 = vld [vmem:[#allocation3 + $0x2d20] sm:$0xff]
    %v3652 = vld [vmem:[#allocation3 + $0x2d28] sm:$0xff]
    %v3653 = vld [vmem:[#allocation3 + $0x2d30] sm:$0xff]
    %v3654 = vld [vmem:[#allocation3 + $0x2d38] sm:$0xff]
    %v3655 = vld [vmem:[#allocation3 + $0x2d40] sm:$0xff]
    %v3656 = vld [vmem:[#allocation3 + $0x2d48] sm:$0xff]
    %v3657 = vld [vmem:[#allocation3 + $0x2d50] sm:$0xff]
    %v3658 = vld [vmem:[#allocation3 + $0x2d58] sm:$0xff]
    %v3659 = vld [vmem:[#allocation3 + $0x2d60] sm:$0xff]
    %v3660 = vld [vmem:[#allocation3 + $0x2d68] sm:$0xff]
    %v3661 = vld [vmem:[#allocation3 + $0x2d70] sm:$0xff]
    %v3662 = vld [vmem:[#allocation3 + $0x2d78] sm:$0xff]
    %v3663 = vld [vmem:[#allocation3 + $0x2d80] sm:$0xff]
    %v3664 = vld [vmem:[#allocation3 + $0x2d88] sm:$0xff]
    %v3665 = vld [vmem:[#allocation3 + $0x2d90] sm:$0xff]
    %v3666 = vld [vmem:[#allocation3 + $0x2d98] sm:$0xff]
    %v3667 = vld [vmem:[#allocation3 + $0x2da0] sm:$0xff]
    %v3668 = vld [vmem:[#allocation3 + $0x2da8] sm:$0xff]
    %v3669 = vld [vmem:[#allocation3 + $0x2db0] sm:$0xff]
    %v3670 = vld [vmem:[#allocation3 + $0x2db8] sm:$0xff]
    %v3671 = vld [vmem:[#allocation3 + $0x2dc0] sm:$0xff]
    %v3672 = vld [vmem:[#allocation3 + $0x2dc8] sm:$0xff]
    %v3673 = vld [vmem:[#allocation3 + $0x2dd0] sm:$0xff]
    %v3674 = vld [vmem:[#allocation3 + $0x2dd8] sm:$0xff]
    %v3675 = vld [vmem:[#allocation3 + $0x2de0] sm:$0xff]
    %v3676 = vld [vmem:[#allocation3 + $0x2de8] sm:$0xff]
    %v3677 = vld [vmem:[#allocation3 + $0x2df0] sm:$0xff]
    %v3678 = vld [vmem:[#allocation3 + $0x2df8] sm:$0xff]
    %v3679 = vld [vmem:[#allocation3 + $0x2e00] sm:$0xff]
    %v3680 = vld [vmem:[#allocation3 + $0x2e08] sm:$0xff]
    %v3681 = vld [vmem:[#allocation3 + $0x2e10] sm:$0xff]
    %v3682 = vld [vmem:[#allocation3 + $0x2e18] sm:$0xff]
    %v3683 = vld [vmem:[#allocation3 + $0x2e20] sm:$0xff]
    %v3684 = vld [vmem:[#allocation3 + $0x2e28] sm:$0xff]
    %v3685 = vld [vmem:[#allocation3 + $0x2e30] sm:$0xff]
    %v3686 = vld [vmem:[#allocation3 + $0x2e38] sm:$0xff]
    %v3687 = vld [vmem:[#allocation3 + $0x2e40] sm:$0xff]
    %v3688 = vld [vmem:[#allocation3 + $0x2e48] sm:$0xff]
    %v3689 = vld [vmem:[#allocation3 + $0x2e50] sm:$0xff]
    %v3690 = vld [vmem:[#allocation3 + $0x2e58] sm:$0xff]
    %v3691 = vld [vmem:[#allocation3 + $0x2e60] sm:$0xff]
    %v3692 = vld [vmem:[#allocation3 + $0x2e68] sm:$0xff]
    %v3693 = vld [vmem:[#allocation3 + $0x2e70] sm:$0xff]
    %v3694 = vld [vmem:[#allocation3 + $0x2e78] sm:$0xff]
    %v3695 = vld [vmem:[#allocation3 + $0x2e80] sm:$0xff]
    %v3696 = vld [vmem:[#allocation3 + $0x2e88] sm:$0xff]
    %v3697 = vld [vmem:[#allocation3 + $0x2e90] sm:$0xff]
    %v3698 = vld [vmem:[#allocation3 + $0x2e98] sm:$0xff]
    %v3699 = vld [vmem:[#allocation3 + $0x2ea0] sm:$0xff]
    %v3700 = vld [vmem:[#allocation3 + $0x2ea8] sm:$0xff]
    %v3701 = vld [vmem:[#allocation3 + $0x2eb0] sm:$0xff]
    %v3702 = vld [vmem:[#allocation3 + $0x2eb8] sm:$0xff]
    %v3703 = vld [vmem:[#allocation3 + $0x2ec0] sm:$0xff]
    %v3704 = vld [vmem:[#allocation3 + $0x2ec8] sm:$0xff]
    %v3705 = vld [vmem:[#allocation3 + $0x2ed0] sm:$0xff]
    %v3706 = vld [vmem:[#allocation3 + $0x2ed8] sm:$0xff]
    %v3707 = vld [vmem:[#allocation3 + $0x2ee0] sm:$0xff]
    %v3708 = vld [vmem:[#allocation3 + $0x2ee8] sm:$0xff]
    %v3709 = vld [vmem:[#allocation3 + $0x2ef0] sm:$0xff]
    %v3710 = vld [vmem:[#allocation3 + $0x2ef8] sm:$0xff]
    %v3711 = vld [vmem:[#allocation3 + $0x2f00] sm:$0xff]
    %v3712 = vld [vmem:[#allocation3 + $0x2f08] sm:$0xff]
    %v3713 = vld [vmem:[#allocation3 + $0x2f10] sm:$0xff]
    %v3714 = vld [vmem:[#allocation3 + $0x2f18] sm:$0xff]
    %v3715 = vld [vmem:[#allocation3 + $0x2f20] sm:$0xff]
    %v3716 = vld [vmem:[#allocation3 + $0x2f28] sm:$0xff]
    %v3717 = vld [vmem:[#allocation3 + $0x2f30] sm:$0xff]
    %v3718 = vld [vmem:[#allocation3 + $0x2f38] sm:$0xff]
    %v3719 = vld [vmem:[#allocation3 + $0x2f40] sm:$0xff]
    %v3720 = vld [vmem:[#allocation3 + $0x2f48] sm:$0xff]
    %v3721 = vld [vmem:[#allocation3 + $0x2f50] sm:$0xff]
    %v3722 = vld [vmem:[#allocation3 + $0x2f58] sm:$0xff]
    %v3723 = vld [vmem:[#allocation3 + $0x2f60] sm:$0xff]
    %v3724 = vld [vmem:[#allocation3 + $0x2f68] sm:$0xff]
    %v3725 = vld [vmem:[#allocation3 + $0x2f70] sm:$0xff]
    %v3726 = vld [vmem:[#allocation3 + $0x2f78] sm:$0xff]
    %v3727 = vld [vmem:[#allocation3 + $0x2f80] sm:$0xff]
    %v3728 = vld [vmem:[#allocation3 + $0x2f88] sm:$0xff]
    %v3729 = vld [vmem:[#allocation3 + $0x2f90] sm:$0xff]
    %v3730 = vld [vmem:[#allocation3 + $0x2f98] sm:$0xff]
    %v3731 = vld [vmem:[#allocation3 + $0x2fa0] sm:$0xff]
    %v3732 = vld [vmem:[#allocation3 + $0x2fa8] sm:$0xff]
    %v3733 = vld [vmem:[#allocation3 + $0x2fb0] sm:$0xff]
    %v3734 = vld [vmem:[#allocation3 + $0x2fb8] sm:$0xff]
    %v3735 = vld [vmem:[#allocation3 + $0x2fc0] sm:$0xff]
    %v3736 = vld [vmem:[#allocation3 + $0x2fc8] sm:$0xff]
    %v3737 = vld [vmem:[#allocation3 + $0x2fd0] sm:$0xff]
    %v3738 = vld [vmem:[#allocation3 + $0x2fd8] sm:$0xff]
    %v3739 = vld [vmem:[#allocation3 + $0x2fe0] sm:$0xff]
    %v3740 = vld [vmem:[#allocation3 + $0x2fe8] sm:$0xff]
    %v3741 = vld [vmem:[#allocation3 + $0x2ff0] sm:$0xff]
    %v3742 = vld [vmem:[#allocation3 + $0x2ff8] sm:$0xff]
    %v3743 = vld [vmem:[#allocation3 + $0x3000] sm:$0xff]
    %v3744 = vld [vmem:[#allocation3 + $0x3008] sm:$0xff]
    %v3745 = vld [vmem:[#allocation3 + $0x3010] sm:$0xff]
    %v3746 = vld [vmem:[#allocation3 + $0x3018] sm:$0xff]
    %v3747 = vld [vmem:[#allocation3 + $0x3020] sm:$0xff]
    %v3748 = vld [vmem:[#allocation3 + $0x3028] sm:$0xff]
    %v3749 = vld [vmem:[#allocation3 + $0x3030] sm:$0xff]
    %v3750 = vld [vmem:[#allocation3 + $0x3038] sm:$0xff]
    %v3751 = vld [vmem:[#allocation3 + $0x3040] sm:$0xff]
    %v3752 = vld [vmem:[#allocation3 + $0x3048] sm:$0xff]
    %v3753 = vld [vmem:[#allocation3 + $0x3050] sm:$0xff]
    %v3754 = vld [vmem:[#allocation3 + $0x3058] sm:$0xff]
    %v3755 = vld [vmem:[#allocation3 + $0x3060] sm:$0xff]
    %v3756 = vld [vmem:[#allocation3 + $0x3068] sm:$0xff]
    %v3757 = vld [vmem:[#allocation3 + $0x3070] sm:$0xff]
    %v3758 = vld [vmem:[#allocation3 + $0x3078] sm:$0xff]
    %v3759 = vld [vmem:[#allocation3 + $0x3080] sm:$0xff]
    %v3760 = vld [vmem:[#allocation3 + $0x3088] sm:$0xff]
    %v3761 = vld [vmem:[#allocation3 + $0x3090] sm:$0xff]
    %v3762 = vld [vmem:[#allocation3 + $0x3098] sm:$0xff]
    %v3763 = vld [vmem:[#allocation3 + $0x30a0] sm:$0xff]
    %v3764 = vld [vmem:[#allocation3 + $0x30a8] sm:$0xff]
    %v3765 = vld [vmem:[#allocation3 + $0x30b0] sm:$0xff]
    %v3766 = vld [vmem:[#allocation3 + $0x30b8] sm:$0xff]
    %v3767 = vld [vmem:[#allocation3 + $0x30c0] sm:$0xff]
    %v3768 = vld [vmem:[#allocation3 + $0x30c8] sm:$0xff]
    %v3769 = vld [vmem:[#allocation3 + $0x30d0] sm:$0xff]
    %v3770 = vld [vmem:[#allocation3 + $0x30d8] sm:$0xff]
    %v3771 = vld [vmem:[#allocation3 + $0x30e0] sm:$0xff]
    %v3772 = vld [vmem:[#allocation3 + $0x30e8] sm:$0xff]
    %v3773 = vld [vmem:[#allocation3 + $0x30f0] sm:$0xff]
    %v3774 = vld [vmem:[#allocation3 + $0x30f8] sm:$0xff]
    %v3775 = vld [vmem:[#allocation3 + $0x3100] sm:$0xff]
    %v3776 = vld [vmem:[#allocation3 + $0x3108] sm:$0xff]
    %v3777 = vld [vmem:[#allocation3 + $0x3110] sm:$0xff]
    %v3778 = vld [vmem:[#allocation3 + $0x3118] sm:$0xff]
    %v3779 = vld [vmem:[#allocation3 + $0x3120] sm:$0xff]
    %v3780 = vld [vmem:[#allocation3 + $0x3128] sm:$0xff]
    %v3781 = vld [vmem:[#allocation3 + $0x3130] sm:$0xff]
    %v3782 = vld [vmem:[#allocation3 + $0x3138] sm:$0xff]
    %v3783 = vld [vmem:[#allocation3 + $0x3140] sm:$0xff]
    %v3784 = vld [vmem:[#allocation3 + $0x3148] sm:$0xff]
    %v3785 = vld [vmem:[#allocation3 + $0x3150] sm:$0xff]
    %v3786 = vld [vmem:[#allocation3 + $0x3158] sm:$0xff]
    %v3787 = vld [vmem:[#allocation3 + $0x3160] sm:$0xff]
    %v3788 = vld [vmem:[#allocation3 + $0x3168] sm:$0xff]
    %v3789 = vld [vmem:[#allocation3 + $0x3170] sm:$0xff]
    %v3790 = vld [vmem:[#allocation3 + $0x3178] sm:$0xff]
    %v3791 = vld [vmem:[#allocation3 + $0x3180] sm:$0xff]
    %v3792 = vld [vmem:[#allocation3 + $0x3188] sm:$0xff]
    %v3793 = vld [vmem:[#allocation3 + $0x3190] sm:$0xff]
    %v3794 = vld [vmem:[#allocation3 + $0x3198] sm:$0xff]
    %v3795 = vld [vmem:[#allocation3 + $0x31a0] sm:$0xff]
    %v3796 = vld [vmem:[#allocation3 + $0x31a8] sm:$0xff]
    %v3797 = vld [vmem:[#allocation3 + $0x31b0] sm:$0xff]
    %v3798 = vld [vmem:[#allocation3 + $0x31b8] sm:$0xff]
    %v3799 = vld [vmem:[#allocation3 + $0x31c0] sm:$0xff]
    %v3800 = vld [vmem:[#allocation3 + $0x31c8] sm:$0xff]
    %v3801 = vld [vmem:[#allocation3 + $0x31d0] sm:$0xff]
    %v3802 = vld [vmem:[#allocation3 + $0x31d8] sm:$0xff]
    %v3803 = vld [vmem:[#allocation3 + $0x31e0] sm:$0xff]
    %v3804 = vld [vmem:[#allocation3 + $0x31e8] sm:$0xff]
    %v3805 = vld [vmem:[#allocation3 + $0x31f0] sm:$0xff]
    %v3806 = vld [vmem:[#allocation3 + $0x31f8] sm:$0xff]
    %v3807 = vld [vmem:[#allocation3 + $0x3200] sm:$0xff]
    %v3808 = vld [vmem:[#allocation3 + $0x3208] sm:$0xff]
    %v3809 = vld [vmem:[#allocation3 + $0x3210] sm:$0xff]
    %v3810 = vld [vmem:[#allocation3 + $0x3218] sm:$0xff]
    %v3811 = vld [vmem:[#allocation3 + $0x3220] sm:$0xff]
    %v3812 = vld [vmem:[#allocation3 + $0x3228] sm:$0xff]
    %v3813 = vld [vmem:[#allocation3 + $0x3230] sm:$0xff]
    %v3814 = vld [vmem:[#allocation3 + $0x3238] sm:$0xff]
    %v3815 = vld [vmem:[#allocation3 + $0x3240] sm:$0xff]
    %v3816 = vld [vmem:[#allocation3 + $0x3248] sm:$0xff]
    %v3817 = vld [vmem:[#allocation3 + $0x3250] sm:$0xff]
    %v3818 = vld [vmem:[#allocation3 + $0x3258] sm:$0xff]
    %v3819 = vld [vmem:[#allocation3 + $0x3260] sm:$0xff]
    %v3820 = vld [vmem:[#allocation3 + $0x3268] sm:$0xff]
    %v3821 = vld [vmem:[#allocation3 + $0x3270] sm:$0xff]
    %v3822 = vld [vmem:[#allocation3 + $0x3278] sm:$0xff]
    %v3823 = vld [vmem:[#allocation3 + $0x3280] sm:$0xff]
    %v3824 = vld [vmem:[#allocation3 + $0x3288] sm:$0xff]
    %v3825 = vld [vmem:[#allocation3 + $0x3290] sm:$0xff]
    %v3826 = vld [vmem:[#allocation3 + $0x3298] sm:$0xff]
    %v3827 = vld [vmem:[#allocation3 + $0x32a0] sm:$0xff]
    %v3828 = vld [vmem:[#allocation3 + $0x32a8] sm:$0xff]
    %v3829 = vld [vmem:[#allocation3 + $0x32b0] sm:$0xff]
    %v3830 = vld [vmem:[#allocation3 + $0x32b8] sm:$0xff]
    %v3831 = vld [vmem:[#allocation3 + $0x32c0] sm:$0xff]
    %v3832 = vld [vmem:[#allocation3 + $0x32c8] sm:$0xff]
    %v3833 = vld [vmem:[#allocation3 + $0x32d0] sm:$0xff]
    %v3834 = vld [vmem:[#allocation3 + $0x32d8] sm:$0xff]
    %v3835 = vld [vmem:[#allocation3 + $0x32e0] sm:$0xff]
    %v3836 = vld [vmem:[#allocation3 + $0x32e8] sm:$0xff]
    %v3837 = vld [vmem:[#allocation3 + $0x32f0] sm:$0xff]
    %v3838 = vld [vmem:[#allocation3 + $0x32f8] sm:$0xff]
    %v3839 = vld [vmem:[#allocation3 + $0x3300] sm:$0xff]
    %v3840 = vld [vmem:[#allocation3 + $0x3308] sm:$0xff]
    %v3841 = vld [vmem:[#allocation3 + $0x3310] sm:$0xff]
    %v3842 = vld [vmem:[#allocation3 + $0x3318] sm:$0xff]
    %v3843 = vld [vmem:[#allocation3 + $0x3320] sm:$0xff]
    %v3844 = vld [vmem:[#allocation3 + $0x3328] sm:$0xff]
    %v3845 = vld [vmem:[#allocation3 + $0x3330] sm:$0xff]
    %v3846 = vld [vmem:[#allocation3 + $0x3338] sm:$0xff]
    %v3847 = vld [vmem:[#allocation3 + $0x3340] sm:$0xff]
    %v3848 = vld [vmem:[#allocation3 + $0x3348] sm:$0xff]
    %v3849 = vld [vmem:[#allocation3 + $0x3350] sm:$0xff]
    %v3850 = vld [vmem:[#allocation3 + $0x3358] sm:$0xff]
    %v3851 = vld [vmem:[#allocation3 + $0x3360] sm:$0xff]
    %v3852 = vld [vmem:[#allocation3 + $0x3368] sm:$0xff]
    %v3853 = vld [vmem:[#allocation3 + $0x3370] sm:$0xff]
    %v3854 = vld [vmem:[#allocation3 + $0x3378] sm:$0xff]
    %v3855 = vld [vmem:[#allocation3 + $0x3380] sm:$0xff]
    %v3856 = vld [vmem:[#allocation3 + $0x3388] sm:$0xff]
    %v3857 = vld [vmem:[#allocation3 + $0x3390] sm:$0xff]
    %v3858 = vld [vmem:[#allocation3 + $0x3398] sm:$0xff]
    %v3859 = vld [vmem:[#allocation3 + $0x33a0] sm:$0xff]
    %v3860 = vld [vmem:[#allocation3 + $0x33a8] sm:$0xff]
    %v3861 = vld [vmem:[#allocation3 + $0x33b0] sm:$0xff]
    %v3862 = vld [vmem:[#allocation3 + $0x33b8] sm:$0xff]
    %v3863 = vld [vmem:[#allocation3 + $0x33c0] sm:$0xff]
    %v3864 = vld [vmem:[#allocation3 + $0x33c8] sm:$0xff]
    %v3865 = vld [vmem:[#allocation3 + $0x33d0] sm:$0xff]
    %v3866 = vld [vmem:[#allocation3 + $0x33d8] sm:$0xff]
    %v3867 = vld [vmem:[#allocation3 + $0x33e0] sm:$0xff]
    %v3868 = vld [vmem:[#allocation3 + $0x33e8] sm:$0xff]
    %v3869 = vld [vmem:[#allocation3 + $0x33f0] sm:$0xff]
    %v3870 = vld [vmem:[#allocation3 + $0x33f8] sm:$0xff]
    %v3871 = vld [vmem:[#allocation3 + $0x3400] sm:$0xff]
    %v3872 = vld [vmem:[#allocation3 + $0x3408] sm:$0xff]
    %v3873 = vld [vmem:[#allocation3 + $0x3410] sm:$0xff]
    %v3874 = vld [vmem:[#allocation3 + $0x3418] sm:$0xff]
    %v3875 = vld [vmem:[#allocation3 + $0x3420] sm:$0xff]
    %v3876 = vld [vmem:[#allocation3 + $0x3428] sm:$0xff]
    %v3877 = vld [vmem:[#allocation3 + $0x3430] sm:$0xff]
    %v3878 = vld [vmem:[#allocation3 + $0x3438] sm:$0xff]
    %v3879 = vld [vmem:[#allocation3 + $0x3440] sm:$0xff]
    %v3880 = vld [vmem:[#allocation3 + $0x3448] sm:$0xff]
    %v3881 = vld [vmem:[#allocation3 + $0x3450] sm:$0xff]
    %v3882 = vld [vmem:[#allocation3 + $0x3458] sm:$0xff]
    %v3883 = vld [vmem:[#allocation3 + $0x3460] sm:$0xff]
    %v3884 = vld [vmem:[#allocation3 + $0x3468] sm:$0xff]
    %v3885 = vld [vmem:[#allocation3 + $0x3470] sm:$0xff]
    %v3886 = vld [vmem:[#allocation3 + $0x3478] sm:$0xff]
    %v3887 = vld [vmem:[#allocation3 + $0x3480] sm:$0xff]
    %v3888 = vld [vmem:[#allocation3 + $0x3488] sm:$0xff]
    %v3889 = vld [vmem:[#allocation3 + $0x3490] sm:$0xff]
    %v3890 = vld [vmem:[#allocation3 + $0x3498] sm:$0xff]
    %v3891 = vld [vmem:[#allocation3 + $0x34a0] sm:$0xff]
    %v3892 = vld [vmem:[#allocation3 + $0x34a8] sm:$0xff]
    %v3893 = vld [vmem:[#allocation3 + $0x34b0] sm:$0xff]
    %v3894 = vld [vmem:[#allocation3 + $0x34b8] sm:$0xff]
    %v3895 = vld [vmem:[#allocation3 + $0x34c0] sm:$0xff]
    %v3896 = vld [vmem:[#allocation3 + $0x34c8] sm:$0xff]
    %v3897 = vld [vmem:[#allocation3 + $0x34d0] sm:$0xff]
    %v3898 = vld [vmem:[#allocation3 + $0x34d8] sm:$0xff]
    %v3899 = vld [vmem:[#allocation3 + $0x34e0] sm:$0xff]
    %v3900 = vld [vmem:[#allocation3 + $0x34e8] sm:$0xff]
    %v3901 = vld [vmem:[#allocation3 + $0x34f0] sm:$0xff]
    %v3902 = vld [vmem:[#allocation3 + $0x34f8] sm:$0xff]
    %v3903 = vld [vmem:[#allocation3 + $0x3500] sm:$0xff]
    %v3904 = vld [vmem:[#allocation3 + $0x3508] sm:$0xff]
    %v3905 = vld [vmem:[#allocation3 + $0x3510] sm:$0xff]
    %v3906 = vld [vmem:[#allocation3 + $0x3518] sm:$0xff]
    %v3907 = vld [vmem:[#allocation3 + $0x3520] sm:$0xff]
    %v3908 = vld [vmem:[#allocation3 + $0x3528] sm:$0xff]
    %v3909 = vld [vmem:[#allocation3 + $0x3530] sm:$0xff]
    %v3910 = vld [vmem:[#allocation3 + $0x3538] sm:$0xff]
    %v3911 = vld [vmem:[#allocation3 + $0x3540] sm:$0xff]
    %v3912 = vld [vmem:[#allocation3 + $0x3548] sm:$0xff]
    %v3913 = vld [vmem:[#allocation3 + $0x3550] sm:$0xff]
    %v3914 = vld [vmem:[#allocation3 + $0x3558] sm:$0xff]
    %v3915 = vld [vmem:[#allocation3 + $0x3560] sm:$0xff]
    %v3916 = vld [vmem:[#allocation3 + $0x3568] sm:$0xff]
    %v3917 = vld [vmem:[#allocation3 + $0x3570] sm:$0xff]
    %v3918 = vld [vmem:[#allocation3 + $0x3578] sm:$0xff]
    %v3919 = vld [vmem:[#allocation3 + $0x3580] sm:$0xff]
    %v3920 = vld [vmem:[#allocation3 + $0x3588] sm:$0xff]
    %v3921 = vld [vmem:[#allocation3 + $0x3590] sm:$0xff]
    %v3922 = vld [vmem:[#allocation3 + $0x3598] sm:$0xff]
    %v3923 = vld [vmem:[#allocation3 + $0x35a0] sm:$0xff]
    %v3924 = vld [vmem:[#allocation3 + $0x35a8] sm:$0xff]
    %v3925 = vld [vmem:[#allocation3 + $0x35b0] sm:$0xff]
    %v3926 = vld [vmem:[#allocation3 + $0x35b8] sm:$0xff]
    %v3927 = vld [vmem:[#allocation3 + $0x35c0] sm:$0xff]
    %v3928 = vld [vmem:[#allocation3 + $0x35c8] sm:$0xff]
    %v3929 = vld [vmem:[#allocation3 + $0x35d0] sm:$0xff]
    %v3930 = vld [vmem:[#allocation3 + $0x35d8] sm:$0xff]
    %v3931 = vld [vmem:[#allocation3 + $0x35e0] sm:$0xff]
    %v3932 = vld [vmem:[#allocation3 + $0x35e8] sm:$0xff]
    %v3933 = vld [vmem:[#allocation3 + $0x35f0] sm:$0xff]
    %v3934 = vld [vmem:[#allocation3 + $0x35f8] sm:$0xff]
    %v3935 = vld [vmem:[#allocation3 + $0x3600] sm:$0xff]
    %v3936 = vld [vmem:[#allocation3 + $0x3608] sm:$0xff]
    %v3937 = vld [vmem:[#allocation3 + $0x3610] sm:$0xff]
    %v3938 = vld [vmem:[#allocation3 + $0x3618] sm:$0xff]
    %v3939 = vld [vmem:[#allocation3 + $0x3620] sm:$0xff]
    %v3940 = vld [vmem:[#allocation3 + $0x3628] sm:$0xff]
    %v3941 = vld [vmem:[#allocation3 + $0x3630] sm:$0xff]
    %v3942 = vld [vmem:[#allocation3 + $0x3638] sm:$0xff]
    %v3943 = vld [vmem:[#allocation3 + $0x3640] sm:$0xff]
    %v3944 = vld [vmem:[#allocation3 + $0x3648] sm:$0xff]
    %v3945 = vld [vmem:[#allocation3 + $0x3650] sm:$0xff]
    %v3946 = vld [vmem:[#allocation3 + $0x3658] sm:$0xff]
    %v3947 = vld [vmem:[#allocation3 + $0x3660] sm:$0xff]
    %v3948 = vld [vmem:[#allocation3 + $0x3668] sm:$0xff]
    %v3949 = vld [vmem:[#allocation3 + $0x3670] sm:$0xff]
    %v3950 = vld [vmem:[#allocation3 + $0x3678] sm:$0xff]
    %v3951 = vld [vmem:[#allocation3 + $0x3680] sm:$0xff]
    %v3952 = vld [vmem:[#allocation3 + $0x3688] sm:$0xff]
    %v3953 = vld [vmem:[#allocation3 + $0x3690] sm:$0xff]
    %v3954 = vld [vmem:[#allocation3 + $0x3698] sm:$0xff]
    %v3955 = vld [vmem:[#allocation3 + $0x36a0] sm:$0xff]
    %v3956 = vld [vmem:[#allocation3 + $0x36a8] sm:$0xff]
    %v3957 = vld [vmem:[#allocation3 + $0x36b0] sm:$0xff]
    %v3958 = vld [vmem:[#allocation3 + $0x36b8] sm:$0xff]
    %v3959 = vld [vmem:[#allocation3 + $0x36c0] sm:$0xff]
    %v3960 = vld [vmem:[#allocation3 + $0x36c8] sm:$0xff]
    %v3961 = vld [vmem:[#allocation3 + $0x36d0] sm:$0xff]
    %v3962 = vld [vmem:[#allocation3 + $0x36d8] sm:$0xff]
    %v3963 = vld [vmem:[#allocation3 + $0x36e0] sm:$0xff]
    %v3964 = vld [vmem:[#allocation3 + $0x36e8] sm:$0xff]
    %v3965 = vld [vmem:[#allocation3 + $0x36f0] sm:$0xff]
    %v3966 = vld [vmem:[#allocation3 + $0x36f8] sm:$0xff]
    %v3967 = vld [vmem:[#allocation3 + $0x3700] sm:$0xff]
    %v3968 = vld [vmem:[#allocation3 + $0x3708] sm:$0xff]
    %v3969 = vld [vmem:[#allocation3 + $0x3710] sm:$0xff]
    %v3970 = vld [vmem:[#allocation3 + $0x3718] sm:$0xff]
    %v3971 = vld [vmem:[#allocation3 + $0x3720] sm:$0xff]
    %v3972 = vld [vmem:[#allocation3 + $0x3728] sm:$0xff]
    %v3973 = vld [vmem:[#allocation3 + $0x3730] sm:$0xff]
    %v3974 = vld [vmem:[#allocation3 + $0x3738] sm:$0xff]
    %v3975 = vld [vmem:[#allocation3 + $0x3740] sm:$0xff]
    %v3976 = vld [vmem:[#allocation3 + $0x3748] sm:$0xff]
    %v3977 = vld [vmem:[#allocation3 + $0x3750] sm:$0xff]
    %v3978 = vld [vmem:[#allocation3 + $0x3758] sm:$0xff]
    %v3979 = vld [vmem:[#allocation3 + $0x3760] sm:$0xff]
    %v3980 = vld [vmem:[#allocation3 + $0x3768] sm:$0xff]
    %v3981 = vld [vmem:[#allocation3 + $0x3770] sm:$0xff]
    %v3982 = vld [vmem:[#allocation3 + $0x3778] sm:$0xff]
    %v3983 = vld [vmem:[#allocation3 + $0x3780] sm:$0xff]
    %v3984 = vld [vmem:[#allocation3 + $0x3788] sm:$0xff]
    %v3985 = vld [vmem:[#allocation3 + $0x3790] sm:$0xff]
    %v3986 = vld [vmem:[#allocation3 + $0x3798] sm:$0xff]
    %v3987 = vld [vmem:[#allocation3 + $0x37a0] sm:$0xff]
    %v3988 = vld [vmem:[#allocation3 + $0x37a8] sm:$0xff]
    %v3989 = vld [vmem:[#allocation3 + $0x37b0] sm:$0xff]
    %v3990 = vld [vmem:[#allocation3 + $0x37b8] sm:$0xff]
    %v3991 = vld [vmem:[#allocation3 + $0x37c0] sm:$0xff]
    %v3992 = vld [vmem:[#allocation3 + $0x37c8] sm:$0xff]
    %v3993 = vld [vmem:[#allocation3 + $0x37d0] sm:$0xff]
    %v3994 = vld [vmem:[#allocation3 + $0x37d8] sm:$0xff]
    %v3995 = vld [vmem:[#allocation3 + $0x37e0] sm:$0xff]
    %v3996 = vld [vmem:[#allocation3 + $0x37e8] sm:$0xff]
    %v3997 = vld [vmem:[#allocation3 + $0x37f0] sm:$0xff]
    %v3998 = vld [vmem:[#allocation3 + $0x37f8] sm:$0xff]
    %v3999 = vld [vmem:[#allocation3 + $0x3800] sm:$0xff]
    %v4000 = vld [vmem:[#allocation3 + $0x3808] sm:$0xff]
    %v4001 = vld [vmem:[#allocation3 + $0x3810] sm:$0xff]
    %v4002 = vld [vmem:[#allocation3 + $0x3818] sm:$0xff]
    %v4003 = vld [vmem:[#allocation3 + $0x3820] sm:$0xff]
    %v4004 = vld [vmem:[#allocation3 + $0x3828] sm:$0xff]
    %v4005 = vld [vmem:[#allocation3 + $0x3830] sm:$0xff]
    %v4006 = vld [vmem:[#allocation3 + $0x3838] sm:$0xff]
    %v4007 = vld [vmem:[#allocation3 + $0x3840] sm:$0xff]
    %v4008 = vld [vmem:[#allocation3 + $0x3848] sm:$0xff]
    %v4009 = vld [vmem:[#allocation3 + $0x3850] sm:$0xff]
    %v4010 = vld [vmem:[#allocation3 + $0x3858] sm:$0xff]
    %v4011 = vld [vmem:[#allocation3 + $0x3860] sm:$0xff]
    %v4012 = vld [vmem:[#allocation3 + $0x3868] sm:$0xff]
    %v4013 = vld [vmem:[#allocation3 + $0x3870] sm:$0xff]
    %v4014 = vld [vmem:[#allocation3 + $0x3878] sm:$0xff]
    %v4015 = vld [vmem:[#allocation3 + $0x3880] sm:$0xff]
    %v4016 = vld [vmem:[#allocation3 + $0x3888] sm:$0xff]
    %v4017 = vld [vmem:[#allocation3 + $0x3890] sm:$0xff]
    %v4018 = vld [vmem:[#allocation3 + $0x3898] sm:$0xff]
    %v4019 = vld [vmem:[#allocation3 + $0x38a0] sm:$0xff]
    %v4020 = vld [vmem:[#allocation3 + $0x38a8] sm:$0xff]
    %v4021 = vld [vmem:[#allocation3 + $0x38b0] sm:$0xff]
    %v4022 = vld [vmem:[#allocation3 + $0x38b8] sm:$0xff]
    %v4023 = vld [vmem:[#allocation3 + $0x38c0] sm:$0xff]
    %v4024 = vld [vmem:[#allocation3 + $0x38c8] sm:$0xff]
    %v4025 = vld [vmem:[#allocation3 + $0x38d0] sm:$0xff]
    %v4026 = vld [vmem:[#allocation3 + $0x38d8] sm:$0xff]
    %v4027 = vld [vmem:[#allocation3 + $0x38e0] sm:$0xff]
    %v4028 = vld [vmem:[#allocation3 + $0x38e8] sm:$0xff]
    %v4029 = vld [vmem:[#allocation3 + $0x38f0] sm:$0xff]
    %v4030 = vld [vmem:[#allocation3 + $0x38f8] sm:$0xff]
    %v4031 = vld [vmem:[#allocation3 + $0x3900] sm:$0xff]
    %v4032 = vld [vmem:[#allocation3 + $0x3908] sm:$0xff]
    %v4033 = vld [vmem:[#allocation3 + $0x3910] sm:$0xff]
    %v4034 = vld [vmem:[#allocation3 + $0x3918] sm:$0xff]
    %v4035 = vld [vmem:[#allocation3 + $0x3920] sm:$0xff]
    %v4036 = vld [vmem:[#allocation3 + $0x3928] sm:$0xff]
    %v4037 = vld [vmem:[#allocation3 + $0x3930] sm:$0xff]
    %v4038 = vld [vmem:[#allocation3 + $0x3938] sm:$0xff]
    %v4039 = vld [vmem:[#allocation3 + $0x3940] sm:$0xff]
    %v4040 = vld [vmem:[#allocation3 + $0x3948] sm:$0xff]
    %v4041 = vld [vmem:[#allocation3 + $0x3950] sm:$0xff]
    %v4042 = vld [vmem:[#allocation3 + $0x3958] sm:$0xff]
    %v4043 = vld [vmem:[#allocation3 + $0x3960] sm:$0xff]
    %v4044 = vld [vmem:[#allocation3 + $0x3968] sm:$0xff]
    %v4045 = vld [vmem:[#allocation3 + $0x3970] sm:$0xff]
    %v4046 = vld [vmem:[#allocation3 + $0x3978] sm:$0xff]
    %v4047 = vld [vmem:[#allocation3 + $0x3980] sm:$0xff]
    %v4048 = vld [vmem:[#allocation3 + $0x3988] sm:$0xff]
    %v4049 = vld [vmem:[#allocation3 + $0x3990] sm:$0xff]
    %v4050 = vld [vmem:[#allocation3 + $0x3998] sm:$0xff]
    %v4051 = vld [vmem:[#allocation3 + $0x39a0] sm:$0xff]
    %v4052 = vld [vmem:[#allocation3 + $0x39a8] sm:$0xff]
    %v4053 = vld [vmem:[#allocation3 + $0x39b0] sm:$0xff]
    %v4054 = vld [vmem:[#allocation3 + $0x39b8] sm:$0xff]
    %v4055 = vld [vmem:[#allocation3 + $0x39c0] sm:$0xff]
    %v4056 = vld [vmem:[#allocation3 + $0x39c8] sm:$0xff]
    %v4057 = vld [vmem:[#allocation3 + $0x39d0] sm:$0xff]
    %v4058 = vld [vmem:[#allocation3 + $0x39d8] sm:$0xff]
    %v4059 = vld [vmem:[#allocation3 + $0x39e0] sm:$0xff]
    %v4060 = vld [vmem:[#allocation3 + $0x39e8] sm:$0xff]
    %v4061 = vld [vmem:[#allocation3 + $0x39f0] sm:$0xff]
    %v4062 = vld [vmem:[#allocation3 + $0x39f8] sm:$0xff]
    %v4063 = vld [vmem:[#allocation3 + $0x3a00] sm:$0xff]
    %v4064 = vld [vmem:[#allocation3 + $0x3a08] sm:$0xff]
    %v4065 = vld [vmem:[#allocation3 + $0x3a10] sm:$0xff]
    %v4066 = vld [vmem:[#allocation3 + $0x3a18] sm:$0xff]
    %v4067 = vld [vmem:[#allocation3 + $0x3a20] sm:$0xff]
    %v4068 = vld [vmem:[#allocation3 + $0x3a28] sm:$0xff]
    %v4069 = vld [vmem:[#allocation3 + $0x3a30] sm:$0xff]
    %v4070 = vld [vmem:[#allocation3 + $0x3a38] sm:$0xff]
    %v4071 = vld [vmem:[#allocation3 + $0x3a40] sm:$0xff]
    %v4072 = vld [vmem:[#allocation3 + $0x3a48] sm:$0xff]
    %v4073 = vld [vmem:[#allocation3 + $0x3a50] sm:$0xff]
    %v4074 = vld [vmem:[#allocation3 + $0x3a58] sm:$0xff]
    %v4075 = vld [vmem:[#allocation3 + $0x3a60] sm:$0xff]
    %v4076 = vld [vmem:[#allocation3 + $0x3a68] sm:$0xff]
    %v4077 = vld [vmem:[#allocation3 + $0x3a70] sm:$0xff]
    %v4078 = vld [vmem:[#allocation3 + $0x3a78] sm:$0xff]
    %v4079 = vld [vmem:[#allocation3 + $0x3a80] sm:$0xff]
    %v4080 = vld [vmem:[#allocation3 + $0x3a88] sm:$0xff]
    %v4081 = vld [vmem:[#allocation3 + $0x3a90] sm:$0xff]
    %v4082 = vld [vmem:[#allocation3 + $0x3a98] sm:$0xff]
    %v4083 = vld [vmem:[#allocation3 + $0x3aa0] sm:$0xff]
    %v4084 = vld [vmem:[#allocation3 + $0x3aa8] sm:$0xff]
    %v4085 = vld [vmem:[#allocation3 + $0x3ab0] sm:$0xff]
    %v4086 = vld [vmem:[#allocation3 + $0x3ab8] sm:$0xff]
    %v4087 = vld [vmem:[#allocation3 + $0x3ac0] sm:$0xff]
    %v4088 = vld [vmem:[#allocation3 + $0x3ac8] sm:$0xff]
    %v4089 = vld [vmem:[#allocation3 + $0x3ad0] sm:$0xff]
    %v4090 = vld [vmem:[#allocation3 + $0x3ad8] sm:$0xff]
    %v4091 = vld [vmem:[#allocation3 + $0x3ae0] sm:$0xff]
    %v4092 = vld [vmem:[#allocation3 + $0x3ae8] sm:$0xff]
    %v4093 = vld [vmem:[#allocation3 + $0x3af0] sm:$0xff]
    %v4094 = vld [vmem:[#allocation3 + $0x3af8] sm:$0xff]
    %v4095 = vld [vmem:[#allocation3 + $0x3b00] sm:$0xff]
    %v4096 = vld [vmem:[#allocation3 + $0x3b08] sm:$0xff]
    %v4097 = vld [vmem:[#allocation3 + $0x3b10] sm:$0xff]
    %v4098 = vld [vmem:[#allocation3 + $0x3b18] sm:$0xff]
    %v4099 = vld [vmem:[#allocation3 + $0x3b20] sm:$0xff]
    %v4100 = vld [vmem:[#allocation3 + $0x3b28] sm:$0xff]
    %v4101 = vld [vmem:[#allocation3 + $0x3b30] sm:$0xff]
    %v4102 = vld [vmem:[#allocation3 + $0x3b38] sm:$0xff]
    %v4103 = vld [vmem:[#allocation3 + $0x3b40] sm:$0xff]
    %v4104 = vld [vmem:[#allocation3 + $0x3b48] sm:$0xff]
    %v4105 = vld [vmem:[#allocation3 + $0x3b50] sm:$0xff]
    %v4106 = vld [vmem:[#allocation3 + $0x3b58] sm:$0xff]
    %v4107 = vld [vmem:[#allocation3 + $0x3b60] sm:$0xff]
    %v4108 = vld [vmem:[#allocation3 + $0x3b68] sm:$0xff]
    %v4109 = vld [vmem:[#allocation3 + $0x3b70] sm:$0xff]
    %v4110 = vld [vmem:[#allocation3 + $0x3b78] sm:$0xff]
    %v4111 = vld [vmem:[#allocation3 + $0x3b80] sm:$0xff]
    %v4112 = vld [vmem:[#allocation3 + $0x3b88] sm:$0xff]
    %v4113 = vld [vmem:[#allocation3 + $0x3b90] sm:$0xff]
    %v4114 = vld [vmem:[#allocation3 + $0x3b98] sm:$0xff]
    %v4115 = vld [vmem:[#allocation3 + $0x3ba0] sm:$0xff]
    %v4116 = vld [vmem:[#allocation3 + $0x3ba8] sm:$0xff]
    %v4117 = vld [vmem:[#allocation3 + $0x3bb0] sm:$0xff]
    %v4118 = vld [vmem:[#allocation3 + $0x3bb8] sm:$0xff]
    %v4119 = vld [vmem:[#allocation3 + $0x3bc0] sm:$0xff]
    %v4120 = vld [vmem:[#allocation3 + $0x3bc8] sm:$0xff]
    %v4121 = vld [vmem:[#allocation3 + $0x3bd0] sm:$0xff]
    %v4122 = vld [vmem:[#allocation3 + $0x3bd8] sm:$0xff]
    %v4123 = vld [vmem:[#allocation3 + $0x3be0] sm:$0xff]
    %v4124 = vld [vmem:[#allocation3 + $0x3be8] sm:$0xff]
    %v4125 = vld [vmem:[#allocation3 + $0x3bf0] sm:$0xff]
    %v4126 = vld [vmem:[#allocation3 + $0x3bf8] sm:$0xff]
    %v4127 = vld [vmem:[#allocation3 + $0x3c00] sm:$0xff]
    %v4128 = vld [vmem:[#allocation3 + $0x3c08] sm:$0xff]
    %v4129 = vld [vmem:[#allocation3 + $0x3c10] sm:$0xff]
    %v4130 = vld [vmem:[#allocation3 + $0x3c18] sm:$0xff]
    %v4131 = vld [vmem:[#allocation3 + $0x3c20] sm:$0xff]
    %v4132 = vld [vmem:[#allocation3 + $0x3c28] sm:$0xff]
    %v4133 = vld [vmem:[#allocation3 + $0x3c30] sm:$0xff]
    %v4134 = vld [vmem:[#allocation3 + $0x3c38] sm:$0xff]
    %v4135 = vld [vmem:[#allocation3 + $0x3c40] sm:$0xff]
    %v4136 = vld [vmem:[#allocation3 + $0x3c48] sm:$0xff]
    %v4137 = vld [vmem:[#allocation3 + $0x3c50] sm:$0xff]
    %v4138 = vld [vmem:[#allocation3 + $0x3c58] sm:$0xff]
    %v4139 = vld [vmem:[#allocation3 + $0x3c60] sm:$0xff]
    %v4140 = vld [vmem:[#allocation3 + $0x3c68] sm:$0xff]
    %v4141 = vld [vmem:[#allocation3 + $0x3c70] sm:$0xff]
    %v4142 = vld [vmem:[#allocation3 + $0x3c78] sm:$0xff]
    %v4143 = vld [vmem:[#allocation3 + $0x3c80] sm:$0xff]
    %v4144 = vld [vmem:[#allocation3 + $0x3c88] sm:$0xff]
    %v4145 = vld [vmem:[#allocation3 + $0x3c90] sm:$0xff]
    %v4146 = vld [vmem:[#allocation3 + $0x3c98] sm:$0xff]
    %v4147 = vld [vmem:[#allocation3 + $0x3ca0] sm:$0xff]
    %v4148 = vld [vmem:[#allocation3 + $0x3ca8] sm:$0xff]
    %v4149 = vld [vmem:[#allocation3 + $0x3cb0] sm:$0xff]
    %v4150 = vld [vmem:[#allocation3 + $0x3cb8] sm:$0xff]
    %v4151 = vld [vmem:[#allocation3 + $0x3cc0] sm:$0xff]
    %v4152 = vld [vmem:[#allocation3 + $0x3cc8] sm:$0xff]
    %v4153 = vld [vmem:[#allocation3 + $0x3cd0] sm:$0xff]
    %v4154 = vld [vmem:[#allocation3 + $0x3cd8] sm:$0xff]
    %v4155 = vld [vmem:[#allocation3 + $0x3ce0] sm:$0xff]
    %v4156 = vld [vmem:[#allocation3 + $0x3ce8] sm:$0xff]
    %v4157 = vld [vmem:[#allocation3 + $0x3cf0] sm:$0xff]
    %v4158 = vld [vmem:[#allocation3 + $0x3cf8] sm:$0xff]
    %v4159 = vld [vmem:[#allocation3 + $0x3d00] sm:$0xff]
    %v4160 = vld [vmem:[#allocation3 + $0x3d08] sm:$0xff]
    %v4161 = vld [vmem:[#allocation3 + $0x3d10] sm:$0xff]
    %v4162 = vld [vmem:[#allocation3 + $0x3d18] sm:$0xff]
    %v4163 = vld [vmem:[#allocation3 + $0x3d20] sm:$0xff]
    %v4164 = vld [vmem:[#allocation3 + $0x3d28] sm:$0xff]
    %v4165 = vld [vmem:[#allocation3 + $0x3d30] sm:$0xff]
    %v4166 = vld [vmem:[#allocation3 + $0x3d38] sm:$0xff]
    %v4167 = vld [vmem:[#allocation3 + $0x3d40] sm:$0xff]
    %v4168 = vld [vmem:[#allocation3 + $0x3d48] sm:$0xff]
    %v4169 = vld [vmem:[#allocation3 + $0x3d50] sm:$0xff]
    %v4170 = vld [vmem:[#allocation3 + $0x3d58] sm:$0xff]
    %v4171 = vld [vmem:[#allocation3 + $0x3d60] sm:$0xff]
    %v4172 = vld [vmem:[#allocation3 + $0x3d68] sm:$0xff]
    %v4173 = vld [vmem:[#allocation3 + $0x3d70] sm:$0xff]
    %v4174 = vld [vmem:[#allocation3 + $0x3d78] sm:$0xff]
    %v4175 = vld [vmem:[#allocation3 + $0x3d80] sm:$0xff]
    %v4176 = vld [vmem:[#allocation3 + $0x3d88] sm:$0xff]
    %v4177 = vld [vmem:[#allocation3 + $0x3d90] sm:$0xff]
    %v4178 = vld [vmem:[#allocation3 + $0x3d98] sm:$0xff]
    %v4179 = vld [vmem:[#allocation3 + $0x3da0] sm:$0xff]
    %v4180 = vld [vmem:[#allocation3 + $0x3da8] sm:$0xff]
    %v4181 = vld [vmem:[#allocation3 + $0x3db0] sm:$0xff]
    %v4182 = vld [vmem:[#allocation3 + $0x3db8] sm:$0xff]
    %v4183 = vld [vmem:[#allocation3 + $0x3dc0] sm:$0xff]
    %v4184 = vld [vmem:[#allocation3 + $0x3dc8] sm:$0xff]
    %v4185 = vld [vmem:[#allocation3 + $0x3dd0] sm:$0xff]
    %v4186 = vld [vmem:[#allocation3 + $0x3dd8] sm:$0xff]
    %v4187 = vld [vmem:[#allocation3 + $0x3de0] sm:$0xff]
    %v4188 = vld [vmem:[#allocation3 + $0x3de8] sm:$0xff]
    %v4189 = vld [vmem:[#allocation3 + $0x3df0] sm:$0xff]
    %v4190 = vld [vmem:[#allocation3 + $0x3df8] sm:$0xff]
    %v4191 = vld [vmem:[#allocation3 + $0x3e00] sm:$0xff]
    %v4192 = vld [vmem:[#allocation3 + $0x3e08] sm:$0xff]
    %v4193 = vld [vmem:[#allocation3 + $0x3e10] sm:$0xff]
    %v4194 = vld [vmem:[#allocation3 + $0x3e18] sm:$0xff]
    %v4195 = vld [vmem:[#allocation3 + $0x3e20] sm:$0xff]
    %v4196 = vld [vmem:[#allocation3 + $0x3e28] sm:$0xff]
    %v4197 = vld [vmem:[#allocation3 + $0x3e30] sm:$0xff]
    %v4198 = vld [vmem:[#allocation3 + $0x3e38] sm:$0xff]
    %v4199 = vld [vmem:[#allocation3 + $0x3e40] sm:$0xff]
    %v4200 = vld [vmem:[#allocation3 + $0x3e48] sm:$0xff]
    %v4201 = vld [vmem:[#allocation3 + $0x3e50] sm:$0xff]
    %v4202 = vld [vmem:[#allocation3 + $0x3e58] sm:$0xff]
    %v4203 = vld [vmem:[#allocation3 + $0x3e60] sm:$0xff]
    %v4204 = vld [vmem:[#allocation3 + $0x3e68] sm:$0xff]
    %v4205 = vld [vmem:[#allocation3 + $0x3e70] sm:$0xff]
    %v4206 = vld [vmem:[#allocation3 + $0x3e78] sm:$0xff]
    %v4207 = vld [vmem:[#allocation3 + $0x3e80] sm:$0xff]
    %v4208 = vld [vmem:[#allocation3 + $0x3e88] sm:$0xff]
    %v4209 = vld [vmem:[#allocation3 + $0x3e90] sm:$0xff]
    %v4210 = vld [vmem:[#allocation3 + $0x3e98] sm:$0xff]
    %v4211 = vld [vmem:[#allocation3 + $0x3ea0] sm:$0xff]
    %v4212 = vld [vmem:[#allocation3 + $0x3ea8] sm:$0xff]
    %v4213 = vld [vmem:[#allocation3 + $0x3eb0] sm:$0xff]
    %v4214 = vld [vmem:[#allocation3 + $0x3eb8] sm:$0xff]
    %v4215 = vld [vmem:[#allocation3 + $0x3ec0] sm:$0xff]
    %v4216 = vld [vmem:[#allocation3 + $0x3ec8] sm:$0xff]
    %v4217 = vld [vmem:[#allocation3 + $0x3ed0] sm:$0xff]
    %v4218 = vld [vmem:[#allocation3 + $0x3ed8] sm:$0xff]
    %v4219 = vld [vmem:[#allocation3 + $0x3ee0] sm:$0xff]
    %v4220 = vld [vmem:[#allocation3 + $0x3ee8] sm:$0xff]
    %v4221 = vld [vmem:[#allocation3 + $0x3ef0] sm:$0xff]
    %v4222 = vld [vmem:[#allocation3 + $0x3ef8] sm:$0xff]
    %v4223 = vld [vmem:[#allocation3 + $0x3f00] sm:$0xff]
    %v4224 = vld [vmem:[#allocation3 + $0x3f08] sm:$0xff]
    %v4225 = vld [vmem:[#allocation3 + $0x3f10] sm:$0xff]
    %v4226 = vld [vmem:[#allocation3 + $0x3f18] sm:$0xff]
    %v4227 = vld [vmem:[#allocation3 + $0x3f20] sm:$0xff]
    %v4228 = vld [vmem:[#allocation3 + $0x3f28] sm:$0xff]
    %v4229 = vld [vmem:[#allocation3 + $0x3f30] sm:$0xff]
    %v4230 = vld [vmem:[#allocation3 + $0x3f38] sm:$0xff]
    %v4231 = vld [vmem:[#allocation3 + $0x3f40] sm:$0xff]
    %v4232 = vld [vmem:[#allocation3 + $0x3f48] sm:$0xff]
    %v4233 = vld [vmem:[#allocation3 + $0x3f50] sm:$0xff]
    %v4234 = vld [vmem:[#allocation3 + $0x3f58] sm:$0xff]
    %v4235 = vld [vmem:[#allocation3 + $0x3f60] sm:$0xff]
    %v4236 = vld [vmem:[#allocation3 + $0x3f68] sm:$0xff]
    %v4237 = vld [vmem:[#allocation3 + $0x3f70] sm:$0xff]
    %v4238 = vld [vmem:[#allocation3 + $0x3f78] sm:$0xff]
    %v4239 = vld [vmem:[#allocation3 + $0x3f80] sm:$0xff]
    %v4240 = vld [vmem:[#allocation3 + $0x3f88] sm:$0xff]
    %v4241 = vld [vmem:[#allocation3 + $0x3f90] sm:$0xff]
    %v4242 = vld [vmem:[#allocation3 + $0x3f98] sm:$0xff]
    %v4243 = vld [vmem:[#allocation3 + $0x3fa0] sm:$0xff]
    %v4244 = vld [vmem:[#allocation3 + $0x3fa8] sm:$0xff]
    %v4245 = vld [vmem:[#allocation3 + $0x3fb0] sm:$0xff]
    %v4246 = vld [vmem:[#allocation3 + $0x3fb8] sm:$0xff]
    %v4247 = vld [vmem:[#allocation3 + $0x3fc0] sm:$0xff]
    %v4248 = vld [vmem:[#allocation3 + $0x3fc8] sm:$0xff]
    %v4249 = vld [vmem:[#allocation3 + $0x3fd0] sm:$0xff]
    %v4250 = vld [vmem:[#allocation3 + $0x3fd8] sm:$0xff]
    %v4251 = vld [vmem:[#allocation3 + $0x3fe0] sm:$0xff]
    %v4252 = vld [vmem:[#allocation3 + $0x3fe8] sm:$0xff]
    %v4253 = vld [vmem:[#allocation3 + $0x3ff0] sm:$0xff]
    %v4254 = vld [vmem:[#allocation3 + $0x3ff8] sm:$0xff]
    %4255 = vmatpush.msra.mxu0 %v2327
    %4256 = vmatpush.msra.mxu0 %v2319
    %4257 = vmatpush.msra.mxu0 %v2311
    %4258 = vmatpush.msra.mxu0 %v2303
    %4259 = vmatpush.msra.mxu0 %v2295
    %4260 = vmatpush.msra.mxu0 %v2287
    %4261 = vmatpush.msra.mxu0 %v2279
    %4262 = vmatpush.msra.mxu0 %v2271
    %4263 = vmatpush.msra.mxu0 %v2263
    %4264 = vmatpush.msra.mxu0 %v2255
    %4265 = vmatpush.msra.mxu0 %v2247
    %4266 = vmatpush.msra.mxu0 %v2239
    %4267 = vmatpush.msra.mxu0 %v2231
    %4268 = vmatpush.msra.mxu0 %v2223
    %4269 = vmatpush.msra.mxu0 %v2215
    %4270 = vmatpush.msra.mxu0 %v2207
    %4271 = vmatmul.f32.gmra.mxu0 %v2187
    %v4272 = vpop.f32.mrf.mxu0
    %v4273 = vadd.f32 0.0, %v4272
    %4274 = vdwg.mxu0
    %4275 = vmatpush.msra.mxu0 %v2455
    %4276 = vmatpush.msra.mxu0 %v2447
    %4277 = vmatpush.msra.mxu0 %v2439
    %4278 = vmatpush.msra.mxu0 %v2431
    %4279 = vmatpush.msra.mxu0 %v2423
    %4280 = vmatpush.msra.mxu0 %v2415
    %4281 = vmatpush.msra.mxu0 %v2407
    %4282 = vmatpush.msra.mxu0 %v2399
    %4283 = vmatpush.msra.mxu0 %v2391
    %4284 = vmatpush.msra.mxu0 %v2383
    %4285 = vmatpush.msra.mxu0 %v2375
    %4286 = vmatpush.msra.mxu0 %v2367
    %4287 = vmatpush.msra.mxu0 %v2359
    %4288 = vmatpush.msra.mxu0 %v2351
    %4289 = vmatpush.msra.mxu0 %v2343
    %4290 = vmatpush.msra.mxu0 %v2335
    %4291 = vmatmul.f32.gmra.mxu0 %v2188
    %v4292 = vpop.f32.mrf.mxu0
    %v4293 = vadd.f32 %v4273, %v4292
    %4294 = vdwg.mxu0
    %4295 = vmatpush.msra.mxu0 %v2583
    %4296 = vmatpush.msra.mxu0 %v2575
    %4297 = vmatpush.msra.mxu0 %v2567
    %4298 = vmatpush.msra.mxu0 %v2559
    %4299 = vmatpush.msra.mxu0 %v2551
    %4300 = vmatpush.msra.mxu0 %v2543
    %4301 = vmatpush.msra.mxu0 %v2535
    %4302 = vmatpush.msra.mxu0 %v2527
    %4303 = vmatpush.msra.mxu0 %v2519
    %4304 = vmatpush.msra.mxu0 %v2511
    %4305 = vmatpush.msra.mxu0 %v2503
    %4306 = vmatpush.msra.mxu0 %v2495
    %4307 = vmatpush.msra.mxu0 %v2487
    %4308 = vmatpush.msra.mxu0 %v2479
    %4309 = vmatpush.msra.mxu0 %v2471
    %4310 = vmatpush.msra.mxu0 %v2463
    %4311 = vmatmul.f32.gmra.mxu0 %v2189
    %v4312 = vpop.f32.mrf.mxu0
    %v4313 = vadd.f32 %v4293, %v4312
    %4314 = vdwg.mxu0
    %4315 = vmatpush.msra.mxu0 %v2711
    %4316 = vmatpush.msra.mxu0 %v2703
    %4317 = vmatpush.msra.mxu0 %v2695
    %4318 = vmatpush.msra.mxu0 %v2687
    %4319 = vmatpush.msra.mxu0 %v2679
    %4320 = vmatpush.msra.mxu0 %v2671
    %4321 = vmatpush.msra.mxu0 %v2663
    %4322 = vmatpush.msra.mxu0 %v2655
    %4323 = vmatpush.msra.mxu0 %v2647
    %4324 = vmatpush.msra.mxu0 %v2639
    %4325 = vmatpush.msra.mxu0 %v2631
    %4326 = vmatpush.msra.mxu0 %v2623
    %4327 = vmatpush.msra.mxu0 %v2615
    %4328 = vmatpush.msra.mxu0 %v2607
    %4329 = vmatpush.msra.mxu0 %v2599
    %4330 = vmatpush.msra.mxu0 %v2591
    %4331 = vmatmul.f32.gmra.mxu0 %v2190
    %v4332 = vpop.f32.mrf.mxu0
    %v4333 = vadd.f32 %v4313, %v4332
    %4334 = vdwg.mxu0
    %4335 = vmatpush.msra.mxu0 %v2839
    %4336 = vmatpush.msra.mxu0 %v2831
    %4337 = vmatpush.msra.mxu0 %v2823
    %4338 = vmatpush.msra.mxu0 %v2815
    %4339 = vmatpush.msra.mxu0 %v2807
    %4340 = vmatpush.msra.mxu0 %v2799
    %4341 = vmatpush.msra.mxu0 %v2791
    %4342 = vmatpush.msra.mxu0 %v2783
    %4343 = vmatpush.msra.mxu0 %v2775
    %4344 = vmatpush.msra.mxu0 %v2767
    %4345 = vmatpush.msra.mxu0 %v2759
    %4346 = vmatpush.msra.mxu0 %v2751
    %4347 = vmatpush.msra.mxu0 %v2743
    %4348 = vmatpush.msra.mxu0 %v2735
    %4349 = vmatpush.msra.mxu0 %v2727
    %4350 = vmatpush.msra.mxu0 %v2719
    %4351 = vmatmul.f32.gmra.mxu0 %v2191
    %v4352 = vpop.f32.mrf.mxu0
    %v4353 = vadd.f32 %v4333, %v4352
    %4354 = vdwg.mxu0
    %4355 = vmatpush.msra.mxu0 %v2967
    %4356 = vmatpush.msra.mxu0 %v2959
    %4357 = vmatpush.msra.mxu0 %v2951
    %4358 = vmatpush.msra.mxu0 %v2943
    %4359 = vmatpush.msra.mxu0 %v2935
    %4360 = vmatpush.msra.mxu0 %v2927
    %4361 = vmatpush.msra.mxu0 %v2919
    %4362 = vmatpush.msra.mxu0 %v2911
    %4363 = vmatpush.msra.mxu0 %v2903
    %4364 = vmatpush.msra.mxu0 %v2895
    %4365 = vmatpush.msra.mxu0 %v2887
    %4366 = vmatpush.msra.mxu0 %v2879
    %4367 = vmatpush.msra.mxu0 %v2871
    %4368 = vmatpush.msra.mxu0 %v2863
    %4369 = vmatpush.msra.mxu0 %v2855
    %4370 = vmatpush.msra.mxu0 %v2847
    %4371 = vmatmul.f32.gmra.mxu0 %v2192
    %v4372 = vpop.f32.mrf.mxu0
    %v4373 = vadd.f32 %v4353, %v4372
    %4374 = vdwg.mxu0
    %4375 = vmatpush.msra.mxu0 %v3095
    %4376 = vmatpush.msra.mxu0 %v3087
    %4377 = vmatpush.msra.mxu0 %v3079
    %4378 = vmatpush.msra.mxu0 %v3071
    %4379 = vmatpush.msra.mxu0 %v3063
    %4380 = vmatpush.msra.mxu0 %v3055
    %4381 = vmatpush.msra.mxu0 %v3047
    %4382 = vmatpush.msra.mxu0 %v3039
    %4383 = vmatpush.msra.mxu0 %v3031
    %4384 = vmatpush.msra.mxu0 %v3023
    %4385 = vmatpush.msra.mxu0 %v3015
    %4386 = vmatpush.msra.mxu0 %v3007
    %4387 = vmatpush.msra.mxu0 %v2999
    %4388 = vmatpush.msra.mxu0 %v2991
    %4389 = vmatpush.msra.mxu0 %v2983
    %4390 = vmatpush.msra.mxu0 %v2975
    %4391 = vmatmul.f32.gmra.mxu0 %v2193
    %v4392 = vpop.f32.mrf.mxu0
    %v4393 = vadd.f32 %v4373, %v4392
    %4394 = vdwg.mxu0
    %4395 = vmatpush.msra.mxu0 %v3223
    %4396 = vmatpush.msra.mxu0 %v3215
    %4397 = vmatpush.msra.mxu0 %v3207
    %4398 = vmatpush.msra.mxu0 %v3199
    %4399 = vmatpush.msra.mxu0 %v3191
    %4400 = vmatpush.msra.mxu0 %v3183
    %4401 = vmatpush.msra.mxu0 %v3175
    %4402 = vmatpush.msra.mxu0 %v3167
    %4403 = vmatpush.msra.mxu0 %v3159
    %4404 = vmatpush.msra.mxu0 %v3151
    %4405 = vmatpush.msra.mxu0 %v3143
    %4406 = vmatpush.msra.mxu0 %v3135
    %4407 = vmatpush.msra.mxu0 %v3127
    %4408 = vmatpush.msra.mxu0 %v3119
    %4409 = vmatpush.msra.mxu0 %v3111
    %4410 = vmatpush.msra.mxu0 %v3103
    %4411 = vmatmul.f32.gmra.mxu0 %v2194
    %v4412 = vpop.f32.mrf.mxu0
    %v4413 = vadd.f32 %v4393, %v4412
    %4414 = vdwg.mxu0
    %4415 = vmatpush.msra.mxu0 %v3351
    %4416 = vmatpush.msra.mxu0 %v3343
    %4417 = vmatpush.msra.mxu0 %v3335
    %4418 = vmatpush.msra.mxu0 %v3327
    %4419 = vmatpush.msra.mxu0 %v3319
    %4420 = vmatpush.msra.mxu0 %v3311
    %4421 = vmatpush.msra.mxu0 %v3303
    %4422 = vmatpush.msra.mxu0 %v3295
    %4423 = vmatpush.msra.mxu0 %v3287
    %4424 = vmatpush.msra.mxu0 %v3279
    %4425 = vmatpush.msra.mxu0 %v3271
    %4426 = vmatpush.msra.mxu0 %v3263
    %4427 = vmatpush.msra.mxu0 %v3255
    %4428 = vmatpush.msra.mxu0 %v3247
    %4429 = vmatpush.msra.mxu0 %v3239
    %4430 = vmatpush.msra.mxu0 %v3231
    %4431 = vmatmul.f32.gmra.mxu0 %v2195
    %v4432 = vpop.f32.mrf.mxu0
    %v4433 = vadd.f32 %v4413, %v4432
    %4434 = vdwg.mxu0
    %4435 = vmatpush.msra.mxu0 %v3479
    %4436 = vmatpush.msra.mxu0 %v3471
    %4437 = vmatpush.msra.mxu0 %v3463
    %4438 = vmatpush.msra.mxu0 %v3455
    %4439 = vmatpush.msra.mxu0 %v3447
    %4440 = vmatpush.msra.mxu0 %v3439
    %4441 = vmatpush.msra.mxu0 %v3431
    %4442 = vmatpush.msra.mxu0 %v3423
    %4443 = vmatpush.msra.mxu0 %v3415
    %4444 = vmatpush.msra.mxu0 %v3407
    %4445 = vmatpush.msra.mxu0 %v3399
    %4446 = vmatpush.msra.mxu0 %v3391
    %4447 = vmatpush.msra.mxu0 %v3383
    %4448 = vmatpush.msra.mxu0 %v3375
    %4449 = vmatpush.msra.mxu0 %v3367
    %4450 = vmatpush.msra.mxu0 %v3359
    %4451 = vmatmul.f32.gmra.mxu0 %v2196
    %v4452 = vpop.f32.mrf.mxu0
    %v4453 = vadd.f32 %v4433, %v4452
    %4454 = vdwg.mxu0
    %4455 = vmatpush.msra.mxu0 %v3607
    %4456 = vmatpush.msra.mxu0 %v3599
    %4457 = vmatpush.msra.mxu0 %v3591
    %4458 = vmatpush.msra.mxu0 %v3583
    %4459 = vmatpush.msra.mxu0 %v3575
    %4460 = vmatpush.msra.mxu0 %v3567
    %4461 = vmatpush.msra.mxu0 %v3559
    %4462 = vmatpush.msra.mxu0 %v3551
    %4463 = vmatpush.msra.mxu0 %v3543
    %4464 = vmatpush.msra.mxu0 %v3535
    %4465 = vmatpush.msra.mxu0 %v3527
    %4466 = vmatpush.msra.mxu0 %v3519
    %4467 = vmatpush.msra.mxu0 %v3511
    %4468 = vmatpush.msra.mxu0 %v3503
    %4469 = vmatpush.msra.mxu0 %v3495
    %4470 = vmatpush.msra.mxu0 %v3487
    %4471 = vmatmul.f32.gmra.mxu0 %v2197
    %v4472 = vpop.f32.mrf.mxu0
    %v4473 = vadd.f32 %v4453, %v4472
    %4474 = vdwg.mxu0
    %4475 = vmatpush.msra.mxu0 %v3735
    %4476 = vmatpush.msra.mxu0 %v3727
    %4477 = vmatpush.msra.mxu0 %v3719
    %4478 = vmatpush.msra.mxu0 %v3711
    %4479 = vmatpush.msra.mxu0 %v3703
    %4480 = vmatpush.msra.mxu0 %v3695
    %4481 = vmatpush.msra.mxu0 %v3687
    %4482 = vmatpush.msra.mxu0 %v3679
    %4483 = vmatpush.msra.mxu0 %v3671
    %4484 = vmatpush.msra.mxu0 %v3663
    %4485 = vmatpush.msra.mxu0 %v3655
    %4486 = vmatpush.msra.mxu0 %v3647
    %4487 = vmatpush.msra.mxu0 %v3639
    %4488 = vmatpush.msra.mxu0 %v3631
    %4489 = vmatpush.msra.mxu0 %v3623
    %4490 = vmatpush.msra.mxu0 %v3615
    %4491 = vmatmul.f32.gmra.mxu0 %v2198
    %v4492 = vpop.f32.mrf.mxu0
    %v4493 = vadd.f32 %v4473, %v4492
    %4494 = vdwg.mxu0
    %4495 = vmatpush.msra.mxu0 %v3863
    %4496 = vmatpush.msra.mxu0 %v3855
    %4497 = vmatpush.msra.mxu0 %v3847
    %4498 = vmatpush.msra.mxu0 %v3839
    %4499 = vmatpush.msra.mxu0 %v3831
    %4500 = vmatpush.msra.mxu0 %v3823
    %4501 = vmatpush.msra.mxu0 %v3815
    %4502 = vmatpush.msra.mxu0 %v3807
    %4503 = vmatpush.msra.mxu0 %v3799
    %4504 = vmatpush.msra.mxu0 %v3791
    %4505 = vmatpush.msra.mxu0 %v3783
    %4506 = vmatpush.msra.mxu0 %v3775
    %4507 = vmatpush.msra.mxu0 %v3767
    %4508 = vmatpush.msra.mxu0 %v3759
    %4509 = vmatpush.msra.mxu0 %v3751
    %4510 = vmatpush.msra.mxu0 %v3743
    %4511 = vmatmul.f32.gmra.mxu0 %v2199
    %v4512 = vpop.f32.mrf.mxu0
    %v4513 = vadd.f32 %v4493, %v4512
    %4514 = vdwg.mxu0
    %4515 = vmatpush.msra.mxu0 %v3991
    %4516 = vmatpush.msra.mxu0 %v3983
    %4517 = vmatpush.msra.mxu0 %v3975
    %4518 = vmatpush.msra.mxu0 %v3967
    %4519 = vmatpush.msra.mxu0 %v3959
    %4520 = vmatpush.msra.mxu0 %v3951
    %4521 = vmatpush.msra.mxu0 %v3943
    %4522 = vmatpush.msra.mxu0 %v3935
    %4523 = vmatpush.msra.mxu0 %v3927
    %4524 = vmatpush.msra.mxu0 %v3919
    %4525 = vmatpush.msra.mxu0 %v3911
    %4526 = vmatpush.msra.mxu0 %v3903
    %4527 = vmatpush.msra.mxu0 %v3895
    %4528 = vmatpush.msra.mxu0 %v3887
    %4529 = vmatpush.msra.mxu0 %v3879
    %4530 = vmatpush.msra.mxu0 %v3871
    %4531 = vmatmul.f32.gmra.mxu0 %v2200
    %v4532 = vpop.f32.mrf.mxu0
    %v4533 = vadd.f32 %v4513, %v4532
    %4534 = vdwg.mxu0
    %4535 = vmatpush.msra.mxu0 %v4119
    %4536 = vmatpush.msra.mxu0 %v4111
    %4537 = vmatpush.msra.mxu0 %v4103
    %4538 = vmatpush.msra.mxu0 %v4095
    %4539 = vmatpush.msra.mxu0 %v4087
    %4540 = vmatpush.msra.mxu0 %v4079
    %4541 = vmatpush.msra.mxu0 %v4071
    %4542 = vmatpush.msra.mxu0 %v4063
    %4543 = vmatpush.msra.mxu0 %v4055
    %4544 = vmatpush.msra.mxu0 %v4047
    %4545 = vmatpush.msra.mxu0 %v4039
    %4546 = vmatpush.msra.mxu0 %v4031
    %4547 = vmatpush.msra.mxu0 %v4023
    %4548 = vmatpush.msra.mxu0 %v4015
    %4549 = vmatpush.msra.mxu0 %v4007
    %4550 = vmatpush.msra.mxu0 %v3999
    %4551 = vmatmul.f32.gmra.mxu0 %v2201
    %v4552 = vpop.f32.mrf.mxu0
    %v4553 = vadd.f32 %v4533, %v4552
    %4554 = vdwg.mxu0
    %4555 = vmatpush.msra.mxu0 %v4247
    %4556 = vmatpush.msra.mxu0 %v4239
    %4557 = vmatpush.msra.mxu0 %v4231
    %4558 = vmatpush.msra.mxu0 %v4223
    %4559 = vmatpush.msra.mxu0 %v4215
    %4560 = vmatpush.msra.mxu0 %v4207
    %4561 = vmatpush.msra.mxu0 %v4199
    %4562 = vmatpush.msra.mxu0 %v4191
    %4563 = vmatpush.msra.mxu0 %v4183
    %4564 = vmatpush.msra.mxu0 %v4175
    %4565 = vmatpush.msra.mxu0 %v4167
    %4566 = vmatpush.msra.mxu0 %v4159
    %4567 = vmatpush.msra.mxu0 %v4151
    %4568 = vmatpush.msra.mxu0 %v4143
    %4569 = vmatpush.msra.mxu0 %v4135
    %4570 = vmatpush.msra.mxu0 %v4127
    %4571 = vmatmul.f32.gmra.mxu0 %v2202
    %v4572 = vpop.f32.mrf.mxu0
    %v4573 = vadd.f32 %v4553, %v4572
    %4574 = vdwg.mxu0
    %4575 = vmatpush.msra.mxu0 %v2328
    %4576 = vmatpush.msra.mxu0 %v2320
    %4577 = vmatpush.msra.mxu0 %v2312
    %4578 = vmatpush.msra.mxu0 %v2304
    %4579 = vmatpush.msra.mxu0 %v2296
    %4580 = vmatpush.msra.mxu0 %v2288
    %4581 = vmatpush.msra.mxu0 %v2280
    %4582 = vmatpush.msra.mxu0 %v2272
    %4583 = vmatpush.msra.mxu0 %v2264
    %4584 = vmatpush.msra.mxu0 %v2256
    %4585 = vmatpush.msra.mxu0 %v2248
    %4586 = vmatpush.msra.mxu0 %v2240
    %4587 = vmatpush.msra.mxu0 %v2232
    %4588 = vmatpush.msra.mxu0 %v2224
    %4589 = vmatpush.msra.mxu0 %v2216
    %4590 = vmatpush.msra.mxu0 %v2208
    %4591 = vmatmul.f32.gmra.mxu0 %v2187
    %v4592 = vpop.f32.mrf.mxu0
    %v4593 = vadd.f32 0.0, %v4592
    %4594 = vdwg.mxu0
    %4595 = vmatpush.msra.mxu0 %v2456
    %4596 = vmatpush.msra.mxu0 %v2448
    %4597 = vmatpush.msra.mxu0 %v2440
    %4598 = vmatpush.msra.mxu0 %v2432
    %4599 = vmatpush.msra.mxu0 %v2424
    %4600 = vmatpush.msra.mxu0 %v2416
    %4601 = vmatpush.msra.mxu0 %v2408
    %4602 = vmatpush.msra.mxu0 %v2400
    %4603 = vmatpush.msra.mxu0 %v2392
    %4604 = vmatpush.msra.mxu0 %v2384
    %4605 = vmatpush.msra.mxu0 %v2376
    %4606 = vmatpush.msra.mxu0 %v2368
    %4607 = vmatpush.msra.mxu0 %v2360
    %4608 = vmatpush.msra.mxu0 %v2352
    %4609 = vmatpush.msra.mxu0 %v2344
    %4610 = vmatpush.msra.mxu0 %v2336
    %4611 = vmatmul.f32.gmra.mxu0 %v2188
    %v4612 = vpop.f32.mrf.mxu0
    %v4613 = vadd.f32 %v4593, %v4612
    %4614 = vdwg.mxu0
    %4615 = vmatpush.msra.mxu0 %v2584
    %4616 = vmatpush.msra.mxu0 %v2576
    %4617 = vmatpush.msra.mxu0 %v2568
    %4618 = vmatpush.msra.mxu0 %v2560
    %4619 = vmatpush.msra.mxu0 %v2552
    %4620 = vmatpush.msra.mxu0 %v2544
    %4621 = vmatpush.msra.mxu0 %v2536
    %4622 = vmatpush.msra.mxu0 %v2528
    %4623 = vmatpush.msra.mxu0 %v2520
    %4624 = vmatpush.msra.mxu0 %v2512
    %4625 = vmatpush.msra.mxu0 %v2504
    %4626 = vmatpush.msra.mxu0 %v2496
    %4627 = vmatpush.msra.mxu0 %v2488
    %4628 = vmatpush.msra.mxu0 %v2480
    %4629 = vmatpush.msra.mxu0 %v2472
    %4630 = vmatpush.msra.mxu0 %v2464
    %4631 = vmatmul.f32.gmra.mxu0 %v2189
    %v4632 = vpop.f32.mrf.mxu0
    %v4633 = vadd.f32 %v4613, %v4632
    %4634 = vdwg.mxu0
    %4635 = vmatpush.msra.mxu0 %v2712
    %4636 = vmatpush.msra.mxu0 %v2704
    %4637 = vmatpush.msra.mxu0 %v2696
    %4638 = vmatpush.msra.mxu0 %v2688
    %4639 = vmatpush.msra.mxu0 %v2680
    %4640 = vmatpush.msra.mxu0 %v2672
    %4641 = vmatpush.msra.mxu0 %v2664
    %4642 = vmatpush.msra.mxu0 %v2656
    %4643 = vmatpush.msra.mxu0 %v2648
    %4644 = vmatpush.msra.mxu0 %v2640
    %4645 = vmatpush.msra.mxu0 %v2632
    %4646 = vmatpush.msra.mxu0 %v2624
    %4647 = vmatpush.msra.mxu0 %v2616
    %4648 = vmatpush.msra.mxu0 %v2608
    %4649 = vmatpush.msra.mxu0 %v2600
    %4650 = vmatpush.msra.mxu0 %v2592
    %4651 = vmatmul.f32.gmra.mxu0 %v2190
    %v4652 = vpop.f32.mrf.mxu0
    %v4653 = vadd.f32 %v4633, %v4652
    %4654 = vdwg.mxu0
    %4655 = vmatpush.msra.mxu0 %v2840
    %4656 = vmatpush.msra.mxu0 %v2832
    %4657 = vmatpush.msra.mxu0 %v2824
    %4658 = vmatpush.msra.mxu0 %v2816
    %4659 = vmatpush.msra.mxu0 %v2808
    %4660 = vmatpush.msra.mxu0 %v2800
    %4661 = vmatpush.msra.mxu0 %v2792
    %4662 = vmatpush.msra.mxu0 %v2784
    %4663 = vmatpush.msra.mxu0 %v2776
    %4664 = vmatpush.msra.mxu0 %v2768
    %4665 = vmatpush.msra.mxu0 %v2760
    %4666 = vmatpush.msra.mxu0 %v2752
    %4667 = vmatpush.msra.mxu0 %v2744
    %4668 = vmatpush.msra.mxu0 %v2736
    %4669 = vmatpush.msra.mxu0 %v2728
    %4670 = vmatpush.msra.mxu0 %v2720
    %4671 = vmatmul.f32.gmra.mxu0 %v2191
    %v4672 = vpop.f32.mrf.mxu0
    %v4673 = vadd.f32 %v4653, %v4672
    %4674 = vdwg.mxu0
    %4675 = vmatpush.msra.mxu0 %v2968
    %4676 = vmatpush.msra.mxu0 %v2960
    %4677 = vmatpush.msra.mxu0 %v2952
    %4678 = vmatpush.msra.mxu0 %v2944
    %4679 = vmatpush.msra.mxu0 %v2936
    %4680 = vmatpush.msra.mxu0 %v2928
    %4681 = vmatpush.msra.mxu0 %v2920
    %4682 = vmatpush.msra.mxu0 %v2912
    %4683 = vmatpush.msra.mxu0 %v2904
    %4684 = vmatpush.msra.mxu0 %v2896
    %4685 = vmatpush.msra.mxu0 %v2888
    %4686 = vmatpush.msra.mxu0 %v2880
    %4687 = vmatpush.msra.mxu0 %v2872
    %4688 = vmatpush.msra.mxu0 %v2864
    %4689 = vmatpush.msra.mxu0 %v2856
    %4690 = vmatpush.msra.mxu0 %v2848
    %4691 = vmatmul.f32.gmra.mxu0 %v2192
    %v4692 = vpop.f32.mrf.mxu0
    %v4693 = vadd.f32 %v4673, %v4692
    %4694 = vdwg.mxu0
    %4695 = vmatpush.msra.mxu0 %v3096
    %4696 = vmatpush.msra.mxu0 %v3088
    %4697 = vmatpush.msra.mxu0 %v3080
    %4698 = vmatpush.msra.mxu0 %v3072
    %4699 = vmatpush.msra.mxu0 %v3064
    %4700 = vmatpush.msra.mxu0 %v3056
    %4701 = vmatpush.msra.mxu0 %v3048
    %4702 = vmatpush.msra.mxu0 %v3040
    %4703 = vmatpush.msra.mxu0 %v3032
    %4704 = vmatpush.msra.mxu0 %v3024
    %4705 = vmatpush.msra.mxu0 %v3016
    %4706 = vmatpush.msra.mxu0 %v3008
    %4707 = vmatpush.msra.mxu0 %v3000
    %4708 = vmatpush.msra.mxu0 %v2992
    %4709 = vmatpush.msra.mxu0 %v2984
    %4710 = vmatpush.msra.mxu0 %v2976
    %4711 = vmatmul.f32.gmra.mxu0 %v2193
    %v4712 = vpop.f32.mrf.mxu0
    %v4713 = vadd.f32 %v4693, %v4712
    %4714 = vdwg.mxu0
    %4715 = vmatpush.msra.mxu0 %v3224
    %4716 = vmatpush.msra.mxu0 %v3216
    %4717 = vmatpush.msra.mxu0 %v3208
    %4718 = vmatpush.msra.mxu0 %v3200
    %4719 = vmatpush.msra.mxu0 %v3192
    %4720 = vmatpush.msra.mxu0 %v3184
    %4721 = vmatpush.msra.mxu0 %v3176
    %4722 = vmatpush.msra.mxu0 %v3168
    %4723 = vmatpush.msra.mxu0 %v3160
    %4724 = vmatpush.msra.mxu0 %v3152
    %4725 = vmatpush.msra.mxu0 %v3144
    %4726 = vmatpush.msra.mxu0 %v3136
    %4727 = vmatpush.msra.mxu0 %v3128
    %4728 = vmatpush.msra.mxu0 %v3120
    %4729 = vmatpush.msra.mxu0 %v3112
    %4730 = vmatpush.msra.mxu0 %v3104
    %4731 = vmatmul.f32.gmra.mxu0 %v2194
    %v4732 = vpop.f32.mrf.mxu0
    %v4733 = vadd.f32 %v4713, %v4732
    %4734 = vdwg.mxu0
    %4735 = vmatpush.msra.mxu0 %v3352
    %4736 = vmatpush.msra.mxu0 %v3344
    %4737 = vmatpush.msra.mxu0 %v3336
    %4738 = vmatpush.msra.mxu0 %v3328
    %4739 = vmatpush.msra.mxu0 %v3320
    %4740 = vmatpush.msra.mxu0 %v3312
    %4741 = vmatpush.msra.mxu0 %v3304
    %4742 = vmatpush.msra.mxu0 %v3296
    %4743 = vmatpush.msra.mxu0 %v3288
    %4744 = vmatpush.msra.mxu0 %v3280
    %4745 = vmatpush.msra.mxu0 %v3272
    %4746 = vmatpush.msra.mxu0 %v3264
    %4747 = vmatpush.msra.mxu0 %v3256
    %4748 = vmatpush.msra.mxu0 %v3248
    %4749 = vmatpush.msra.mxu0 %v3240
    %4750 = vmatpush.msra.mxu0 %v3232
    %4751 = vmatmul.f32.gmra.mxu0 %v2195
    %v4752 = vpop.f32.mrf.mxu0
    %v4753 = vadd.f32 %v4733, %v4752
    %4754 = vdwg.mxu0
    %4755 = vmatpush.msra.mxu0 %v3480
    %4756 = vmatpush.msra.mxu0 %v3472
    %4757 = vmatpush.msra.mxu0 %v3464
    %4758 = vmatpush.msra.mxu0 %v3456
    %4759 = vmatpush.msra.mxu0 %v3448
    %4760 = vmatpush.msra.mxu0 %v3440
    %4761 = vmatpush.msra.mxu0 %v3432
    %4762 = vmatpush.msra.mxu0 %v3424
    %4763 = vmatpush.msra.mxu0 %v3416
    %4764 = vmatpush.msra.mxu0 %v3408
    %4765 = vmatpush.msra.mxu0 %v3400
    %4766 = vmatpush.msra.mxu0 %v3392
    %4767 = vmatpush.msra.mxu0 %v3384
    %4768 = vmatpush.msra.mxu0 %v3376
    %4769 = vmatpush.msra.mxu0 %v3368
    %4770 = vmatpush.msra.mxu0 %v3360
    %4771 = vmatmul.f32.gmra.mxu0 %v2196
    %v4772 = vpop.f32.mrf.mxu0
    %v4773 = vadd.f32 %v4753, %v4772
    %4774 = vdwg.mxu0
    %4775 = vmatpush.msra.mxu0 %v3608
    %4776 = vmatpush.msra.mxu0 %v3600
    %4777 = vmatpush.msra.mxu0 %v3592
    %4778 = vmatpush.msra.mxu0 %v3584
    %4779 = vmatpush.msra.mxu0 %v3576
    %4780 = vmatpush.msra.mxu0 %v3568
    %4781 = vmatpush.msra.mxu0 %v3560
    %4782 = vmatpush.msra.mxu0 %v3552
    %4783 = vmatpush.msra.mxu0 %v3544
    %4784 = vmatpush.msra.mxu0 %v3536
    %4785 = vmatpush.msra.mxu0 %v3528
    %4786 = vmatpush.msra.mxu0 %v3520
    %4787 = vmatpush.msra.mxu0 %v3512
    %4788 = vmatpush.msra.mxu0 %v3504
    %4789 = vmatpush.msra.mxu0 %v3496
    %4790 = vmatpush.msra.mxu0 %v3488
    %4791 = vmatmul.f32.gmra.mxu0 %v2197
    %v4792 = vpop.f32.mrf.mxu0
    %v4793 = vadd.f32 %v4773, %v4792
    %4794 = vdwg.mxu0
    %4795 = vmatpush.msra.mxu0 %v3736
    %4796 = vmatpush.msra.mxu0 %v3728
    %4797 = vmatpush.msra.mxu0 %v3720
    %4798 = vmatpush.msra.mxu0 %v3712
    %4799 = vmatpush.msra.mxu0 %v3704
    %4800 = vmatpush.msra.mxu0 %v3696
    %4801 = vmatpush.msra.mxu0 %v3688
    %4802 = vmatpush.msra.mxu0 %v3680
    %4803 = vmatpush.msra.mxu0 %v3672
    %4804 = vmatpush.msra.mxu0 %v3664
    %4805 = vmatpush.msra.mxu0 %v3656
    %4806 = vmatpush.msra.mxu0 %v3648
    %4807 = vmatpush.msra.mxu0 %v3640
    %4808 = vmatpush.msra.mxu0 %v3632
    %4809 = vmatpush.msra.mxu0 %v3624
    %4810 = vmatpush.msra.mxu0 %v3616
    %4811 = vmatmul.f32.gmra.mxu0 %v2198
    %v4812 = vpop.f32.mrf.mxu0
    %v4813 = vadd.f32 %v4793, %v4812
    %4814 = vdwg.mxu0
    %4815 = vmatpush.msra.mxu0 %v3864
    %4816 = vmatpush.msra.mxu0 %v3856
    %4817 = vmatpush.msra.mxu0 %v3848
    %4818 = vmatpush.msra.mxu0 %v3840
    %4819 = vmatpush.msra.mxu0 %v3832
    %4820 = vmatpush.msra.mxu0 %v3824
    %4821 = vmatpush.msra.mxu0 %v3816
    %4822 = vmatpush.msra.mxu0 %v3808
    %4823 = vmatpush.msra.mxu0 %v3800
    %4824 = vmatpush.msra.mxu0 %v3792
    %4825 = vmatpush.msra.mxu0 %v3784
    %4826 = vmatpush.msra.mxu0 %v3776
    %4827 = vmatpush.msra.mxu0 %v3768
    %4828 = vmatpush.msra.mxu0 %v3760
    %4829 = vmatpush.msra.mxu0 %v3752
    %4830 = vmatpush.msra.mxu0 %v3744
    %4831 = vmatmul.f32.gmra.mxu0 %v2199
    %v4832 = vpop.f32.mrf.mxu0
    %v4833 = vadd.f32 %v4813, %v4832
    %4834 = vdwg.mxu0
    %4835 = vmatpush.msra.mxu0 %v3992
    %4836 = vmatpush.msra.mxu0 %v3984
    %4837 = vmatpush.msra.mxu0 %v3976
    %4838 = vmatpush.msra.mxu0 %v3968
    %4839 = vmatpush.msra.mxu0 %v3960
    %4840 = vmatpush.msra.mxu0 %v3952
    %4841 = vmatpush.msra.mxu0 %v3944
    %4842 = vmatpush.msra.mxu0 %v3936
    %4843 = vmatpush.msra.mxu0 %v3928
    %4844 = vmatpush.msra.mxu0 %v3920
    %4845 = vmatpush.msra.mxu0 %v3912
    %4846 = vmatpush.msra.mxu0 %v3904
    %4847 = vmatpush.msra.mxu0 %v3896
    %4848 = vmatpush.msra.mxu0 %v3888
    %4849 = vmatpush.msra.mxu0 %v3880
    %4850 = vmatpush.msra.mxu0 %v3872
    %4851 = vmatmul.f32.gmra.mxu0 %v2200
    %v4852 = vpop.f32.mrf.mxu0
    %v4853 = vadd.f32 %v4833, %v4852
    %4854 = vdwg.mxu0
    %4855 = vmatpush.msra.mxu0 %v4120
    %4856 = vmatpush.msra.mxu0 %v4112
    %4857 = vmatpush.msra.mxu0 %v4104
    %4858 = vmatpush.msra.mxu0 %v4096
    %4859 = vmatpush.msra.mxu0 %v4088
    %4860 = vmatpush.msra.mxu0 %v4080
    %4861 = vmatpush.msra.mxu0 %v4072
    %4862 = vmatpush.msra.mxu0 %v4064
    %4863 = vmatpush.msra.mxu0 %v4056
    %4864 = vmatpush.msra.mxu0 %v4048
    %4865 = vmatpush.msra.mxu0 %v4040
    %4866 = vmatpush.msra.mxu0 %v4032
    %4867 = vmatpush.msra.mxu0 %v4024
    %4868 = vmatpush.msra.mxu0 %v4016
    %4869 = vmatpush.msra.mxu0 %v4008
    %4870 = vmatpush.msra.mxu0 %v4000
    %4871 = vmatmul.f32.gmra.mxu0 %v2201
    %v4872 = vpop.f32.mrf.mxu0
    %v4873 = vadd.f32 %v4853, %v4872
    %4874 = vdwg.mxu0
    %4875 = vmatpush.msra.mxu0 %v4248
    %4876 = vmatpush.msra.mxu0 %v4240
    %4877 = vmatpush.msra.mxu0 %v4232
    %4878 = vmatpush.msra.mxu0 %v4224
    %4879 = vmatpush.msra.mxu0 %v4216
    %4880 = vmatpush.msra.mxu0 %v4208
    %4881 = vmatpush.msra.mxu0 %v4200
    %4882 = vmatpush.msra.mxu0 %v4192
    %4883 = vmatpush.msra.mxu0 %v4184
    %4884 = vmatpush.msra.mxu0 %v4176
    %4885 = vmatpush.msra.mxu0 %v4168
    %4886 = vmatpush.msra.mxu0 %v4160
    %4887 = vmatpush.msra.mxu0 %v4152
    %4888 = vmatpush.msra.mxu0 %v4144
    %4889 = vmatpush.msra.mxu0 %v4136
    %4890 = vmatpush.msra.mxu0 %v4128
    %4891 = vmatmul.f32.gmra.mxu0 %v2202
    %v4892 = vpop.f32.mrf.mxu0
    %v4893 = vadd.f32 %v4873, %v4892
    %4894 = vdwg.mxu0
    %4895 = vmatpush.msra.mxu0 %v2329
    %4896 = vmatpush.msra.mxu0 %v2321
    %4897 = vmatpush.msra.mxu0 %v2313
    %4898 = vmatpush.msra.mxu0 %v2305
    %4899 = vmatpush.msra.mxu0 %v2297
    %4900 = vmatpush.msra.mxu0 %v2289
    %4901 = vmatpush.msra.mxu0 %v2281
    %4902 = vmatpush.msra.mxu0 %v2273
    %4903 = vmatpush.msra.mxu0 %v2265
    %4904 = vmatpush.msra.mxu0 %v2257
    %4905 = vmatpush.msra.mxu0 %v2249
    %4906 = vmatpush.msra.mxu0 %v2241
    %4907 = vmatpush.msra.mxu0 %v2233
    %4908 = vmatpush.msra.mxu0 %v2225
    %4909 = vmatpush.msra.mxu0 %v2217
    %4910 = vmatpush.msra.mxu0 %v2209
    %4911 = vmatmul.f32.gmra.mxu0 %v2187
    %v4912 = vpop.f32.mrf.mxu0
    %v4913 = vadd.f32 0.0, %v4912
    %4914 = vdwg.mxu0
    %4915 = vmatpush.msra.mxu0 %v2457
    %4916 = vmatpush.msra.mxu0 %v2449
    %4917 = vmatpush.msra.mxu0 %v2441
    %4918 = vmatpush.msra.mxu0 %v2433
    %4919 = vmatpush.msra.mxu0 %v2425
    %4920 = vmatpush.msra.mxu0 %v2417
    %4921 = vmatpush.msra.mxu0 %v2409
    %4922 = vmatpush.msra.mxu0 %v2401
    %4923 = vmatpush.msra.mxu0 %v2393
    %4924 = vmatpush.msra.mxu0 %v2385
    %4925 = vmatpush.msra.mxu0 %v2377
    %4926 = vmatpush.msra.mxu0 %v2369
    %4927 = vmatpush.msra.mxu0 %v2361
    %4928 = vmatpush.msra.mxu0 %v2353
    %4929 = vmatpush.msra.mxu0 %v2345
    %4930 = vmatpush.msra.mxu0 %v2337
    %4931 = vmatmul.f32.gmra.mxu0 %v2188
    %v4932 = vpop.f32.mrf.mxu0
    %v4933 = vadd.f32 %v4913, %v4932
    %4934 = vdwg.mxu0
    %4935 = vmatpush.msra.mxu0 %v2585
    %4936 = vmatpush.msra.mxu0 %v2577
    %4937 = vmatpush.msra.mxu0 %v2569
    %4938 = vmatpush.msra.mxu0 %v2561
    %4939 = vmatpush.msra.mxu0 %v2553
    %4940 = vmatpush.msra.mxu0 %v2545
    %4941 = vmatpush.msra.mxu0 %v2537
    %4942 = vmatpush.msra.mxu0 %v2529
    %4943 = vmatpush.msra.mxu0 %v2521
    %4944 = vmatpush.msra.mxu0 %v2513
    %4945 = vmatpush.msra.mxu0 %v2505
    %4946 = vmatpush.msra.mxu0 %v2497
    %4947 = vmatpush.msra.mxu0 %v2489
    %4948 = vmatpush.msra.mxu0 %v2481
    %4949 = vmatpush.msra.mxu0 %v2473
    %4950 = vmatpush.msra.mxu0 %v2465
    %4951 = vmatmul.f32.gmra.mxu0 %v2189
    %v4952 = vpop.f32.mrf.mxu0
    %v4953 = vadd.f32 %v4933, %v4952
    %4954 = vdwg.mxu0
    %4955 = vmatpush.msra.mxu0 %v2713
    %4956 = vmatpush.msra.mxu0 %v2705
    %4957 = vmatpush.msra.mxu0 %v2697
    %4958 = vmatpush.msra.mxu0 %v2689
    %4959 = vmatpush.msra.mxu0 %v2681
    %4960 = vmatpush.msra.mxu0 %v2673
    %4961 = vmatpush.msra.mxu0 %v2665
    %4962 = vmatpush.msra.mxu0 %v2657
    %4963 = vmatpush.msra.mxu0 %v2649
    %4964 = vmatpush.msra.mxu0 %v2641
    %4965 = vmatpush.msra.mxu0 %v2633
    %4966 = vmatpush.msra.mxu0 %v2625
    %4967 = vmatpush.msra.mxu0 %v2617
    %4968 = vmatpush.msra.mxu0 %v2609
    %4969 = vmatpush.msra.mxu0 %v2601
    %4970 = vmatpush.msra.mxu0 %v2593
    %4971 = vmatmul.f32.gmra.mxu0 %v2190
    %v4972 = vpop.f32.mrf.mxu0
    %v4973 = vadd.f32 %v4953, %v4972
    %4974 = vdwg.mxu0
    %4975 = vmatpush.msra.mxu0 %v2841
    %4976 = vmatpush.msra.mxu0 %v2833
    %4977 = vmatpush.msra.mxu0 %v2825
    %4978 = vmatpush.msra.mxu0 %v2817
    %4979 = vmatpush.msra.mxu0 %v2809
    %4980 = vmatpush.msra.mxu0 %v2801
    %4981 = vmatpush.msra.mxu0 %v2793
    %4982 = vmatpush.msra.mxu0 %v2785
    %4983 = vmatpush.msra.mxu0 %v2777
    %4984 = vmatpush.msra.mxu0 %v2769
    %4985 = vmatpush.msra.mxu0 %v2761
    %4986 = vmatpush.msra.mxu0 %v2753
    %4987 = vmatpush.msra.mxu0 %v2745
    %4988 = vmatpush.msra.mxu0 %v2737
    %4989 = vmatpush.msra.mxu0 %v2729
    %4990 = vmatpush.msra.mxu0 %v2721
    %4991 = vmatmul.f32.gmra.mxu0 %v2191
    %v4992 = vpop.f32.mrf.mxu0
    %v4993 = vadd.f32 %v4973, %v4992
    %4994 = vdwg.mxu0
    %4995 = vmatpush.msra.mxu0 %v2969
    %4996 = vmatpush.msra.mxu0 %v2961
    %4997 = vmatpush.msra.mxu0 %v2953
    %4998 = vmatpush.msra.mxu0 %v2945
    %4999 = vmatpush.msra.mxu0 %v2937
    %5000 = vmatpush.msra.mxu0 %v2929
    %5001 = vmatpush.msra.mxu0 %v2921
    %5002 = vmatpush.msra.mxu0 %v2913
    %5003 = vmatpush.msra.mxu0 %v2905
    %5004 = vmatpush.msra.mxu0 %v2897
    %5005 = vmatpush.msra.mxu0 %v2889
    %5006 = vmatpush.msra.mxu0 %v2881
    %5007 = vmatpush.msra.mxu0 %v2873
    %5008 = vmatpush.msra.mxu0 %v2865
    %5009 = vmatpush.msra.mxu0 %v2857
    %5010 = vmatpush.msra.mxu0 %v2849
    %5011 = vmatmul.f32.gmra.mxu0 %v2192
    %v5012 = vpop.f32.mrf.mxu0
    %v5013 = vadd.f32 %v4993, %v5012
    %5014 = vdwg.mxu0
    %5015 = vmatpush.msra.mxu0 %v3097
    %5016 = vmatpush.msra.mxu0 %v3089
    %5017 = vmatpush.msra.mxu0 %v3081
    %5018 = vmatpush.msra.mxu0 %v3073
    %5019 = vmatpush.msra.mxu0 %v3065
    %5020 = vmatpush.msra.mxu0 %v3057
    %5021 = vmatpush.msra.mxu0 %v3049
    %5022 = vmatpush.msra.mxu0 %v3041
    %5023 = vmatpush.msra.mxu0 %v3033
    %5024 = vmatpush.msra.mxu0 %v3025
    %5025 = vmatpush.msra.mxu0 %v3017
    %5026 = vmatpush.msra.mxu0 %v3009
    %5027 = vmatpush.msra.mxu0 %v3001
    %5028 = vmatpush.msra.mxu0 %v2993
    %5029 = vmatpush.msra.mxu0 %v2985
    %5030 = vmatpush.msra.mxu0 %v2977
    %5031 = vmatmul.f32.gmra.mxu0 %v2193
    %v5032 = vpop.f32.mrf.mxu0
    %v5033 = vadd.f32 %v5013, %v5032
    %5034 = vdwg.mxu0
    %5035 = vmatpush.msra.mxu0 %v3225
    %5036 = vmatpush.msra.mxu0 %v3217
    %5037 = vmatpush.msra.mxu0 %v3209
    %5038 = vmatpush.msra.mxu0 %v3201
    %5039 = vmatpush.msra.mxu0 %v3193
    %5040 = vmatpush.msra.mxu0 %v3185
    %5041 = vmatpush.msra.mxu0 %v3177
    %5042 = vmatpush.msra.mxu0 %v3169
    %5043 = vmatpush.msra.mxu0 %v3161
    %5044 = vmatpush.msra.mxu0 %v3153
    %5045 = vmatpush.msra.mxu0 %v3145
    %5046 = vmatpush.msra.mxu0 %v3137
    %5047 = vmatpush.msra.mxu0 %v3129
    %5048 = vmatpush.msra.mxu0 %v3121
    %5049 = vmatpush.msra.mxu0 %v3113
    %5050 = vmatpush.msra.mxu0 %v3105
    %5051 = vmatmul.f32.gmra.mxu0 %v2194
    %v5052 = vpop.f32.mrf.mxu0
    %v5053 = vadd.f32 %v5033, %v5052
    %5054 = vdwg.mxu0
    %5055 = vmatpush.msra.mxu0 %v3353
    %5056 = vmatpush.msra.mxu0 %v3345
    %5057 = vmatpush.msra.mxu0 %v3337
    %5058 = vmatpush.msra.mxu0 %v3329
    %5059 = vmatpush.msra.mxu0 %v3321
    %5060 = vmatpush.msra.mxu0 %v3313
    %5061 = vmatpush.msra.mxu0 %v3305
    %5062 = vmatpush.msra.mxu0 %v3297
    %5063 = vmatpush.msra.mxu0 %v3289
    %5064 = vmatpush.msra.mxu0 %v3281
    %5065 = vmatpush.msra.mxu0 %v3273
    %5066 = vmatpush.msra.mxu0 %v3265
    %5067 = vmatpush.msra.mxu0 %v3257
    %5068 = vmatpush.msra.mxu0 %v3249
    %5069 = vmatpush.msra.mxu0 %v3241
    %5070 = vmatpush.msra.mxu0 %v3233
    %5071 = vmatmul.f32.gmra.mxu0 %v2195
    %v5072 = vpop.f32.mrf.mxu0
    %v5073 = vadd.f32 %v5053, %v5072
    %5074 = vdwg.mxu0
    %5075 = vmatpush.msra.mxu0 %v3481
    %5076 = vmatpush.msra.mxu0 %v3473
    %5077 = vmatpush.msra.mxu0 %v3465
    %5078 = vmatpush.msra.mxu0 %v3457
    %5079 = vmatpush.msra.mxu0 %v3449
    %5080 = vmatpush.msra.mxu0 %v3441
    %5081 = vmatpush.msra.mxu0 %v3433
    %5082 = vmatpush.msra.mxu0 %v3425
    %5083 = vmatpush.msra.mxu0 %v3417
    %5084 = vmatpush.msra.mxu0 %v3409
    %5085 = vmatpush.msra.mxu0 %v3401
    %5086 = vmatpush.msra.mxu0 %v3393
    %5087 = vmatpush.msra.mxu0 %v3385
    %5088 = vmatpush.msra.mxu0 %v3377
    %5089 = vmatpush.msra.mxu0 %v3369
    %5090 = vmatpush.msra.mxu0 %v3361
    %5091 = vmatmul.f32.gmra.mxu0 %v2196
    %v5092 = vpop.f32.mrf.mxu0
    %v5093 = vadd.f32 %v5073, %v5092
    %5094 = vdwg.mxu0
    %5095 = vmatpush.msra.mxu0 %v3609
    %5096 = vmatpush.msra.mxu0 %v3601
    %5097 = vmatpush.msra.mxu0 %v3593
    %5098 = vmatpush.msra.mxu0 %v3585
    %5099 = vmatpush.msra.mxu0 %v3577
    %5100 = vmatpush.msra.mxu0 %v3569
    %5101 = vmatpush.msra.mxu0 %v3561
    %5102 = vmatpush.msra.mxu0 %v3553
    %5103 = vmatpush.msra.mxu0 %v3545
    %5104 = vmatpush.msra.mxu0 %v3537
    %5105 = vmatpush.msra.mxu0 %v3529
    %5106 = vmatpush.msra.mxu0 %v3521
    %5107 = vmatpush.msra.mxu0 %v3513
    %5108 = vmatpush.msra.mxu0 %v3505
    %5109 = vmatpush.msra.mxu0 %v3497
    %5110 = vmatpush.msra.mxu0 %v3489
    %5111 = vmatmul.f32.gmra.mxu0 %v2197
    %v5112 = vpop.f32.mrf.mxu0
    %v5113 = vadd.f32 %v5093, %v5112
    %5114 = vdwg.mxu0
    %5115 = vmatpush.msra.mxu0 %v3737
    %5116 = vmatpush.msra.mxu0 %v3729
    %5117 = vmatpush.msra.mxu0 %v3721
    %5118 = vmatpush.msra.mxu0 %v3713
    %5119 = vmatpush.msra.mxu0 %v3705
    %5120 = vmatpush.msra.mxu0 %v3697
    %5121 = vmatpush.msra.mxu0 %v3689
    %5122 = vmatpush.msra.mxu0 %v3681
    %5123 = vmatpush.msra.mxu0 %v3673
    %5124 = vmatpush.msra.mxu0 %v3665
    %5125 = vmatpush.msra.mxu0 %v3657
    %5126 = vmatpush.msra.mxu0 %v3649
    %5127 = vmatpush.msra.mxu0 %v3641
    %5128 = vmatpush.msra.mxu0 %v3633
    %5129 = vmatpush.msra.mxu0 %v3625
    %5130 = vmatpush.msra.mxu0 %v3617
    %5131 = vmatmul.f32.gmra.mxu0 %v2198
    %v5132 = vpop.f32.mrf.mxu0
    %v5133 = vadd.f32 %v5113, %v5132
    %5134 = vdwg.mxu0
    %5135 = vmatpush.msra.mxu0 %v3865
    %5136 = vmatpush.msra.mxu0 %v3857
    %5137 = vmatpush.msra.mxu0 %v3849
    %5138 = vmatpush.msra.mxu0 %v3841
    %5139 = vmatpush.msra.mxu0 %v3833
    %5140 = vmatpush.msra.mxu0 %v3825
    %5141 = vmatpush.msra.mxu0 %v3817
    %5142 = vmatpush.msra.mxu0 %v3809
    %5143 = vmatpush.msra.mxu0 %v3801
    %5144 = vmatpush.msra.mxu0 %v3793
    %5145 = vmatpush.msra.mxu0 %v3785
    %5146 = vmatpush.msra.mxu0 %v3777
    %5147 = vmatpush.msra.mxu0 %v3769
    %5148 = vmatpush.msra.mxu0 %v3761
    %5149 = vmatpush.msra.mxu0 %v3753
    %5150 = vmatpush.msra.mxu0 %v3745
    %5151 = vmatmul.f32.gmra.mxu0 %v2199
    %v5152 = vpop.f32.mrf.mxu0
    %v5153 = vadd.f32 %v5133, %v5152
    %5154 = vdwg.mxu0
    %5155 = vmatpush.msra.mxu0 %v3993
    %5156 = vmatpush.msra.mxu0 %v3985
    %5157 = vmatpush.msra.mxu0 %v3977
    %5158 = vmatpush.msra.mxu0 %v3969
    %5159 = vmatpush.msra.mxu0 %v3961
    %5160 = vmatpush.msra.mxu0 %v3953
    %5161 = vmatpush.msra.mxu0 %v3945
    %5162 = vmatpush.msra.mxu0 %v3937
    %5163 = vmatpush.msra.mxu0 %v3929
    %5164 = vmatpush.msra.mxu0 %v3921
    %5165 = vmatpush.msra.mxu0 %v3913
    %5166 = vmatpush.msra.mxu0 %v3905
    %5167 = vmatpush.msra.mxu0 %v3897
    %5168 = vmatpush.msra.mxu0 %v3889
    %5169 = vmatpush.msra.mxu0 %v3881
    %5170 = vmatpush.msra.mxu0 %v3873
    %5171 = vmatmul.f32.gmra.mxu0 %v2200
    %v5172 = vpop.f32.mrf.mxu0
    %v5173 = vadd.f32 %v5153, %v5172
    %5174 = vdwg.mxu0
    %5175 = vmatpush.msra.mxu0 %v4121
    %5176 = vmatpush.msra.mxu0 %v4113
    %5177 = vmatpush.msra.mxu0 %v4105
    %5178 = vmatpush.msra.mxu0 %v4097
    %5179 = vmatpush.msra.mxu0 %v4089
    %5180 = vmatpush.msra.mxu0 %v4081
    %5181 = vmatpush.msra.mxu0 %v4073
    %5182 = vmatpush.msra.mxu0 %v4065
    %5183 = vmatpush.msra.mxu0 %v4057
    %5184 = vmatpush.msra.mxu0 %v4049
    %5185 = vmatpush.msra.mxu0 %v4041
    %5186 = vmatpush.msra.mxu0 %v4033
    %5187 = vmatpush.msra.mxu0 %v4025
    %5188 = vmatpush.msra.mxu0 %v4017
    %5189 = vmatpush.msra.mxu0 %v4009
    %5190 = vmatpush.msra.mxu0 %v4001
    %5191 = vmatmul.f32.gmra.mxu0 %v2201
    %v5192 = vpop.f32.mrf.mxu0
    %v5193 = vadd.f32 %v5173, %v5192
    %5194 = vdwg.mxu0
    %5195 = vmatpush.msra.mxu0 %v4249
    %5196 = vmatpush.msra.mxu0 %v4241
    %5197 = vmatpush.msra.mxu0 %v4233
    %5198 = vmatpush.msra.mxu0 %v4225
    %5199 = vmatpush.msra.mxu0 %v4217
    %5200 = vmatpush.msra.mxu0 %v4209
    %5201 = vmatpush.msra.mxu0 %v4201
    %5202 = vmatpush.msra.mxu0 %v4193
    %5203 = vmatpush.msra.mxu0 %v4185
    %5204 = vmatpush.msra.mxu0 %v4177
    %5205 = vmatpush.msra.mxu0 %v4169
    %5206 = vmatpush.msra.mxu0 %v4161
    %5207 = vmatpush.msra.mxu0 %v4153
    %5208 = vmatpush.msra.mxu0 %v4145
    %5209 = vmatpush.msra.mxu0 %v4137
    %5210 = vmatpush.msra.mxu0 %v4129
    %5211 = vmatmul.f32.gmra.mxu0 %v2202
    %v5212 = vpop.f32.mrf.mxu0
    %v5213 = vadd.f32 %v5193, %v5212
    %5214 = vdwg.mxu0
    %5215 = vmatpush.msra.mxu0 %v2330
    %5216 = vmatpush.msra.mxu0 %v2322
    %5217 = vmatpush.msra.mxu0 %v2314
    %5218 = vmatpush.msra.mxu0 %v2306
    %5219 = vmatpush.msra.mxu0 %v2298
    %5220 = vmatpush.msra.mxu0 %v2290
    %5221 = vmatpush.msra.mxu0 %v2282
    %5222 = vmatpush.msra.mxu0 %v2274
    %5223 = vmatpush.msra.mxu0 %v2266
    %5224 = vmatpush.msra.mxu0 %v2258
    %5225 = vmatpush.msra.mxu0 %v2250
    %5226 = vmatpush.msra.mxu0 %v2242
    %5227 = vmatpush.msra.mxu0 %v2234
    %5228 = vmatpush.msra.mxu0 %v2226
    %5229 = vmatpush.msra.mxu0 %v2218
    %5230 = vmatpush.msra.mxu0 %v2210
    %5231 = vmatmul.f32.gmra.mxu0 %v2187
    %v5232 = vpop.f32.mrf.mxu0
    %v5233 = vadd.f32 0.0, %v5232
    %5234 = vdwg.mxu0
    %5235 = vmatpush.msra.mxu0 %v2458
    %5236 = vmatpush.msra.mxu0 %v2450
    %5237 = vmatpush.msra.mxu0 %v2442
    %5238 = vmatpush.msra.mxu0 %v2434
    %5239 = vmatpush.msra.mxu0 %v2426
    %5240 = vmatpush.msra.mxu0 %v2418
    %5241 = vmatpush.msra.mxu0 %v2410
    %5242 = vmatpush.msra.mxu0 %v2402
    %5243 = vmatpush.msra.mxu0 %v2394
    %5244 = vmatpush.msra.mxu0 %v2386
    %5245 = vmatpush.msra.mxu0 %v2378
    %5246 = vmatpush.msra.mxu0 %v2370
    %5247 = vmatpush.msra.mxu0 %v2362
    %5248 = vmatpush.msra.mxu0 %v2354
    %5249 = vmatpush.msra.mxu0 %v2346
    %5250 = vmatpush.msra.mxu0 %v2338
    %5251 = vmatmul.f32.gmra.mxu0 %v2188
    %v5252 = vpop.f32.mrf.mxu0
    %v5253 = vadd.f32 %v5233, %v5252
    %5254 = vdwg.mxu0
    %5255 = vmatpush.msra.mxu0 %v2586
    %5256 = vmatpush.msra.mxu0 %v2578
    %5257 = vmatpush.msra.mxu0 %v2570
    %5258 = vmatpush.msra.mxu0 %v2562
    %5259 = vmatpush.msra.mxu0 %v2554
    %5260 = vmatpush.msra.mxu0 %v2546
    %5261 = vmatpush.msra.mxu0 %v2538
    %5262 = vmatpush.msra.mxu0 %v2530
    %5263 = vmatpush.msra.mxu0 %v2522
    %5264 = vmatpush.msra.mxu0 %v2514
    %5265 = vmatpush.msra.mxu0 %v2506
    %5266 = vmatpush.msra.mxu0 %v2498
    %5267 = vmatpush.msra.mxu0 %v2490
    %5268 = vmatpush.msra.mxu0 %v2482
    %5269 = vmatpush.msra.mxu0 %v2474
    %5270 = vmatpush.msra.mxu0 %v2466
    %5271 = vmatmul.f32.gmra.mxu0 %v2189
    %v5272 = vpop.f32.mrf.mxu0
    %v5273 = vadd.f32 %v5253, %v5272
    %5274 = vdwg.mxu0
    %5275 = vmatpush.msra.mxu0 %v2714
    %5276 = vmatpush.msra.mxu0 %v2706
    %5277 = vmatpush.msra.mxu0 %v2698
    %5278 = vmatpush.msra.mxu0 %v2690
    %5279 = vmatpush.msra.mxu0 %v2682
    %5280 = vmatpush.msra.mxu0 %v2674
    %5281 = vmatpush.msra.mxu0 %v2666
    %5282 = vmatpush.msra.mxu0 %v2658
    %5283 = vmatpush.msra.mxu0 %v2650
    %5284 = vmatpush.msra.mxu0 %v2642
    %5285 = vmatpush.msra.mxu0 %v2634
    %5286 = vmatpush.msra.mxu0 %v2626
    %5287 = vmatpush.msra.mxu0 %v2618
    %5288 = vmatpush.msra.mxu0 %v2610
    %5289 = vmatpush.msra.mxu0 %v2602
    %5290 = vmatpush.msra.mxu0 %v2594
    %5291 = vmatmul.f32.gmra.mxu0 %v2190
    %v5292 = vpop.f32.mrf.mxu0
    %v5293 = vadd.f32 %v5273, %v5292
    %5294 = vdwg.mxu0
    %5295 = vmatpush.msra.mxu0 %v2842
    %5296 = vmatpush.msra.mxu0 %v2834
    %5297 = vmatpush.msra.mxu0 %v2826
    %5298 = vmatpush.msra.mxu0 %v2818
    %5299 = vmatpush.msra.mxu0 %v2810
    %5300 = vmatpush.msra.mxu0 %v2802
    %5301 = vmatpush.msra.mxu0 %v2794
    %5302 = vmatpush.msra.mxu0 %v2786
    %5303 = vmatpush.msra.mxu0 %v2778
    %5304 = vmatpush.msra.mxu0 %v2770
    %5305 = vmatpush.msra.mxu0 %v2762
    %5306 = vmatpush.msra.mxu0 %v2754
    %5307 = vmatpush.msra.mxu0 %v2746
    %5308 = vmatpush.msra.mxu0 %v2738
    %5309 = vmatpush.msra.mxu0 %v2730
    %5310 = vmatpush.msra.mxu0 %v2722
    %5311 = vmatmul.f32.gmra.mxu0 %v2191
    %v5312 = vpop.f32.mrf.mxu0
    %v5313 = vadd.f32 %v5293, %v5312
    %5314 = vdwg.mxu0
    %5315 = vmatpush.msra.mxu0 %v2970
    %5316 = vmatpush.msra.mxu0 %v2962
    %5317 = vmatpush.msra.mxu0 %v2954
    %5318 = vmatpush.msra.mxu0 %v2946
    %5319 = vmatpush.msra.mxu0 %v2938
    %5320 = vmatpush.msra.mxu0 %v2930
    %5321 = vmatpush.msra.mxu0 %v2922
    %5322 = vmatpush.msra.mxu0 %v2914
    %5323 = vmatpush.msra.mxu0 %v2906
    %5324 = vmatpush.msra.mxu0 %v2898
    %5325 = vmatpush.msra.mxu0 %v2890
    %5326 = vmatpush.msra.mxu0 %v2882
    %5327 = vmatpush.msra.mxu0 %v2874
    %5328 = vmatpush.msra.mxu0 %v2866
    %5329 = vmatpush.msra.mxu0 %v2858
    %5330 = vmatpush.msra.mxu0 %v2850
    %5331 = vmatmul.f32.gmra.mxu0 %v2192
    %v5332 = vpop.f32.mrf.mxu0
    %v5333 = vadd.f32 %v5313, %v5332
    %5334 = vdwg.mxu0
    %5335 = vmatpush.msra.mxu0 %v3098
    %5336 = vmatpush.msra.mxu0 %v3090
    %5337 = vmatpush.msra.mxu0 %v3082
    %5338 = vmatpush.msra.mxu0 %v3074
    %5339 = vmatpush.msra.mxu0 %v3066
    %5340 = vmatpush.msra.mxu0 %v3058
    %5341 = vmatpush.msra.mxu0 %v3050
    %5342 = vmatpush.msra.mxu0 %v3042
    %5343 = vmatpush.msra.mxu0 %v3034
    %5344 = vmatpush.msra.mxu0 %v3026
    %5345 = vmatpush.msra.mxu0 %v3018
    %5346 = vmatpush.msra.mxu0 %v3010
    %5347 = vmatpush.msra.mxu0 %v3002
    %5348 = vmatpush.msra.mxu0 %v2994
    %5349 = vmatpush.msra.mxu0 %v2986
    %5350 = vmatpush.msra.mxu0 %v2978
    %5351 = vmatmul.f32.gmra.mxu0 %v2193
    %v5352 = vpop.f32.mrf.mxu0
    %v5353 = vadd.f32 %v5333, %v5352
    %5354 = vdwg.mxu0
    %5355 = vmatpush.msra.mxu0 %v3226
    %5356 = vmatpush.msra.mxu0 %v3218
    %5357 = vmatpush.msra.mxu0 %v3210
    %5358 = vmatpush.msra.mxu0 %v3202
    %5359 = vmatpush.msra.mxu0 %v3194
    %5360 = vmatpush.msra.mxu0 %v3186
    %5361 = vmatpush.msra.mxu0 %v3178
    %5362 = vmatpush.msra.mxu0 %v3170
    %5363 = vmatpush.msra.mxu0 %v3162
    %5364 = vmatpush.msra.mxu0 %v3154
    %5365 = vmatpush.msra.mxu0 %v3146
    %5366 = vmatpush.msra.mxu0 %v3138
    %5367 = vmatpush.msra.mxu0 %v3130
    %5368 = vmatpush.msra.mxu0 %v3122
    %5369 = vmatpush.msra.mxu0 %v3114
    %5370 = vmatpush.msra.mxu0 %v3106
    %5371 = vmatmul.f32.gmra.mxu0 %v2194
    %v5372 = vpop.f32.mrf.mxu0
    %v5373 = vadd.f32 %v5353, %v5372
    %5374 = vdwg.mxu0
    %5375 = vmatpush.msra.mxu0 %v3354
    %5376 = vmatpush.msra.mxu0 %v3346
    %5377 = vmatpush.msra.mxu0 %v3338
    %5378 = vmatpush.msra.mxu0 %v3330
    %5379 = vmatpush.msra.mxu0 %v3322
    %5380 = vmatpush.msra.mxu0 %v3314
    %5381 = vmatpush.msra.mxu0 %v3306
    %5382 = vmatpush.msra.mxu0 %v3298
    %5383 = vmatpush.msra.mxu0 %v3290
    %5384 = vmatpush.msra.mxu0 %v3282
    %5385 = vmatpush.msra.mxu0 %v3274
    %5386 = vmatpush.msra.mxu0 %v3266
    %5387 = vmatpush.msra.mxu0 %v3258
    %5388 = vmatpush.msra.mxu0 %v3250
    %5389 = vmatpush.msra.mxu0 %v3242
    %5390 = vmatpush.msra.mxu0 %v3234
    %5391 = vmatmul.f32.gmra.mxu0 %v2195
    %v5392 = vpop.f32.mrf.mxu0
    %v5393 = vadd.f32 %v5373, %v5392
    %5394 = vdwg.mxu0
    %5395 = vmatpush.msra.mxu0 %v3482
    %5396 = vmatpush.msra.mxu0 %v3474
    %5397 = vmatpush.msra.mxu0 %v3466
    %5398 = vmatpush.msra.mxu0 %v3458
    %5399 = vmatpush.msra.mxu0 %v3450
    %5400 = vmatpush.msra.mxu0 %v3442
    %5401 = vmatpush.msra.mxu0 %v3434
    %5402 = vmatpush.msra.mxu0 %v3426
    %5403 = vmatpush.msra.mxu0 %v3418
    %5404 = vmatpush.msra.mxu0 %v3410
    %5405 = vmatpush.msra.mxu0 %v3402
    %5406 = vmatpush.msra.mxu0 %v3394
    %5407 = vmatpush.msra.mxu0 %v3386
    %5408 = vmatpush.msra.mxu0 %v3378
    %5409 = vmatpush.msra.mxu0 %v3370
    %5410 = vmatpush.msra.mxu0 %v3362
    %5411 = vmatmul.f32.gmra.mxu0 %v2196
    %v5412 = vpop.f32.mrf.mxu0
    %v5413 = vadd.f32 %v5393, %v5412
    %5414 = vdwg.mxu0
    %5415 = vmatpush.msra.mxu0 %v3610
    %5416 = vmatpush.msra.mxu0 %v3602
    %5417 = vmatpush.msra.mxu0 %v3594
    %5418 = vmatpush.msra.mxu0 %v3586
    %5419 = vmatpush.msra.mxu0 %v3578
    %5420 = vmatpush.msra.mxu0 %v3570
    %5421 = vmatpush.msra.mxu0 %v3562
    %5422 = vmatpush.msra.mxu0 %v3554
    %5423 = vmatpush.msra.mxu0 %v3546
    %5424 = vmatpush.msra.mxu0 %v3538
    %5425 = vmatpush.msra.mxu0 %v3530
    %5426 = vmatpush.msra.mxu0 %v3522
    %5427 = vmatpush.msra.mxu0 %v3514
    %5428 = vmatpush.msra.mxu0 %v3506
    %5429 = vmatpush.msra.mxu0 %v3498
    %5430 = vmatpush.msra.mxu0 %v3490
    %5431 = vmatmul.f32.gmra.mxu0 %v2197
    %v5432 = vpop.f32.mrf.mxu0
    %v5433 = vadd.f32 %v5413, %v5432
    %5434 = vdwg.mxu0
    %5435 = vmatpush.msra.mxu0 %v3738
    %5436 = vmatpush.msra.mxu0 %v3730
    %5437 = vmatpush.msra.mxu0 %v3722
    %5438 = vmatpush.msra.mxu0 %v3714
    %5439 = vmatpush.msra.mxu0 %v3706
    %5440 = vmatpush.msra.mxu0 %v3698
    %5441 = vmatpush.msra.mxu0 %v3690
    %5442 = vmatpush.msra.mxu0 %v3682
    %5443 = vmatpush.msra.mxu0 %v3674
    %5444 = vmatpush.msra.mxu0 %v3666
    %5445 = vmatpush.msra.mxu0 %v3658
    %5446 = vmatpush.msra.mxu0 %v3650
    %5447 = vmatpush.msra.mxu0 %v3642
    %5448 = vmatpush.msra.mxu0 %v3634
    %5449 = vmatpush.msra.mxu0 %v3626
    %5450 = vmatpush.msra.mxu0 %v3618
    %5451 = vmatmul.f32.gmra.mxu0 %v2198
    %v5452 = vpop.f32.mrf.mxu0
    %v5453 = vadd.f32 %v5433, %v5452
    %5454 = vdwg.mxu0
    %5455 = vmatpush.msra.mxu0 %v3866
    %5456 = vmatpush.msra.mxu0 %v3858
    %5457 = vmatpush.msra.mxu0 %v3850
    %5458 = vmatpush.msra.mxu0 %v3842
    %5459 = vmatpush.msra.mxu0 %v3834
    %5460 = vmatpush.msra.mxu0 %v3826
    %5461 = vmatpush.msra.mxu0 %v3818
    %5462 = vmatpush.msra.mxu0 %v3810
    %5463 = vmatpush.msra.mxu0 %v3802
    %5464 = vmatpush.msra.mxu0 %v3794
    %5465 = vmatpush.msra.mxu0 %v3786
    %5466 = vmatpush.msra.mxu0 %v3778
    %5467 = vmatpush.msra.mxu0 %v3770
    %5468 = vmatpush.msra.mxu0 %v3762
    %5469 = vmatpush.msra.mxu0 %v3754
    %5470 = vmatpush.msra.mxu0 %v3746
    %5471 = vmatmul.f32.gmra.mxu0 %v2199
    %v5472 = vpop.f32.mrf.mxu0
    %v5473 = vadd.f32 %v5453, %v5472
    %5474 = vdwg.mxu0
    %5475 = vmatpush.msra.mxu0 %v3994
    %5476 = vmatpush.msra.mxu0 %v3986
    %5477 = vmatpush.msra.mxu0 %v3978
    %5478 = vmatpush.msra.mxu0 %v3970
    %5479 = vmatpush.msra.mxu0 %v3962
    %5480 = vmatpush.msra.mxu0 %v3954
    %5481 = vmatpush.msra.mxu0 %v3946
    %5482 = vmatpush.msra.mxu0 %v3938
    %5483 = vmatpush.msra.mxu0 %v3930
    %5484 = vmatpush.msra.mxu0 %v3922
    %5485 = vmatpush.msra.mxu0 %v3914
    %5486 = vmatpush.msra.mxu0 %v3906
    %5487 = vmatpush.msra.mxu0 %v3898
    %5488 = vmatpush.msra.mxu0 %v3890
    %5489 = vmatpush.msra.mxu0 %v3882
    %5490 = vmatpush.msra.mxu0 %v3874
    %5491 = vmatmul.f32.gmra.mxu0 %v2200
    %v5492 = vpop.f32.mrf.mxu0
    %v5493 = vadd.f32 %v5473, %v5492
    %5494 = vdwg.mxu0
    %5495 = vmatpush.msra.mxu0 %v4122
    %5496 = vmatpush.msra.mxu0 %v4114
    %5497 = vmatpush.msra.mxu0 %v4106
    %5498 = vmatpush.msra.mxu0 %v4098
    %5499 = vmatpush.msra.mxu0 %v4090
    %5500 = vmatpush.msra.mxu0 %v4082
    %5501 = vmatpush.msra.mxu0 %v4074
    %5502 = vmatpush.msra.mxu0 %v4066
    %5503 = vmatpush.msra.mxu0 %v4058
    %5504 = vmatpush.msra.mxu0 %v4050
    %5505 = vmatpush.msra.mxu0 %v4042
    %5506 = vmatpush.msra.mxu0 %v4034
    %5507 = vmatpush.msra.mxu0 %v4026
    %5508 = vmatpush.msra.mxu0 %v4018
    %5509 = vmatpush.msra.mxu0 %v4010
    %5510 = vmatpush.msra.mxu0 %v4002
    %5511 = vmatmul.f32.gmra.mxu0 %v2201
    %v5512 = vpop.f32.mrf.mxu0
    %v5513 = vadd.f32 %v5493, %v5512
    %5514 = vdwg.mxu0
    %5515 = vmatpush.msra.mxu0 %v4250
    %5516 = vmatpush.msra.mxu0 %v4242
    %5517 = vmatpush.msra.mxu0 %v4234
    %5518 = vmatpush.msra.mxu0 %v4226
    %5519 = vmatpush.msra.mxu0 %v4218
    %5520 = vmatpush.msra.mxu0 %v4210
    %5521 = vmatpush.msra.mxu0 %v4202
    %5522 = vmatpush.msra.mxu0 %v4194
    %5523 = vmatpush.msra.mxu0 %v4186
    %5524 = vmatpush.msra.mxu0 %v4178
    %5525 = vmatpush.msra.mxu0 %v4170
    %5526 = vmatpush.msra.mxu0 %v4162
    %5527 = vmatpush.msra.mxu0 %v4154
    %5528 = vmatpush.msra.mxu0 %v4146
    %5529 = vmatpush.msra.mxu0 %v4138
    %5530 = vmatpush.msra.mxu0 %v4130
    %5531 = vmatmul.f32.gmra.mxu0 %v2202
    %v5532 = vpop.f32.mrf.mxu0
    %v5533 = vadd.f32 %v5513, %v5532
    %5534 = vdwg.mxu0
    %5535 = vmatpush.msra.mxu0 %v2331
    %5536 = vmatpush.msra.mxu0 %v2323
    %5537 = vmatpush.msra.mxu0 %v2315
    %5538 = vmatpush.msra.mxu0 %v2307
    %5539 = vmatpush.msra.mxu0 %v2299
    %5540 = vmatpush.msra.mxu0 %v2291
    %5541 = vmatpush.msra.mxu0 %v2283
    %5542 = vmatpush.msra.mxu0 %v2275
    %5543 = vmatpush.msra.mxu0 %v2267
    %5544 = vmatpush.msra.mxu0 %v2259
    %5545 = vmatpush.msra.mxu0 %v2251
    %5546 = vmatpush.msra.mxu0 %v2243
    %5547 = vmatpush.msra.mxu0 %v2235
    %5548 = vmatpush.msra.mxu0 %v2227
    %5549 = vmatpush.msra.mxu0 %v2219
    %5550 = vmatpush.msra.mxu0 %v2211
    %5551 = vmatmul.f32.gmra.mxu0 %v2187
    %v5552 = vpop.f32.mrf.mxu0
    %v5553 = vadd.f32 0.0, %v5552
    %5554 = vdwg.mxu0
    %5555 = vmatpush.msra.mxu0 %v2459
    %5556 = vmatpush.msra.mxu0 %v2451
    %5557 = vmatpush.msra.mxu0 %v2443
    %5558 = vmatpush.msra.mxu0 %v2435
    %5559 = vmatpush.msra.mxu0 %v2427
    %5560 = vmatpush.msra.mxu0 %v2419
    %5561 = vmatpush.msra.mxu0 %v2411
    %5562 = vmatpush.msra.mxu0 %v2403
    %5563 = vmatpush.msra.mxu0 %v2395
    %5564 = vmatpush.msra.mxu0 %v2387
    %5565 = vmatpush.msra.mxu0 %v2379
    %5566 = vmatpush.msra.mxu0 %v2371
    %5567 = vmatpush.msra.mxu0 %v2363
    %5568 = vmatpush.msra.mxu0 %v2355
    %5569 = vmatpush.msra.mxu0 %v2347
    %5570 = vmatpush.msra.mxu0 %v2339
    %5571 = vmatmul.f32.gmra.mxu0 %v2188
    %v5572 = vpop.f32.mrf.mxu0
    %v5573 = vadd.f32 %v5553, %v5572
    %5574 = vdwg.mxu0
    %5575 = vmatpush.msra.mxu0 %v2587
    %5576 = vmatpush.msra.mxu0 %v2579
    %5577 = vmatpush.msra.mxu0 %v2571
    %5578 = vmatpush.msra.mxu0 %v2563
    %5579 = vmatpush.msra.mxu0 %v2555
    %5580 = vmatpush.msra.mxu0 %v2547
    %5581 = vmatpush.msra.mxu0 %v2539
    %5582 = vmatpush.msra.mxu0 %v2531
    %5583 = vmatpush.msra.mxu0 %v2523
    %5584 = vmatpush.msra.mxu0 %v2515
    %5585 = vmatpush.msra.mxu0 %v2507
    %5586 = vmatpush.msra.mxu0 %v2499
    %5587 = vmatpush.msra.mxu0 %v2491
    %5588 = vmatpush.msra.mxu0 %v2483
    %5589 = vmatpush.msra.mxu0 %v2475
    %5590 = vmatpush.msra.mxu0 %v2467
    %5591 = vmatmul.f32.gmra.mxu0 %v2189
    %v5592 = vpop.f32.mrf.mxu0
    %v5593 = vadd.f32 %v5573, %v5592
    %5594 = vdwg.mxu0
    %5595 = vmatpush.msra.mxu0 %v2715
    %5596 = vmatpush.msra.mxu0 %v2707
    %5597 = vmatpush.msra.mxu0 %v2699
    %5598 = vmatpush.msra.mxu0 %v2691
    %5599 = vmatpush.msra.mxu0 %v2683
    %5600 = vmatpush.msra.mxu0 %v2675
    %5601 = vmatpush.msra.mxu0 %v2667
    %5602 = vmatpush.msra.mxu0 %v2659
    %5603 = vmatpush.msra.mxu0 %v2651
    %5604 = vmatpush.msra.mxu0 %v2643
    %5605 = vmatpush.msra.mxu0 %v2635
    %5606 = vmatpush.msra.mxu0 %v2627
    %5607 = vmatpush.msra.mxu0 %v2619
    %5608 = vmatpush.msra.mxu0 %v2611
    %5609 = vmatpush.msra.mxu0 %v2603
    %5610 = vmatpush.msra.mxu0 %v2595
    %5611 = vmatmul.f32.gmra.mxu0 %v2190
    %v5612 = vpop.f32.mrf.mxu0
    %v5613 = vadd.f32 %v5593, %v5612
    %5614 = vdwg.mxu0
    %5615 = vmatpush.msra.mxu0 %v2843
    %5616 = vmatpush.msra.mxu0 %v2835
    %5617 = vmatpush.msra.mxu0 %v2827
    %5618 = vmatpush.msra.mxu0 %v2819
    %5619 = vmatpush.msra.mxu0 %v2811
    %5620 = vmatpush.msra.mxu0 %v2803
    %5621 = vmatpush.msra.mxu0 %v2795
    %5622 = vmatpush.msra.mxu0 %v2787
    %5623 = vmatpush.msra.mxu0 %v2779
    %5624 = vmatpush.msra.mxu0 %v2771
    %5625 = vmatpush.msra.mxu0 %v2763
    %5626 = vmatpush.msra.mxu0 %v2755
    %5627 = vmatpush.msra.mxu0 %v2747
    %5628 = vmatpush.msra.mxu0 %v2739
    %5629 = vmatpush.msra.mxu0 %v2731
    %5630 = vmatpush.msra.mxu0 %v2723
    %5631 = vmatmul.f32.gmra.mxu0 %v2191
    %v5632 = vpop.f32.mrf.mxu0
    %v5633 = vadd.f32 %v5613, %v5632
    %5634 = vdwg.mxu0
    %5635 = vmatpush.msra.mxu0 %v2971
    %5636 = vmatpush.msra.mxu0 %v2963
    %5637 = vmatpush.msra.mxu0 %v2955
    %5638 = vmatpush.msra.mxu0 %v2947
    %5639 = vmatpush.msra.mxu0 %v2939
    %5640 = vmatpush.msra.mxu0 %v2931
    %5641 = vmatpush.msra.mxu0 %v2923
    %5642 = vmatpush.msra.mxu0 %v2915
    %5643 = vmatpush.msra.mxu0 %v2907
    %5644 = vmatpush.msra.mxu0 %v2899
    %5645 = vmatpush.msra.mxu0 %v2891
    %5646 = vmatpush.msra.mxu0 %v2883
    %5647 = vmatpush.msra.mxu0 %v2875
    %5648 = vmatpush.msra.mxu0 %v2867
    %5649 = vmatpush.msra.mxu0 %v2859
    %5650 = vmatpush.msra.mxu0 %v2851
    %5651 = vmatmul.f32.gmra.mxu0 %v2192
    %v5652 = vpop.f32.mrf.mxu0
    %v5653 = vadd.f32 %v5633, %v5652
    %5654 = vdwg.mxu0
    %5655 = vmatpush.msra.mxu0 %v3099
    %5656 = vmatpush.msra.mxu0 %v3091
    %5657 = vmatpush.msra.mxu0 %v3083
    %5658 = vmatpush.msra.mxu0 %v3075
    %5659 = vmatpush.msra.mxu0 %v3067
    %5660 = vmatpush.msra.mxu0 %v3059
    %5661 = vmatpush.msra.mxu0 %v3051
    %5662 = vmatpush.msra.mxu0 %v3043
    %5663 = vmatpush.msra.mxu0 %v3035
    %5664 = vmatpush.msra.mxu0 %v3027
    %5665 = vmatpush.msra.mxu0 %v3019
    %5666 = vmatpush.msra.mxu0 %v3011
    %5667 = vmatpush.msra.mxu0 %v3003
    %5668 = vmatpush.msra.mxu0 %v2995
    %5669 = vmatpush.msra.mxu0 %v2987
    %5670 = vmatpush.msra.mxu0 %v2979
    %5671 = vmatmul.f32.gmra.mxu0 %v2193
    %v5672 = vpop.f32.mrf.mxu0
    %v5673 = vadd.f32 %v5653, %v5672
    %5674 = vdwg.mxu0
    %5675 = vmatpush.msra.mxu0 %v3227
    %5676 = vmatpush.msra.mxu0 %v3219
    %5677 = vmatpush.msra.mxu0 %v3211
    %5678 = vmatpush.msra.mxu0 %v3203
    %5679 = vmatpush.msra.mxu0 %v3195
    %5680 = vmatpush.msra.mxu0 %v3187
    %5681 = vmatpush.msra.mxu0 %v3179
    %5682 = vmatpush.msra.mxu0 %v3171
    %5683 = vmatpush.msra.mxu0 %v3163
    %5684 = vmatpush.msra.mxu0 %v3155
    %5685 = vmatpush.msra.mxu0 %v3147
    %5686 = vmatpush.msra.mxu0 %v3139
    %5687 = vmatpush.msra.mxu0 %v3131
    %5688 = vmatpush.msra.mxu0 %v3123
    %5689 = vmatpush.msra.mxu0 %v3115
    %5690 = vmatpush.msra.mxu0 %v3107
    %5691 = vmatmul.f32.gmra.mxu0 %v2194
    %v5692 = vpop.f32.mrf.mxu0
    %v5693 = vadd.f32 %v5673, %v5692
    %5694 = vdwg.mxu0
    %5695 = vmatpush.msra.mxu0 %v3355
    %5696 = vmatpush.msra.mxu0 %v3347
    %5697 = vmatpush.msra.mxu0 %v3339
    %5698 = vmatpush.msra.mxu0 %v3331
    %5699 = vmatpush.msra.mxu0 %v3323
    %5700 = vmatpush.msra.mxu0 %v3315
    %5701 = vmatpush.msra.mxu0 %v3307
    %5702 = vmatpush.msra.mxu0 %v3299
    %5703 = vmatpush.msra.mxu0 %v3291
    %5704 = vmatpush.msra.mxu0 %v3283
    %5705 = vmatpush.msra.mxu0 %v3275
    %5706 = vmatpush.msra.mxu0 %v3267
    %5707 = vmatpush.msra.mxu0 %v3259
    %5708 = vmatpush.msra.mxu0 %v3251
    %5709 = vmatpush.msra.mxu0 %v3243
    %5710 = vmatpush.msra.mxu0 %v3235
    %5711 = vmatmul.f32.gmra.mxu0 %v2195
    %v5712 = vpop.f32.mrf.mxu0
    %v5713 = vadd.f32 %v5693, %v5712
    %5714 = vdwg.mxu0
    %5715 = vmatpush.msra.mxu0 %v3483
    %5716 = vmatpush.msra.mxu0 %v3475
    %5717 = vmatpush.msra.mxu0 %v3467
    %5718 = vmatpush.msra.mxu0 %v3459
    %5719 = vmatpush.msra.mxu0 %v3451
    %5720 = vmatpush.msra.mxu0 %v3443
    %5721 = vmatpush.msra.mxu0 %v3435
    %5722 = vmatpush.msra.mxu0 %v3427
    %5723 = vmatpush.msra.mxu0 %v3419
    %5724 = vmatpush.msra.mxu0 %v3411
    %5725 = vmatpush.msra.mxu0 %v3403
    %5726 = vmatpush.msra.mxu0 %v3395
    %5727 = vmatpush.msra.mxu0 %v3387
    %5728 = vmatpush.msra.mxu0 %v3379
    %5729 = vmatpush.msra.mxu0 %v3371
    %5730 = vmatpush.msra.mxu0 %v3363
    %5731 = vmatmul.f32.gmra.mxu0 %v2196
    %v5732 = vpop.f32.mrf.mxu0
    %v5733 = vadd.f32 %v5713, %v5732
    %5734 = vdwg.mxu0
    %5735 = vmatpush.msra.mxu0 %v3611
    %5736 = vmatpush.msra.mxu0 %v3603
    %5737 = vmatpush.msra.mxu0 %v3595
    %5738 = vmatpush.msra.mxu0 %v3587
    %5739 = vmatpush.msra.mxu0 %v3579
    %5740 = vmatpush.msra.mxu0 %v3571
    %5741 = vmatpush.msra.mxu0 %v3563
    %5742 = vmatpush.msra.mxu0 %v3555
    %5743 = vmatpush.msra.mxu0 %v3547
    %5744 = vmatpush.msra.mxu0 %v3539
    %5745 = vmatpush.msra.mxu0 %v3531
    %5746 = vmatpush.msra.mxu0 %v3523
    %5747 = vmatpush.msra.mxu0 %v3515
    %5748 = vmatpush.msra.mxu0 %v3507
    %5749 = vmatpush.msra.mxu0 %v3499
    %5750 = vmatpush.msra.mxu0 %v3491
    %5751 = vmatmul.f32.gmra.mxu0 %v2197
    %v5752 = vpop.f32.mrf.mxu0
    %v5753 = vadd.f32 %v5733, %v5752
    %5754 = vdwg.mxu0
    %5755 = vmatpush.msra.mxu0 %v3739
    %5756 = vmatpush.msra.mxu0 %v3731
    %5757 = vmatpush.msra.mxu0 %v3723
    %5758 = vmatpush.msra.mxu0 %v3715
    %5759 = vmatpush.msra.mxu0 %v3707
    %5760 = vmatpush.msra.mxu0 %v3699
    %5761 = vmatpush.msra.mxu0 %v3691
    %5762 = vmatpush.msra.mxu0 %v3683
    %5763 = vmatpush.msra.mxu0 %v3675
    %5764 = vmatpush.msra.mxu0 %v3667
    %5765 = vmatpush.msra.mxu0 %v3659
    %5766 = vmatpush.msra.mxu0 %v3651
    %5767 = vmatpush.msra.mxu0 %v3643
    %5768 = vmatpush.msra.mxu0 %v3635
    %5769 = vmatpush.msra.mxu0 %v3627
    %5770 = vmatpush.msra.mxu0 %v3619
    %5771 = vmatmul.f32.gmra.mxu0 %v2198
    %v5772 = vpop.f32.mrf.mxu0
    %v5773 = vadd.f32 %v5753, %v5772
    %5774 = vdwg.mxu0
    %5775 = vmatpush.msra.mxu0 %v3867
    %5776 = vmatpush.msra.mxu0 %v3859
    %5777 = vmatpush.msra.mxu0 %v3851
    %5778 = vmatpush.msra.mxu0 %v3843
    %5779 = vmatpush.msra.mxu0 %v3835
    %5780 = vmatpush.msra.mxu0 %v3827
    %5781 = vmatpush.msra.mxu0 %v3819
    %5782 = vmatpush.msra.mxu0 %v3811
    %5783 = vmatpush.msra.mxu0 %v3803
    %5784 = vmatpush.msra.mxu0 %v3795
    %5785 = vmatpush.msra.mxu0 %v3787
    %5786 = vmatpush.msra.mxu0 %v3779
    %5787 = vmatpush.msra.mxu0 %v3771
    %5788 = vmatpush.msra.mxu0 %v3763
    %5789 = vmatpush.msra.mxu0 %v3755
    %5790 = vmatpush.msra.mxu0 %v3747
    %5791 = vmatmul.f32.gmra.mxu0 %v2199
    %v5792 = vpop.f32.mrf.mxu0
    %v5793 = vadd.f32 %v5773, %v5792
    %5794 = vdwg.mxu0
    %5795 = vmatpush.msra.mxu0 %v3995
    %5796 = vmatpush.msra.mxu0 %v3987
    %5797 = vmatpush.msra.mxu0 %v3979
    %5798 = vmatpush.msra.mxu0 %v3971
    %5799 = vmatpush.msra.mxu0 %v3963
    %5800 = vmatpush.msra.mxu0 %v3955
    %5801 = vmatpush.msra.mxu0 %v3947
    %5802 = vmatpush.msra.mxu0 %v3939
    %5803 = vmatpush.msra.mxu0 %v3931
    %5804 = vmatpush.msra.mxu0 %v3923
    %5805 = vmatpush.msra.mxu0 %v3915
    %5806 = vmatpush.msra.mxu0 %v3907
    %5807 = vmatpush.msra.mxu0 %v3899
    %5808 = vmatpush.msra.mxu0 %v3891
    %5809 = vmatpush.msra.mxu0 %v3883
    %5810 = vmatpush.msra.mxu0 %v3875
    %5811 = vmatmul.f32.gmra.mxu0 %v2200
    %v5812 = vpop.f32.mrf.mxu0
    %v5813 = vadd.f32 %v5793, %v5812
    %5814 = vdwg.mxu0
    %5815 = vmatpush.msra.mxu0 %v4123
    %5816 = vmatpush.msra.mxu0 %v4115
    %5817 = vmatpush.msra.mxu0 %v4107
    %5818 = vmatpush.msra.mxu0 %v4099
    %5819 = vmatpush.msra.mxu0 %v4091
    %5820 = vmatpush.msra.mxu0 %v4083
    %5821 = vmatpush.msra.mxu0 %v4075
    %5822 = vmatpush.msra.mxu0 %v4067
    %5823 = vmatpush.msra.mxu0 %v4059
    %5824 = vmatpush.msra.mxu0 %v4051
    %5825 = vmatpush.msra.mxu0 %v4043
    %5826 = vmatpush.msra.mxu0 %v4035
    %5827 = vmatpush.msra.mxu0 %v4027
    %5828 = vmatpush.msra.mxu0 %v4019
    %5829 = vmatpush.msra.mxu0 %v4011
    %5830 = vmatpush.msra.mxu0 %v4003
    %5831 = vmatmul.f32.gmra.mxu0 %v2201
    %v5832 = vpop.f32.mrf.mxu0
    %v5833 = vadd.f32 %v5813, %v5832
    %5834 = vdwg.mxu0
    %5835 = vmatpush.msra.mxu0 %v4251
    %5836 = vmatpush.msra.mxu0 %v4243
    %5837 = vmatpush.msra.mxu0 %v4235
    %5838 = vmatpush.msra.mxu0 %v4227
    %5839 = vmatpush.msra.mxu0 %v4219
    %5840 = vmatpush.msra.mxu0 %v4211
    %5841 = vmatpush.msra.mxu0 %v4203
    %5842 = vmatpush.msra.mxu0 %v4195
    %5843 = vmatpush.msra.mxu0 %v4187
    %5844 = vmatpush.msra.mxu0 %v4179
    %5845 = vmatpush.msra.mxu0 %v4171
    %5846 = vmatpush.msra.mxu0 %v4163
    %5847 = vmatpush.msra.mxu0 %v4155
    %5848 = vmatpush.msra.mxu0 %v4147
    %5849 = vmatpush.msra.mxu0 %v4139
    %5850 = vmatpush.msra.mxu0 %v4131
    %5851 = vmatmul.f32.gmra.mxu0 %v2202
    %v5852 = vpop.f32.mrf.mxu0
    %v5853 = vadd.f32 %v5833, %v5852
    %5854 = vdwg.mxu0
    %5855 = vmatpush.msra.mxu0 %v2332
    %5856 = vmatpush.msra.mxu0 %v2324
    %5857 = vmatpush.msra.mxu0 %v2316
    %5858 = vmatpush.msra.mxu0 %v2308
    %5859 = vmatpush.msra.mxu0 %v2300
    %5860 = vmatpush.msra.mxu0 %v2292
    %5861 = vmatpush.msra.mxu0 %v2284
    %5862 = vmatpush.msra.mxu0 %v2276
    %5863 = vmatpush.msra.mxu0 %v2268
    %5864 = vmatpush.msra.mxu0 %v2260
    %5865 = vmatpush.msra.mxu0 %v2252
    %5866 = vmatpush.msra.mxu0 %v2244
    %5867 = vmatpush.msra.mxu0 %v2236
    %5868 = vmatpush.msra.mxu0 %v2228
    %5869 = vmatpush.msra.mxu0 %v2220
    %5870 = vmatpush.msra.mxu0 %v2212
    %5871 = vmatmul.f32.gmra.mxu0 %v2187
    %v5872 = vpop.f32.mrf.mxu0
    %v5873 = vadd.f32 0.0, %v5872
    %5874 = vdwg.mxu0
    %5875 = vmatpush.msra.mxu0 %v2460
    %5876 = vmatpush.msra.mxu0 %v2452
    %5877 = vmatpush.msra.mxu0 %v2444
    %5878 = vmatpush.msra.mxu0 %v2436
    %5879 = vmatpush.msra.mxu0 %v2428
    %5880 = vmatpush.msra.mxu0 %v2420
    %5881 = vmatpush.msra.mxu0 %v2412
    %5882 = vmatpush.msra.mxu0 %v2404
    %5883 = vmatpush.msra.mxu0 %v2396
    %5884 = vmatpush.msra.mxu0 %v2388
    %5885 = vmatpush.msra.mxu0 %v2380
    %5886 = vmatpush.msra.mxu0 %v2372
    %5887 = vmatpush.msra.mxu0 %v2364
    %5888 = vmatpush.msra.mxu0 %v2356
    %5889 = vmatpush.msra.mxu0 %v2348
    %5890 = vmatpush.msra.mxu0 %v2340
    %5891 = vmatmul.f32.gmra.mxu0 %v2188
    %v5892 = vpop.f32.mrf.mxu0
    %v5893 = vadd.f32 %v5873, %v5892
    %5894 = vdwg.mxu0
    %5895 = vmatpush.msra.mxu0 %v2588
    %5896 = vmatpush.msra.mxu0 %v2580
    %5897 = vmatpush.msra.mxu0 %v2572
    %5898 = vmatpush.msra.mxu0 %v2564
    %5899 = vmatpush.msra.mxu0 %v2556
    %5900 = vmatpush.msra.mxu0 %v2548
    %5901 = vmatpush.msra.mxu0 %v2540
    %5902 = vmatpush.msra.mxu0 %v2532
    %5903 = vmatpush.msra.mxu0 %v2524
    %5904 = vmatpush.msra.mxu0 %v2516
    %5905 = vmatpush.msra.mxu0 %v2508
    %5906 = vmatpush.msra.mxu0 %v2500
    %5907 = vmatpush.msra.mxu0 %v2492
    %5908 = vmatpush.msra.mxu0 %v2484
    %5909 = vmatpush.msra.mxu0 %v2476
    %5910 = vmatpush.msra.mxu0 %v2468
    %5911 = vmatmul.f32.gmra.mxu0 %v2189
    %v5912 = vpop.f32.mrf.mxu0
    %v5913 = vadd.f32 %v5893, %v5912
    %5914 = vdwg.mxu0
    %5915 = vmatpush.msra.mxu0 %v2716
    %5916 = vmatpush.msra.mxu0 %v2708
    %5917 = vmatpush.msra.mxu0 %v2700
    %5918 = vmatpush.msra.mxu0 %v2692
    %5919 = vmatpush.msra.mxu0 %v2684
    %5920 = vmatpush.msra.mxu0 %v2676
    %5921 = vmatpush.msra.mxu0 %v2668
    %5922 = vmatpush.msra.mxu0 %v2660
    %5923 = vmatpush.msra.mxu0 %v2652
    %5924 = vmatpush.msra.mxu0 %v2644
    %5925 = vmatpush.msra.mxu0 %v2636
    %5926 = vmatpush.msra.mxu0 %v2628
    %5927 = vmatpush.msra.mxu0 %v2620
    %5928 = vmatpush.msra.mxu0 %v2612
    %5929 = vmatpush.msra.mxu0 %v2604
    %5930 = vmatpush.msra.mxu0 %v2596
    %5931 = vmatmul.f32.gmra.mxu0 %v2190
    %v5932 = vpop.f32.mrf.mxu0
    %v5933 = vadd.f32 %v5913, %v5932
    %5934 = vdwg.mxu0
    %5935 = vmatpush.msra.mxu0 %v2844
    %5936 = vmatpush.msra.mxu0 %v2836
    %5937 = vmatpush.msra.mxu0 %v2828
    %5938 = vmatpush.msra.mxu0 %v2820
    %5939 = vmatpush.msra.mxu0 %v2812
    %5940 = vmatpush.msra.mxu0 %v2804
    %5941 = vmatpush.msra.mxu0 %v2796
    %5942 = vmatpush.msra.mxu0 %v2788
    %5943 = vmatpush.msra.mxu0 %v2780
    %5944 = vmatpush.msra.mxu0 %v2772
    %5945 = vmatpush.msra.mxu0 %v2764
    %5946 = vmatpush.msra.mxu0 %v2756
    %5947 = vmatpush.msra.mxu0 %v2748
    %5948 = vmatpush.msra.mxu0 %v2740
    %5949 = vmatpush.msra.mxu0 %v2732
    %5950 = vmatpush.msra.mxu0 %v2724
    %5951 = vmatmul.f32.gmra.mxu0 %v2191
    %v5952 = vpop.f32.mrf.mxu0
    %v5953 = vadd.f32 %v5933, %v5952
    %5954 = vdwg.mxu0
    %5955 = vmatpush.msra.mxu0 %v2972
    %5956 = vmatpush.msra.mxu0 %v2964
    %5957 = vmatpush.msra.mxu0 %v2956
    %5958 = vmatpush.msra.mxu0 %v2948
    %5959 = vmatpush.msra.mxu0 %v2940
    %5960 = vmatpush.msra.mxu0 %v2932
    %5961 = vmatpush.msra.mxu0 %v2924
    %5962 = vmatpush.msra.mxu0 %v2916
    %5963 = vmatpush.msra.mxu0 %v2908
    %5964 = vmatpush.msra.mxu0 %v2900
    %5965 = vmatpush.msra.mxu0 %v2892
    %5966 = vmatpush.msra.mxu0 %v2884
    %5967 = vmatpush.msra.mxu0 %v2876
    %5968 = vmatpush.msra.mxu0 %v2868
    %5969 = vmatpush.msra.mxu0 %v2860
    %5970 = vmatpush.msra.mxu0 %v2852
    %5971 = vmatmul.f32.gmra.mxu0 %v2192
    %v5972 = vpop.f32.mrf.mxu0
    %v5973 = vadd.f32 %v5953, %v5972
    %5974 = vdwg.mxu0
    %5975 = vmatpush.msra.mxu0 %v3100
    %5976 = vmatpush.msra.mxu0 %v3092
    %5977 = vmatpush.msra.mxu0 %v3084
    %5978 = vmatpush.msra.mxu0 %v3076
    %5979 = vmatpush.msra.mxu0 %v3068
    %5980 = vmatpush.msra.mxu0 %v3060
    %5981 = vmatpush.msra.mxu0 %v3052
    %5982 = vmatpush.msra.mxu0 %v3044
    %5983 = vmatpush.msra.mxu0 %v3036
    %5984 = vmatpush.msra.mxu0 %v3028
    %5985 = vmatpush.msra.mxu0 %v3020
    %5986 = vmatpush.msra.mxu0 %v3012
    %5987 = vmatpush.msra.mxu0 %v3004
    %5988 = vmatpush.msra.mxu0 %v2996
    %5989 = vmatpush.msra.mxu0 %v2988
    %5990 = vmatpush.msra.mxu0 %v2980
    %5991 = vmatmul.f32.gmra.mxu0 %v2193
    %v5992 = vpop.f32.mrf.mxu0
    %v5993 = vadd.f32 %v5973, %v5992
    %5994 = vdwg.mxu0
    %5995 = vmatpush.msra.mxu0 %v3228
    %5996 = vmatpush.msra.mxu0 %v3220
    %5997 = vmatpush.msra.mxu0 %v3212
    %5998 = vmatpush.msra.mxu0 %v3204
    %5999 = vmatpush.msra.mxu0 %v3196
    %6000 = vmatpush.msra.mxu0 %v3188
    %6001 = vmatpush.msra.mxu0 %v3180
    %6002 = vmatpush.msra.mxu0 %v3172
    %6003 = vmatpush.msra.mxu0 %v3164
    %6004 = vmatpush.msra.mxu0 %v3156
    %6005 = vmatpush.msra.mxu0 %v3148
    %6006 = vmatpush.msra.mxu0 %v3140
    %6007 = vmatpush.msra.mxu0 %v3132
    %6008 = vmatpush.msra.mxu0 %v3124
    %6009 = vmatpush.msra.mxu0 %v3116
    %6010 = vmatpush.msra.mxu0 %v3108
    %6011 = vmatmul.f32.gmra.mxu0 %v2194
    %v6012 = vpop.f32.mrf.mxu0
    %v6013 = vadd.f32 %v5993, %v6012
    %6014 = vdwg.mxu0
    %6015 = vmatpush.msra.mxu0 %v3356
    %6016 = vmatpush.msra.mxu0 %v3348
    %6017 = vmatpush.msra.mxu0 %v3340
    %6018 = vmatpush.msra.mxu0 %v3332
    %6019 = vmatpush.msra.mxu0 %v3324
    %6020 = vmatpush.msra.mxu0 %v3316
    %6021 = vmatpush.msra.mxu0 %v3308
    %6022 = vmatpush.msra.mxu0 %v3300
    %6023 = vmatpush.msra.mxu0 %v3292
    %6024 = vmatpush.msra.mxu0 %v3284
    %6025 = vmatpush.msra.mxu0 %v3276
    %6026 = vmatpush.msra.mxu0 %v3268
    %6027 = vmatpush.msra.mxu0 %v3260
    %6028 = vmatpush.msra.mxu0 %v3252
    %6029 = vmatpush.msra.mxu0 %v3244
    %6030 = vmatpush.msra.mxu0 %v3236
    %6031 = vmatmul.f32.gmra.mxu0 %v2195
    %v6032 = vpop.f32.mrf.mxu0
    %v6033 = vadd.f32 %v6013, %v6032
    %6034 = vdwg.mxu0
    %6035 = vmatpush.msra.mxu0 %v3484
    %6036 = vmatpush.msra.mxu0 %v3476
    %6037 = vmatpush.msra.mxu0 %v3468
    %6038 = vmatpush.msra.mxu0 %v3460
    %6039 = vmatpush.msra.mxu0 %v3452
    %6040 = vmatpush.msra.mxu0 %v3444
    %6041 = vmatpush.msra.mxu0 %v3436
    %6042 = vmatpush.msra.mxu0 %v3428
    %6043 = vmatpush.msra.mxu0 %v3420
    %6044 = vmatpush.msra.mxu0 %v3412
    %6045 = vmatpush.msra.mxu0 %v3404
    %6046 = vmatpush.msra.mxu0 %v3396
    %6047 = vmatpush.msra.mxu0 %v3388
    %6048 = vmatpush.msra.mxu0 %v3380
    %6049 = vmatpush.msra.mxu0 %v3372
    %6050 = vmatpush.msra.mxu0 %v3364
    %6051 = vmatmul.f32.gmra.mxu0 %v2196
    %v6052 = vpop.f32.mrf.mxu0
    %v6053 = vadd.f32 %v6033, %v6052
    %6054 = vdwg.mxu0
    %6055 = vmatpush.msra.mxu0 %v3612
    %6056 = vmatpush.msra.mxu0 %v3604
    %6057 = vmatpush.msra.mxu0 %v3596
    %6058 = vmatpush.msra.mxu0 %v3588
    %6059 = vmatpush.msra.mxu0 %v3580
    %6060 = vmatpush.msra.mxu0 %v3572
    %6061 = vmatpush.msra.mxu0 %v3564
    %6062 = vmatpush.msra.mxu0 %v3556
    %6063 = vmatpush.msra.mxu0 %v3548
    %6064 = vmatpush.msra.mxu0 %v3540
    %6065 = vmatpush.msra.mxu0 %v3532
    %6066 = vmatpush.msra.mxu0 %v3524
    %6067 = vmatpush.msra.mxu0 %v3516
    %6068 = vmatpush.msra.mxu0 %v3508
    %6069 = vmatpush.msra.mxu0 %v3500
    %6070 = vmatpush.msra.mxu0 %v3492
    %6071 = vmatmul.f32.gmra.mxu0 %v2197
    %v6072 = vpop.f32.mrf.mxu0
    %v6073 = vadd.f32 %v6053, %v6072
    %6074 = vdwg.mxu0
    %6075 = vmatpush.msra.mxu0 %v3740
    %6076 = vmatpush.msra.mxu0 %v3732
    %6077 = vmatpush.msra.mxu0 %v3724
    %6078 = vmatpush.msra.mxu0 %v3716
    %6079 = vmatpush.msra.mxu0 %v3708
    %6080 = vmatpush.msra.mxu0 %v3700
    %6081 = vmatpush.msra.mxu0 %v3692
    %6082 = vmatpush.msra.mxu0 %v3684
    %6083 = vmatpush.msra.mxu0 %v3676
    %6084 = vmatpush.msra.mxu0 %v3668
    %6085 = vmatpush.msra.mxu0 %v3660
    %6086 = vmatpush.msra.mxu0 %v3652
    %6087 = vmatpush.msra.mxu0 %v3644
    %6088 = vmatpush.msra.mxu0 %v3636
    %6089 = vmatpush.msra.mxu0 %v3628
    %6090 = vmatpush.msra.mxu0 %v3620
    %6091 = vmatmul.f32.gmra.mxu0 %v2198
    %v6092 = vpop.f32.mrf.mxu0
    %v6093 = vadd.f32 %v6073, %v6092
    %6094 = vdwg.mxu0
    %6095 = vmatpush.msra.mxu0 %v3868
    %6096 = vmatpush.msra.mxu0 %v3860
    %6097 = vmatpush.msra.mxu0 %v3852
    %6098 = vmatpush.msra.mxu0 %v3844
    %6099 = vmatpush.msra.mxu0 %v3836
    %6100 = vmatpush.msra.mxu0 %v3828
    %6101 = vmatpush.msra.mxu0 %v3820
    %6102 = vmatpush.msra.mxu0 %v3812
    %6103 = vmatpush.msra.mxu0 %v3804
    %6104 = vmatpush.msra.mxu0 %v3796
    %6105 = vmatpush.msra.mxu0 %v3788
    %6106 = vmatpush.msra.mxu0 %v3780
    %6107 = vmatpush.msra.mxu0 %v3772
    %6108 = vmatpush.msra.mxu0 %v3764
    %6109 = vmatpush.msra.mxu0 %v3756
    %6110 = vmatpush.msra.mxu0 %v3748
    %6111 = vmatmul.f32.gmra.mxu0 %v2199
    %v6112 = vpop.f32.mrf.mxu0
    %v6113 = vadd.f32 %v6093, %v6112
    %6114 = vdwg.mxu0
    %6115 = vmatpush.msra.mxu0 %v3996
    %6116 = vmatpush.msra.mxu0 %v3988
    %6117 = vmatpush.msra.mxu0 %v3980
    %6118 = vmatpush.msra.mxu0 %v3972
    %6119 = vmatpush.msra.mxu0 %v3964
    %6120 = vmatpush.msra.mxu0 %v3956
    %6121 = vmatpush.msra.mxu0 %v3948
    %6122 = vmatpush.msra.mxu0 %v3940
    %6123 = vmatpush.msra.mxu0 %v3932
    %6124 = vmatpush.msra.mxu0 %v3924
    %6125 = vmatpush.msra.mxu0 %v3916
    %6126 = vmatpush.msra.mxu0 %v3908
    %6127 = vmatpush.msra.mxu0 %v3900
    %6128 = vmatpush.msra.mxu0 %v3892
    %6129 = vmatpush.msra.mxu0 %v3884
    %6130 = vmatpush.msra.mxu0 %v3876
    %6131 = vmatmul.f32.gmra.mxu0 %v2200
    %v6132 = vpop.f32.mrf.mxu0
    %v6133 = vadd.f32 %v6113, %v6132
    %6134 = vdwg.mxu0
    %6135 = vmatpush.msra.mxu0 %v4124
    %6136 = vmatpush.msra.mxu0 %v4116
    %6137 = vmatpush.msra.mxu0 %v4108
    %6138 = vmatpush.msra.mxu0 %v4100
    %6139 = vmatpush.msra.mxu0 %v4092
    %6140 = vmatpush.msra.mxu0 %v4084
    %6141 = vmatpush.msra.mxu0 %v4076
    %6142 = vmatpush.msra.mxu0 %v4068
    %6143 = vmatpush.msra.mxu0 %v4060
    %6144 = vmatpush.msra.mxu0 %v4052
    %6145 = vmatpush.msra.mxu0 %v4044
    %6146 = vmatpush.msra.mxu0 %v4036
    %6147 = vmatpush.msra.mxu0 %v4028
    %6148 = vmatpush.msra.mxu0 %v4020
    %6149 = vmatpush.msra.mxu0 %v4012
    %6150 = vmatpush.msra.mxu0 %v4004
    %6151 = vmatmul.f32.gmra.mxu0 %v2201
    %v6152 = vpop.f32.mrf.mxu0
    %v6153 = vadd.f32 %v6133, %v6152
    %6154 = vdwg.mxu0
    %6155 = vmatpush.msra.mxu0 %v4252
    %6156 = vmatpush.msra.mxu0 %v4244
    %6157 = vmatpush.msra.mxu0 %v4236
    %6158 = vmatpush.msra.mxu0 %v4228
    %6159 = vmatpush.msra.mxu0 %v4220
    %6160 = vmatpush.msra.mxu0 %v4212
    %6161 = vmatpush.msra.mxu0 %v4204
    %6162 = vmatpush.msra.mxu0 %v4196
    %6163 = vmatpush.msra.mxu0 %v4188
    %6164 = vmatpush.msra.mxu0 %v4180
    %6165 = vmatpush.msra.mxu0 %v4172
    %6166 = vmatpush.msra.mxu0 %v4164
    %6167 = vmatpush.msra.mxu0 %v4156
    %6168 = vmatpush.msra.mxu0 %v4148
    %6169 = vmatpush.msra.mxu0 %v4140
    %6170 = vmatpush.msra.mxu0 %v4132
    %6171 = vmatmul.f32.gmra.mxu0 %v2202
    %v6172 = vpop.f32.mrf.mxu0
    %v6173 = vadd.f32 %v6153, %v6172
    %6174 = vdwg.mxu0
    %6175 = vmatpush.msra.mxu0 %v2333
    %6176 = vmatpush.msra.mxu0 %v2325
    %6177 = vmatpush.msra.mxu0 %v2317
    %6178 = vmatpush.msra.mxu0 %v2309
    %6179 = vmatpush.msra.mxu0 %v2301
    %6180 = vmatpush.msra.mxu0 %v2293
    %6181 = vmatpush.msra.mxu0 %v2285
    %6182 = vmatpush.msra.mxu0 %v2277
    %6183 = vmatpush.msra.mxu0 %v2269
    %6184 = vmatpush.msra.mxu0 %v2261
    %6185 = vmatpush.msra.mxu0 %v2253
    %6186 = vmatpush.msra.mxu0 %v2245
    %6187 = vmatpush.msra.mxu0 %v2237
    %6188 = vmatpush.msra.mxu0 %v2229
    %6189 = vmatpush.msra.mxu0 %v2221
    %6190 = vmatpush.msra.mxu0 %v2213
    %6191 = vmatmul.f32.gmra.mxu0 %v2187
    %v6192 = vpop.f32.mrf.mxu0
    %v6193 = vadd.f32 0.0, %v6192
    %6194 = vdwg.mxu0
    %6195 = vmatpush.msra.mxu0 %v2461
    %6196 = vmatpush.msra.mxu0 %v2453
    %6197 = vmatpush.msra.mxu0 %v2445
    %6198 = vmatpush.msra.mxu0 %v2437
    %6199 = vmatpush.msra.mxu0 %v2429
    %6200 = vmatpush.msra.mxu0 %v2421
    %6201 = vmatpush.msra.mxu0 %v2413
    %6202 = vmatpush.msra.mxu0 %v2405
    %6203 = vmatpush.msra.mxu0 %v2397
    %6204 = vmatpush.msra.mxu0 %v2389
    %6205 = vmatpush.msra.mxu0 %v2381
    %6206 = vmatpush.msra.mxu0 %v2373
    %6207 = vmatpush.msra.mxu0 %v2365
    %6208 = vmatpush.msra.mxu0 %v2357
    %6209 = vmatpush.msra.mxu0 %v2349
    %6210 = vmatpush.msra.mxu0 %v2341
    %6211 = vmatmul.f32.gmra.mxu0 %v2188
    %v6212 = vpop.f32.mrf.mxu0
    %v6213 = vadd.f32 %v6193, %v6212
    %6214 = vdwg.mxu0
    %6215 = vmatpush.msra.mxu0 %v2589
    %6216 = vmatpush.msra.mxu0 %v2581
    %6217 = vmatpush.msra.mxu0 %v2573
    %6218 = vmatpush.msra.mxu0 %v2565
    %6219 = vmatpush.msra.mxu0 %v2557
    %6220 = vmatpush.msra.mxu0 %v2549
    %6221 = vmatpush.msra.mxu0 %v2541
    %6222 = vmatpush.msra.mxu0 %v2533
    %6223 = vmatpush.msra.mxu0 %v2525
    %6224 = vmatpush.msra.mxu0 %v2517
    %6225 = vmatpush.msra.mxu0 %v2509
    %6226 = vmatpush.msra.mxu0 %v2501
    %6227 = vmatpush.msra.mxu0 %v2493
    %6228 = vmatpush.msra.mxu0 %v2485
    %6229 = vmatpush.msra.mxu0 %v2477
    %6230 = vmatpush.msra.mxu0 %v2469
    %6231 = vmatmul.f32.gmra.mxu0 %v2189
    %v6232 = vpop.f32.mrf.mxu0
    %v6233 = vadd.f32 %v6213, %v6232
    %6234 = vdwg.mxu0
    %6235 = vmatpush.msra.mxu0 %v2717
    %6236 = vmatpush.msra.mxu0 %v2709
    %6237 = vmatpush.msra.mxu0 %v2701
    %6238 = vmatpush.msra.mxu0 %v2693
    %6239 = vmatpush.msra.mxu0 %v2685
    %6240 = vmatpush.msra.mxu0 %v2677
    %6241 = vmatpush.msra.mxu0 %v2669
    %6242 = vmatpush.msra.mxu0 %v2661
    %6243 = vmatpush.msra.mxu0 %v2653
    %6244 = vmatpush.msra.mxu0 %v2645
    %6245 = vmatpush.msra.mxu0 %v2637
    %6246 = vmatpush.msra.mxu0 %v2629
    %6247 = vmatpush.msra.mxu0 %v2621
    %6248 = vmatpush.msra.mxu0 %v2613
    %6249 = vmatpush.msra.mxu0 %v2605
    %6250 = vmatpush.msra.mxu0 %v2597
    %6251 = vmatmul.f32.gmra.mxu0 %v2190
    %v6252 = vpop.f32.mrf.mxu0
    %v6253 = vadd.f32 %v6233, %v6252
    %6254 = vdwg.mxu0
    %6255 = vmatpush.msra.mxu0 %v2845
    %6256 = vmatpush.msra.mxu0 %v2837
    %6257 = vmatpush.msra.mxu0 %v2829
    %6258 = vmatpush.msra.mxu0 %v2821
    %6259 = vmatpush.msra.mxu0 %v2813
    %6260 = vmatpush.msra.mxu0 %v2805
    %6261 = vmatpush.msra.mxu0 %v2797
    %6262 = vmatpush.msra.mxu0 %v2789
    %6263 = vmatpush.msra.mxu0 %v2781
    %6264 = vmatpush.msra.mxu0 %v2773
    %6265 = vmatpush.msra.mxu0 %v2765
    %6266 = vmatpush.msra.mxu0 %v2757
    %6267 = vmatpush.msra.mxu0 %v2749
    %6268 = vmatpush.msra.mxu0 %v2741
    %6269 = vmatpush.msra.mxu0 %v2733
    %6270 = vmatpush.msra.mxu0 %v2725
    %6271 = vmatmul.f32.gmra.mxu0 %v2191
    %v6272 = vpop.f32.mrf.mxu0
    %v6273 = vadd.f32 %v6253, %v6272
    %6274 = vdwg.mxu0
    %6275 = vmatpush.msra.mxu0 %v2973
    %6276 = vmatpush.msra.mxu0 %v2965
    %6277 = vmatpush.msra.mxu0 %v2957
    %6278 = vmatpush.msra.mxu0 %v2949
    %6279 = vmatpush.msra.mxu0 %v2941
    %6280 = vmatpush.msra.mxu0 %v2933
    %6281 = vmatpush.msra.mxu0 %v2925
    %6282 = vmatpush.msra.mxu0 %v2917
    %6283 = vmatpush.msra.mxu0 %v2909
    %6284 = vmatpush.msra.mxu0 %v2901
    %6285 = vmatpush.msra.mxu0 %v2893
    %6286 = vmatpush.msra.mxu0 %v2885
    %6287 = vmatpush.msra.mxu0 %v2877
    %6288 = vmatpush.msra.mxu0 %v2869
    %6289 = vmatpush.msra.mxu0 %v2861
    %6290 = vmatpush.msra.mxu0 %v2853
    %6291 = vmatmul.f32.gmra.mxu0 %v2192
    %v6292 = vpop.f32.mrf.mxu0
    %v6293 = vadd.f32 %v6273, %v6292
    %6294 = vdwg.mxu0
    %6295 = vmatpush.msra.mxu0 %v3101
    %6296 = vmatpush.msra.mxu0 %v3093
    %6297 = vmatpush.msra.mxu0 %v3085
    %6298 = vmatpush.msra.mxu0 %v3077
    %6299 = vmatpush.msra.mxu0 %v3069
    %6300 = vmatpush.msra.mxu0 %v3061
    %6301 = vmatpush.msra.mxu0 %v3053
    %6302 = vmatpush.msra.mxu0 %v3045
    %6303 = vmatpush.msra.mxu0 %v3037
    %6304 = vmatpush.msra.mxu0 %v3029
    %6305 = vmatpush.msra.mxu0 %v3021
    %6306 = vmatpush.msra.mxu0 %v3013
    %6307 = vmatpush.msra.mxu0 %v3005
    %6308 = vmatpush.msra.mxu0 %v2997
    %6309 = vmatpush.msra.mxu0 %v2989
    %6310 = vmatpush.msra.mxu0 %v2981
    %6311 = vmatmul.f32.gmra.mxu0 %v2193
    %v6312 = vpop.f32.mrf.mxu0
    %v6313 = vadd.f32 %v6293, %v6312
    %6314 = vdwg.mxu0
    %6315 = vmatpush.msra.mxu0 %v3229
    %6316 = vmatpush.msra.mxu0 %v3221
    %6317 = vmatpush.msra.mxu0 %v3213
    %6318 = vmatpush.msra.mxu0 %v3205
    %6319 = vmatpush.msra.mxu0 %v3197
    %6320 = vmatpush.msra.mxu0 %v3189
    %6321 = vmatpush.msra.mxu0 %v3181
    %6322 = vmatpush.msra.mxu0 %v3173
    %6323 = vmatpush.msra.mxu0 %v3165
    %6324 = vmatpush.msra.mxu0 %v3157
    %6325 = vmatpush.msra.mxu0 %v3149
    %6326 = vmatpush.msra.mxu0 %v3141
    %6327 = vmatpush.msra.mxu0 %v3133
    %6328 = vmatpush.msra.mxu0 %v3125
    %6329 = vmatpush.msra.mxu0 %v3117
    %6330 = vmatpush.msra.mxu0 %v3109
    %6331 = vmatmul.f32.gmra.mxu0 %v2194
    %v6332 = vpop.f32.mrf.mxu0
    %v6333 = vadd.f32 %v6313, %v6332
    %6334 = vdwg.mxu0
    %6335 = vmatpush.msra.mxu0 %v3357
    %6336 = vmatpush.msra.mxu0 %v3349
    %6337 = vmatpush.msra.mxu0 %v3341
    %6338 = vmatpush.msra.mxu0 %v3333
    %6339 = vmatpush.msra.mxu0 %v3325
    %6340 = vmatpush.msra.mxu0 %v3317
    %6341 = vmatpush.msra.mxu0 %v3309
    %6342 = vmatpush.msra.mxu0 %v3301
    %6343 = vmatpush.msra.mxu0 %v3293
    %6344 = vmatpush.msra.mxu0 %v3285
    %6345 = vmatpush.msra.mxu0 %v3277
    %6346 = vmatpush.msra.mxu0 %v3269
    %6347 = vmatpush.msra.mxu0 %v3261
    %6348 = vmatpush.msra.mxu0 %v3253
    %6349 = vmatpush.msra.mxu0 %v3245
    %6350 = vmatpush.msra.mxu0 %v3237
    %6351 = vmatmul.f32.gmra.mxu0 %v2195
    %v6352 = vpop.f32.mrf.mxu0
    %v6353 = vadd.f32 %v6333, %v6352
    %6354 = vdwg.mxu0
    %6355 = vmatpush.msra.mxu0 %v3485
    %6356 = vmatpush.msra.mxu0 %v3477
    %6357 = vmatpush.msra.mxu0 %v3469
    %6358 = vmatpush.msra.mxu0 %v3461
    %6359 = vmatpush.msra.mxu0 %v3453
    %6360 = vmatpush.msra.mxu0 %v3445
    %6361 = vmatpush.msra.mxu0 %v3437
    %6362 = vmatpush.msra.mxu0 %v3429
    %6363 = vmatpush.msra.mxu0 %v3421
    %6364 = vmatpush.msra.mxu0 %v3413
    %6365 = vmatpush.msra.mxu0 %v3405
    %6366 = vmatpush.msra.mxu0 %v3397
    %6367 = vmatpush.msra.mxu0 %v3389
    %6368 = vmatpush.msra.mxu0 %v3381
    %6369 = vmatpush.msra.mxu0 %v3373
    %6370 = vmatpush.msra.mxu0 %v3365
    %6371 = vmatmul.f32.gmra.mxu0 %v2196
    %v6372 = vpop.f32.mrf.mxu0
    %v6373 = vadd.f32 %v6353, %v6372
    %6374 = vdwg.mxu0
    %6375 = vmatpush.msra.mxu0 %v3613
    %6376 = vmatpush.msra.mxu0 %v3605
    %6377 = vmatpush.msra.mxu0 %v3597
    %6378 = vmatpush.msra.mxu0 %v3589
    %6379 = vmatpush.msra.mxu0 %v3581
    %6380 = vmatpush.msra.mxu0 %v3573
    %6381 = vmatpush.msra.mxu0 %v3565
    %6382 = vmatpush.msra.mxu0 %v3557
    %6383 = vmatpush.msra.mxu0 %v3549
    %6384 = vmatpush.msra.mxu0 %v3541
    %6385 = vmatpush.msra.mxu0 %v3533
    %6386 = vmatpush.msra.mxu0 %v3525
    %6387 = vmatpush.msra.mxu0 %v3517
    %6388 = vmatpush.msra.mxu0 %v3509
    %6389 = vmatpush.msra.mxu0 %v3501
    %6390 = vmatpush.msra.mxu0 %v3493
    %6391 = vmatmul.f32.gmra.mxu0 %v2197
    %v6392 = vpop.f32.mrf.mxu0
    %v6393 = vadd.f32 %v6373, %v6392
    %6394 = vdwg.mxu0
    %6395 = vmatpush.msra.mxu0 %v3741
    %6396 = vmatpush.msra.mxu0 %v3733
    %6397 = vmatpush.msra.mxu0 %v3725
    %6398 = vmatpush.msra.mxu0 %v3717
    %6399 = vmatpush.msra.mxu0 %v3709
    %6400 = vmatpush.msra.mxu0 %v3701
    %6401 = vmatpush.msra.mxu0 %v3693
    %6402 = vmatpush.msra.mxu0 %v3685
    %6403 = vmatpush.msra.mxu0 %v3677
    %6404 = vmatpush.msra.mxu0 %v3669
    %6405 = vmatpush.msra.mxu0 %v3661
    %6406 = vmatpush.msra.mxu0 %v3653
    %6407 = vmatpush.msra.mxu0 %v3645
    %6408 = vmatpush.msra.mxu0 %v3637
    %6409 = vmatpush.msra.mxu0 %v3629
    %6410 = vmatpush.msra.mxu0 %v3621
    %6411 = vmatmul.f32.gmra.mxu0 %v2198
    %v6412 = vpop.f32.mrf.mxu0
    %v6413 = vadd.f32 %v6393, %v6412
    %6414 = vdwg.mxu0
    %6415 = vmatpush.msra.mxu0 %v3869
    %6416 = vmatpush.msra.mxu0 %v3861
    %6417 = vmatpush.msra.mxu0 %v3853
    %6418 = vmatpush.msra.mxu0 %v3845
    %6419 = vmatpush.msra.mxu0 %v3837
    %6420 = vmatpush.msra.mxu0 %v3829
    %6421 = vmatpush.msra.mxu0 %v3821
    %6422 = vmatpush.msra.mxu0 %v3813
    %6423 = vmatpush.msra.mxu0 %v3805
    %6424 = vmatpush.msra.mxu0 %v3797
    %6425 = vmatpush.msra.mxu0 %v3789
    %6426 = vmatpush.msra.mxu0 %v3781
    %6427 = vmatpush.msra.mxu0 %v3773
    %6428 = vmatpush.msra.mxu0 %v3765
    %6429 = vmatpush.msra.mxu0 %v3757
    %6430 = vmatpush.msra.mxu0 %v3749
    %6431 = vmatmul.f32.gmra.mxu0 %v2199
    %v6432 = vpop.f32.mrf.mxu0
    %v6433 = vadd.f32 %v6413, %v6432
    %6434 = vdwg.mxu0
    %6435 = vmatpush.msra.mxu0 %v3997
    %6436 = vmatpush.msra.mxu0 %v3989
    %6437 = vmatpush.msra.mxu0 %v3981
    %6438 = vmatpush.msra.mxu0 %v3973
    %6439 = vmatpush.msra.mxu0 %v3965
    %6440 = vmatpush.msra.mxu0 %v3957
    %6441 = vmatpush.msra.mxu0 %v3949
    %6442 = vmatpush.msra.mxu0 %v3941
    %6443 = vmatpush.msra.mxu0 %v3933
    %6444 = vmatpush.msra.mxu0 %v3925
    %6445 = vmatpush.msra.mxu0 %v3917
    %6446 = vmatpush.msra.mxu0 %v3909
    %6447 = vmatpush.msra.mxu0 %v3901
    %6448 = vmatpush.msra.mxu0 %v3893
    %6449 = vmatpush.msra.mxu0 %v3885
    %6450 = vmatpush.msra.mxu0 %v3877
    %6451 = vmatmul.f32.gmra.mxu0 %v2200
    %v6452 = vpop.f32.mrf.mxu0
    %v6453 = vadd.f32 %v6433, %v6452
    %6454 = vdwg.mxu0
    %6455 = vmatpush.msra.mxu0 %v4125
    %6456 = vmatpush.msra.mxu0 %v4117
    %6457 = vmatpush.msra.mxu0 %v4109
    %6458 = vmatpush.msra.mxu0 %v4101
    %6459 = vmatpush.msra.mxu0 %v4093
    %6460 = vmatpush.msra.mxu0 %v4085
    %6461 = vmatpush.msra.mxu0 %v4077
    %6462 = vmatpush.msra.mxu0 %v4069
    %6463 = vmatpush.msra.mxu0 %v4061
    %6464 = vmatpush.msra.mxu0 %v4053
    %6465 = vmatpush.msra.mxu0 %v4045
    %6466 = vmatpush.msra.mxu0 %v4037
    %6467 = vmatpush.msra.mxu0 %v4029
    %6468 = vmatpush.msra.mxu0 %v4021
    %6469 = vmatpush.msra.mxu0 %v4013
    %6470 = vmatpush.msra.mxu0 %v4005
    %6471 = vmatmul.f32.gmra.mxu0 %v2201
    %v6472 = vpop.f32.mrf.mxu0
    %v6473 = vadd.f32 %v6453, %v6472
    %6474 = vdwg.mxu0
    %6475 = vmatpush.msra.mxu0 %v4253
    %6476 = vmatpush.msra.mxu0 %v4245
    %6477 = vmatpush.msra.mxu0 %v4237
    %6478 = vmatpush.msra.mxu0 %v4229
    %6479 = vmatpush.msra.mxu0 %v4221
    %6480 = vmatpush.msra.mxu0 %v4213
    %6481 = vmatpush.msra.mxu0 %v4205
    %6482 = vmatpush.msra.mxu0 %v4197
    %6483 = vmatpush.msra.mxu0 %v4189
    %6484 = vmatpush.msra.mxu0 %v4181
    %6485 = vmatpush.msra.mxu0 %v4173
    %6486 = vmatpush.msra.mxu0 %v4165
    %6487 = vmatpush.msra.mxu0 %v4157
    %6488 = vmatpush.msra.mxu0 %v4149
    %6489 = vmatpush.msra.mxu0 %v4141
    %6490 = vmatpush.msra.mxu0 %v4133
    %6491 = vmatmul.f32.gmra.mxu0 %v2202
    %v6492 = vpop.f32.mrf.mxu0
    %v6493 = vadd.f32 %v6473, %v6492
    %6494 = vdwg.mxu0
    %6495 = vmatpush.msra.mxu0 %v2334
    %6496 = vmatpush.msra.mxu0 %v2326
    %6497 = vmatpush.msra.mxu0 %v2318
    %6498 = vmatpush.msra.mxu0 %v2310
    %6499 = vmatpush.msra.mxu0 %v2302
    %6500 = vmatpush.msra.mxu0 %v2294
    %6501 = vmatpush.msra.mxu0 %v2286
    %6502 = vmatpush.msra.mxu0 %v2278
    %6503 = vmatpush.msra.mxu0 %v2270
    %6504 = vmatpush.msra.mxu0 %v2262
    %6505 = vmatpush.msra.mxu0 %v2254
    %6506 = vmatpush.msra.mxu0 %v2246
    %6507 = vmatpush.msra.mxu0 %v2238
    %6508 = vmatpush.msra.mxu0 %v2230
    %6509 = vmatpush.msra.mxu0 %v2222
    %6510 = vmatpush.msra.mxu0 %v2214
    %6511 = vmatmul.f32.gmra.mxu0 %v2187
    %v6512 = vpop.f32.mrf.mxu0
    %v6513 = vadd.f32 0.0, %v6512
    %6514 = vdwg.mxu0
    %6515 = vmatpush.msra.mxu0 %v2462
    %6516 = vmatpush.msra.mxu0 %v2454
    %6517 = vmatpush.msra.mxu0 %v2446
    %6518 = vmatpush.msra.mxu0 %v2438
    %6519 = vmatpush.msra.mxu0 %v2430
    %6520 = vmatpush.msra.mxu0 %v2422
    %6521 = vmatpush.msra.mxu0 %v2414
    %6522 = vmatpush.msra.mxu0 %v2406
    %6523 = vmatpush.msra.mxu0 %v2398
    %6524 = vmatpush.msra.mxu0 %v2390
    %6525 = vmatpush.msra.mxu0 %v2382
    %6526 = vmatpush.msra.mxu0 %v2374
    %6527 = vmatpush.msra.mxu0 %v2366
    %6528 = vmatpush.msra.mxu0 %v2358
    %6529 = vmatpush.msra.mxu0 %v2350
    %6530 = vmatpush.msra.mxu0 %v2342
    %6531 = vmatmul.f32.gmra.mxu0 %v2188
    %v6532 = vpop.f32.mrf.mxu0
    %v6533 = vadd.f32 %v6513, %v6532
    %6534 = vdwg.mxu0
    %6535 = vmatpush.msra.mxu0 %v2590
    %6536 = vmatpush.msra.mxu0 %v2582
    %6537 = vmatpush.msra.mxu0 %v2574
    %6538 = vmatpush.msra.mxu0 %v2566
    %6539 = vmatpush.msra.mxu0 %v2558
    %6540 = vmatpush.msra.mxu0 %v2550
    %6541 = vmatpush.msra.mxu0 %v2542
    %6542 = vmatpush.msra.mxu0 %v2534
    %6543 = vmatpush.msra.mxu0 %v2526
    %6544 = vmatpush.msra.mxu0 %v2518
    %6545 = vmatpush.msra.mxu0 %v2510
    %6546 = vmatpush.msra.mxu0 %v2502
    %6547 = vmatpush.msra.mxu0 %v2494
    %6548 = vmatpush.msra.mxu0 %v2486
    %6549 = vmatpush.msra.mxu0 %v2478
    %6550 = vmatpush.msra.mxu0 %v2470
    %6551 = vmatmul.f32.gmra.mxu0 %v2189
    %v6552 = vpop.f32.mrf.mxu0
    %v6553 = vadd.f32 %v6533, %v6552
    %6554 = vdwg.mxu0
    %6555 = vmatpush.msra.mxu0 %v2718
    %6556 = vmatpush.msra.mxu0 %v2710
    %6557 = vmatpush.msra.mxu0 %v2702
    %6558 = vmatpush.msra.mxu0 %v2694
    %6559 = vmatpush.msra.mxu0 %v2686
    %6560 = vmatpush.msra.mxu0 %v2678
    %6561 = vmatpush.msra.mxu0 %v2670
    %6562 = vmatpush.msra.mxu0 %v2662
    %6563 = vmatpush.msra.mxu0 %v2654
    %6564 = vmatpush.msra.mxu0 %v2646
    %6565 = vmatpush.msra.mxu0 %v2638
    %6566 = vmatpush.msra.mxu0 %v2630
    %6567 = vmatpush.msra.mxu0 %v2622
    %6568 = vmatpush.msra.mxu0 %v2614
    %6569 = vmatpush.msra.mxu0 %v2606
    %6570 = vmatpush.msra.mxu0 %v2598
    %6571 = vmatmul.f32.gmra.mxu0 %v2190
    %v6572 = vpop.f32.mrf.mxu0
    %v6573 = vadd.f32 %v6553, %v6572
    %6574 = vdwg.mxu0
    %6575 = vmatpush.msra.mxu0 %v2846
    %6576 = vmatpush.msra.mxu0 %v2838
    %6577 = vmatpush.msra.mxu0 %v2830
    %6578 = vmatpush.msra.mxu0 %v2822
    %6579 = vmatpush.msra.mxu0 %v2814
    %6580 = vmatpush.msra.mxu0 %v2806
    %6581 = vmatpush.msra.mxu0 %v2798
    %6582 = vmatpush.msra.mxu0 %v2790
    %6583 = vmatpush.msra.mxu0 %v2782
    %6584 = vmatpush.msra.mxu0 %v2774
    %6585 = vmatpush.msra.mxu0 %v2766
    %6586 = vmatpush.msra.mxu0 %v2758
    %6587 = vmatpush.msra.mxu0 %v2750
    %6588 = vmatpush.msra.mxu0 %v2742
    %6589 = vmatpush.msra.mxu0 %v2734
    %6590 = vmatpush.msra.mxu0 %v2726
    %6591 = vmatmul.f32.gmra.mxu0 %v2191
    %v6592 = vpop.f32.mrf.mxu0
    %v6593 = vadd.f32 %v6573, %v6592
    %6594 = vdwg.mxu0
    %6595 = vmatpush.msra.mxu0 %v2974
    %6596 = vmatpush.msra.mxu0 %v2966
    %6597 = vmatpush.msra.mxu0 %v2958
    %6598 = vmatpush.msra.mxu0 %v2950
    %6599 = vmatpush.msra.mxu0 %v2942
    %6600 = vmatpush.msra.mxu0 %v2934
    %6601 = vmatpush.msra.mxu0 %v2926
    %6602 = vmatpush.msra.mxu0 %v2918
    %6603 = vmatpush.msra.mxu0 %v2910
    %6604 = vmatpush.msra.mxu0 %v2902
    %6605 = vmatpush.msra.mxu0 %v2894
    %6606 = vmatpush.msra.mxu0 %v2886
    %6607 = vmatpush.msra.mxu0 %v2878
    %6608 = vmatpush.msra.mxu0 %v2870
    %6609 = vmatpush.msra.mxu0 %v2862
    %6610 = vmatpush.msra.mxu0 %v2854
    %6611 = vmatmul.f32.gmra.mxu0 %v2192
    %v6612 = vpop.f32.mrf.mxu0
    %v6613 = vadd.f32 %v6593, %v6612
    %6614 = vdwg.mxu0
    %6615 = vmatpush.msra.mxu0 %v3102
    %6616 = vmatpush.msra.mxu0 %v3094
    %6617 = vmatpush.msra.mxu0 %v3086
    %6618 = vmatpush.msra.mxu0 %v3078
    %6619 = vmatpush.msra.mxu0 %v3070
    %6620 = vmatpush.msra.mxu0 %v3062
    %6621 = vmatpush.msra.mxu0 %v3054
    %6622 = vmatpush.msra.mxu0 %v3046
    %6623 = vmatpush.msra.mxu0 %v3038
    %6624 = vmatpush.msra.mxu0 %v3030
    %6625 = vmatpush.msra.mxu0 %v3022
    %6626 = vmatpush.msra.mxu0 %v3014
    %6627 = vmatpush.msra.mxu0 %v3006
    %6628 = vmatpush.msra.mxu0 %v2998
    %6629 = vmatpush.msra.mxu0 %v2990
    %6630 = vmatpush.msra.mxu0 %v2982
    %6631 = vmatmul.f32.gmra.mxu0 %v2193
    %v6632 = vpop.f32.mrf.mxu0
    %v6633 = vadd.f32 %v6613, %v6632
    %6634 = vdwg.mxu0
    %6635 = vmatpush.msra.mxu0 %v3230
    %6636 = vmatpush.msra.mxu0 %v3222
    %6637 = vmatpush.msra.mxu0 %v3214
    %6638 = vmatpush.msra.mxu0 %v3206
    %6639 = vmatpush.msra.mxu0 %v3198
    %6640 = vmatpush.msra.mxu0 %v3190
    %6641 = vmatpush.msra.mxu0 %v3182
    %6642 = vmatpush.msra.mxu0 %v3174
    %6643 = vmatpush.msra.mxu0 %v3166
    %6644 = vmatpush.msra.mxu0 %v3158
    %6645 = vmatpush.msra.mxu0 %v3150
    %6646 = vmatpush.msra.mxu0 %v3142
    %6647 = vmatpush.msra.mxu0 %v3134
    %6648 = vmatpush.msra.mxu0 %v3126
    %6649 = vmatpush.msra.mxu0 %v3118
    %6650 = vmatpush.msra.mxu0 %v3110
    %6651 = vmatmul.f32.gmra.mxu0 %v2194
    %v6652 = vpop.f32.mrf.mxu0
    %v6653 = vadd.f32 %v6633, %v6652
    %6654 = vdwg.mxu0
    %6655 = vmatpush.msra.mxu0 %v3358
    %6656 = vmatpush.msra.mxu0 %v3350
    %6657 = vmatpush.msra.mxu0 %v3342
    %6658 = vmatpush.msra.mxu0 %v3334
    %6659 = vmatpush.msra.mxu0 %v3326
    %6660 = vmatpush.msra.mxu0 %v3318
    %6661 = vmatpush.msra.mxu0 %v3310
    %6662 = vmatpush.msra.mxu0 %v3302
    %6663 = vmatpush.msra.mxu0 %v3294
    %6664 = vmatpush.msra.mxu0 %v3286
    %6665 = vmatpush.msra.mxu0 %v3278
    %6666 = vmatpush.msra.mxu0 %v3270
    %6667 = vmatpush.msra.mxu0 %v3262
    %6668 = vmatpush.msra.mxu0 %v3254
    %6669 = vmatpush.msra.mxu0 %v3246
    %6670 = vmatpush.msra.mxu0 %v3238
    %6671 = vmatmul.f32.gmra.mxu0 %v2195
    %v6672 = vpop.f32.mrf.mxu0
    %v6673 = vadd.f32 %v6653, %v6672
    %6674 = vdwg.mxu0
    %6675 = vmatpush.msra.mxu0 %v3486
    %6676 = vmatpush.msra.mxu0 %v3478
    %6677 = vmatpush.msra.mxu0 %v3470
    %6678 = vmatpush.msra.mxu0 %v3462
    %6679 = vmatpush.msra.mxu0 %v3454
    %6680 = vmatpush.msra.mxu0 %v3446
    %6681 = vmatpush.msra.mxu0 %v3438
    %6682 = vmatpush.msra.mxu0 %v3430
    %6683 = vmatpush.msra.mxu0 %v3422
    %6684 = vmatpush.msra.mxu0 %v3414
    %6685 = vmatpush.msra.mxu0 %v3406
    %6686 = vmatpush.msra.mxu0 %v3398
    %6687 = vmatpush.msra.mxu0 %v3390
    %6688 = vmatpush.msra.mxu0 %v3382
    %6689 = vmatpush.msra.mxu0 %v3374
    %6690 = vmatpush.msra.mxu0 %v3366
    %6691 = vmatmul.f32.gmra.mxu0 %v2196
    %v6692 = vpop.f32.mrf.mxu0
    %v6693 = vadd.f32 %v6673, %v6692
    %6694 = vdwg.mxu0
    %6695 = vmatpush.msra.mxu0 %v3614
    %6696 = vmatpush.msra.mxu0 %v3606
    %6697 = vmatpush.msra.mxu0 %v3598
    %6698 = vmatpush.msra.mxu0 %v3590
    %6699 = vmatpush.msra.mxu0 %v3582
    %6700 = vmatpush.msra.mxu0 %v3574
    %6701 = vmatpush.msra.mxu0 %v3566
    %6702 = vmatpush.msra.mxu0 %v3558
    %6703 = vmatpush.msra.mxu0 %v3550
    %6704 = vmatpush.msra.mxu0 %v3542
    %6705 = vmatpush.msra.mxu0 %v3534
    %6706 = vmatpush.msra.mxu0 %v3526
    %6707 = vmatpush.msra.mxu0 %v3518
    %6708 = vmatpush.msra.mxu0 %v3510
    %6709 = vmatpush.msra.mxu0 %v3502
    %6710 = vmatpush.msra.mxu0 %v3494
    %6711 = vmatmul.f32.gmra.mxu0 %v2197
    %v6712 = vpop.f32.mrf.mxu0
    %v6713 = vadd.f32 %v6693, %v6712
    %6714 = vdwg.mxu0
    %6715 = vmatpush.msra.mxu0 %v3742
    %6716 = vmatpush.msra.mxu0 %v3734
    %6717 = vmatpush.msra.mxu0 %v3726
    %6718 = vmatpush.msra.mxu0 %v3718
    %6719 = vmatpush.msra.mxu0 %v3710
    %6720 = vmatpush.msra.mxu0 %v3702
    %6721 = vmatpush.msra.mxu0 %v3694
    %6722 = vmatpush.msra.mxu0 %v3686
    %6723 = vmatpush.msra.mxu0 %v3678
    %6724 = vmatpush.msra.mxu0 %v3670
    %6725 = vmatpush.msra.mxu0 %v3662
    %6726 = vmatpush.msra.mxu0 %v3654
    %6727 = vmatpush.msra.mxu0 %v3646
    %6728 = vmatpush.msra.mxu0 %v3638
    %6729 = vmatpush.msra.mxu0 %v3630
    %6730 = vmatpush.msra.mxu0 %v3622
    %6731 = vmatmul.f32.gmra.mxu0 %v2198
    %v6732 = vpop.f32.mrf.mxu0
    %v6733 = vadd.f32 %v6713, %v6732
    %6734 = vdwg.mxu0
    %6735 = vmatpush.msra.mxu0 %v3870
    %6736 = vmatpush.msra.mxu0 %v3862
    %6737 = vmatpush.msra.mxu0 %v3854
    %6738 = vmatpush.msra.mxu0 %v3846
    %6739 = vmatpush.msra.mxu0 %v3838
    %6740 = vmatpush.msra.mxu0 %v3830
    %6741 = vmatpush.msra.mxu0 %v3822
    %6742 = vmatpush.msra.mxu0 %v3814
    %6743 = vmatpush.msra.mxu0 %v3806
    %6744 = vmatpush.msra.mxu0 %v3798
    %6745 = vmatpush.msra.mxu0 %v3790
    %6746 = vmatpush.msra.mxu0 %v3782
    %6747 = vmatpush.msra.mxu0 %v3774
    %6748 = vmatpush.msra.mxu0 %v3766
    %6749 = vmatpush.msra.mxu0 %v3758
    %6750 = vmatpush.msra.mxu0 %v3750
    %6751 = vmatmul.f32.gmra.mxu0 %v2199
    %v6752 = vpop.f32.mrf.mxu0
    %v6753 = vadd.f32 %v6733, %v6752
    %6754 = vdwg.mxu0
    %6755 = vmatpush.msra.mxu0 %v3998
    %6756 = vmatpush.msra.mxu0 %v3990
    %6757 = vmatpush.msra.mxu0 %v3982
    %6758 = vmatpush.msra.mxu0 %v3974
    %6759 = vmatpush.msra.mxu0 %v3966
    %6760 = vmatpush.msra.mxu0 %v3958
    %6761 = vmatpush.msra.mxu0 %v3950
    %6762 = vmatpush.msra.mxu0 %v3942
    %6763 = vmatpush.msra.mxu0 %v3934
    %6764 = vmatpush.msra.mxu0 %v3926
    %6765 = vmatpush.msra.mxu0 %v3918
    %6766 = vmatpush.msra.mxu0 %v3910
    %6767 = vmatpush.msra.mxu0 %v3902
    %6768 = vmatpush.msra.mxu0 %v3894
    %6769 = vmatpush.msra.mxu0 %v3886
    %6770 = vmatpush.msra.mxu0 %v3878
    %6771 = vmatmul.f32.gmra.mxu0 %v2200
    %v6772 = vpop.f32.mrf.mxu0
    %v6773 = vadd.f32 %v6753, %v6772
    %6774 = vdwg.mxu0
    %6775 = vmatpush.msra.mxu0 %v4126
    %6776 = vmatpush.msra.mxu0 %v4118
    %6777 = vmatpush.msra.mxu0 %v4110
    %6778 = vmatpush.msra.mxu0 %v4102
    %6779 = vmatpush.msra.mxu0 %v4094
    %6780 = vmatpush.msra.mxu0 %v4086
    %6781 = vmatpush.msra.mxu0 %v4078
    %6782 = vmatpush.msra.mxu0 %v4070
    %6783 = vmatpush.msra.mxu0 %v4062
    %6784 = vmatpush.msra.mxu0 %v4054
    %6785 = vmatpush.msra.mxu0 %v4046
    %6786 = vmatpush.msra.mxu0 %v4038
    %6787 = vmatpush.msra.mxu0 %v4030
    %6788 = vmatpush.msra.mxu0 %v4022
    %6789 = vmatpush.msra.mxu0 %v4014
    %6790 = vmatpush.msra.mxu0 %v4006
    %6791 = vmatmul.f32.gmra.mxu0 %v2201
    %v6792 = vpop.f32.mrf.mxu0
    %v6793 = vadd.f32 %v6773, %v6792
    %6794 = vdwg.mxu0
    %6795 = vmatpush.msra.mxu0 %v4254
    %6796 = vmatpush.msra.mxu0 %v4246
    %6797 = vmatpush.msra.mxu0 %v4238
    %6798 = vmatpush.msra.mxu0 %v4230
    %6799 = vmatpush.msra.mxu0 %v4222
    %6800 = vmatpush.msra.mxu0 %v4214
    %6801 = vmatpush.msra.mxu0 %v4206
    %6802 = vmatpush.msra.mxu0 %v4198
    %6803 = vmatpush.msra.mxu0 %v4190
    %6804 = vmatpush.msra.mxu0 %v4182
    %6805 = vmatpush.msra.mxu0 %v4174
    %6806 = vmatpush.msra.mxu0 %v4166
    %6807 = vmatpush.msra.mxu0 %v4158
    %6808 = vmatpush.msra.mxu0 %v4150
    %6809 = vmatpush.msra.mxu0 %v4142
    %6810 = vmatpush.msra.mxu0 %v4134
    %6811 = vmatmul.f32.gmra.mxu0 %v2202
    %v6812 = vpop.f32.mrf.mxu0
    %v6813 = vadd.f32 %v6793, %v6812
    %6814 = vdwg.mxu0
    %v6815 = vrot.slane %v4573, 4
    %v6816 = vadd.f32 %v4573, %v6815
    %v6817 = vrot.slane %v6816, 2
    %v6818 = vadd.f32 %v6816, %v6817
    %v6819 = vrot.slane %v6818, 1
    %v6820 = vadd.f32 %v6818, %v6819
    %v6821 = vrot.slane %v4893, 4
    %v6822 = vadd.f32 %v4893, %v6821
    %v6823 = vrot.slane %v6822, 2
    %v6824 = vadd.f32 %v6822, %v6823
    %v6825 = vrot.slane %v6824, 1
    %v6826 = vadd.f32 %v6824, %v6825
    %v6827 = vrot.slane %v5213, 4
    %v6828 = vadd.f32 %v5213, %v6827
    %v6829 = vrot.slane %v6828, 2
    %v6830 = vadd.f32 %v6828, %v6829
    %v6831 = vrot.slane %v6830, 1
    %v6832 = vadd.f32 %v6830, %v6831
    %v6833 = vrot.slane %v5533, 4
    %v6834 = vadd.f32 %v5533, %v6833
    %v6835 = vrot.slane %v6834, 2
    %v6836 = vadd.f32 %v6834, %v6835
    %v6837 = vrot.slane %v6836, 1
    %v6838 = vadd.f32 %v6836, %v6837
    %v6839 = vrot.slane %v5853, 4
    %v6840 = vadd.f32 %v5853, %v6839
    %v6841 = vrot.slane %v6840, 2
    %v6842 = vadd.f32 %v6840, %v6841
    %v6843 = vrot.slane %v6842, 1
    %v6844 = vadd.f32 %v6842, %v6843
    %v6845 = vrot.slane %v6173, 4
    %v6846 = vadd.f32 %v6173, %v6845
    %v6847 = vrot.slane %v6846, 2
    %v6848 = vadd.f32 %v6846, %v6847
    %v6849 = vrot.slane %v6848, 1
    %v6850 = vadd.f32 %v6848, %v6849
    %v6851 = vrot.slane %v6493, 4
    %v6852 = vadd.f32 %v6493, %v6851
    %v6853 = vrot.slane %v6852, 2
    %v6854 = vadd.f32 %v6852, %v6853
    %v6855 = vrot.slane %v6854, 1
    %v6856 = vadd.f32 %v6854, %v6855
    %v6857 = vrot.slane %v6813, 4
    %v6858 = vadd.f32 %v6813, %v6857
    %v6859 = vrot.slane %v6858, 2
    %v6860 = vadd.f32 %v6858, %v6859
    %v6861 = vrot.slane %v6860, 1
    %v6862 = vadd.f32 %v6860, %v6861
    %v6863 = vmul.f32 %v6820, %v1595
    %v6864 = vmul.f32 %v6826, %v1595
    %v6865 = vmul.f32 %v6832, %v1595
    %v6866 = vmul.f32 %v6838, %v1595
    %v6867 = vmul.f32 %v6844, %v1595
    %v6868 = vmul.f32 %v6850, %v1595
    %v6869 = vmul.f32 %v6856, %v1595
    %v6870 = vmul.f32 %v6862, %v1595
    %v6871 = vmul.f32 %v4573, %v4573
    %v6872 = vmul.f32 %v4893, %v4893
    %v6873 = vmul.f32 %v5213, %v5213
    %v6874 = vmul.f32 %v5533, %v5533
    %v6875 = vmul.f32 %v5853, %v5853
    %v6876 = vmul.f32 %v6173, %v6173
    %v6877 = vmul.f32 %v6493, %v6493
    %v6878 = vmul.f32 %v6813, %v6813
    %v6879 = vrot.slane %v6871, 4
    %v6880 = vadd.f32 %v6871, %v6879
    %v6881 = vrot.slane %v6880, 2
    %v6882 = vadd.f32 %v6880, %v6881
    %v6883 = vrot.slane %v6882, 1
    %v6884 = vadd.f32 %v6882, %v6883
    %v6885 = vrot.slane %v6872, 4
    %v6886 = vadd.f32 %v6872, %v6885
    %v6887 = vrot.slane %v6886, 2
    %v6888 = vadd.f32 %v6886, %v6887
    %v6889 = vrot.slane %v6888, 1
    %v6890 = vadd.f32 %v6888, %v6889
    %v6891 = vrot.slane %v6873, 4
    %v6892 = vadd.f32 %v6873, %v6891
    %v6893 = vrot.slane %v6892, 2
    %v6894 = vadd.f32 %v6892, %v6893
    %v6895 = vrot.slane %v6894, 1
    %v6896 = vadd.f32 %v6894, %v6895
    %v6897 = vrot.slane %v6874, 4
    %v6898 = vadd.f32 %v6874, %v6897
    %v6899 = vrot.slane %v6898, 2
    %v6900 = vadd.f32 %v6898, %v6899
    %v6901 = vrot.slane %v6900, 1
    %v6902 = vadd.f32 %v6900, %v6901
    %v6903 = vrot.slane %v6875, 4
    %v6904 = vadd.f32 %v6875, %v6903
    %v6905 = vrot.slane %v6904, 2
    %v6906 = vadd.f32 %v6904, %v6905
    %v6907 = vrot.slane %v6906, 1
    %v6908 = vadd.f32 %v6906, %v6907
    %v6909 = vrot.slane %v6876, 4
    %v6910 = vadd.f32 %v6876, %v6909
    %v6911 = vrot.slane %v6910, 2
    %v6912 = vadd.f32 %v6910, %v6911
    %v6913 = vrot.slane %v6912, 1
    %v6914 = vadd.f32 %v6912, %v6913
    %v6915 = vrot.slane %v6877, 4
    %v6916 = vadd.f32 %v6877, %v6915
    %v6917 = vrot.slane %v6916, 2
    %v6918 = vadd.f32 %v6916, %v6917
    %v6919 = vrot.slane %v6918, 1
    %v6920 = vadd.f32 %v6918, %v6919
    %v6921 = vrot.slane %v6878, 4
    %v6922 = vadd.f32 %v6878, %v6921
    %v6923 = vrot.slane %v6922, 2
    %v6924 = vadd.f32 %v6922, %v6923
    %v6925 = vrot.slane %v6924, 1
    %v6926 = vadd.f32 %v6924, %v6925
    %v6927 = vmul.f32 %v6884, %v1595
    %v6928 = vmul.f32 %v6890, %v1595
    %v6929 = vmul.f32 %v6896, %v1595
    %v6930 = vmul.f32 %v6902, %v1595
    %v6931 = vmul.f32 %v6908, %v1595
    %v6932 = vmul.f32 %v6914, %v1595
    %v6933 = vmul.f32 %v6920, %v1595
    %v6934 = vmul.f32 %v6926, %v1595
    %v6935 = vmul.f32 %v6863, %v6863
    %v6936 = vmul.f32 %v6864, %v6864
    %v6937 = vmul.f32 %v6865, %v6865
    %v6938 = vmul.f32 %v6866, %v6866
    %v6939 = vmul.f32 %v6867, %v6867
    %v6940 = vmul.f32 %v6868, %v6868
    %v6941 = vmul.f32 %v6869, %v6869
    %v6942 = vmul.f32 %v6870, %v6870
    %v6943 = vsub.f32 %v6927, %v6935
    %v6944 = vsub.f32 %v6928, %v6936
    %v6945 = vsub.f32 %v6929, %v6937
    %v6946 = vsub.f32 %v6930, %v6938
    %v6947 = vsub.f32 %v6931, %v6939
    %v6948 = vsub.f32 %v6932, %v6940
    %v6949 = vsub.f32 %v6933, %v6941
    %v6950 = vsub.f32 %v6934, %v6942
    %v6951 = vmax.f32 %v6943, 0.0
    %v6952 = vmax.f32 %v6944, 0.0
    %v6953 = vmax.f32 %v6945, 0.0
    %v6954 = vmax.f32 %v6946, 0.0
    %v6955 = vmax.f32 %v6947, 0.0
    %v6956 = vmax.f32 %v6948, 0.0
    %v6957 = vmax.f32 %v6949, 0.0
    %v6958 = vmax.f32 %v6950, 0.0
    %v6959 = vld [vmem:[#allocation14] sm:$0xff]
    %v6960 = vadd.f32 %v6951, 1e-05
    %v6961 = vadd.f32 %v6952, 1e-05
    %v6962 = vadd.f32 %v6953, 1e-05
    %v6963 = vadd.f32 %v6954, 1e-05
    %v6964 = vadd.f32 %v6955, 1e-05
    %v6965 = vadd.f32 %v6956, 1e-05
    %v6966 = vadd.f32 %v6957, 1e-05
    %v6967 = vadd.f32 %v6958, 1e-05
    %v6968 = vrsqrt.pop %v6960
    %v6969 = vmul.f32 %v6968, %v6960
    %v6970 = vmul.f32 %v6969, %v6968
    %v6971 = vmul.f32 0.5, %v6970
    %v6972 = vsub.f32 1.5, %v6971
    %v6973 = vmul.f32 %v6968, %v6972
    %vm6974 = vweird.f32 %v6960
    %vm6975 = vweird.f32 %v6968
    %vm6976 = vmor %vm6974, %vm6975
    %v6977 = vsel %vm6976, %v6968, %v6973
    %v6978 = vrsqrt.pop %v6961
    %v6979 = vmul.f32 %v6978, %v6961
    %v6980 = vmul.f32 %v6979, %v6978
    %v6981 = vmul.f32 0.5, %v6980
    %v6982 = vsub.f32 1.5, %v6981
    %v6983 = vmul.f32 %v6978, %v6982
    %vm6984 = vweird.f32 %v6961
    %vm6985 = vweird.f32 %v6978
    %vm6986 = vmor %vm6984, %vm6985
    %v6987 = vsel %vm6986, %v6978, %v6983
    %v6988 = vrsqrt.pop %v6962
    %v6989 = vmul.f32 %v6988, %v6962
    %v6990 = vmul.f32 %v6989, %v6988
    %v6991 = vmul.f32 0.5, %v6990
    %v6992 = vsub.f32 1.5, %v6991
    %v6993 = vmul.f32 %v6988, %v6992
    %vm6994 = vweird.f32 %v6962
    %vm6995 = vweird.f32 %v6988
    %vm6996 = vmor %vm6994, %vm6995
    %v6997 = vsel %vm6996, %v6988, %v6993
    %v6998 = vrsqrt.pop %v6963
    %v6999 = vmul.f32 %v6998, %v6963
    %v7000 = vmul.f32 %v6999, %v6998
    %v7001 = vmul.f32 0.5, %v7000
    %v7002 = vsub.f32 1.5, %v7001
    %v7003 = vmul.f32 %v6998, %v7002
    %vm7004 = vweird.f32 %v6963
    %vm7005 = vweird.f32 %v6998
    %vm7006 = vmor %vm7004, %vm7005
    %v7007 = vsel %vm7006, %v6998, %v7003
    %v7008 = vrsqrt.pop %v6964
    %v7009 = vmul.f32 %v7008, %v6964
    %v7010 = vmul.f32 %v7009, %v7008
    %v7011 = vmul.f32 0.5, %v7010
    %v7012 = vsub.f32 1.5, %v7011
    %v7013 = vmul.f32 %v7008, %v7012
    %vm7014 = vweird.f32 %v6964
    %vm7015 = vweird.f32 %v7008
    %vm7016 = vmor %vm7014, %vm7015
    %v7017 = vsel %vm7016, %v7008, %v7013
    %v7018 = vrsqrt.pop %v6965
    %v7019 = vmul.f32 %v7018, %v6965
    %v7020 = vmul.f32 %v7019, %v7018
    %v7021 = vmul.f32 0.5, %v7020
    %v7022 = vsub.f32 1.5, %v7021
    %v7023 = vmul.f32 %v7018, %v7022
    %vm7024 = vweird.f32 %v6965
    %vm7025 = vweird.f32 %v7018
    %vm7026 = vmor %vm7024, %vm7025
    %v7027 = vsel %vm7026, %v7018, %v7023
    %v7028 = vrsqrt.pop %v6966
    %v7029 = vmul.f32 %v7028, %v6966
    %v7030 = vmul.f32 %v7029, %v7028
    %v7031 = vmul.f32 0.5, %v7030
    %v7032 = vsub.f32 1.5, %v7031
    %v7033 = vmul.f32 %v7028, %v7032
    %vm7034 = vweird.f32 %v6966
    %vm7035 = vweird.f32 %v7028
    %vm7036 = vmor %vm7034, %vm7035
    %v7037 = vsel %vm7036, %v7028, %v7033
    %v7038 = vrsqrt.pop %v6967
    %v7039 = vmul.f32 %v7038, %v6967
    %v7040 = vmul.f32 %v7039, %v7038
    %v7041 = vmul.f32 0.5, %v7040
    %v7042 = vsub.f32 1.5, %v7041
    %v7043 = vmul.f32 %v7038, %v7042
    %vm7044 = vweird.f32 %v6967
    %vm7045 = vweird.f32 %v7038
    %vm7046 = vmor %vm7044, %vm7045
    %v7047 = vsel %vm7046, %v7038, %v7043
    %v7056 = vrot.slane %v6987, 7
    %v7057 = vrot.slane %v6997, 6
    %v7058 = vrot.slane %v7007, 5
    %v7059 = vrot.slane %v7017, 4
    %v7060 = vrot.slane %v7027, 3
    %v7061 = vrot.slane %v7037, 2
    %v7062 = vrot.slane %v7047, 1
    %v7063 = vsel %vm1996, %v6977, %v7056
    %v7064 = vsel %vm1998, %v7057, %v7058
    %v7065 = vsel %vm2000, %v7063, %v7064
    %v7066 = vsel %vm2002, %v7059, %v7060
    %v7067 = vsel %vm2004, %v7061, %v7062
    %v7068 = vsel %vm2006, %v7066, %v7067
    %v7069 = vsel %vm2008, %v7065, %v7068
    %v7071 = vmul.f32 %v6959, %v7069
    %v7072 = vld [vmem:[#allocation21] sm:$0xff]
    %v7074 = vperm.slane %v7071, 0
    %v7075 = vperm.slane %v7071, 1
    %v7076 = vperm.slane %v7071, 2
    %v7077 = vperm.slane %v7071, 3
    %v7078 = vperm.slane %v7071, 4
    %v7079 = vperm.slane %v7071, 5
    %v7080 = vperm.slane %v7071, 6
    %v7081 = vperm.slane %v7071, 7
    %v7090 = vmul.f32 %v6863, %v7074
    %v7091 = vmul.f32 %v6864, %v7075
    %v7092 = vmul.f32 %v6865, %v7076
    %v7093 = vmul.f32 %v6866, %v7077
    %v7094 = vmul.f32 %v6867, %v7078
    %v7095 = vmul.f32 %v6868, %v7079
    %v7096 = vmul.f32 %v6869, %v7080
    %v7097 = vmul.f32 %v6870, %v7081
    %v7106 = vrot.slane %v7091, 7
    %v7107 = vrot.slane %v7092, 6
    %v7108 = vrot.slane %v7093, 5
    %v7109 = vrot.slane %v7094, 4
    %v7110 = vrot.slane %v7095, 3
    %v7111 = vrot.slane %v7096, 2
    %v7112 = vrot.slane %v7097, 1
    %v7113 = vsel %vm1996, %v7090, %v7106
    %v7114 = vsel %vm1998, %v7107, %v7108
    %v7115 = vsel %vm2000, %v7113, %v7114
    %v7116 = vsel %vm2002, %v7109, %v7110
    %v7117 = vsel %vm2004, %v7111, %v7112
    %v7118 = vsel %vm2006, %v7116, %v7117
    %v7119 = vsel %vm2008, %v7115, %v7118
    %v7121 = vsub.f32 %v7072, %v7119
    %v7122 = vmul.f32 %v4573, %v7074
    %v7123 = vmul.f32 %v4893, %v7075
    %v7124 = vmul.f32 %v5213, %v7076
    %v7125 = vmul.f32 %v5533, %v7077
    %v7126 = vmul.f32 %v5853, %v7078
    %v7127 = vmul.f32 %v6173, %v7079
    %v7128 = vmul.f32 %v6493, %v7080
    %v7129 = vmul.f32 %v6813, %v7081
    %v7131 = vperm.slane %v7121, 0
    %v7132 = vperm.slane %v7121, 1
    %v7133 = vperm.slane %v7121, 2
    %v7134 = vperm.slane %v7121, 3
    %v7135 = vperm.slane %v7121, 4
    %v7136 = vperm.slane %v7121, 5
    %v7137 = vperm.slane %v7121, 6
    %v7138 = vperm.slane %v7121, 7
    %v7147 = vadd.f32 %v7122, %v7131
    %v7148 = vadd.f32 %v7123, %v7132
    %v7149 = vadd.f32 %v7124, %v7133
    %v7150 = vadd.f32 %v7125, %v7134
    %v7151 = vadd.f32 %v7126, %v7135
    %v7152 = vadd.f32 %v7127, %v7136
    %v7153 = vadd.f32 %v7128, %v7137
    %v7154 = vadd.f32 %v7129, %v7138
    %v7155 = vmax.f32 %v7147, 0.0
    %v7156 = vmax.f32 %v7148, 0.0
    %v7157 = vmax.f32 %v7149, 0.0
    %v7158 = vmax.f32 %v7150, 0.0
    %v7159 = vmax.f32 %v7151, 0.0
    %v7160 = vmax.f32 %v7152, 0.0
    %v7161 = vmax.f32 %v7153, 0.0
    %v7162 = vmax.f32 %v7154, 0.0
    %s7163 = smul.u32 8, 128
    %s7164 = smul.u32 %s7163, 4
    %s7165 = sshll.u32 %s7164, 4
    %7166 = dma.done %s225, %s7165
    %v7167 = vld [vmem:[#allocation4] sm:$0xff]
    %v7168 = vld [vmem:[#allocation4 + $0x8] sm:$0xff]
    %v7169 = vld [vmem:[#allocation4 + $0x10] sm:$0xff]
    %v7170 = vld [vmem:[#allocation4 + $0x18] sm:$0xff]
    %v7171 = vld [vmem:[#allocation4 + $0x20] sm:$0xff]
    %v7172 = vld [vmem:[#allocation4 + $0x28] sm:$0xff]
    %v7173 = vld [vmem:[#allocation4 + $0x30] sm:$0xff]
    %v7174 = vld [vmem:[#allocation4 + $0x38] sm:$0xff]
    %v7175 = vld [vmem:[#allocation4 + $0x40] sm:$0xff]
    %v7176 = vld [vmem:[#allocation4 + $0x48] sm:$0xff]
    %v7177 = vld [vmem:[#allocation4 + $0x50] sm:$0xff]
    %v7178 = vld [vmem:[#allocation4 + $0x58] sm:$0xff]
    %v7179 = vld [vmem:[#allocation4 + $0x60] sm:$0xff]
    %v7180 = vld [vmem:[#allocation4 + $0x68] sm:$0xff]
    %v7181 = vld [vmem:[#allocation4 + $0x70] sm:$0xff]
    %v7182 = vld [vmem:[#allocation4 + $0x78] sm:$0xff]
    %v7183 = vld [vmem:[#allocation4 + $0x80] sm:$0xff]
    %v7184 = vld [vmem:[#allocation4 + $0x88] sm:$0xff]
    %v7185 = vld [vmem:[#allocation4 + $0x90] sm:$0xff]
    %v7186 = vld [vmem:[#allocation4 + $0x98] sm:$0xff]
    %v7187 = vld [vmem:[#allocation4 + $0xa0] sm:$0xff]
    %v7188 = vld [vmem:[#allocation4 + $0xa8] sm:$0xff]
    %v7189 = vld [vmem:[#allocation4 + $0xb0] sm:$0xff]
    %v7190 = vld [vmem:[#allocation4 + $0xb8] sm:$0xff]
    %v7191 = vld [vmem:[#allocation4 + $0xc0] sm:$0xff]
    %v7192 = vld [vmem:[#allocation4 + $0xc8] sm:$0xff]
    %v7193 = vld [vmem:[#allocation4 + $0xd0] sm:$0xff]
    %v7194 = vld [vmem:[#allocation4 + $0xd8] sm:$0xff]
    %v7195 = vld [vmem:[#allocation4 + $0xe0] sm:$0xff]
    %v7196 = vld [vmem:[#allocation4 + $0xe8] sm:$0xff]
    %v7197 = vld [vmem:[#allocation4 + $0xf0] sm:$0xff]
    %v7198 = vld [vmem:[#allocation4 + $0xf8] sm:$0xff]
    %v7199 = vld [vmem:[#allocation4 + $0x100] sm:$0xff]
    %v7200 = vld [vmem:[#allocation4 + $0x108] sm:$0xff]
    %v7201 = vld [vmem:[#allocation4 + $0x110] sm:$0xff]
    %v7202 = vld [vmem:[#allocation4 + $0x118] sm:$0xff]
    %v7203 = vld [vmem:[#allocation4 + $0x120] sm:$0xff]
    %v7204 = vld [vmem:[#allocation4 + $0x128] sm:$0xff]
    %v7205 = vld [vmem:[#allocation4 + $0x130] sm:$0xff]
    %v7206 = vld [vmem:[#allocation4 + $0x138] sm:$0xff]
    %v7207 = vld [vmem:[#allocation4 + $0x140] sm:$0xff]
    %v7208 = vld [vmem:[#allocation4 + $0x148] sm:$0xff]
    %v7209 = vld [vmem:[#allocation4 + $0x150] sm:$0xff]
    %v7210 = vld [vmem:[#allocation4 + $0x158] sm:$0xff]
    %v7211 = vld [vmem:[#allocation4 + $0x160] sm:$0xff]
    %v7212 = vld [vmem:[#allocation4 + $0x168] sm:$0xff]
    %v7213 = vld [vmem:[#allocation4 + $0x170] sm:$0xff]
    %v7214 = vld [vmem:[#allocation4 + $0x178] sm:$0xff]
    %v7215 = vld [vmem:[#allocation4 + $0x180] sm:$0xff]
    %v7216 = vld [vmem:[#allocation4 + $0x188] sm:$0xff]
    %v7217 = vld [vmem:[#allocation4 + $0x190] sm:$0xff]
    %v7218 = vld [vmem:[#allocation4 + $0x198] sm:$0xff]
    %v7219 = vld [vmem:[#allocation4 + $0x1a0] sm:$0xff]
    %v7220 = vld [vmem:[#allocation4 + $0x1a8] sm:$0xff]
    %v7221 = vld [vmem:[#allocation4 + $0x1b0] sm:$0xff]
    %v7222 = vld [vmem:[#allocation4 + $0x1b8] sm:$0xff]
    %v7223 = vld [vmem:[#allocation4 + $0x1c0] sm:$0xff]
    %v7224 = vld [vmem:[#allocation4 + $0x1c8] sm:$0xff]
    %v7225 = vld [vmem:[#allocation4 + $0x1d0] sm:$0xff]
    %v7226 = vld [vmem:[#allocation4 + $0x1d8] sm:$0xff]
    %v7227 = vld [vmem:[#allocation4 + $0x1e0] sm:$0xff]
    %v7228 = vld [vmem:[#allocation4 + $0x1e8] sm:$0xff]
    %v7229 = vld [vmem:[#allocation4 + $0x1f0] sm:$0xff]
    %v7230 = vld [vmem:[#allocation4 + $0x1f8] sm:$0xff]
    %v7231 = vld [vmem:[#allocation4 + $0x200] sm:$0xff]
    %v7232 = vld [vmem:[#allocation4 + $0x208] sm:$0xff]
    %v7233 = vld [vmem:[#allocation4 + $0x210] sm:$0xff]
    %v7234 = vld [vmem:[#allocation4 + $0x218] sm:$0xff]
    %v7235 = vld [vmem:[#allocation4 + $0x220] sm:$0xff]
    %v7236 = vld [vmem:[#allocation4 + $0x228] sm:$0xff]
    %v7237 = vld [vmem:[#allocation4 + $0x230] sm:$0xff]
    %v7238 = vld [vmem:[#allocation4 + $0x238] sm:$0xff]
    %v7239 = vld [vmem:[#allocation4 + $0x240] sm:$0xff]
    %v7240 = vld [vmem:[#allocation4 + $0x248] sm:$0xff]
    %v7241 = vld [vmem:[#allocation4 + $0x250] sm:$0xff]
    %v7242 = vld [vmem:[#allocation4 + $0x258] sm:$0xff]
    %v7243 = vld [vmem:[#allocation4 + $0x260] sm:$0xff]
    %v7244 = vld [vmem:[#allocation4 + $0x268] sm:$0xff]
    %v7245 = vld [vmem:[#allocation4 + $0x270] sm:$0xff]
    %v7246 = vld [vmem:[#allocation4 + $0x278] sm:$0xff]
    %v7247 = vld [vmem:[#allocation4 + $0x280] sm:$0xff]
    %v7248 = vld [vmem:[#allocation4 + $0x288] sm:$0xff]
    %v7249 = vld [vmem:[#allocation4 + $0x290] sm:$0xff]
    %v7250 = vld [vmem:[#allocation4 + $0x298] sm:$0xff]
    %v7251 = vld [vmem:[#allocation4 + $0x2a0] sm:$0xff]
    %v7252 = vld [vmem:[#allocation4 + $0x2a8] sm:$0xff]
    %v7253 = vld [vmem:[#allocation4 + $0x2b0] sm:$0xff]
    %v7254 = vld [vmem:[#allocation4 + $0x2b8] sm:$0xff]
    %v7255 = vld [vmem:[#allocation4 + $0x2c0] sm:$0xff]
    %v7256 = vld [vmem:[#allocation4 + $0x2c8] sm:$0xff]
    %v7257 = vld [vmem:[#allocation4 + $0x2d0] sm:$0xff]
    %v7258 = vld [vmem:[#allocation4 + $0x2d8] sm:$0xff]
    %v7259 = vld [vmem:[#allocation4 + $0x2e0] sm:$0xff]
    %v7260 = vld [vmem:[#allocation4 + $0x2e8] sm:$0xff]
    %v7261 = vld [vmem:[#allocation4 + $0x2f0] sm:$0xff]
    %v7262 = vld [vmem:[#allocation4 + $0x2f8] sm:$0xff]
    %v7263 = vld [vmem:[#allocation4 + $0x300] sm:$0xff]
    %v7264 = vld [vmem:[#allocation4 + $0x308] sm:$0xff]
    %v7265 = vld [vmem:[#allocation4 + $0x310] sm:$0xff]
    %v7266 = vld [vmem:[#allocation4 + $0x318] sm:$0xff]
    %v7267 = vld [vmem:[#allocation4 + $0x320] sm:$0xff]
    %v7268 = vld [vmem:[#allocation4 + $0x328] sm:$0xff]
    %v7269 = vld [vmem:[#allocation4 + $0x330] sm:$0xff]
    %v7270 = vld [vmem:[#allocation4 + $0x338] sm:$0xff]
    %v7271 = vld [vmem:[#allocation4 + $0x340] sm:$0xff]
    %v7272 = vld [vmem:[#allocation4 + $0x348] sm:$0xff]
    %v7273 = vld [vmem:[#allocation4 + $0x350] sm:$0xff]
    %v7274 = vld [vmem:[#allocation4 + $0x358] sm:$0xff]
    %v7275 = vld [vmem:[#allocation4 + $0x360] sm:$0xff]
    %v7276 = vld [vmem:[#allocation4 + $0x368] sm:$0xff]
    %v7277 = vld [vmem:[#allocation4 + $0x370] sm:$0xff]
    %v7278 = vld [vmem:[#allocation4 + $0x378] sm:$0xff]
    %v7279 = vld [vmem:[#allocation4 + $0x380] sm:$0xff]
    %v7280 = vld [vmem:[#allocation4 + $0x388] sm:$0xff]
    %v7281 = vld [vmem:[#allocation4 + $0x390] sm:$0xff]
    %v7282 = vld [vmem:[#allocation4 + $0x398] sm:$0xff]
    %v7283 = vld [vmem:[#allocation4 + $0x3a0] sm:$0xff]
    %v7284 = vld [vmem:[#allocation4 + $0x3a8] sm:$0xff]
    %v7285 = vld [vmem:[#allocation4 + $0x3b0] sm:$0xff]
    %v7286 = vld [vmem:[#allocation4 + $0x3b8] sm:$0xff]
    %v7287 = vld [vmem:[#allocation4 + $0x3c0] sm:$0xff]
    %v7288 = vld [vmem:[#allocation4 + $0x3c8] sm:$0xff]
    %v7289 = vld [vmem:[#allocation4 + $0x3d0] sm:$0xff]
    %v7290 = vld [vmem:[#allocation4 + $0x3d8] sm:$0xff]
    %v7291 = vld [vmem:[#allocation4 + $0x3e0] sm:$0xff]
    %v7292 = vld [vmem:[#allocation4 + $0x3e8] sm:$0xff]
    %v7293 = vld [vmem:[#allocation4 + $0x3f0] sm:$0xff]
    %v7294 = vld [vmem:[#allocation4 + $0x3f8] sm:$0xff]
    %v7295 = vld [vmem:[#allocation4 + $0x400] sm:$0xff]
    %v7296 = vld [vmem:[#allocation4 + $0x408] sm:$0xff]
    %v7297 = vld [vmem:[#allocation4 + $0x410] sm:$0xff]
    %v7298 = vld [vmem:[#allocation4 + $0x418] sm:$0xff]
    %v7299 = vld [vmem:[#allocation4 + $0x420] sm:$0xff]
    %v7300 = vld [vmem:[#allocation4 + $0x428] sm:$0xff]
    %v7301 = vld [vmem:[#allocation4 + $0x430] sm:$0xff]
    %v7302 = vld [vmem:[#allocation4 + $0x438] sm:$0xff]
    %v7303 = vld [vmem:[#allocation4 + $0x440] sm:$0xff]
    %v7304 = vld [vmem:[#allocation4 + $0x448] sm:$0xff]
    %v7305 = vld [vmem:[#allocation4 + $0x450] sm:$0xff]
    %v7306 = vld [vmem:[#allocation4 + $0x458] sm:$0xff]
    %v7307 = vld [vmem:[#allocation4 + $0x460] sm:$0xff]
    %v7308 = vld [vmem:[#allocation4 + $0x468] sm:$0xff]
    %v7309 = vld [vmem:[#allocation4 + $0x470] sm:$0xff]
    %v7310 = vld [vmem:[#allocation4 + $0x478] sm:$0xff]
    %v7311 = vld [vmem:[#allocation4 + $0x480] sm:$0xff]
    %v7312 = vld [vmem:[#allocation4 + $0x488] sm:$0xff]
    %v7313 = vld [vmem:[#allocation4 + $0x490] sm:$0xff]
    %v7314 = vld [vmem:[#allocation4 + $0x498] sm:$0xff]
    %v7315 = vld [vmem:[#allocation4 + $0x4a0] sm:$0xff]
    %v7316 = vld [vmem:[#allocation4 + $0x4a8] sm:$0xff]
    %v7317 = vld [vmem:[#allocation4 + $0x4b0] sm:$0xff]
    %v7318 = vld [vmem:[#allocation4 + $0x4b8] sm:$0xff]
    %v7319 = vld [vmem:[#allocation4 + $0x4c0] sm:$0xff]
    %v7320 = vld [vmem:[#allocation4 + $0x4c8] sm:$0xff]
    %v7321 = vld [vmem:[#allocation4 + $0x4d0] sm:$0xff]
    %v7322 = vld [vmem:[#allocation4 + $0x4d8] sm:$0xff]
    %v7323 = vld [vmem:[#allocation4 + $0x4e0] sm:$0xff]
    %v7324 = vld [vmem:[#allocation4 + $0x4e8] sm:$0xff]
    %v7325 = vld [vmem:[#allocation4 + $0x4f0] sm:$0xff]
    %v7326 = vld [vmem:[#allocation4 + $0x4f8] sm:$0xff]
    %v7327 = vld [vmem:[#allocation4 + $0x500] sm:$0xff]
    %v7328 = vld [vmem:[#allocation4 + $0x508] sm:$0xff]
    %v7329 = vld [vmem:[#allocation4 + $0x510] sm:$0xff]
    %v7330 = vld [vmem:[#allocation4 + $0x518] sm:$0xff]
    %v7331 = vld [vmem:[#allocation4 + $0x520] sm:$0xff]
    %v7332 = vld [vmem:[#allocation4 + $0x528] sm:$0xff]
    %v7333 = vld [vmem:[#allocation4 + $0x530] sm:$0xff]
    %v7334 = vld [vmem:[#allocation4 + $0x538] sm:$0xff]
    %v7335 = vld [vmem:[#allocation4 + $0x540] sm:$0xff]
    %v7336 = vld [vmem:[#allocation4 + $0x548] sm:$0xff]
    %v7337 = vld [vmem:[#allocation4 + $0x550] sm:$0xff]
    %v7338 = vld [vmem:[#allocation4 + $0x558] sm:$0xff]
    %v7339 = vld [vmem:[#allocation4 + $0x560] sm:$0xff]
    %v7340 = vld [vmem:[#allocation4 + $0x568] sm:$0xff]
    %v7341 = vld [vmem:[#allocation4 + $0x570] sm:$0xff]
    %v7342 = vld [vmem:[#allocation4 + $0x578] sm:$0xff]
    %v7343 = vld [vmem:[#allocation4 + $0x580] sm:$0xff]
    %v7344 = vld [vmem:[#allocation4 + $0x588] sm:$0xff]
    %v7345 = vld [vmem:[#allocation4 + $0x590] sm:$0xff]
    %v7346 = vld [vmem:[#allocation4 + $0x598] sm:$0xff]
    %v7347 = vld [vmem:[#allocation4 + $0x5a0] sm:$0xff]
    %v7348 = vld [vmem:[#allocation4 + $0x5a8] sm:$0xff]
    %v7349 = vld [vmem:[#allocation4 + $0x5b0] sm:$0xff]
    %v7350 = vld [vmem:[#allocation4 + $0x5b8] sm:$0xff]
    %v7351 = vld [vmem:[#allocation4 + $0x5c0] sm:$0xff]
    %v7352 = vld [vmem:[#allocation4 + $0x5c8] sm:$0xff]
    %v7353 = vld [vmem:[#allocation4 + $0x5d0] sm:$0xff]
    %v7354 = vld [vmem:[#allocation4 + $0x5d8] sm:$0xff]
    %v7355 = vld [vmem:[#allocation4 + $0x5e0] sm:$0xff]
    %v7356 = vld [vmem:[#allocation4 + $0x5e8] sm:$0xff]
    %v7357 = vld [vmem:[#allocation4 + $0x5f0] sm:$0xff]
    %v7358 = vld [vmem:[#allocation4 + $0x5f8] sm:$0xff]
    %v7359 = vld [vmem:[#allocation4 + $0x600] sm:$0xff]
    %v7360 = vld [vmem:[#allocation4 + $0x608] sm:$0xff]
    %v7361 = vld [vmem:[#allocation4 + $0x610] sm:$0xff]
    %v7362 = vld [vmem:[#allocation4 + $0x618] sm:$0xff]
    %v7363 = vld [vmem:[#allocation4 + $0x620] sm:$0xff]
    %v7364 = vld [vmem:[#allocation4 + $0x628] sm:$0xff]
    %v7365 = vld [vmem:[#allocation4 + $0x630] sm:$0xff]
    %v7366 = vld [vmem:[#allocation4 + $0x638] sm:$0xff]
    %v7367 = vld [vmem:[#allocation4 + $0x640] sm:$0xff]
    %v7368 = vld [vmem:[#allocation4 + $0x648] sm:$0xff]
    %v7369 = vld [vmem:[#allocation4 + $0x650] sm:$0xff]
    %v7370 = vld [vmem:[#allocation4 + $0x658] sm:$0xff]
    %v7371 = vld [vmem:[#allocation4 + $0x660] sm:$0xff]
    %v7372 = vld [vmem:[#allocation4 + $0x668] sm:$0xff]
    %v7373 = vld [vmem:[#allocation4 + $0x670] sm:$0xff]
    %v7374 = vld [vmem:[#allocation4 + $0x678] sm:$0xff]
    %v7375 = vld [vmem:[#allocation4 + $0x680] sm:$0xff]
    %v7376 = vld [vmem:[#allocation4 + $0x688] sm:$0xff]
    %v7377 = vld [vmem:[#allocation4 + $0x690] sm:$0xff]
    %v7378 = vld [vmem:[#allocation4 + $0x698] sm:$0xff]
    %v7379 = vld [vmem:[#allocation4 + $0x6a0] sm:$0xff]
    %v7380 = vld [vmem:[#allocation4 + $0x6a8] sm:$0xff]
    %v7381 = vld [vmem:[#allocation4 + $0x6b0] sm:$0xff]
    %v7382 = vld [vmem:[#allocation4 + $0x6b8] sm:$0xff]
    %v7383 = vld [vmem:[#allocation4 + $0x6c0] sm:$0xff]
    %v7384 = vld [vmem:[#allocation4 + $0x6c8] sm:$0xff]
    %v7385 = vld [vmem:[#allocation4 + $0x6d0] sm:$0xff]
    %v7386 = vld [vmem:[#allocation4 + $0x6d8] sm:$0xff]
    %v7387 = vld [vmem:[#allocation4 + $0x6e0] sm:$0xff]
    %v7388 = vld [vmem:[#allocation4 + $0x6e8] sm:$0xff]
    %v7389 = vld [vmem:[#allocation4 + $0x6f0] sm:$0xff]
    %v7390 = vld [vmem:[#allocation4 + $0x6f8] sm:$0xff]
    %v7391 = vld [vmem:[#allocation4 + $0x700] sm:$0xff]
    %v7392 = vld [vmem:[#allocation4 + $0x708] sm:$0xff]
    %v7393 = vld [vmem:[#allocation4 + $0x710] sm:$0xff]
    %v7394 = vld [vmem:[#allocation4 + $0x718] sm:$0xff]
    %v7395 = vld [vmem:[#allocation4 + $0x720] sm:$0xff]
    %v7396 = vld [vmem:[#allocation4 + $0x728] sm:$0xff]
    %v7397 = vld [vmem:[#allocation4 + $0x730] sm:$0xff]
    %v7398 = vld [vmem:[#allocation4 + $0x738] sm:$0xff]
    %v7399 = vld [vmem:[#allocation4 + $0x740] sm:$0xff]
    %v7400 = vld [vmem:[#allocation4 + $0x748] sm:$0xff]
    %v7401 = vld [vmem:[#allocation4 + $0x750] sm:$0xff]
    %v7402 = vld [vmem:[#allocation4 + $0x758] sm:$0xff]
    %v7403 = vld [vmem:[#allocation4 + $0x760] sm:$0xff]
    %v7404 = vld [vmem:[#allocation4 + $0x768] sm:$0xff]
    %v7405 = vld [vmem:[#allocation4 + $0x770] sm:$0xff]
    %v7406 = vld [vmem:[#allocation4 + $0x778] sm:$0xff]
    %v7407 = vld [vmem:[#allocation4 + $0x780] sm:$0xff]
    %v7408 = vld [vmem:[#allocation4 + $0x788] sm:$0xff]
    %v7409 = vld [vmem:[#allocation4 + $0x790] sm:$0xff]
    %v7410 = vld [vmem:[#allocation4 + $0x798] sm:$0xff]
    %v7411 = vld [vmem:[#allocation4 + $0x7a0] sm:$0xff]
    %v7412 = vld [vmem:[#allocation4 + $0x7a8] sm:$0xff]
    %v7413 = vld [vmem:[#allocation4 + $0x7b0] sm:$0xff]
    %v7414 = vld [vmem:[#allocation4 + $0x7b8] sm:$0xff]
    %v7415 = vld [vmem:[#allocation4 + $0x7c0] sm:$0xff]
    %v7416 = vld [vmem:[#allocation4 + $0x7c8] sm:$0xff]
    %v7417 = vld [vmem:[#allocation4 + $0x7d0] sm:$0xff]
    %v7418 = vld [vmem:[#allocation4 + $0x7d8] sm:$0xff]
    %v7419 = vld [vmem:[#allocation4 + $0x7e0] sm:$0xff]
    %v7420 = vld [vmem:[#allocation4 + $0x7e8] sm:$0xff]
    %v7421 = vld [vmem:[#allocation4 + $0x7f0] sm:$0xff]
    %v7422 = vld [vmem:[#allocation4 + $0x7f8] sm:$0xff]
    %v7423 = vld [vmem:[#allocation4 + $0x800] sm:$0xff]
    %v7424 = vld [vmem:[#allocation4 + $0x808] sm:$0xff]
    %v7425 = vld [vmem:[#allocation4 + $0x810] sm:$0xff]
    %v7426 = vld [vmem:[#allocation4 + $0x818] sm:$0xff]
    %v7427 = vld [vmem:[#allocation4 + $0x820] sm:$0xff]
    %v7428 = vld [vmem:[#allocation4 + $0x828] sm:$0xff]
    %v7429 = vld [vmem:[#allocation4 + $0x830] sm:$0xff]
    %v7430 = vld [vmem:[#allocation4 + $0x838] sm:$0xff]
    %v7431 = vld [vmem:[#allocation4 + $0x840] sm:$0xff]
    %v7432 = vld [vmem:[#allocation4 + $0x848] sm:$0xff]
    %v7433 = vld [vmem:[#allocation4 + $0x850] sm:$0xff]
    %v7434 = vld [vmem:[#allocation4 + $0x858] sm:$0xff]
    %v7435 = vld [vmem:[#allocation4 + $0x860] sm:$0xff]
    %v7436 = vld [vmem:[#allocation4 + $0x868] sm:$0xff]
    %v7437 = vld [vmem:[#allocation4 + $0x870] sm:$0xff]
    %v7438 = vld [vmem:[#allocation4 + $0x878] sm:$0xff]
    %v7439 = vld [vmem:[#allocation4 + $0x880] sm:$0xff]
    %v7440 = vld [vmem:[#allocation4 + $0x888] sm:$0xff]
    %v7441 = vld [vmem:[#allocation4 + $0x890] sm:$0xff]
    %v7442 = vld [vmem:[#allocation4 + $0x898] sm:$0xff]
    %v7443 = vld [vmem:[#allocation4 + $0x8a0] sm:$0xff]
    %v7444 = vld [vmem:[#allocation4 + $0x8a8] sm:$0xff]
    %v7445 = vld [vmem:[#allocation4 + $0x8b0] sm:$0xff]
    %v7446 = vld [vmem:[#allocation4 + $0x8b8] sm:$0xff]
    %v7447 = vld [vmem:[#allocation4 + $0x8c0] sm:$0xff]
    %v7448 = vld [vmem:[#allocation4 + $0x8c8] sm:$0xff]
    %v7449 = vld [vmem:[#allocation4 + $0x8d0] sm:$0xff]
    %v7450 = vld [vmem:[#allocation4 + $0x8d8] sm:$0xff]
    %v7451 = vld [vmem:[#allocation4 + $0x8e0] sm:$0xff]
    %v7452 = vld [vmem:[#allocation4 + $0x8e8] sm:$0xff]
    %v7453 = vld [vmem:[#allocation4 + $0x8f0] sm:$0xff]
    %v7454 = vld [vmem:[#allocation4 + $0x8f8] sm:$0xff]
    %v7455 = vld [vmem:[#allocation4 + $0x900] sm:$0xff]
    %v7456 = vld [vmem:[#allocation4 + $0x908] sm:$0xff]
    %v7457 = vld [vmem:[#allocation4 + $0x910] sm:$0xff]
    %v7458 = vld [vmem:[#allocation4 + $0x918] sm:$0xff]
    %v7459 = vld [vmem:[#allocation4 + $0x920] sm:$0xff]
    %v7460 = vld [vmem:[#allocation4 + $0x928] sm:$0xff]
    %v7461 = vld [vmem:[#allocation4 + $0x930] sm:$0xff]
    %v7462 = vld [vmem:[#allocation4 + $0x938] sm:$0xff]
    %v7463 = vld [vmem:[#allocation4 + $0x940] sm:$0xff]
    %v7464 = vld [vmem:[#allocation4 + $0x948] sm:$0xff]
    %v7465 = vld [vmem:[#allocation4 + $0x950] sm:$0xff]
    %v7466 = vld [vmem:[#allocation4 + $0x958] sm:$0xff]
    %v7467 = vld [vmem:[#allocation4 + $0x960] sm:$0xff]
    %v7468 = vld [vmem:[#allocation4 + $0x968] sm:$0xff]
    %v7469 = vld [vmem:[#allocation4 + $0x970] sm:$0xff]
    %v7470 = vld [vmem:[#allocation4 + $0x978] sm:$0xff]
    %v7471 = vld [vmem:[#allocation4 + $0x980] sm:$0xff]
    %v7472 = vld [vmem:[#allocation4 + $0x988] sm:$0xff]
    %v7473 = vld [vmem:[#allocation4 + $0x990] sm:$0xff]
    %v7474 = vld [vmem:[#allocation4 + $0x998] sm:$0xff]
    %v7475 = vld [vmem:[#allocation4 + $0x9a0] sm:$0xff]
    %v7476 = vld [vmem:[#allocation4 + $0x9a8] sm:$0xff]
    %v7477 = vld [vmem:[#allocation4 + $0x9b0] sm:$0xff]
    %v7478 = vld [vmem:[#allocation4 + $0x9b8] sm:$0xff]
    %v7479 = vld [vmem:[#allocation4 + $0x9c0] sm:$0xff]
    %v7480 = vld [vmem:[#allocation4 + $0x9c8] sm:$0xff]
    %v7481 = vld [vmem:[#allocation4 + $0x9d0] sm:$0xff]
    %v7482 = vld [vmem:[#allocation4 + $0x9d8] sm:$0xff]
    %v7483 = vld [vmem:[#allocation4 + $0x9e0] sm:$0xff]
    %v7484 = vld [vmem:[#allocation4 + $0x9e8] sm:$0xff]
    %v7485 = vld [vmem:[#allocation4 + $0x9f0] sm:$0xff]
    %v7486 = vld [vmem:[#allocation4 + $0x9f8] sm:$0xff]
    %v7487 = vld [vmem:[#allocation4 + $0xa00] sm:$0xff]
    %v7488 = vld [vmem:[#allocation4 + $0xa08] sm:$0xff]
    %v7489 = vld [vmem:[#allocation4 + $0xa10] sm:$0xff]
    %v7490 = vld [vmem:[#allocation4 + $0xa18] sm:$0xff]
    %v7491 = vld [vmem:[#allocation4 + $0xa20] sm:$0xff]
    %v7492 = vld [vmem:[#allocation4 + $0xa28] sm:$0xff]
    %v7493 = vld [vmem:[#allocation4 + $0xa30] sm:$0xff]
    %v7494 = vld [vmem:[#allocation4 + $0xa38] sm:$0xff]
    %v7495 = vld [vmem:[#allocation4 + $0xa40] sm:$0xff]
    %v7496 = vld [vmem:[#allocation4 + $0xa48] sm:$0xff]
    %v7497 = vld [vmem:[#allocation4 + $0xa50] sm:$0xff]
    %v7498 = vld [vmem:[#allocation4 + $0xa58] sm:$0xff]
    %v7499 = vld [vmem:[#allocation4 + $0xa60] sm:$0xff]
    %v7500 = vld [vmem:[#allocation4 + $0xa68] sm:$0xff]
    %v7501 = vld [vmem:[#allocation4 + $0xa70] sm:$0xff]
    %v7502 = vld [vmem:[#allocation4 + $0xa78] sm:$0xff]
    %v7503 = vld [vmem:[#allocation4 + $0xa80] sm:$0xff]
    %v7504 = vld [vmem:[#allocation4 + $0xa88] sm:$0xff]
    %v7505 = vld [vmem:[#allocation4 + $0xa90] sm:$0xff]
    %v7506 = vld [vmem:[#allocation4 + $0xa98] sm:$0xff]
    %v7507 = vld [vmem:[#allocation4 + $0xaa0] sm:$0xff]
    %v7508 = vld [vmem:[#allocation4 + $0xaa8] sm:$0xff]
    %v7509 = vld [vmem:[#allocation4 + $0xab0] sm:$0xff]
    %v7510 = vld [vmem:[#allocation4 + $0xab8] sm:$0xff]
    %v7511 = vld [vmem:[#allocation4 + $0xac0] sm:$0xff]
    %v7512 = vld [vmem:[#allocation4 + $0xac8] sm:$0xff]
    %v7513 = vld [vmem:[#allocation4 + $0xad0] sm:$0xff]
    %v7514 = vld [vmem:[#allocation4 + $0xad8] sm:$0xff]
    %v7515 = vld [vmem:[#allocation4 + $0xae0] sm:$0xff]
    %v7516 = vld [vmem:[#allocation4 + $0xae8] sm:$0xff]
    %v7517 = vld [vmem:[#allocation4 + $0xaf0] sm:$0xff]
    %v7518 = vld [vmem:[#allocation4 + $0xaf8] sm:$0xff]
    %v7519 = vld [vmem:[#allocation4 + $0xb00] sm:$0xff]
    %v7520 = vld [vmem:[#allocation4 + $0xb08] sm:$0xff]
    %v7521 = vld [vmem:[#allocation4 + $0xb10] sm:$0xff]
    %v7522 = vld [vmem:[#allocation4 + $0xb18] sm:$0xff]
    %v7523 = vld [vmem:[#allocation4 + $0xb20] sm:$0xff]
    %v7524 = vld [vmem:[#allocation4 + $0xb28] sm:$0xff]
    %v7525 = vld [vmem:[#allocation4 + $0xb30] sm:$0xff]
    %v7526 = vld [vmem:[#allocation4 + $0xb38] sm:$0xff]
    %v7527 = vld [vmem:[#allocation4 + $0xb40] sm:$0xff]
    %v7528 = vld [vmem:[#allocation4 + $0xb48] sm:$0xff]
    %v7529 = vld [vmem:[#allocation4 + $0xb50] sm:$0xff]
    %v7530 = vld [vmem:[#allocation4 + $0xb58] sm:$0xff]
    %v7531 = vld [vmem:[#allocation4 + $0xb60] sm:$0xff]
    %v7532 = vld [vmem:[#allocation4 + $0xb68] sm:$0xff]
    %v7533 = vld [vmem:[#allocation4 + $0xb70] sm:$0xff]
    %v7534 = vld [vmem:[#allocation4 + $0xb78] sm:$0xff]
    %v7535 = vld [vmem:[#allocation4 + $0xb80] sm:$0xff]
    %v7536 = vld [vmem:[#allocation4 + $0xb88] sm:$0xff]
    %v7537 = vld [vmem:[#allocation4 + $0xb90] sm:$0xff]
    %v7538 = vld [vmem:[#allocation4 + $0xb98] sm:$0xff]
    %v7539 = vld [vmem:[#allocation4 + $0xba0] sm:$0xff]
    %v7540 = vld [vmem:[#allocation4 + $0xba8] sm:$0xff]
    %v7541 = vld [vmem:[#allocation4 + $0xbb0] sm:$0xff]
    %v7542 = vld [vmem:[#allocation4 + $0xbb8] sm:$0xff]
    %v7543 = vld [vmem:[#allocation4 + $0xbc0] sm:$0xff]
    %v7544 = vld [vmem:[#allocation4 + $0xbc8] sm:$0xff]
    %v7545 = vld [vmem:[#allocation4 + $0xbd0] sm:$0xff]
    %v7546 = vld [vmem:[#allocation4 + $0xbd8] sm:$0xff]
    %v7547 = vld [vmem:[#allocation4 + $0xbe0] sm:$0xff]
    %v7548 = vld [vmem:[#allocation4 + $0xbe8] sm:$0xff]
    %v7549 = vld [vmem:[#allocation4 + $0xbf0] sm:$0xff]
    %v7550 = vld [vmem:[#allocation4 + $0xbf8] sm:$0xff]
    %v7551 = vld [vmem:[#allocation4 + $0xc00] sm:$0xff]
    %v7552 = vld [vmem:[#allocation4 + $0xc08] sm:$0xff]
    %v7553 = vld [vmem:[#allocation4 + $0xc10] sm:$0xff]
    %v7554 = vld [vmem:[#allocation4 + $0xc18] sm:$0xff]
    %v7555 = vld [vmem:[#allocation4 + $0xc20] sm:$0xff]
    %v7556 = vld [vmem:[#allocation4 + $0xc28] sm:$0xff]
    %v7557 = vld [vmem:[#allocation4 + $0xc30] sm:$0xff]
    %v7558 = vld [vmem:[#allocation4 + $0xc38] sm:$0xff]
    %v7559 = vld [vmem:[#allocation4 + $0xc40] sm:$0xff]
    %v7560 = vld [vmem:[#allocation4 + $0xc48] sm:$0xff]
    %v7561 = vld [vmem:[#allocation4 + $0xc50] sm:$0xff]
    %v7562 = vld [vmem:[#allocation4 + $0xc58] sm:$0xff]
    %v7563 = vld [vmem:[#allocation4 + $0xc60] sm:$0xff]
    %v7564 = vld [vmem:[#allocation4 + $0xc68] sm:$0xff]
    %v7565 = vld [vmem:[#allocation4 + $0xc70] sm:$0xff]
    %v7566 = vld [vmem:[#allocation4 + $0xc78] sm:$0xff]
    %v7567 = vld [vmem:[#allocation4 + $0xc80] sm:$0xff]
    %v7568 = vld [vmem:[#allocation4 + $0xc88] sm:$0xff]
    %v7569 = vld [vmem:[#allocation4 + $0xc90] sm:$0xff]
    %v7570 = vld [vmem:[#allocation4 + $0xc98] sm:$0xff]
    %v7571 = vld [vmem:[#allocation4 + $0xca0] sm:$0xff]
    %v7572 = vld [vmem:[#allocation4 + $0xca8] sm:$0xff]
    %v7573 = vld [vmem:[#allocation4 + $0xcb0] sm:$0xff]
    %v7574 = vld [vmem:[#allocation4 + $0xcb8] sm:$0xff]
    %v7575 = vld [vmem:[#allocation4 + $0xcc0] sm:$0xff]
    %v7576 = vld [vmem:[#allocation4 + $0xcc8] sm:$0xff]
    %v7577 = vld [vmem:[#allocation4 + $0xcd0] sm:$0xff]
    %v7578 = vld [vmem:[#allocation4 + $0xcd8] sm:$0xff]
    %v7579 = vld [vmem:[#allocation4 + $0xce0] sm:$0xff]
    %v7580 = vld [vmem:[#allocation4 + $0xce8] sm:$0xff]
    %v7581 = vld [vmem:[#allocation4 + $0xcf0] sm:$0xff]
    %v7582 = vld [vmem:[#allocation4 + $0xcf8] sm:$0xff]
    %v7583 = vld [vmem:[#allocation4 + $0xd00] sm:$0xff]
    %v7584 = vld [vmem:[#allocation4 + $0xd08] sm:$0xff]
    %v7585 = vld [vmem:[#allocation4 + $0xd10] sm:$0xff]
    %v7586 = vld [vmem:[#allocation4 + $0xd18] sm:$0xff]
    %v7587 = vld [vmem:[#allocation4 + $0xd20] sm:$0xff]
    %v7588 = vld [vmem:[#allocation4 + $0xd28] sm:$0xff]
    %v7589 = vld [vmem:[#allocation4 + $0xd30] sm:$0xff]
    %v7590 = vld [vmem:[#allocation4 + $0xd38] sm:$0xff]
    %v7591 = vld [vmem:[#allocation4 + $0xd40] sm:$0xff]
    %v7592 = vld [vmem:[#allocation4 + $0xd48] sm:$0xff]
    %v7593 = vld [vmem:[#allocation4 + $0xd50] sm:$0xff]
    %v7594 = vld [vmem:[#allocation4 + $0xd58] sm:$0xff]
    %v7595 = vld [vmem:[#allocation4 + $0xd60] sm:$0xff]
    %v7596 = vld [vmem:[#allocation4 + $0xd68] sm:$0xff]
    %v7597 = vld [vmem:[#allocation4 + $0xd70] sm:$0xff]
    %v7598 = vld [vmem:[#allocation4 + $0xd78] sm:$0xff]
    %v7599 = vld [vmem:[#allocation4 + $0xd80] sm:$0xff]
    %v7600 = vld [vmem:[#allocation4 + $0xd88] sm:$0xff]
    %v7601 = vld [vmem:[#allocation4 + $0xd90] sm:$0xff]
    %v7602 = vld [vmem:[#allocation4 + $0xd98] sm:$0xff]
    %v7603 = vld [vmem:[#allocation4 + $0xda0] sm:$0xff]
    %v7604 = vld [vmem:[#allocation4 + $0xda8] sm:$0xff]
    %v7605 = vld [vmem:[#allocation4 + $0xdb0] sm:$0xff]
    %v7606 = vld [vmem:[#allocation4 + $0xdb8] sm:$0xff]
    %v7607 = vld [vmem:[#allocation4 + $0xdc0] sm:$0xff]
    %v7608 = vld [vmem:[#allocation4 + $0xdc8] sm:$0xff]
    %v7609 = vld [vmem:[#allocation4 + $0xdd0] sm:$0xff]
    %v7610 = vld [vmem:[#allocation4 + $0xdd8] sm:$0xff]
    %v7611 = vld [vmem:[#allocation4 + $0xde0] sm:$0xff]
    %v7612 = vld [vmem:[#allocation4 + $0xde8] sm:$0xff]
    %v7613 = vld [vmem:[#allocation4 + $0xdf0] sm:$0xff]
    %v7614 = vld [vmem:[#allocation4 + $0xdf8] sm:$0xff]
    %v7615 = vld [vmem:[#allocation4 + $0xe00] sm:$0xff]
    %v7616 = vld [vmem:[#allocation4 + $0xe08] sm:$0xff]
    %v7617 = vld [vmem:[#allocation4 + $0xe10] sm:$0xff]
    %v7618 = vld [vmem:[#allocation4 + $0xe18] sm:$0xff]
    %v7619 = vld [vmem:[#allocation4 + $0xe20] sm:$0xff]
    %v7620 = vld [vmem:[#allocation4 + $0xe28] sm:$0xff]
    %v7621 = vld [vmem:[#allocation4 + $0xe30] sm:$0xff]
    %v7622 = vld [vmem:[#allocation4 + $0xe38] sm:$0xff]
    %v7623 = vld [vmem:[#allocation4 + $0xe40] sm:$0xff]
    %v7624 = vld [vmem:[#allocation4 + $0xe48] sm:$0xff]
    %v7625 = vld [vmem:[#allocation4 + $0xe50] sm:$0xff]
    %v7626 = vld [vmem:[#allocation4 + $0xe58] sm:$0xff]
    %v7627 = vld [vmem:[#allocation4 + $0xe60] sm:$0xff]
    %v7628 = vld [vmem:[#allocation4 + $0xe68] sm:$0xff]
    %v7629 = vld [vmem:[#allocation4 + $0xe70] sm:$0xff]
    %v7630 = vld [vmem:[#allocation4 + $0xe78] sm:$0xff]
    %v7631 = vld [vmem:[#allocation4 + $0xe80] sm:$0xff]
    %v7632 = vld [vmem:[#allocation4 + $0xe88] sm:$0xff]
    %v7633 = vld [vmem:[#allocation4 + $0xe90] sm:$0xff]
    %v7634 = vld [vmem:[#allocation4 + $0xe98] sm:$0xff]
    %v7635 = vld [vmem:[#allocation4 + $0xea0] sm:$0xff]
    %v7636 = vld [vmem:[#allocation4 + $0xea8] sm:$0xff]
    %v7637 = vld [vmem:[#allocation4 + $0xeb0] sm:$0xff]
    %v7638 = vld [vmem:[#allocation4 + $0xeb8] sm:$0xff]
    %v7639 = vld [vmem:[#allocation4 + $0xec0] sm:$0xff]
    %v7640 = vld [vmem:[#allocation4 + $0xec8] sm:$0xff]
    %v7641 = vld [vmem:[#allocation4 + $0xed0] sm:$0xff]
    %v7642 = vld [vmem:[#allocation4 + $0xed8] sm:$0xff]
    %v7643 = vld [vmem:[#allocation4 + $0xee0] sm:$0xff]
    %v7644 = vld [vmem:[#allocation4 + $0xee8] sm:$0xff]
    %v7645 = vld [vmem:[#allocation4 + $0xef0] sm:$0xff]
    %v7646 = vld [vmem:[#allocation4 + $0xef8] sm:$0xff]
    %v7647 = vld [vmem:[#allocation4 + $0xf00] sm:$0xff]
    %v7648 = vld [vmem:[#allocation4 + $0xf08] sm:$0xff]
    %v7649 = vld [vmem:[#allocation4 + $0xf10] sm:$0xff]
    %v7650 = vld [vmem:[#allocation4 + $0xf18] sm:$0xff]
    %v7651 = vld [vmem:[#allocation4 + $0xf20] sm:$0xff]
    %v7652 = vld [vmem:[#allocation4 + $0xf28] sm:$0xff]
    %v7653 = vld [vmem:[#allocation4 + $0xf30] sm:$0xff]
    %v7654 = vld [vmem:[#allocation4 + $0xf38] sm:$0xff]
    %v7655 = vld [vmem:[#allocation4 + $0xf40] sm:$0xff]
    %v7656 = vld [vmem:[#allocation4 + $0xf48] sm:$0xff]
    %v7657 = vld [vmem:[#allocation4 + $0xf50] sm:$0xff]
    %v7658 = vld [vmem:[#allocation4 + $0xf58] sm:$0xff]
    %v7659 = vld [vmem:[#allocation4 + $0xf60] sm:$0xff]
    %v7660 = vld [vmem:[#allocation4 + $0xf68] sm:$0xff]
    %v7661 = vld [vmem:[#allocation4 + $0xf70] sm:$0xff]
    %v7662 = vld [vmem:[#allocation4 + $0xf78] sm:$0xff]
    %v7663 = vld [vmem:[#allocation4 + $0xf80] sm:$0xff]
    %v7664 = vld [vmem:[#allocation4 + $0xf88] sm:$0xff]
    %v7665 = vld [vmem:[#allocation4 + $0xf90] sm:$0xff]
    %v7666 = vld [vmem:[#allocation4 + $0xf98] sm:$0xff]
    %v7667 = vld [vmem:[#allocation4 + $0xfa0] sm:$0xff]
    %v7668 = vld [vmem:[#allocation4 + $0xfa8] sm:$0xff]
    %v7669 = vld [vmem:[#allocation4 + $0xfb0] sm:$0xff]
    %v7670 = vld [vmem:[#allocation4 + $0xfb8] sm:$0xff]
    %v7671 = vld [vmem:[#allocation4 + $0xfc0] sm:$0xff]
    %v7672 = vld [vmem:[#allocation4 + $0xfc8] sm:$0xff]
    %v7673 = vld [vmem:[#allocation4 + $0xfd0] sm:$0xff]
    %v7674 = vld [vmem:[#allocation4 + $0xfd8] sm:$0xff]
    %v7675 = vld [vmem:[#allocation4 + $0xfe0] sm:$0xff]
    %v7676 = vld [vmem:[#allocation4 + $0xfe8] sm:$0xff]
    %v7677 = vld [vmem:[#allocation4 + $0xff0] sm:$0xff]
    %v7678 = vld [vmem:[#allocation4 + $0xff8] sm:$0xff]
    %7679 = vmatpush.msra.mxu0 %v7227
    %7680 = vmatpush.msra.mxu0 %v7223
    %7681 = vmatpush.msra.mxu0 %v7219
    %7682 = vmatpush.msra.mxu0 %v7215
    %7683 = vmatpush.msra.mxu0 %v7211
    %7684 = vmatpush.msra.mxu0 %v7207
    %7685 = vmatpush.msra.mxu0 %v7203
    %7686 = vmatpush.msra.mxu0 %v7199
    %7687 = vmatpush.msra.mxu0 %v7195
    %7688 = vmatpush.msra.mxu0 %v7191
    %7689 = vmatpush.msra.mxu0 %v7187
    %7690 = vmatpush.msra.mxu0 %v7183
    %7691 = vmatpush.msra.mxu0 %v7179
    %7692 = vmatpush.msra.mxu0 %v7175
    %7693 = vmatpush.msra.mxu0 %v7171
    %7694 = vmatpush.msra.mxu0 %v7167
    %7695 = vmatmul.f32.gmra.mxu0 %v7155
    %v7696 = vpop.f32.mrf.mxu0
    %v7697 = vadd.f32 0.0, %v7696
    %7698 = vdwg.mxu0
    %7699 = vmatpush.msra.mxu0 %v7291
    %7700 = vmatpush.msra.mxu0 %v7287
    %7701 = vmatpush.msra.mxu0 %v7283
    %7702 = vmatpush.msra.mxu0 %v7279
    %7703 = vmatpush.msra.mxu0 %v7275
    %7704 = vmatpush.msra.mxu0 %v7271
    %7705 = vmatpush.msra.mxu0 %v7267
    %7706 = vmatpush.msra.mxu0 %v7263
    %7707 = vmatpush.msra.mxu0 %v7259
    %7708 = vmatpush.msra.mxu0 %v7255
    %7709 = vmatpush.msra.mxu0 %v7251
    %7710 = vmatpush.msra.mxu0 %v7247
    %7711 = vmatpush.msra.mxu0 %v7243
    %7712 = vmatpush.msra.mxu0 %v7239
    %7713 = vmatpush.msra.mxu0 %v7235
    %7714 = vmatpush.msra.mxu0 %v7231
    %7715 = vmatmul.f32.gmra.mxu0 %v7156
    %v7716 = vpop.f32.mrf.mxu0
    %v7717 = vadd.f32 %v7697, %v7716
    %7718 = vdwg.mxu0
    %7719 = vmatpush.msra.mxu0 %v7355
    %7720 = vmatpush.msra.mxu0 %v7351
    %7721 = vmatpush.msra.mxu0 %v7347
    %7722 = vmatpush.msra.mxu0 %v7343
    %7723 = vmatpush.msra.mxu0 %v7339
    %7724 = vmatpush.msra.mxu0 %v7335
    %7725 = vmatpush.msra.mxu0 %v7331
    %7726 = vmatpush.msra.mxu0 %v7327
    %7727 = vmatpush.msra.mxu0 %v7323
    %7728 = vmatpush.msra.mxu0 %v7319
    %7729 = vmatpush.msra.mxu0 %v7315
    %7730 = vmatpush.msra.mxu0 %v7311
    %7731 = vmatpush.msra.mxu0 %v7307
    %7732 = vmatpush.msra.mxu0 %v7303
    %7733 = vmatpush.msra.mxu0 %v7299
    %7734 = vmatpush.msra.mxu0 %v7295
    %7735 = vmatmul.f32.gmra.mxu0 %v7157
    %v7736 = vpop.f32.mrf.mxu0
    %v7737 = vadd.f32 %v7717, %v7736
    %7738 = vdwg.mxu0
    %7739 = vmatpush.msra.mxu0 %v7419
    %7740 = vmatpush.msra.mxu0 %v7415
    %7741 = vmatpush.msra.mxu0 %v7411
    %7742 = vmatpush.msra.mxu0 %v7407
    %7743 = vmatpush.msra.mxu0 %v7403
    %7744 = vmatpush.msra.mxu0 %v7399
    %7745 = vmatpush.msra.mxu0 %v7395
    %7746 = vmatpush.msra.mxu0 %v7391
    %7747 = vmatpush.msra.mxu0 %v7387
    %7748 = vmatpush.msra.mxu0 %v7383
    %7749 = vmatpush.msra.mxu0 %v7379
    %7750 = vmatpush.msra.mxu0 %v7375
    %7751 = vmatpush.msra.mxu0 %v7371
    %7752 = vmatpush.msra.mxu0 %v7367
    %7753 = vmatpush.msra.mxu0 %v7363
    %7754 = vmatpush.msra.mxu0 %v7359
    %7755 = vmatmul.f32.gmra.mxu0 %v7158
    %v7756 = vpop.f32.mrf.mxu0
    %v7757 = vadd.f32 %v7737, %v7756
    %7758 = vdwg.mxu0
    %7759 = vmatpush.msra.mxu0 %v7483
    %7760 = vmatpush.msra.mxu0 %v7479
    %7761 = vmatpush.msra.mxu0 %v7475
    %7762 = vmatpush.msra.mxu0 %v7471
    %7763 = vmatpush.msra.mxu0 %v7467
    %7764 = vmatpush.msra.mxu0 %v7463
    %7765 = vmatpush.msra.mxu0 %v7459
    %7766 = vmatpush.msra.mxu0 %v7455
    %7767 = vmatpush.msra.mxu0 %v7451
    %7768 = vmatpush.msra.mxu0 %v7447
    %7769 = vmatpush.msra.mxu0 %v7443
    %7770 = vmatpush.msra.mxu0 %v7439
    %7771 = vmatpush.msra.mxu0 %v7435
    %7772 = vmatpush.msra.mxu0 %v7431
    %7773 = vmatpush.msra.mxu0 %v7427
    %7774 = vmatpush.msra.mxu0 %v7423
    %7775 = vmatmul.f32.gmra.mxu0 %v7159
    %v7776 = vpop.f32.mrf.mxu0
    %v7777 = vadd.f32 %v7757, %v7776
    %7778 = vdwg.mxu0
    %7779 = vmatpush.msra.mxu0 %v7547
    %7780 = vmatpush.msra.mxu0 %v7543
    %7781 = vmatpush.msra.mxu0 %v7539
    %7782 = vmatpush.msra.mxu0 %v7535
    %7783 = vmatpush.msra.mxu0 %v7531
    %7784 = vmatpush.msra.mxu0 %v7527
    %7785 = vmatpush.msra.mxu0 %v7523
    %7786 = vmatpush.msra.mxu0 %v7519
    %7787 = vmatpush.msra.mxu0 %v7515
    %7788 = vmatpush.msra.mxu0 %v7511
    %7789 = vmatpush.msra.mxu0 %v7507
    %7790 = vmatpush.msra.mxu0 %v7503
    %7791 = vmatpush.msra.mxu0 %v7499
    %7792 = vmatpush.msra.mxu0 %v7495
    %7793 = vmatpush.msra.mxu0 %v7491
    %7794 = vmatpush.msra.mxu0 %v7487
    %7795 = vmatmul.f32.gmra.mxu0 %v7160
    %v7796 = vpop.f32.mrf.mxu0
    %v7797 = vadd.f32 %v7777, %v7796
    %7798 = vdwg.mxu0
    %7799 = vmatpush.msra.mxu0 %v7611
    %7800 = vmatpush.msra.mxu0 %v7607
    %7801 = vmatpush.msra.mxu0 %v7603
    %7802 = vmatpush.msra.mxu0 %v7599
    %7803 = vmatpush.msra.mxu0 %v7595
    %7804 = vmatpush.msra.mxu0 %v7591
    %7805 = vmatpush.msra.mxu0 %v7587
    %7806 = vmatpush.msra.mxu0 %v7583
    %7807 = vmatpush.msra.mxu0 %v7579
    %7808 = vmatpush.msra.mxu0 %v7575
    %7809 = vmatpush.msra.mxu0 %v7571
    %7810 = vmatpush.msra.mxu0 %v7567
    %7811 = vmatpush.msra.mxu0 %v7563
    %7812 = vmatpush.msra.mxu0 %v7559
    %7813 = vmatpush.msra.mxu0 %v7555
    %7814 = vmatpush.msra.mxu0 %v7551
    %7815 = vmatmul.f32.gmra.mxu0 %v7161
    %v7816 = vpop.f32.mrf.mxu0
    %v7817 = vadd.f32 %v7797, %v7816
    %7818 = vdwg.mxu0
    %7819 = vmatpush.msra.mxu0 %v7675
    %7820 = vmatpush.msra.mxu0 %v7671
    %7821 = vmatpush.msra.mxu0 %v7667
    %7822 = vmatpush.msra.mxu0 %v7663
    %7823 = vmatpush.msra.mxu0 %v7659
    %7824 = vmatpush.msra.mxu0 %v7655
    %7825 = vmatpush.msra.mxu0 %v7651
    %7826 = vmatpush.msra.mxu0 %v7647
    %7827 = vmatpush.msra.mxu0 %v7643
    %7828 = vmatpush.msra.mxu0 %v7639
    %7829 = vmatpush.msra.mxu0 %v7635
    %7830 = vmatpush.msra.mxu0 %v7631
    %7831 = vmatpush.msra.mxu0 %v7627
    %7832 = vmatpush.msra.mxu0 %v7623
    %7833 = vmatpush.msra.mxu0 %v7619
    %7834 = vmatpush.msra.mxu0 %v7615
    %7835 = vmatmul.f32.gmra.mxu0 %v7162
    %v7836 = vpop.f32.mrf.mxu0
    %v7837 = vadd.f32 %v7817, %v7836
    %7838 = vdwg.mxu0
    %7839 = vmatpush.msra.mxu0 %v7228
    %7840 = vmatpush.msra.mxu0 %v7224
    %7841 = vmatpush.msra.mxu0 %v7220
    %7842 = vmatpush.msra.mxu0 %v7216
    %7843 = vmatpush.msra.mxu0 %v7212
    %7844 = vmatpush.msra.mxu0 %v7208
    %7845 = vmatpush.msra.mxu0 %v7204
    %7846 = vmatpush.msra.mxu0 %v7200
    %7847 = vmatpush.msra.mxu0 %v7196
    %7848 = vmatpush.msra.mxu0 %v7192
    %7849 = vmatpush.msra.mxu0 %v7188
    %7850 = vmatpush.msra.mxu0 %v7184
    %7851 = vmatpush.msra.mxu0 %v7180
    %7852 = vmatpush.msra.mxu0 %v7176
    %7853 = vmatpush.msra.mxu0 %v7172
    %7854 = vmatpush.msra.mxu0 %v7168
    %7855 = vmatmul.f32.gmra.mxu0 %v7155
    %v7856 = vpop.f32.mrf.mxu0
    %v7857 = vadd.f32 0.0, %v7856
    %7858 = vdwg.mxu0
    %7859 = vmatpush.msra.mxu0 %v7292
    %7860 = vmatpush.msra.mxu0 %v7288
    %7861 = vmatpush.msra.mxu0 %v7284
    %7862 = vmatpush.msra.mxu0 %v7280
    %7863 = vmatpush.msra.mxu0 %v7276
    %7864 = vmatpush.msra.mxu0 %v7272
    %7865 = vmatpush.msra.mxu0 %v7268
    %7866 = vmatpush.msra.mxu0 %v7264
    %7867 = vmatpush.msra.mxu0 %v7260
    %7868 = vmatpush.msra.mxu0 %v7256
    %7869 = vmatpush.msra.mxu0 %v7252
    %7870 = vmatpush.msra.mxu0 %v7248
    %7871 = vmatpush.msra.mxu0 %v7244
    %7872 = vmatpush.msra.mxu0 %v7240
    %7873 = vmatpush.msra.mxu0 %v7236
    %7874 = vmatpush.msra.mxu0 %v7232
    %7875 = vmatmul.f32.gmra.mxu0 %v7156
    %v7876 = vpop.f32.mrf.mxu0
    %v7877 = vadd.f32 %v7857, %v7876
    %7878 = vdwg.mxu0
    %7879 = vmatpush.msra.mxu0 %v7356
    %7880 = vmatpush.msra.mxu0 %v7352
    %7881 = vmatpush.msra.mxu0 %v7348
    %7882 = vmatpush.msra.mxu0 %v7344
    %7883 = vmatpush.msra.mxu0 %v7340
    %7884 = vmatpush.msra.mxu0 %v7336
    %7885 = vmatpush.msra.mxu0 %v7332
    %7886 = vmatpush.msra.mxu0 %v7328
    %7887 = vmatpush.msra.mxu0 %v7324
    %7888 = vmatpush.msra.mxu0 %v7320
    %7889 = vmatpush.msra.mxu0 %v7316
    %7890 = vmatpush.msra.mxu0 %v7312
    %7891 = vmatpush.msra.mxu0 %v7308
    %7892 = vmatpush.msra.mxu0 %v7304
    %7893 = vmatpush.msra.mxu0 %v7300
    %7894 = vmatpush.msra.mxu0 %v7296
    %7895 = vmatmul.f32.gmra.mxu0 %v7157
    %v7896 = vpop.f32.mrf.mxu0
    %v7897 = vadd.f32 %v7877, %v7896
    %7898 = vdwg.mxu0
    %7899 = vmatpush.msra.mxu0 %v7420
    %7900 = vmatpush.msra.mxu0 %v7416
    %7901 = vmatpush.msra.mxu0 %v7412
    %7902 = vmatpush.msra.mxu0 %v7408
    %7903 = vmatpush.msra.mxu0 %v7404
    %7904 = vmatpush.msra.mxu0 %v7400
    %7905 = vmatpush.msra.mxu0 %v7396
    %7906 = vmatpush.msra.mxu0 %v7392
    %7907 = vmatpush.msra.mxu0 %v7388
    %7908 = vmatpush.msra.mxu0 %v7384
    %7909 = vmatpush.msra.mxu0 %v7380
    %7910 = vmatpush.msra.mxu0 %v7376
    %7911 = vmatpush.msra.mxu0 %v7372
    %7912 = vmatpush.msra.mxu0 %v7368
    %7913 = vmatpush.msra.mxu0 %v7364
    %7914 = vmatpush.msra.mxu0 %v7360
    %7915 = vmatmul.f32.gmra.mxu0 %v7158
    %v7916 = vpop.f32.mrf.mxu0
    %v7917 = vadd.f32 %v7897, %v7916
    %7918 = vdwg.mxu0
    %7919 = vmatpush.msra.mxu0 %v7484
    %7920 = vmatpush.msra.mxu0 %v7480
    %7921 = vmatpush.msra.mxu0 %v7476
    %7922 = vmatpush.msra.mxu0 %v7472
    %7923 = vmatpush.msra.mxu0 %v7468
    %7924 = vmatpush.msra.mxu0 %v7464
    %7925 = vmatpush.msra.mxu0 %v7460
    %7926 = vmatpush.msra.mxu0 %v7456
    %7927 = vmatpush.msra.mxu0 %v7452
    %7928 = vmatpush.msra.mxu0 %v7448
    %7929 = vmatpush.msra.mxu0 %v7444
    %7930 = vmatpush.msra.mxu0 %v7440
    %7931 = vmatpush.msra.mxu0 %v7436
    %7932 = vmatpush.msra.mxu0 %v7432
    %7933 = vmatpush.msra.mxu0 %v7428
    %7934 = vmatpush.msra.mxu0 %v7424
    %7935 = vmatmul.f32.gmra.mxu0 %v7159
    %v7936 = vpop.f32.mrf.mxu0
    %v7937 = vadd.f32 %v7917, %v7936
    %7938 = vdwg.mxu0
    %7939 = vmatpush.msra.mxu0 %v7548
    %7940 = vmatpush.msra.mxu0 %v7544
    %7941 = vmatpush.msra.mxu0 %v7540
    %7942 = vmatpush.msra.mxu0 %v7536
    %7943 = vmatpush.msra.mxu0 %v7532
    %7944 = vmatpush.msra.mxu0 %v7528
    %7945 = vmatpush.msra.mxu0 %v7524
    %7946 = vmatpush.msra.mxu0 %v7520
    %7947 = vmatpush.msra.mxu0 %v7516
    %7948 = vmatpush.msra.mxu0 %v7512
    %7949 = vmatpush.msra.mxu0 %v7508
    %7950 = vmatpush.msra.mxu0 %v7504
    %7951 = vmatpush.msra.mxu0 %v7500
    %7952 = vmatpush.msra.mxu0 %v7496
    %7953 = vmatpush.msra.mxu0 %v7492
    %7954 = vmatpush.msra.mxu0 %v7488
    %7955 = vmatmul.f32.gmra.mxu0 %v7160
    %v7956 = vpop.f32.mrf.mxu0
    %v7957 = vadd.f32 %v7937, %v7956
    %7958 = vdwg.mxu0
    %7959 = vmatpush.msra.mxu0 %v7612
    %7960 = vmatpush.msra.mxu0 %v7608
    %7961 = vmatpush.msra.mxu0 %v7604
    %7962 = vmatpush.msra.mxu0 %v7600
    %7963 = vmatpush.msra.mxu0 %v7596
    %7964 = vmatpush.msra.mxu0 %v7592
    %7965 = vmatpush.msra.mxu0 %v7588
    %7966 = vmatpush.msra.mxu0 %v7584
    %7967 = vmatpush.msra.mxu0 %v7580
    %7968 = vmatpush.msra.mxu0 %v7576
    %7969 = vmatpush.msra.mxu0 %v7572
    %7970 = vmatpush.msra.mxu0 %v7568
    %7971 = vmatpush.msra.mxu0 %v7564
    %7972 = vmatpush.msra.mxu0 %v7560
    %7973 = vmatpush.msra.mxu0 %v7556
    %7974 = vmatpush.msra.mxu0 %v7552
    %7975 = vmatmul.f32.gmra.mxu0 %v7161
    %v7976 = vpop.f32.mrf.mxu0
    %v7977 = vadd.f32 %v7957, %v7976
    %7978 = vdwg.mxu0
    %7979 = vmatpush.msra.mxu0 %v7676
    %7980 = vmatpush.msra.mxu0 %v7672
    %7981 = vmatpush.msra.mxu0 %v7668
    %7982 = vmatpush.msra.mxu0 %v7664
    %7983 = vmatpush.msra.mxu0 %v7660
    %7984 = vmatpush.msra.mxu0 %v7656
    %7985 = vmatpush.msra.mxu0 %v7652
    %7986 = vmatpush.msra.mxu0 %v7648
    %7987 = vmatpush.msra.mxu0 %v7644
    %7988 = vmatpush.msra.mxu0 %v7640
    %7989 = vmatpush.msra.mxu0 %v7636
    %7990 = vmatpush.msra.mxu0 %v7632
    %7991 = vmatpush.msra.mxu0 %v7628
    %7992 = vmatpush.msra.mxu0 %v7624
    %7993 = vmatpush.msra.mxu0 %v7620
    %7994 = vmatpush.msra.mxu0 %v7616
    %7995 = vmatmul.f32.gmra.mxu0 %v7162
    %v7996 = vpop.f32.mrf.mxu0
    %v7997 = vadd.f32 %v7977, %v7996
    %7998 = vdwg.mxu0
    %7999 = vmatpush.msra.mxu0 %v7229
    %8000 = vmatpush.msra.mxu0 %v7225
    %8001 = vmatpush.msra.mxu0 %v7221
    %8002 = vmatpush.msra.mxu0 %v7217
    %8003 = vmatpush.msra.mxu0 %v7213
    %8004 = vmatpush.msra.mxu0 %v7209
    %8005 = vmatpush.msra.mxu0 %v7205
    %8006 = vmatpush.msra.mxu0 %v7201
    %8007 = vmatpush.msra.mxu0 %v7197
    %8008 = vmatpush.msra.mxu0 %v7193
    %8009 = vmatpush.msra.mxu0 %v7189
    %8010 = vmatpush.msra.mxu0 %v7185
    %8011 = vmatpush.msra.mxu0 %v7181
    %8012 = vmatpush.msra.mxu0 %v7177
    %8013 = vmatpush.msra.mxu0 %v7173
    %8014 = vmatpush.msra.mxu0 %v7169
    %8015 = vmatmul.f32.gmra.mxu0 %v7155
    %v8016 = vpop.f32.mrf.mxu0
    %v8017 = vadd.f32 0.0, %v8016
    %8018 = vdwg.mxu0
    %8019 = vmatpush.msra.mxu0 %v7293
    %8020 = vmatpush.msra.mxu0 %v7289
    %8021 = vmatpush.msra.mxu0 %v7285
    %8022 = vmatpush.msra.mxu0 %v7281
    %8023 = vmatpush.msra.mxu0 %v7277
    %8024 = vmatpush.msra.mxu0 %v7273
    %8025 = vmatpush.msra.mxu0 %v7269
    %8026 = vmatpush.msra.mxu0 %v7265
    %8027 = vmatpush.msra.mxu0 %v7261
    %8028 = vmatpush.msra.mxu0 %v7257
    %8029 = vmatpush.msra.mxu0 %v7253
    %8030 = vmatpush.msra.mxu0 %v7249
    %8031 = vmatpush.msra.mxu0 %v7245
    %8032 = vmatpush.msra.mxu0 %v7241
    %8033 = vmatpush.msra.mxu0 %v7237
    %8034 = vmatpush.msra.mxu0 %v7233
    %8035 = vmatmul.f32.gmra.mxu0 %v7156
    %v8036 = vpop.f32.mrf.mxu0
    %v8037 = vadd.f32 %v8017, %v8036
    %8038 = vdwg.mxu0
    %8039 = vmatpush.msra.mxu0 %v7357
    %8040 = vmatpush.msra.mxu0 %v7353
    %8041 = vmatpush.msra.mxu0 %v7349
    %8042 = vmatpush.msra.mxu0 %v7345
    %8043 = vmatpush.msra.mxu0 %v7341
    %8044 = vmatpush.msra.mxu0 %v7337
    %8045 = vmatpush.msra.mxu0 %v7333
    %8046 = vmatpush.msra.mxu0 %v7329
    %8047 = vmatpush.msra.mxu0 %v7325
    %8048 = vmatpush.msra.mxu0 %v7321
    %8049 = vmatpush.msra.mxu0 %v7317
    %8050 = vmatpush.msra.mxu0 %v7313
    %8051 = vmatpush.msra.mxu0 %v7309
    %8052 = vmatpush.msra.mxu0 %v7305
    %8053 = vmatpush.msra.mxu0 %v7301
    %8054 = vmatpush.msra.mxu0 %v7297
    %8055 = vmatmul.f32.gmra.mxu0 %v7157
    %v8056 = vpop.f32.mrf.mxu0
    %v8057 = vadd.f32 %v8037, %v8056
    %8058 = vdwg.mxu0
    %8059 = vmatpush.msra.mxu0 %v7421
    %8060 = vmatpush.msra.mxu0 %v7417
    %8061 = vmatpush.msra.mxu0 %v7413
    %8062 = vmatpush.msra.mxu0 %v7409
    %8063 = vmatpush.msra.mxu0 %v7405
    %8064 = vmatpush.msra.mxu0 %v7401
    %8065 = vmatpush.msra.mxu0 %v7397
    %8066 = vmatpush.msra.mxu0 %v7393
    %8067 = vmatpush.msra.mxu0 %v7389
    %8068 = vmatpush.msra.mxu0 %v7385
    %8069 = vmatpush.msra.mxu0 %v7381
    %8070 = vmatpush.msra.mxu0 %v7377
    %8071 = vmatpush.msra.mxu0 %v7373
    %8072 = vmatpush.msra.mxu0 %v7369
    %8073 = vmatpush.msra.mxu0 %v7365
    %8074 = vmatpush.msra.mxu0 %v7361
    %8075 = vmatmul.f32.gmra.mxu0 %v7158
    %v8076 = vpop.f32.mrf.mxu0
    %v8077 = vadd.f32 %v8057, %v8076
    %8078 = vdwg.mxu0
    %8079 = vmatpush.msra.mxu0 %v7485
    %8080 = vmatpush.msra.mxu0 %v7481
    %8081 = vmatpush.msra.mxu0 %v7477
    %8082 = vmatpush.msra.mxu0 %v7473
    %8083 = vmatpush.msra.mxu0 %v7469
    %8084 = vmatpush.msra.mxu0 %v7465
    %8085 = vmatpush.msra.mxu0 %v7461
    %8086 = vmatpush.msra.mxu0 %v7457
    %8087 = vmatpush.msra.mxu0 %v7453
    %8088 = vmatpush.msra.mxu0 %v7449
    %8089 = vmatpush.msra.mxu0 %v7445
    %8090 = vmatpush.msra.mxu0 %v7441
    %8091 = vmatpush.msra.mxu0 %v7437
    %8092 = vmatpush.msra.mxu0 %v7433
    %8093 = vmatpush.msra.mxu0 %v7429
    %8094 = vmatpush.msra.mxu0 %v7425
    %8095 = vmatmul.f32.gmra.mxu0 %v7159
    %v8096 = vpop.f32.mrf.mxu0
    %v8097 = vadd.f32 %v8077, %v8096
    %8098 = vdwg.mxu0
    %8099 = vmatpush.msra.mxu0 %v7549
    %8100 = vmatpush.msra.mxu0 %v7545
    %8101 = vmatpush.msra.mxu0 %v7541
    %8102 = vmatpush.msra.mxu0 %v7537
    %8103 = vmatpush.msra.mxu0 %v7533
    %8104 = vmatpush.msra.mxu0 %v7529
    %8105 = vmatpush.msra.mxu0 %v7525
    %8106 = vmatpush.msra.mxu0 %v7521
    %8107 = vmatpush.msra.mxu0 %v7517
    %8108 = vmatpush.msra.mxu0 %v7513
    %8109 = vmatpush.msra.mxu0 %v7509
    %8110 = vmatpush.msra.mxu0 %v7505
    %8111 = vmatpush.msra.mxu0 %v7501
    %8112 = vmatpush.msra.mxu0 %v7497
    %8113 = vmatpush.msra.mxu0 %v7493
    %8114 = vmatpush.msra.mxu0 %v7489
    %8115 = vmatmul.f32.gmra.mxu0 %v7160
    %v8116 = vpop.f32.mrf.mxu0
    %v8117 = vadd.f32 %v8097, %v8116
    %8118 = vdwg.mxu0
    %8119 = vmatpush.msra.mxu0 %v7613
    %8120 = vmatpush.msra.mxu0 %v7609
    %8121 = vmatpush.msra.mxu0 %v7605
    %8122 = vmatpush.msra.mxu0 %v7601
    %8123 = vmatpush.msra.mxu0 %v7597
    %8124 = vmatpush.msra.mxu0 %v7593
    %8125 = vmatpush.msra.mxu0 %v7589
    %8126 = vmatpush.msra.mxu0 %v7585
    %8127 = vmatpush.msra.mxu0 %v7581
    %8128 = vmatpush.msra.mxu0 %v7577
    %8129 = vmatpush.msra.mxu0 %v7573
    %8130 = vmatpush.msra.mxu0 %v7569
    %8131 = vmatpush.msra.mxu0 %v7565
    %8132 = vmatpush.msra.mxu0 %v7561
    %8133 = vmatpush.msra.mxu0 %v7557
    %8134 = vmatpush.msra.mxu0 %v7553
    %8135 = vmatmul.f32.gmra.mxu0 %v7161
    %v8136 = vpop.f32.mrf.mxu0
    %v8137 = vadd.f32 %v8117, %v8136
    %8138 = vdwg.mxu0
    %8139 = vmatpush.msra.mxu0 %v7677
    %8140 = vmatpush.msra.mxu0 %v7673
    %8141 = vmatpush.msra.mxu0 %v7669
    %8142 = vmatpush.msra.mxu0 %v7665
    %8143 = vmatpush.msra.mxu0 %v7661
    %8144 = vmatpush.msra.mxu0 %v7657
    %8145 = vmatpush.msra.mxu0 %v7653
    %8146 = vmatpush.msra.mxu0 %v7649
    %8147 = vmatpush.msra.mxu0 %v7645
    %8148 = vmatpush.msra.mxu0 %v7641
    %8149 = vmatpush.msra.mxu0 %v7637
    %8150 = vmatpush.msra.mxu0 %v7633
    %8151 = vmatpush.msra.mxu0 %v7629
    %8152 = vmatpush.msra.mxu0 %v7625
    %8153 = vmatpush.msra.mxu0 %v7621
    %8154 = vmatpush.msra.mxu0 %v7617
    %8155 = vmatmul.f32.gmra.mxu0 %v7162
    %v8156 = vpop.f32.mrf.mxu0
    %v8157 = vadd.f32 %v8137, %v8156
    %8158 = vdwg.mxu0
    %8159 = vmatpush.msra.mxu0 %v7230
    %8160 = vmatpush.msra.mxu0 %v7226
    %8161 = vmatpush.msra.mxu0 %v7222
    %8162 = vmatpush.msra.mxu0 %v7218
    %8163 = vmatpush.msra.mxu0 %v7214
    %8164 = vmatpush.msra.mxu0 %v7210
    %8165 = vmatpush.msra.mxu0 %v7206
    %8166 = vmatpush.msra.mxu0 %v7202
    %8167 = vmatpush.msra.mxu0 %v7198
    %8168 = vmatpush.msra.mxu0 %v7194
    %8169 = vmatpush.msra.mxu0 %v7190
    %8170 = vmatpush.msra.mxu0 %v7186
    %8171 = vmatpush.msra.mxu0 %v7182
    %8172 = vmatpush.msra.mxu0 %v7178
    %8173 = vmatpush.msra.mxu0 %v7174
    %8174 = vmatpush.msra.mxu0 %v7170
    %8175 = vmatmul.f32.gmra.mxu0 %v7155
    %v8176 = vpop.f32.mrf.mxu0
    %v8177 = vadd.f32 0.0, %v8176
    %8178 = vdwg.mxu0
    %8179 = vmatpush.msra.mxu0 %v7294
    %8180 = vmatpush.msra.mxu0 %v7290
    %8181 = vmatpush.msra.mxu0 %v7286
    %8182 = vmatpush.msra.mxu0 %v7282
    %8183 = vmatpush.msra.mxu0 %v7278
    %8184 = vmatpush.msra.mxu0 %v7274
    %8185 = vmatpush.msra.mxu0 %v7270
    %8186 = vmatpush.msra.mxu0 %v7266
    %8187 = vmatpush.msra.mxu0 %v7262
    %8188 = vmatpush.msra.mxu0 %v7258
    %8189 = vmatpush.msra.mxu0 %v7254
    %8190 = vmatpush.msra.mxu0 %v7250
    %8191 = vmatpush.msra.mxu0 %v7246
    %8192 = vmatpush.msra.mxu0 %v7242
    %8193 = vmatpush.msra.mxu0 %v7238
    %8194 = vmatpush.msra.mxu0 %v7234
    %8195 = vmatmul.f32.gmra.mxu0 %v7156
    %v8196 = vpop.f32.mrf.mxu0
    %v8197 = vadd.f32 %v8177, %v8196
    %8198 = vdwg.mxu0
    %8199 = vmatpush.msra.mxu0 %v7358
    %8200 = vmatpush.msra.mxu0 %v7354
    %8201 = vmatpush.msra.mxu0 %v7350
    %8202 = vmatpush.msra.mxu0 %v7346
    %8203 = vmatpush.msra.mxu0 %v7342
    %8204 = vmatpush.msra.mxu0 %v7338
    %8205 = vmatpush.msra.mxu0 %v7334
    %8206 = vmatpush.msra.mxu0 %v7330
    %8207 = vmatpush.msra.mxu0 %v7326
    %8208 = vmatpush.msra.mxu0 %v7322
    %8209 = vmatpush.msra.mxu0 %v7318
    %8210 = vmatpush.msra.mxu0 %v7314
    %8211 = vmatpush.msra.mxu0 %v7310
    %8212 = vmatpush.msra.mxu0 %v7306
    %8213 = vmatpush.msra.mxu0 %v7302
    %8214 = vmatpush.msra.mxu0 %v7298
    %8215 = vmatmul.f32.gmra.mxu0 %v7157
    %v8216 = vpop.f32.mrf.mxu0
    %v8217 = vadd.f32 %v8197, %v8216
    %8218 = vdwg.mxu0
    %8219 = vmatpush.msra.mxu0 %v7422
    %8220 = vmatpush.msra.mxu0 %v7418
    %8221 = vmatpush.msra.mxu0 %v7414
    %8222 = vmatpush.msra.mxu0 %v7410
    %8223 = vmatpush.msra.mxu0 %v7406
    %8224 = vmatpush.msra.mxu0 %v7402
    %8225 = vmatpush.msra.mxu0 %v7398
    %8226 = vmatpush.msra.mxu0 %v7394
    %8227 = vmatpush.msra.mxu0 %v7390
    %8228 = vmatpush.msra.mxu0 %v7386
    %8229 = vmatpush.msra.mxu0 %v7382
    %8230 = vmatpush.msra.mxu0 %v7378
    %8231 = vmatpush.msra.mxu0 %v7374
    %8232 = vmatpush.msra.mxu0 %v7370
    %8233 = vmatpush.msra.mxu0 %v7366
    %8234 = vmatpush.msra.mxu0 %v7362
    %8235 = vmatmul.f32.gmra.mxu0 %v7158
    %v8236 = vpop.f32.mrf.mxu0
    %v8237 = vadd.f32 %v8217, %v8236
    %8238 = vdwg.mxu0
    %8239 = vmatpush.msra.mxu0 %v7486
    %8240 = vmatpush.msra.mxu0 %v7482
    %8241 = vmatpush.msra.mxu0 %v7478
    %8242 = vmatpush.msra.mxu0 %v7474
    %8243 = vmatpush.msra.mxu0 %v7470
    %8244 = vmatpush.msra.mxu0 %v7466
    %8245 = vmatpush.msra.mxu0 %v7462
    %8246 = vmatpush.msra.mxu0 %v7458
    %8247 = vmatpush.msra.mxu0 %v7454
    %8248 = vmatpush.msra.mxu0 %v7450
    %8249 = vmatpush.msra.mxu0 %v7446
    %8250 = vmatpush.msra.mxu0 %v7442
    %8251 = vmatpush.msra.mxu0 %v7438
    %8252 = vmatpush.msra.mxu0 %v7434
    %8253 = vmatpush.msra.mxu0 %v7430
    %8254 = vmatpush.msra.mxu0 %v7426
    %8255 = vmatmul.f32.gmra.mxu0 %v7159
    %v8256 = vpop.f32.mrf.mxu0
    %v8257 = vadd.f32 %v8237, %v8256
    %8258 = vdwg.mxu0
    %8259 = vmatpush.msra.mxu0 %v7550
    %8260 = vmatpush.msra.mxu0 %v7546
    %8261 = vmatpush.msra.mxu0 %v7542
    %8262 = vmatpush.msra.mxu0 %v7538
    %8263 = vmatpush.msra.mxu0 %v7534
    %8264 = vmatpush.msra.mxu0 %v7530
    %8265 = vmatpush.msra.mxu0 %v7526
    %8266 = vmatpush.msra.mxu0 %v7522
    %8267 = vmatpush.msra.mxu0 %v7518
    %8268 = vmatpush.msra.mxu0 %v7514
    %8269 = vmatpush.msra.mxu0 %v7510
    %8270 = vmatpush.msra.mxu0 %v7506
    %8271 = vmatpush.msra.mxu0 %v7502
    %8272 = vmatpush.msra.mxu0 %v7498
    %8273 = vmatpush.msra.mxu0 %v7494
    %8274 = vmatpush.msra.mxu0 %v7490
    %8275 = vmatmul.f32.gmra.mxu0 %v7160
    %v8276 = vpop.f32.mrf.mxu0
    %v8277 = vadd.f32 %v8257, %v8276
    %8278 = vdwg.mxu0
    %8279 = vmatpush.msra.mxu0 %v7614
    %8280 = vmatpush.msra.mxu0 %v7610
    %8281 = vmatpush.msra.mxu0 %v7606
    %8282 = vmatpush.msra.mxu0 %v7602
    %8283 = vmatpush.msra.mxu0 %v7598
    %8284 = vmatpush.msra.mxu0 %v7594
    %8285 = vmatpush.msra.mxu0 %v7590
    %8286 = vmatpush.msra.mxu0 %v7586
    %8287 = vmatpush.msra.mxu0 %v7582
    %8288 = vmatpush.msra.mxu0 %v7578
    %8289 = vmatpush.msra.mxu0 %v7574
    %8290 = vmatpush.msra.mxu0 %v7570
    %8291 = vmatpush.msra.mxu0 %v7566
    %8292 = vmatpush.msra.mxu0 %v7562
    %8293 = vmatpush.msra.mxu0 %v7558
    %8294 = vmatpush.msra.mxu0 %v7554
    %8295 = vmatmul.f32.gmra.mxu0 %v7161
    %v8296 = vpop.f32.mrf.mxu0
    %v8297 = vadd.f32 %v8277, %v8296
    %8298 = vdwg.mxu0
    %8299 = vmatpush.msra.mxu0 %v7678
    %8300 = vmatpush.msra.mxu0 %v7674
    %8301 = vmatpush.msra.mxu0 %v7670
    %8302 = vmatpush.msra.mxu0 %v7666
    %8303 = vmatpush.msra.mxu0 %v7662
    %8304 = vmatpush.msra.mxu0 %v7658
    %8305 = vmatpush.msra.mxu0 %v7654
    %8306 = vmatpush.msra.mxu0 %v7650
    %8307 = vmatpush.msra.mxu0 %v7646
    %8308 = vmatpush.msra.mxu0 %v7642
    %8309 = vmatpush.msra.mxu0 %v7638
    %8310 = vmatpush.msra.mxu0 %v7634
    %8311 = vmatpush.msra.mxu0 %v7630
    %8312 = vmatpush.msra.mxu0 %v7626
    %8313 = vmatpush.msra.mxu0 %v7622
    %8314 = vmatpush.msra.mxu0 %v7618
    %8315 = vmatmul.f32.gmra.mxu0 %v7162
    %v8316 = vpop.f32.mrf.mxu0
    %v8317 = vadd.f32 %v8297, %v8316
    %8318 = vdwg.mxu0
    %v8319 = vrot.slane %v7837, 4
    %v8320 = vadd.f32 %v7837, %v8319
    %v8321 = vrot.slane %v8320, 2
    %v8322 = vadd.f32 %v8320, %v8321
    %v8323 = vrot.slane %v8322, 1
    %v8324 = vadd.f32 %v8322, %v8323
    %v8325 = vrot.slane %v7997, 4
    %v8326 = vadd.f32 %v7997, %v8325
    %v8327 = vrot.slane %v8326, 2
    %v8328 = vadd.f32 %v8326, %v8327
    %v8329 = vrot.slane %v8328, 1
    %v8330 = vadd.f32 %v8328, %v8329
    %v8331 = vrot.slane %v8157, 4
    %v8332 = vadd.f32 %v8157, %v8331
    %v8333 = vrot.slane %v8332, 2
    %v8334 = vadd.f32 %v8332, %v8333
    %v8335 = vrot.slane %v8334, 1
    %v8336 = vadd.f32 %v8334, %v8335
    %v8337 = vrot.slane %v8317, 4
    %v8338 = vadd.f32 %v8317, %v8337
    %v8339 = vrot.slane %v8338, 2
    %v8340 = vadd.f32 %v8338, %v8339
    %v8341 = vrot.slane %v8340, 1
    %v8342 = vadd.f32 %v8340, %v8341
    %v8343 = vmul.f32 %v8324, %v1595
    %v8344 = vmul.f32 %v8330, %v1595
    %v8345 = vmul.f32 %v8336, %v1595
    %v8346 = vmul.f32 %v8342, %v1595
    %v8347 = vmul.f32 %v7837, %v7837
    %v8348 = vmul.f32 %v7997, %v7997
    %v8349 = vmul.f32 %v8157, %v8157
    %v8350 = vmul.f32 %v8317, %v8317
    %v8351 = vrot.slane %v8347, 4
    %v8352 = vadd.f32 %v8347, %v8351
    %v8353 = vrot.slane %v8352, 2
    %v8354 = vadd.f32 %v8352, %v8353
    %v8355 = vrot.slane %v8354, 1
    %v8356 = vadd.f32 %v8354, %v8355
    %v8357 = vrot.slane %v8348, 4
    %v8358 = vadd.f32 %v8348, %v8357
    %v8359 = vrot.slane %v8358, 2
    %v8360 = vadd.f32 %v8358, %v8359
    %v8361 = vrot.slane %v8360, 1
    %v8362 = vadd.f32 %v8360, %v8361
    %v8363 = vrot.slane %v8349, 4
    %v8364 = vadd.f32 %v8349, %v8363
    %v8365 = vrot.slane %v8364, 2
    %v8366 = vadd.f32 %v8364, %v8365
    %v8367 = vrot.slane %v8366, 1
    %v8368 = vadd.f32 %v8366, %v8367
    %v8369 = vrot.slane %v8350, 4
    %v8370 = vadd.f32 %v8350, %v8369
    %v8371 = vrot.slane %v8370, 2
    %v8372 = vadd.f32 %v8370, %v8371
    %v8373 = vrot.slane %v8372, 1
    %v8374 = vadd.f32 %v8372, %v8373
    %v8375 = vmul.f32 %v8356, %v1595
    %v8376 = vmul.f32 %v8362, %v1595
    %v8377 = vmul.f32 %v8368, %v1595
    %v8378 = vmul.f32 %v8374, %v1595
    %v8379 = vmul.f32 %v8343, %v8343
    %v8380 = vmul.f32 %v8344, %v8344
    %v8381 = vmul.f32 %v8345, %v8345
    %v8382 = vmul.f32 %v8346, %v8346
    %v8383 = vsub.f32 %v8375, %v8379
    %v8384 = vsub.f32 %v8376, %v8380
    %v8385 = vsub.f32 %v8377, %v8381
    %v8386 = vsub.f32 %v8378, %v8382
    %v8387 = vmax.f32 %v8383, 0.0
    %v8388 = vmax.f32 %v8384, 0.0
    %v8389 = vmax.f32 %v8385, 0.0
    %v8390 = vmax.f32 %v8386, 0.0
    %v8391 = vld [vmem:[#allocation15] sm:$0xf]
    %v8392 = vadd.f32 %v8387, 1e-05
    %v8393 = vadd.f32 %v8388, 1e-05
    %v8394 = vadd.f32 %v8389, 1e-05
    %v8395 = vadd.f32 %v8390, 1e-05
    %v8396 = vrsqrt.pop %v8392
    %v8397 = vmul.f32 %v8396, %v8392
    %v8398 = vmul.f32 %v8397, %v8396
    %v8399 = vmul.f32 0.5, %v8398
    %v8400 = vsub.f32 1.5, %v8399
    %v8401 = vmul.f32 %v8396, %v8400
    %vm8402 = vweird.f32 %v8392
    %vm8403 = vweird.f32 %v8396
    %vm8404 = vmor %vm8402, %vm8403
    %v8405 = vsel %vm8404, %v8396, %v8401
    %v8406 = vrsqrt.pop %v8393
    %v8407 = vmul.f32 %v8406, %v8393
    %v8408 = vmul.f32 %v8407, %v8406
    %v8409 = vmul.f32 0.5, %v8408
    %v8410 = vsub.f32 1.5, %v8409
    %v8411 = vmul.f32 %v8406, %v8410
    %vm8412 = vweird.f32 %v8393
    %vm8413 = vweird.f32 %v8406
    %vm8414 = vmor %vm8412, %vm8413
    %v8415 = vsel %vm8414, %v8406, %v8411
    %v8416 = vrsqrt.pop %v8394
    %v8417 = vmul.f32 %v8416, %v8394
    %v8418 = vmul.f32 %v8417, %v8416
    %v8419 = vmul.f32 0.5, %v8418
    %v8420 = vsub.f32 1.5, %v8419
    %v8421 = vmul.f32 %v8416, %v8420
    %vm8422 = vweird.f32 %v8394
    %vm8423 = vweird.f32 %v8416
    %vm8424 = vmor %vm8422, %vm8423
    %v8425 = vsel %vm8424, %v8416, %v8421
    %v8426 = vrsqrt.pop %v8395
    %v8427 = vmul.f32 %v8426, %v8395
    %v8428 = vmul.f32 %v8427, %v8426
    %v8429 = vmul.f32 0.5, %v8428
    %v8430 = vsub.f32 1.5, %v8429
    %v8431 = vmul.f32 %v8426, %v8430
    %vm8432 = vweird.f32 %v8395
    %vm8433 = vweird.f32 %v8426
    %vm8434 = vmor %vm8432, %vm8433
    %v8435 = vsel %vm8434, %v8426, %v8431
    %v8440 = vrot.slane %v8415, 7
    %v8441 = vrot.slane %v8425, 6
    %v8442 = vrot.slane %v8435, 5
    %v8443 = vsel %vm1996, %v8405, %v8440
    %v8444 = vsel %vm1998, %v8441, %v8442
    %v8445 = vsel %vm2000, %v8443, %v8444
    %v8447 = vmul.f32 %v8391, %v8445
    %v8448 = vld [vmem:[#allocation23] sm:$0xf]
    %v8450 = vperm.slane %v8447, 0
    %v8451 = vperm.slane %v8447, 1
    %v8452 = vperm.slane %v8447, 2
    %v8453 = vperm.slane %v8447, 3
    %v8458 = vmul.f32 %v8343, %v8450
    %v8459 = vmul.f32 %v8344, %v8451
    %v8460 = vmul.f32 %v8345, %v8452
    %v8461 = vmul.f32 %v8346, %v8453
    %v8466 = vrot.slane %v8459, 7
    %v8467 = vrot.slane %v8460, 6
    %v8468 = vrot.slane %v8461, 5
    %v8469 = vsel %vm1996, %v8458, %v8466
    %v8470 = vsel %vm1998, %v8467, %v8468
    %v8471 = vsel %vm2000, %v8469, %v8470
    %v8473 = vsub.f32 %v8448, %v8471
    %v8474 = vmul.f32 %v7837, %v8450
    %v8475 = vmul.f32 %v7997, %v8451
    %v8476 = vmul.f32 %v8157, %v8452
    %v8477 = vmul.f32 %v8317, %v8453
    %v8479 = vperm.slane %v8473, 0
    %v8480 = vperm.slane %v8473, 1
    %v8481 = vperm.slane %v8473, 2
    %v8482 = vperm.slane %v8473, 3
    %v8487 = vadd.f32 %v8474, %v8479
    %v8488 = vadd.f32 %v8475, %v8480
    %v8489 = vadd.f32 %v8476, %v8481
    %v8490 = vadd.f32 %v8477, %v8482
    %v8491 = vmax.f32 %v8487, 0.0
    %v8492 = vmax.f32 %v8488, 0.0
    %v8493 = vmax.f32 %v8489, 0.0
    %v8494 = vmax.f32 %v8490, 0.0
    %s8495 = smul.u32 512, 1
    %s8496 = sshll.u32 %s8495, 4
    %8497 = dma.done %s239, %s8496
    %v8498 = vld [vmem:[#allocation5] sm:$0xff]
    %v8499 = vld [vmem:[#allocation5 + $0x8] sm:$0xff]
    %v8500 = vld [vmem:[#allocation5 + $0x10] sm:$0xff]
    %v8501 = vld [vmem:[#allocation5 + $0x18] sm:$0xff]
    %v8502 = vld [vmem:[#allocation5 + $0x20] sm:$0xff]
    %v8503 = vld [vmem:[#allocation5 + $0x28] sm:$0xff]
    %v8504 = vld [vmem:[#allocation5 + $0x30] sm:$0xff]
    %v8505 = vld [vmem:[#allocation5 + $0x38] sm:$0xff]
    %v8506 = vld [vmem:[#allocation5 + $0x40] sm:$0xff]
    %v8507 = vld [vmem:[#allocation5 + $0x48] sm:$0xff]
    %v8508 = vld [vmem:[#allocation5 + $0x50] sm:$0xff]
    %v8509 = vld [vmem:[#allocation5 + $0x58] sm:$0xff]
    %v8510 = vld [vmem:[#allocation5 + $0x60] sm:$0xff]
    %v8511 = vld [vmem:[#allocation5 + $0x68] sm:$0xff]
    %v8512 = vld [vmem:[#allocation5 + $0x70] sm:$0xff]
    %v8513 = vld [vmem:[#allocation5 + $0x78] sm:$0xff]
    %v8514 = vld [vmem:[#allocation5 + $0x80] sm:$0xff]
    %v8515 = vld [vmem:[#allocation5 + $0x88] sm:$0xff]
    %v8516 = vld [vmem:[#allocation5 + $0x90] sm:$0xff]
    %v8517 = vld [vmem:[#allocation5 + $0x98] sm:$0xff]
    %v8518 = vld [vmem:[#allocation5 + $0xa0] sm:$0xff]
    %v8519 = vld [vmem:[#allocation5 + $0xa8] sm:$0xff]
    %v8520 = vld [vmem:[#allocation5 + $0xb0] sm:$0xff]
    %v8521 = vld [vmem:[#allocation5 + $0xb8] sm:$0xff]
    %v8522 = vld [vmem:[#allocation5 + $0xc0] sm:$0xff]
    %v8523 = vld [vmem:[#allocation5 + $0xc8] sm:$0xff]
    %v8524 = vld [vmem:[#allocation5 + $0xd0] sm:$0xff]
    %v8525 = vld [vmem:[#allocation5 + $0xd8] sm:$0xff]
    %v8526 = vld [vmem:[#allocation5 + $0xe0] sm:$0xff]
    %v8527 = vld [vmem:[#allocation5 + $0xe8] sm:$0xff]
    %v8528 = vld [vmem:[#allocation5 + $0xf0] sm:$0xff]
    %v8529 = vld [vmem:[#allocation5 + $0xf8] sm:$0xff]
    %v8530 = vld [vmem:[#allocation5 + $0x100] sm:$0xff]
    %v8531 = vld [vmem:[#allocation5 + $0x108] sm:$0xff]
    %v8532 = vld [vmem:[#allocation5 + $0x110] sm:$0xff]
    %v8533 = vld [vmem:[#allocation5 + $0x118] sm:$0xff]
    %v8534 = vld [vmem:[#allocation5 + $0x120] sm:$0xff]
    %v8535 = vld [vmem:[#allocation5 + $0x128] sm:$0xff]
    %v8536 = vld [vmem:[#allocation5 + $0x130] sm:$0xff]
    %v8537 = vld [vmem:[#allocation5 + $0x138] sm:$0xff]
    %v8538 = vld [vmem:[#allocation5 + $0x140] sm:$0xff]
    %v8539 = vld [vmem:[#allocation5 + $0x148] sm:$0xff]
    %v8540 = vld [vmem:[#allocation5 + $0x150] sm:$0xff]
    %v8541 = vld [vmem:[#allocation5 + $0x158] sm:$0xff]
    %v8542 = vld [vmem:[#allocation5 + $0x160] sm:$0xff]
    %v8543 = vld [vmem:[#allocation5 + $0x168] sm:$0xff]
    %v8544 = vld [vmem:[#allocation5 + $0x170] sm:$0xff]
    %v8545 = vld [vmem:[#allocation5 + $0x178] sm:$0xff]
    %v8546 = vld [vmem:[#allocation5 + $0x180] sm:$0xff]
    %v8547 = vld [vmem:[#allocation5 + $0x188] sm:$0xff]
    %v8548 = vld [vmem:[#allocation5 + $0x190] sm:$0xff]
    %v8549 = vld [vmem:[#allocation5 + $0x198] sm:$0xff]
    %v8550 = vld [vmem:[#allocation5 + $0x1a0] sm:$0xff]
    %v8551 = vld [vmem:[#allocation5 + $0x1a8] sm:$0xff]
    %v8552 = vld [vmem:[#allocation5 + $0x1b0] sm:$0xff]
    %v8553 = vld [vmem:[#allocation5 + $0x1b8] sm:$0xff]
    %v8554 = vld [vmem:[#allocation5 + $0x1c0] sm:$0xff]
    %v8555 = vld [vmem:[#allocation5 + $0x1c8] sm:$0xff]
    %v8556 = vld [vmem:[#allocation5 + $0x1d0] sm:$0xff]
    %v8557 = vld [vmem:[#allocation5 + $0x1d8] sm:$0xff]
    %v8558 = vld [vmem:[#allocation5 + $0x1e0] sm:$0xff]
    %v8559 = vld [vmem:[#allocation5 + $0x1e8] sm:$0xff]
    %v8560 = vld [vmem:[#allocation5 + $0x1f0] sm:$0xff]
    %v8561 = vld [vmem:[#allocation5 + $0x1f8] sm:$0xff]
    %8562 = vmatpush.msra.mxu0 %v8513
    %8563 = vmatpush.msra.mxu0 %v8512
    %8564 = vmatpush.msra.mxu0 %v8511
    %8565 = vmatpush.msra.mxu0 %v8510
    %8566 = vmatpush.msra.mxu0 %v8509
    %8567 = vmatpush.msra.mxu0 %v8508
    %8568 = vmatpush.msra.mxu0 %v8507
    %8569 = vmatpush.msra.mxu0 %v8506
    %8570 = vmatpush.msra.mxu0 %v8505
    %8571 = vmatpush.msra.mxu0 %v8504
    %8572 = vmatpush.msra.mxu0 %v8503
    %8573 = vmatpush.msra.mxu0 %v8502
    %8574 = vmatpush.msra.mxu0 %v8501
    %8575 = vmatpush.msra.mxu0 %v8500
    %8576 = vmatpush.msra.mxu0 %v8499
    %8577 = vmatpush.msra.mxu0 %v8498
    %8578 = vmatmul.f32.gmra.mxu0 %v8491
    %v8579 = vpop.f32.mrf.mxu0
    %v8580 = vadd.f32 0.0, %v8579
    %8581 = vdwg.mxu0
    %8582 = vmatpush.msra.mxu0 %v8529
    %8583 = vmatpush.msra.mxu0 %v8528
    %8584 = vmatpush.msra.mxu0 %v8527
    %8585 = vmatpush.msra.mxu0 %v8526
    %8586 = vmatpush.msra.mxu0 %v8525
    %8587 = vmatpush.msra.mxu0 %v8524
    %8588 = vmatpush.msra.mxu0 %v8523
    %8589 = vmatpush.msra.mxu0 %v8522
    %8590 = vmatpush.msra.mxu0 %v8521
    %8591 = vmatpush.msra.mxu0 %v8520
    %8592 = vmatpush.msra.mxu0 %v8519
    %8593 = vmatpush.msra.mxu0 %v8518
    %8594 = vmatpush.msra.mxu0 %v8517
    %8595 = vmatpush.msra.mxu0 %v8516
    %8596 = vmatpush.msra.mxu0 %v8515
    %8597 = vmatpush.msra.mxu0 %v8514
    %8598 = vmatmul.f32.gmra.mxu0 %v8492
    %v8599 = vpop.f32.mrf.mxu0
    %v8600 = vadd.f32 %v8580, %v8599
    %8601 = vdwg.mxu0
    %8602 = vmatpush.msra.mxu0 %v8545
    %8603 = vmatpush.msra.mxu0 %v8544
    %8604 = vmatpush.msra.mxu0 %v8543
    %8605 = vmatpush.msra.mxu0 %v8542
    %8606 = vmatpush.msra.mxu0 %v8541
    %8607 = vmatpush.msra.mxu0 %v8540
    %8608 = vmatpush.msra.mxu0 %v8539
    %8609 = vmatpush.msra.mxu0 %v8538
    %8610 = vmatpush.msra.mxu0 %v8537
    %8611 = vmatpush.msra.mxu0 %v8536
    %8612 = vmatpush.msra.mxu0 %v8535
    %8613 = vmatpush.msra.mxu0 %v8534
    %8614 = vmatpush.msra.mxu0 %v8533
    %8615 = vmatpush.msra.mxu0 %v8532
    %8616 = vmatpush.msra.mxu0 %v8531
    %8617 = vmatpush.msra.mxu0 %v8530
    %8618 = vmatmul.f32.gmra.mxu0 %v8493
    %v8619 = vpop.f32.mrf.mxu0
    %v8620 = vadd.f32 %v8600, %v8619
    %8621 = vdwg.mxu0
    %8622 = vmatpush.msra.mxu0 %v8561
    %8623 = vmatpush.msra.mxu0 %v8560
    %8624 = vmatpush.msra.mxu0 %v8559
    %8625 = vmatpush.msra.mxu0 %v8558
    %8626 = vmatpush.msra.mxu0 %v8557
    %8627 = vmatpush.msra.mxu0 %v8556
    %8628 = vmatpush.msra.mxu0 %v8555
    %8629 = vmatpush.msra.mxu0 %v8554
    %8630 = vmatpush.msra.mxu0 %v8553
    %8631 = vmatpush.msra.mxu0 %v8552
    %8632 = vmatpush.msra.mxu0 %v8551
    %8633 = vmatpush.msra.mxu0 %v8550
    %8634 = vmatpush.msra.mxu0 %v8549
    %8635 = vmatpush.msra.mxu0 %v8548
    %8636 = vmatpush.msra.mxu0 %v8547
    %8637 = vmatpush.msra.mxu0 %v8546
    %8638 = vmatmul.f32.gmra.mxu0 %v8494
    %v8639 = vpop.f32.mrf.mxu0
    %v8640 = vadd.f32 %v8620, %v8639
    %8641 = vdwg.mxu0
    %v8642 = vrot.slane %v8640, 4
    %v8643 = vadd.f32 %v8640, %v8642
    %v8644 = vrot.slane %v8643, 2
    %v8645 = vadd.f32 %v8643, %v8644
    %v8646 = vrot.slane %v8645, 1
    %v8647 = vadd.f32 %v8645, %v8646
    %v8648 = vmul.f32 %v8647, %v1595
    %v8649 = vmul.f32 %v8640, %v8640
    %v8650 = vrot.slane %v8649, 4
    %v8651 = vadd.f32 %v8649, %v8650
    %v8652 = vrot.slane %v8651, 2
    %v8653 = vadd.f32 %v8651, %v8652
    %v8654 = vrot.slane %v8653, 1
    %v8655 = vadd.f32 %v8653, %v8654
    %v8656 = vmul.f32 %v8655, %v1595
    %v8657 = vmul.f32 %v8648, %v8648
    %v8658 = vsub.f32 %v8656, %v8657
    %v8659 = vmax.f32 %v8658, 0.0
    %v8660 = vld [vmem:[#allocation17] sm:$0x1]
    %v8661 = vadd.f32 %v8659, 1e-05
    %v8662 = vrsqrt.pop %v8661
    %v8663 = vmul.f32 %v8662, %v8661
    %v8664 = vmul.f32 %v8663, %v8662
    %v8665 = vmul.f32 0.5, %v8664
    %v8666 = vsub.f32 1.5, %v8665
    %v8667 = vmul.f32 %v8662, %v8666
    %vm8668 = vweird.f32 %v8661
    %vm8669 = vweird.f32 %v8662
    %vm8670 = vmor %vm8668, %vm8669
    %v8671 = vsel %vm8670, %v8662, %v8667
    %v8672 = vmul.f32 %v8660, %v8671
    %v8673 = vld [vmem:[#allocation24] sm:$0x1]
    %v8674 = vmul.f32 %v8648, %v8672
    %v8675 = vsub.f32 %v8673, %v8674
    %v8677 = vperm.slane %v8672, 0
    %v8679 = vmul.f32 %v8640, %v8677
    %v8681 = vperm.slane %v8675, 0
    %v8683 = vadd.f32 %v8679, %v8681
    %v8684 = vmax.f32 %v8683, 0.0
    %s8685 = smul.u32 128, 1
    %s8686 = sshll.u32 %s8685, 4
    %8687 = dma.done %s253, %s8686
    %v8688 = vld [vmem:[#allocation6] sm:$0xff]
    %v8689 = vld [vmem:[#allocation6 + $0x8] sm:$0xff]
    %v8690 = vld [vmem:[#allocation6 + $0x10] sm:$0xff]
    %v8691 = vld [vmem:[#allocation6 + $0x18] sm:$0xff]
    %v8692 = vld [vmem:[#allocation6 + $0x20] sm:$0xff]
    %v8693 = vld [vmem:[#allocation6 + $0x28] sm:$0xff]
    %v8694 = vld [vmem:[#allocation6 + $0x30] sm:$0xff]
    %v8695 = vld [vmem:[#allocation6 + $0x38] sm:$0xff]
    %v8696 = vld [vmem:[#allocation6 + $0x40] sm:$0xff]
    %v8697 = vld [vmem:[#allocation6 + $0x48] sm:$0xff]
    %v8698 = vld [vmem:[#allocation6 + $0x50] sm:$0xff]
    %v8699 = vld [vmem:[#allocation6 + $0x58] sm:$0xff]
    %v8700 = vld [vmem:[#allocation6 + $0x60] sm:$0xff]
    %v8701 = vld [vmem:[#allocation6 + $0x68] sm:$0xff]
    %v8702 = vld [vmem:[#allocation6 + $0x70] sm:$0xff]
    %v8703 = vld [vmem:[#allocation6 + $0x78] sm:$0xff]
    %8704 = vmatpush.msra.mxu0 %v8703
    %8705 = vmatpush.msra.mxu0 %v8702
    %8706 = vmatpush.msra.mxu0 %v8701
    %8707 = vmatpush.msra.mxu0 %v8700
    %8708 = vmatpush.msra.mxu0 %v8699
    %8709 = vmatpush.msra.mxu0 %v8698
    %8710 = vmatpush.msra.mxu0 %v8697
    %8711 = vmatpush.msra.mxu0 %v8696
    %8712 = vmatpush.msra.mxu0 %v8695
    %8713 = vmatpush.msra.mxu0 %v8694
    %8714 = vmatpush.msra.mxu0 %v8693
    %8715 = vmatpush.msra.mxu0 %v8692
    %8716 = vmatpush.msra.mxu0 %v8691
    %8717 = vmatpush.msra.mxu0 %v8690
    %8718 = vmatpush.msra.mxu0 %v8689
    %8719 = vmatpush.msra.mxu0 %v8688
    %8720 = vmatmul.f32.gmra.mxu0 %v8684
    %v8721 = vpop.f32.mrf.mxu0
    %v8722 = vadd.f32 0.0, %v8721
    %8723 = vdwg.mxu0
    %vm8724 = vcmask 523264
    %v8725 = vsel %vm8724, %v8722, 0.0
    %v8726 = vrot.slane %v8725, 4
    %v8727 = vadd.f32 %v8725, %v8726
    %v8728 = vrot.slane %v8727, 2
    %v8729 = vadd.f32 %v8727, %v8728
    %v8730 = vrot.slane %v8729, 1
    %v8731 = vadd.f32 %v8729, %v8730
    %v8732 = vmul.f32 %v8731, %v1595
    %v8733 = vmul.f32 %v8722, %v8722
    %v8734 = vsel %vm8724, %v8733, 0.0
    %v8735 = vrot.slane %v8734, 4
    %v8736 = vadd.f32 %v8734, %v8735
    %v8737 = vrot.slane %v8736, 2
    %v8738 = vadd.f32 %v8736, %v8737
    %v8739 = vrot.slane %v8738, 1
    %v8740 = vadd.f32 %v8738, %v8739
    %v8741 = vmul.f32 %v8740, %v1595
    %v8742 = vmul.f32 %v8732, %v8732
    %v8743 = vsub.f32 %v8741, %v8742
    %v8744 = vmax.f32 %v8743, 0.0
    %v8745 = vld [vmem:[#allocation18] sm:$0x1]
    %v8746 = vadd.f32 %v8744, 1e-05
    %v8747 = vrsqrt.pop %v8746
    %v8748 = vmul.f32 %v8747, %v8746
    %v8749 = vmul.f32 %v8748, %v8747
    %v8750 = vmul.f32 0.5, %v8749
    %v8751 = vsub.f32 1.5, %v8750
    %v8752 = vmul.f32 %v8747, %v8751
    %vm8753 = vweird.f32 %v8746
    %vm8754 = vweird.f32 %v8747
    %vm8755 = vmor %vm8753, %vm8754
    %v8756 = vsel %vm8755, %v8747, %v8752
    %v8757 = vmul.f32 %v8745, %v8756
    %v8758 = vld [vmem:[#allocation26] sm:$0x1]
    %v8759 = vmul.f32 %v8732, %v8757
    %v8760 = vsub.f32 %v8758, %v8759
    %v8762 = vperm.slane %v8757, 0
    %v8764 = vmul.f32 %v8722, %v8762
    %v8766 = vperm.slane %v8760, 0
    %v8768 = vadd.f32 %v8764, %v8766
    %v8769 = vmax.f32 %v8768, 0.0
    %s8770 = smul.u32 64, 1
    %s8771 = sshll.u32 %s8770, 4
    %8772 = dma.done %s302, %s8771
    %v8773 = vld [vmem:[#allocation7] sm:$0xff]
    %v8774 = vld [vmem:[#allocation7 + $0x8] sm:$0xff]
    %v8775 = vld [vmem:[#allocation7 + $0x10] sm:$0xff]
    %v8776 = vld [vmem:[#allocation7 + $0x18] sm:$0xff]
    %v8777 = vld [vmem:[#allocation7 + $0x20] sm:$0xff]
    %v8778 = vld [vmem:[#allocation7 + $0x28] sm:$0xff]
    %v8779 = vld [vmem:[#allocation7 + $0x30] sm:$0xff]
    %v8780 = vld [vmem:[#allocation7 + $0x38] sm:$0xff]
    %v8781 = vld [vmem:[#allocation9] sm:$0x1]
    %v8783 = vperm.slane %v8781, 0
    %v8786 = vsel %vm8724, %v8769, 0
    %8788 = vmatpush.msra.mxu0 0.0
    %8789 = vmatpush.msra.mxu0 0.0
    %8790 = vmatpush.msra.mxu0 0.0
    %8791 = vmatpush.msra.mxu0 0.0
    %8792 = vmatpush.msra.mxu0 0.0
    %8793 = vmatpush.msra.mxu0 0.0
    %8794 = vmatpush.msra.mxu0 0.0
    %8795 = vmatpush.msra.mxu0 0.0
    %8796 = vmatpush.msra.mxu0 %v8780
    %8797 = vmatpush.msra.mxu0 %v8779
    %8798 = vmatpush.msra.mxu0 %v8778
    %8799 = vmatpush.msra.mxu0 %v8777
    %8800 = vmatpush.msra.mxu0 %v8776
    %8801 = vmatpush.msra.mxu0 %v8775
    %8802 = vmatpush.msra.mxu0 %v8774
    %8803 = vmatpush.msra.mxu0 %v8773
    %8804 = vmatmul.f32.gmra.mxu0 %v8786
    %v8805 = vpop.f32.mrf.mxu0
    %v8806 = vadd.f32 %v8783, %v8805
    %8807 = vdwg.mxu0
    %vm8808 = vcmask 7168
    %8809 = vst.msk [vmem:[%s18] sm:$0xff] %vm8808, %v8806
    // Predicated region
    $region148: #{model2_forward.1} parent=1 // pred_check
      _
    $region149: #{model2_forward.1} parent=1 // pred_check_branch
      %8811 = sbr.rel (0) target = $region151
    $region150: #{model2_forward.1} parent=1 // pred_region
      _
    $region151: #{model2_forward.1} parent=1 // pred_fallthru
      _
    // Predicated region
    $region152: #{model2_forward.1} parent=1 // pred_check
      _
    $region153: #{model2_forward.1} parent=1 // pred_check_branch
      %8813 = sbr.rel (0) target = $region155
    $region154: #{model2_forward.1} parent=1 // pred_region
      _
    $region155: #{model2_forward.1} parent=1 // pred_fallthru
      _
    %8814 = vsyncpa [#allocation11], 1
    %8815 = vsyncpa [#allocation13], 1
    %8816 = vsyncpa [#allocation16], 1
    %8817 = vsyncpa [#allocation19], 1
    %8818 = vsyncpa [#allocation22], 1
    %8819 = vsyncpa [#allocation25], 1
  %8820 = vsyncmov [#allocation8]
  %s8821 = vpop.sfrf %8820
  %p8822 = scmp.eq.s32.totalorder %s8821, 0
  %p8823 = pneg %p8822
  %8825 = shalt.err (%p8823)
  %s8826 = scalar_lea.sflag [#allocation8], 1
  %8827 = vsyncmov %s8826
  %s8828 = vpop.sfrf %8827
  %p8829 = scmp.eq.s32.totalorder %s8828, 0
  %p8830 = pneg %p8829
  %8832 = shalt.err (%p8830)
  %s8833 = scalar_lea.sflag [#allocation8], 2
  %8834 = vsyncmov %s8833
  %s8835 = vpop.sfrf %8834
  %p8836 = scmp.eq.s32.totalorder %s8835, 0
  %p8837 = pneg %p8836
  %8839 = shalt.err (%p8837)
  %s8840 = scalar_lea.sflag [#allocation8], 3
  %8841 = vsyncmov %s8840
  %s8842 = vpop.sfrf %8841
  %p8843 = scmp.eq.s32.totalorder %s8842, 0
  %p8844 = pneg %p8843
  %8846 = shalt.err (%p8844)
  %s8847 = scalar_lea.sflag [#allocation8], 4
  %8848 = vsyncmov %s8847
  %s8849 = vpop.sfrf %8848
  %p8850 = scmp.eq.s32.totalorder %s8849, 0
  %p8851 = pneg %p8850
  %8853 = shalt.err (%p8851)
  %s8854 = scalar_lea.sflag [#allocation8], 5
  %8855 = vsyncmov %s8854
  %s8856 = vpop.sfrf %8855
  %p8857 = scmp.eq.s32.totalorder %s8856, 0
  %p8858 = pneg %p8857
  %8860 = shalt.err (%p8858)

</llo_original>
